<compile_context>
chip_gen: v7x
topology: tpu7x:2x2x1
jax: 0.10.0
libtpu: 0.0.40
codegen_flags: <defaults>
</compile_context>

<pallas_src>
import functools
import math

import jax
import jax.numpy as jnp
import numpy as np
from jax.experimental import pallas as pl
from jax.experimental.pallas import tpu as pltpu


def _cdiv(a, b):
    return -(-a // b)


# ----------------------------------------------------------------------------
# Fused Pallas kernel:
#   [snake] -> K-tap dilated conv as ONE tap-stacked MXU matmul -> +bias
#   [-> snake -> 1x1 conv -> +bias -> +residual]   (fused ResidualUnit tail)
#   [-> tanh]
# ----------------------------------------------------------------------------
def _fused_conv_kernel(*refs, K, dilation, TL, halo, pad_left,
                       snake1, stage2, apply_tanh):
    it = iter(refs)
    x_ref = next(it)                       # (1, Cin, TL)
    w_ref = next(it)                       # (Cout, K*Cin) bf16 (tap-stacked)
    b_ref = next(it)                       # (Cout, 1) f32
    a1_ref = next(it) if snake1 else None  # (Cin, 1) f32
    if stage2:
        w2_ref = next(it)                  # (Cout, Cout) bf16
        b2_ref = next(it)                  # (Cout, 1) f32
        a2_ref = next(it)                  # (Cout, 1) f32
    o_ref = next(it)                       # (1, Cout, TL)
    carry_ref = next(it)                   # VMEM (Cin, halo): halo of tile to the right

    # Tiles are visited right-to-left; the first visited (right-most) tile's
    # halo is semantic zero padding.  NOTE: only valid while the length axis
    # is the innermost, sequentially executed ("arbitrary") grid axis.
    @pl.when(pl.program_id(1) == 0)
    def _init():
        carry_ref[...] = jnp.zeros_like(carry_ref)

    x_blk = x_ref[0]                                              # (Cin, TL)
    x_full = jnp.concatenate([x_blk, carry_ref[...]], axis=-1)    # (Cin, TL+halo)
    carry_ref[...] = x_blk[:, :halo]                # becomes halo of tile to the left

    xf = x_full.astype(jnp.float32)
    if snake1:
        a = a1_ref[...]
        inv2a = 0.5 * pl.reciprocal(a + 1e-9, approx=True)        # (Cin,1), EUP
        # snake(x) = x + sin^2(a x)/a  ==  x + (1 - cos(2 a x)) / (2 a)
        xf = xf + inv2a * (1.0 - jnp.cos((2.0 * a) * xf))         # snake(0) == 0
    xb = xf.astype(jnp.bfloat16)                                  # bf16 MXU operand

    # Tap-stacked operand: one (K*Cin, TL) matrix from K shifted slices, then
    # a single MXU matmul with contraction depth K*Cin (f32 accumulation).
    if K > 1:
        xs = jnp.concatenate(
            [xb[:, k * dilation:k * dilation + TL] for k in range(K)], axis=0)
    else:
        xs = xb[:, :TL]
    acc = jnp.dot(w_ref[...], xs, preferred_element_type=jnp.float32)
    acc = acc + b_ref[...]

    if stage2:
        a2 = a2_ref[...]
        inv2a2 = 0.5 * pl.reciprocal(a2 + 1e-9, approx=True)
        y = acc + inv2a2 * (1.0 - jnp.cos((2.0 * a2) * acc))      # snake in f32
        acc = jnp.dot(w2_ref[...], y.astype(jnp.bfloat16),
                      preferred_element_type=jnp.float32)
        acc = acc + b2_ref[...]
        # residual add: pre-snake input, already resident in VMEM (offset fold)
        acc = acc + x_full[:, pad_left:pad_left + TL].astype(jnp.float32)

    if apply_tanh:
        acc = jnp.tanh(acc)
    o_ref[0] = acc.astype(o_ref.dtype)


def _pick_tl(Cin, Cout, K):
    """Per-layer length-tile target (multiple of 128 in [256, 4096]) so the f32
    temporaries + stacked bf16 operand stay within a ~6 MiB working set."""
    denom = 4 * (Cin + 2 * Cout) + 2 * K * Cin + 2 * (Cin + Cout)
    tl = (6 << 20) // max(denom, 1)
    return max(256, min(4096, (tl // 128) * 128))


def fused_conv(x, w, b, *, K, L_out, dilation=1, pad_left=0,
               alpha1=None, w2=None, b2=None, alpha2=None,
               apply_tanh=False, out_dtype=jnp.bfloat16, target_tl=None):
    """x: (B, Cin, L_in); w: (Cout, K*Cin) tap-stacked; b: (Cout,).
    Returns (B, Cout, L_out) with
      out[:, :, n] = sum_k w[:, k*Cin:(k+1)*Cin] @ act(x)[:, :, n - pad_left + k*dilation]
    (zero outside [0, L_in)), plus optional fused snake / 1x1-conv / residual /
    tanh stages."""
    B, Cin, L_in = x.shape
    Cout, KC = w.shape
    assert KC == K * Cin
    halo = (K - 1) * dilation
    snake1 = alpha1 is not None
    stage2 = w2 is not None
    if stage2:
        assert Cout == Cin and b2 is not None and alpha2 is not None
        assert pad_left <= halo

    if target_tl is None:
        target_tl = _pick_tl(Cin, Cout, K)

    # --- length tiling -------------------------------------------------------
    need = max(L_out, pad_left + L_in)
    if need <= target_tl:
        n_t, TL = 1, max(need, halo)          # single full-length tile
    else:
        assert target_tl % 128 == 0 and halo < target_tl
        n_t, TL = _cdiv(need, target_tl), target_tl
    L_pad = n_t * TL

    # zero pad: left conv padding + right up to the tile grid (snake(0)==0).
    # TODO(synk): handle the small left pad in-kernel (edge masking) to avoid
    # one full HBM round trip of the activation per layer.
    x = jnp.pad(x, ((0, 0), (0, 0), (pad_left, L_pad - pad_left - L_in)))

    kernel = functools.partial(
        _fused_conv_kernel, K=K, dilation=dilation, TL=TL, halo=halo,
        pad_left=pad_left, snake1=snake1, stage2=stage2, apply_tanh=apply_tanh)

    rev = lambda bi, ti: (bi, 0, n_t - 1 - ti)       # right-to-left tile walk
    fixed = lambda bi, ti: (0, 0)

    in_specs = [pl.BlockSpec((1, Cin, TL), rev),
                pl.BlockSpec((Cout, K * Cin), fixed),
                pl.BlockSpec((Cout, 1), fixed)]
    args = [x, w, b.reshape(Cout, 1).astype(jnp.float32)]
    if snake1:
        in_specs.append(pl.BlockSpec((Cin, 1), fixed))
        args.append(alpha1.reshape(Cin, 1).astype(jnp.float32))
    if stage2:
        in_specs += [pl.BlockSpec((Cout, Cout), fixed),
                     pl.BlockSpec((Cout, 1), fixed),
                     pl.BlockSpec((Cout, 1), fixed)]
        args += [w2, b2.reshape(Cout, 1).astype(jnp.float32),
                 alpha2.reshape(Cout, 1).astype(jnp.float32)]

    # Explicit scoped-VMEM budget sized from the actual block footprint
    # (capped below v7x's 64 MiB physical VMEM).
    # TODO(synk): Cout grid tiling + single-buffered weight blocks for
    # production channel widths (>~512); toy widths fit trivially.
    w_bytes = w.size * w.dtype.itemsize + (w2.size * w2.dtype.itemsize if stage2 else 0)
    blk_bytes = (Cin * TL * x.dtype.itemsize
                 + Cout * TL * np.dtype(out_dtype).itemsize)
    tmp_bytes = Cin * (TL + halo) * 4 + K * Cin * TL * 2 + 2 * Cout * TL * 4
    vmem_limit = int(min(56 << 20,
                         max(32 << 20, 2 * (2 * blk_bytes + 2 * w_bytes + tmp_bytes))))

    out = pl.pallas_call(
        kernel,
        out_shape=jax.ShapeDtypeStruct((B, Cout, L_pad), out_dtype),
        grid=(B, n_t),
        in_specs=in_specs,
        out_specs=pl.BlockSpec((1, Cout, TL), rev),
        scratch_shapes=[pltpu.VMEM((Cin, halo), x.dtype)],
        compiler_params=pltpu.CompilerParams(
            dimension_semantics=("parallel", "arbitrary"),
            vmem_limit_bytes=vmem_limit),
    )(*args)
    return out[:, :, :L_out]


# ----------------------------------------------------------------------------
# Decoder forward (composition of the fused kernels)
# ----------------------------------------------------------------------------
def decoder_forward(kparams, x, cfg):
    # input conv: K=7, pad=3, no snake
    x = fused_conv(x, kparams['conv_in_w'], kparams['conv_in_b'], K=7,
                   L_out=x.shape[-1], pad_left=3, out_dtype=jnp.bfloat16)

    for kblk, cblk in zip(kparams['blocks'], cfg['blocks']):
        s, p = cblk['stride'], cblk['padding']
        cout = kblk['w_poly'].shape[0] // s
        L_in = x.shape[-1]
        L_t = (L_in - 1) * s - 2 * p + 2 * s          # ConvTranspose1d out length
        Lp = _cdiv(L_t, s)                            # outputs per polyphase branch

        # snake + ConvTranspose1d as a polyphase bank of stride-1 3-tap convs
        # (s*cout channels) on the un-stuffed input.
        y = fused_conv(x, kblk['w_poly'], kblk['b_poly'], K=3,
                       L_out=Lp, pad_left=1, alpha1=kblk['alpha'],
                       out_dtype=jnp.bfloat16)
        B = y.shape[0]
        # TODO(synk): fuse this phase interleave into the kernel's store to
        # save one HBM round trip of the upsampled activation.
        y = y.reshape(B, s, cout, Lp).transpose(0, 2, 3, 1).reshape(B, cout, s * Lp)
        x = y[:, :, :L_t]                             # interleave the phases

        # three fully fused residual units
        for kru, d in zip(kblk['res_units'], cblk['dilations']):
            x = fused_conv(x, kru['w1'], kru['b1'], K=7,
                           L_out=x.shape[-1], dilation=d, pad_left=3 * d,
                           alpha1=kru['alpha1'], w2=kru['w2'], b2=kru['b2'],
                           alpha2=kru['alpha2'], out_dtype=jnp.bfloat16)

    # output conv: snake + K=7 conv + tanh (Cout zero-padded to multiple of 8)
    x = fused_conv(x, kparams['conv_out_w'], kparams['conv_out_b'], K=7,
                   L_out=x.shape[-1], pad_left=3, alpha1=kparams['alpha_out'],
                   apply_tanh=True, out_dtype=jnp.float32)
    return x[:, :cfg['d_out'], :]


# ----------------------------------------------------------------------------
# Deterministic parameter init (weight_norm == identity at init)
# ----------------------------------------------------------------------------
def init_params(key, input_channel, channels, rates, d_out=1):
    keys = iter(jax.random.split(key, 64))

    def u(shape, fan):
        return (jax.random.uniform(next(keys), shape, jnp.float32, -1.0, 1.0)
                * math.sqrt(3.0 / fan))

    params = {
        'conv_in_w': u((channels, input_channel, 7), input_channel * 7),
        'conv_in_b': u((channels,), input_channel * 7),
        'blocks': [],
    }
    out_dim = channels
    for i, stride in enumerate(rates):
        in_dim = channels // 2 ** i
        out_dim = channels // 2 ** (i + 1)
        K = 2 * stride
        blk = {
            'stride': stride,
            'alpha': jnp.ones((in_dim, 1), jnp.float32),
            'wt': u((in_dim, out_dim, K), out_dim * K),
            'bt': u((out_dim,), out_dim * K),
            'res_units': [],
        }
        for d in (1, 3, 9):
            blk['res_units'].append({
                'dilation': d,
                'alpha1': jnp.ones((out_dim, 1), jnp.float32),
                'w1': u((out_dim, out_dim, 7), out_dim * 7),
                'b1': u((out_dim,), out_dim * 7),
                'alpha2': jnp.ones((out_dim, 1), jnp.float32),
                'w2': u((out_dim, out_dim, 1), out_dim),
                'b2': u((out_dim,), out_dim),
            })
        params['blocks'].append(blk)
    params['alpha_out'] = jnp.ones((out_dim, 1), jnp.float32)
    params['conv_out_w'] = u((d_out, out_dim, 7), out_dim * 7)
    params['conv_out_b'] = u((d_out,), out_dim * 7)
    return params


def prepare_kernel_params(params):
    """PyTorch-layout params -> kernel layout:
      * Conv1d weights (Cout, Cin, K) -> tap-stacked (Cout, K*Cin) bf16
      * ConvTranspose1d -> polyphase bank of 3-tap stride-1 convs, tap-stacked
        to (stride*Cout, 3*Cin) bf16
      * biases / snake alphas -> f32 column vectors
      * final conv Cout zero-padded to a multiple of 8 (unmasked stores).
    Returns (array pytree, static int config)."""
    def wstack(w):                                      # (Cout, Cin, K) -> (Cout, K*Cin)
        Cout, Cin, K = w.shape
        return (jnp.transpose(w, (0, 2, 1)).reshape(Cout, K * Cin)
                .astype(jnp.bfloat16))

    kp = {'conv_in_w': wstack(params['conv_in_w']),
          'conv_in_b': params['conv_in_b'].astype(jnp.float32),
          'blocks': []}
    cfg = {'blocks': []}
    for blk in params['blocks']:
        s = blk['stride']
        p = math.ceil(s / 2)
        wt = blk['wt']                                  # (Cin, Cout, K), K == 2*s
        Cin, Cout, K = wt.shape
        assert K == 2 * s
        A = jnp.transpose(wt, (2, 1, 0))                # A[k, cout, cin] = wt[cin, cout, k]
        zero = jnp.zeros((Cout, Cin), wt.dtype)
        phase_rows = []
        for o in range(s):                              # o = output index mod s
            r = (o + p) % s
            if o + p >= s:
                taps = [zero, A[r + s], A[r]]
            else:
                taps = [A[r + s], A[r], zero]
            phase_rows.append(jnp.concatenate(taps, axis=1))   # (Cout, 3*Cin)
        kblk = {'w_poly': jnp.concatenate(phase_rows, axis=0).astype(jnp.bfloat16),
                'b_poly': jnp.tile(blk['bt'], s).astype(jnp.float32),
                'alpha': blk['alpha'].astype(jnp.float32),
                'res_units': []}
        cblk = {'stride': s, 'padding': p, 'dilations': []}
        for ru in blk['res_units']:
            kblk['res_units'].append({
                'w1': wstack(ru['w1']), 'b1': ru['b1'].astype(jnp.float32),
                'alpha1': ru['alpha1'].astype(jnp.float32),
                'w2': ru['w2'][:, :, 0].astype(jnp.bfloat16),
                'b2': ru['b2'].astype(jnp.float32),
                'alpha2': ru['alpha2'].astype(jnp.float32)})
            cblk['dilations'].append(ru['dilation'])
        kp['blocks'].append(kblk)
        cfg['blocks'].append(cblk)

    w, b = params['conv_out_w'], params['conv_out_b']
    d_out = w.shape[0]
    cpad = _cdiv(d_out, 8) * 8
    kp['conv_out_w'] = wstack(jnp.pad(w, ((0, cpad - d_out), (0, 0), (0, 0))))
    kp['conv_out_b'] = jnp.pad(b, (0, cpad - d_out)).astype(jnp.float32)
    kp['alpha_out'] = params['alpha_out'].astype(jnp.float32)
    cfg['d_out'] = d_out
    return kp, cfg


# ----------------------------------------------------------------------------
# Pure-JAX reference (same dtype policy: bf16 operands, f32 accumulation)
# ----------------------------------------------------------------------------
def _ref_snake(x, alpha):
    a = alpha[None]                                     # (1, C, 1)
    return x + (jnp.sin(a * x) ** 2) / (a + 1e-9)


def _ref_conv(x, w, b, pad, dilation=1, lhs_dilation=1):
    y = jax.lax.conv_general_dilated(
        x.astype(jnp.bfloat16), w.astype(jnp.bfloat16),
        window_strides=(1,), padding=[(pad, pad)],
        lhs_dilation=(lhs_dilation,), rhs_dilation=(dilation,),
        dimension_numbers=('NCH', 'OIH', 'NCH'),
        preferred_element_type=jnp.float32)
    return y + b[None, :, None].astype(jnp.float32)


def ref_decoder(params, x):
    x = _ref_conv(x, params['conv_in_w'], params['conv_in_b'], pad=3)
    x = x.astype(jnp.bfloat16)
    for blk in params['blocks']:
        s, K = blk['stride'], blk['wt'].shape[2]
        p = math.ceil(s / 2)
        h = _ref_snake(x.astype(jnp.float32), blk['alpha'])
        w_conv = jnp.flip(blk['wt'], 2).transpose(1, 0, 2)
        x = _ref_conv(h, w_conv, blk['bt'], pad=K - 1 - p, lhs_dilation=s)
        x = x.astype(jnp.bfloat16)
        for ru in blk['res_units']:
            d = ru['dilation']
            y = _ref_snake(x.astype(jnp.float32), ru['alpha1'])
            y = _ref_conv(y, ru['w1'], ru['b1'], pad=3 * d, dilation=d)
            y = _ref_snake(y, ru['alpha2'])
            y = _ref_conv(y, ru['w2'], ru['b2'], pad=0)
            x = (x.astype(jnp.float32) + y).astype(jnp.bfloat16)
    h = _ref_snake(x.astype(jnp.float32), params['alpha_out'])
    x = _ref_conv(h, params['conv_out_w'], params['conv_out_b'], pad=3)
    return jnp.tanh(x)


if __name__ == "__main__":
    key = jax.random.PRNGKey(0)
    kp_key, kx_key = jax.random.split(key)

    input_channel, channels, rates, d_out = 4, 32, (2, 2), 1
    B, L = 2, 16

    params = init_params(kp_key, input_channel, channels, rates, d_out)
    kparams, cfg = prepare_kernel_params(params)
    x = jax.random.normal(kx_key, (B, input_channel, L), jnp.float32)

    fwd = jax.jit(functools.partial(decoder_forward, cfg=cfg))
    out = jax.block_until_ready(fwd(kparams, x))
    ref = jax.block_until_ready(ref_decoder(params, x))
    np.testing.assert_allclose(np.asarray(out), np.asarray(ref),
                               atol=2e-2, rtol=2e-2)

    # Extra check: exercise the multi-tile (carried-halo) path of the fused
    # residual-unit kernel at a longer length with 128-lane tiles.
    C, Lt, d = 16, 400, 3
    ks = jax.random.split(jax.random.PRNGKey(1), 3)
    xt = jax.random.normal(ks[0], (1, C, Lt), jnp.float32)
    w1 = jax.random.normal(ks[1], (C, C, 7), jnp.float32) * 0.1
    w2 = jax.random.normal(ks[2], (C, C, 1), jnp.float32) * 0.1
    b1 = jnp.zeros((C,), jnp.float32)
    b2 = jnp.zeros((C,), jnp.float32)
    a1 = jnp.ones((C, 1), jnp.float32)
    a2 = jnp.ones((C, 1), jnp.float32)
    w1_stacked = (jnp.transpose(w1, (0, 2, 1)).reshape(C, 7 * C)
                  .astype(jnp.bfloat16))
    got = fused_conv(xt, w1_stacked, b1, K=7,
                     L_out=Lt, dilation=d, pad_left=3 * d, alpha1=a1,
                     w2=w2[:, :, 0].astype(jnp.bfloat16), b2=b2, alpha2=a2,
                     out_dtype=jnp.float32, target_tl=128)
    got = jax.block_until_ready(got)
    yr = _ref_snake(xt, a1)
    yr = _ref_conv(yr, w1, b1, pad=3 * d, dilation=d)
    yr = _ref_snake(yr, a2)
    yr = _ref_conv(yr, w2, b2, pad=0)
    want = xt + yr
    np.testing.assert_allclose(np.asarray(got), np.asarray(want),
                               atol=2e-2, rtol=2e-2)

    print("KERNEL_OK")
</pallas_src>

<mosaic_0001>
module attributes {stable_mosaic.version = 11 : i64} {
  func.func @_fused_conv_kernel(%arg0: i32, %arg1: i32, %arg2: memref<1x4x19xf32, #tpu.memory_space<vmem>>, %arg3: memref<32x28xbf16, #tpu.memory_space<vmem>>, %arg4: memref<32x1xf32, #tpu.memory_space<vmem>>, %arg5: memref<1x32x19xbf16, #tpu.memory_space<vmem>>, %arg6: memref<4x6xf32, #tpu.memory_space<vmem>>) attributes {dimension_semantics = [#tpu.dimension_semantics<parallel>, #tpu.dimension_semantics<arbitrary>], iteration_bounds = array<i64: 2, 1>, scalar_prefetch = 0 : i64, scratch_operands = 1 : i64, tpu.core_type = #tpu.core_type<tc>, window_params = [{transform_indices = @transform_0, window_bounds = array<i64: 1, 4, 19>}, {pipeline_mode = #tpu.pipeline_mode<synchronous>, transform_indices = @transform_1, window_bounds = array<i64: 32, 28>}, {pipeline_mode = #tpu.pipeline_mode<synchronous>, transform_indices = @transform_2, window_bounds = array<i64: 32, 1>}, {transform_indices = @transform_3, window_bounds = array<i64: 1, 32, 19>}]} {
    %c0_i32 = arith.constant 0 : i32
    %0 = arith.cmpi eq, %arg1, %c0_i32 : i32
    %1 = arith.extui %0 : i1 to i32
    %c0_i32_0 = arith.constant 0 : i32
    %2 = arith.cmpi ne, %1, %c0_i32_0 : i32
    scf.if %2 {
      %cst_14 = arith.constant 0.000000e+00 : f32
      %27 = vector.broadcast %cst_14 : f32 to vector<4x6xf32>
      %c0_15 = arith.constant 0 : index
      %c0_16 = arith.constant 0 : index
      %28 = vector.load %arg6[%c0_15, %c0_16] : memref<4x6xf32, #tpu.memory_space<vmem>>, vector<4x6xf32>
      tpu.vector_store %arg6[%c0_15, %c0_16], %27 {strides = array<i32>} : memref<4x6xf32, #tpu.memory_space<vmem>>, vector<4x6xf32>,
    } else {
    }
    %c0 = arith.constant 0 : index
    %c0_1 = arith.constant 0 : index
    %c0_2 = arith.constant 0 : index
    %3 = vector.load %arg2[%c0, %c0_1, %c0_2] : memref<1x4x19xf32, #tpu.memory_space<vmem>>, vector<1x4x19xf32>
    %4 = vector.shape_cast %3 : vector<1x4x19xf32> to vector<4x19xf32>
    %c0_3 = arith.constant 0 : index
    %c0_4 = arith.constant 0 : index
    %5 = vector.load %arg6[%c0_3, %c0_4] : memref<4x6xf32, #tpu.memory_space<vmem>>, vector<4x6xf32>
    %6 = tpu.concatenate %4, %5 in 1 : vector<4x19xf32>, vector<4x6xf32> -> vector<4x25xf32>
    %7 = vector.extract_strided_slice %4 {offsets = [0, 0], sizes = [4, 6], strides = [1, 1]} : vector<4x19xf32> to vector<4x6xf32>
    %c0_5 = arith.constant 0 : index
    %c0_6 = arith.constant 0 : index
    %8 = vector.load %arg6[%c0_5, %c0_6] : memref<4x6xf32, #tpu.memory_space<vmem>>, vector<4x6xf32>
    tpu.vector_store %arg6[%c0_5, %c0_6], %7 {strides = array<i32>} : memref<4x6xf32, #tpu.memory_space<vmem>>, vector<4x6xf32>,
    %9 = arith.truncf %6 : vector<4x25xf32> to vector<4x25xbf16>
    %10 = vector.extract_strided_slice %9 {offsets = [0, 0], sizes = [4, 19], strides = [1, 1]} : vector<4x25xbf16> to vector<4x19xbf16>
    %11 = vector.extract_strided_slice %9 {offsets = [0, 1], sizes = [4, 19], strides = [1, 1]} : vector<4x25xbf16> to vector<4x19xbf16>
    %12 = vector.extract_strided_slice %9 {offsets = [0, 2], sizes = [4, 19], strides = [1, 1]} : vector<4x25xbf16> to vector<4x19xbf16>
    %13 = vector.extract_strided_slice %9 {offsets = [0, 3], sizes = [4, 19], strides = [1, 1]} : vector<4x25xbf16> to vector<4x19xbf16>
    %14 = vector.extract_strided_slice %9 {offsets = [0, 4], sizes = [4, 19], strides = [1, 1]} : vector<4x25xbf16> to vector<4x19xbf16>
    %15 = vector.extract_strided_slice %9 {offsets = [0, 5], sizes = [4, 19], strides = [1, 1]} : vector<4x25xbf16> to vector<4x19xbf16>
    %16 = vector.extract_strided_slice %9 {offsets = [0, 6], sizes = [4, 19], strides = [1, 1]} : vector<4x25xbf16> to vector<4x19xbf16>
    %17 = tpu.concatenate %10, %11, %12, %13, %14, %15, %16 in 0 : vector<4x19xbf16>, vector<4x19xbf16>, vector<4x19xbf16>, vector<4x19xbf16>, vector<4x19xbf16>, vector<4x19xbf16>, vector<4x19xbf16> -> vector<28x19xbf16>
    %c0_7 = arith.constant 0 : index
    %c0_8 = arith.constant 0 : index
    %18 = vector.load %arg3[%c0_7, %c0_8] : memref<32x28xbf16, #tpu.memory_space<vmem>>, vector<32x28xbf16>
    %cst = arith.constant dense<0.000000e+00> : vector<32x19xf32>
    %19 = tpu.matmul %18, %17, %cst {dimension_numbers = #tpu.dot_dimension_numbers<[1], [0], [0], [1], [0, 0, 1, 1], [], []>} : vector<32x28xbf16>, vector<28x19xbf16>, vector<32x19xf32> -> vector<32x19xf32>
    %c0_9 = arith.constant 0 : index
    %c0_10 = arith.constant 0 : index
    %20 = vector.load %arg4[%c0_9, %c0_10] : memref<32x1xf32, #tpu.memory_space<vmem>>, vector<32x1xf32>
    %21 = vector.broadcast %20 : vector<32x1xf32> to vector<32x19xf32>
    %22 = arith.addf %19, %21 : vector<32x19xf32>
    %23 = arith.truncf %22 : vector<32x19xf32> to vector<32x19xbf16>
    %c0_11 = arith.constant 0 : index
    %c0_12 = arith.constant 0 : index
    %c0_13 = arith.constant 0 : index
    %24 = vector.load %arg5[%c0_11, %c0_12, %c0_13] : memref<1x32x19xbf16, #tpu.memory_space<vmem>>, vector<1x32x19xbf16>
    %25 = vector.shape_cast %24 : vector<1x32x19xbf16> to vector<32x19xbf16>
    %26 = vector.shape_cast %23 : vector<32x19xbf16> to vector<1x32x19xbf16>
    tpu.vector_store %arg5[%c0_11, %c0_12, %c0_13], %26 {strides = array<i32>} : memref<1x32x19xbf16, #tpu.memory_space<vmem>>, vector<1x32x19xbf16>,
    return
  }
  func.func @transform_0(%arg0: i32, %arg1: i32) -> (i32, i32, i32) {
    %c0_i32 = arith.constant 0 : i32
    %0 = arith.subi %c0_i32, %arg1 : i32
    %c0_i32_0 = arith.constant 0 : i32
    %c0_i32_1 = arith.constant 0 : i32
    return %arg0, %c0_i32_0, %0 : i32, i32, i32
  }
  func.func @transform_1(%arg0: i32, %arg1: i32) -> (i32, i32) {
    %c0_i32 = arith.constant 0 : i32
    %c0_i32_0 = arith.constant 0 : i32
    %c0_i32_1 = arith.constant 0 : i32
    return %c0_i32, %c0_i32_0 : i32, i32
  }
  func.func @transform_2(%arg0: i32, %arg1: i32) -> (i32, i32) {
    %c0_i32 = arith.constant 0 : i32
    %c0_i32_0 = arith.constant 0 : i32
    %c0_i32_1 = arith.constant 0 : i32
    return %c0_i32, %c0_i32_0 : i32, i32
  }
  func.func @transform_3(%arg0: i32, %arg1: i32) -> (i32, i32, i32) {
    %c0_i32 = arith.constant 0 : i32
    %0 = arith.subi %c0_i32, %arg1 : i32
    %c0_i32_0 = arith.constant 0 : i32
    %c0_i32_1 = arith.constant 0 : i32
    return %arg0, %c0_i32_0, %0 : i32, i32, i32
  }
}

module attributes {stable_mosaic.version = 11 : i64} {
  func.func @_fused_conv_kernel(%arg0: i32, %arg1: i32, %arg2: memref<1x32x17xbf16, #tpu.memory_space<vmem>>, %arg3: memref<32x96xbf16, #tpu.memory_space<vmem>>, %arg4: memref<32x1xf32, #tpu.memory_space<vmem>>, %arg5: memref<32x1xf32, #tpu.memory_space<vmem>>, %arg6: memref<1x32x17xbf16, #tpu.memory_space<vmem>>, %arg7: memref<32x2xbf16, #tpu.memory_space<vmem>>) attributes {dimension_semantics = [#tpu.dimension_semantics<parallel>, #tpu.dimension_semantics<arbitrary>], iteration_bounds = array<i64: 2, 1>, scalar_prefetch = 0 : i64, scratch_operands = 1 : i64, tpu.core_type = #tpu.core_type<tc>, window_params = [{transform_indices = @transform_0, window_bounds = array<i64: 1, 32, 17>}, {pipeline_mode = #tpu.pipeline_mode<synchronous>, transform_indices = @transform_1, window_bounds = array<i64: 32, 96>}, {pipeline_mode = #tpu.pipeline_mode<synchronous>, transform_indices = @transform_2, window_bounds = array<i64: 32, 1>}, {pipeline_mode = #tpu.pipeline_mode<synchronous>, transform_indices = @transform_3, window_bounds = array<i64: 32, 1>}, {transform_indices = @transform_4, window_bounds = array<i64: 1, 32, 17>}]} {
    %c0_i32 = arith.constant 0 : i32
    %0 = arith.cmpi eq, %arg1, %c0_i32 : i32
    %1 = arith.extui %0 : i1 to i32
    %c0_i32_0 = arith.constant 0 : i32
    %2 = arith.cmpi ne, %1, %c0_i32_0 : i32
    scf.if %2 {
      %cst_20 = arith.constant 0.000000e+00 : bf16
      %40 = vector.broadcast %cst_20 : bf16 to vector<32x2xbf16>
      %c0_21 = arith.constant 0 : index
      %c0_22 = arith.constant 0 : index
      %41 = vector.load %arg7[%c0_21, %c0_22] : memref<32x2xbf16, #tpu.memory_space<vmem>>, vector<32x2xbf16>
      tpu.vector_store %arg7[%c0_21, %c0_22], %40 {strides = array<i32>} : memref<32x2xbf16, #tpu.memory_space<vmem>>, vector<32x2xbf16>,
    } else {
    }
    %c0 = arith.constant 0 : index
    %c0_1 = arith.constant 0 : index
    %c0_2 = arith.constant 0 : index
    %3 = vector.load %arg2[%c0, %c0_1, %c0_2] : memref<1x32x17xbf16, #tpu.memory_space<vmem>>, vector<1x32x17xbf16>
    %4 = vector.shape_cast %3 : vector<1x32x17xbf16> to vector<32x17xbf16>
    %c0_3 = arith.constant 0 : index
    %c0_4 = arith.constant 0 : index
    %5 = vector.load %arg7[%c0_3, %c0_4] : memref<32x2xbf16, #tpu.memory_space<vmem>>, vector<32x2xbf16>
    %6 = tpu.concatenate %4, %5 in 1 : vector<32x17xbf16>, vector<32x2xbf16> -> vector<32x19xbf16>
    %7 = vector.extract_strided_slice %4 {offsets = [0, 0], sizes = [32, 2], strides = [1, 1]} : vector<32x17xbf16> to vector<32x2xbf16>
    %c0_5 = arith.constant 0 : index
    %c0_6 = arith.constant 0 : index
    %8 = vector.load %arg7[%c0_5, %c0_6] : memref<32x2xbf16, #tpu.memory_space<vmem>>, vector<32x2xbf16>
    tpu.vector_store %arg7[%c0_5, %c0_6], %7 {strides = array<i32>} : memref<32x2xbf16, #tpu.memory_space<vmem>>, vector<32x2xbf16>,
    %9 = arith.extf %6 : vector<32x19xbf16> to vector<32x19xf32>
    %c0_7 = arith.constant 0 : index
    %c0_8 = arith.constant 0 : index
    %10 = vector.load %arg5[%c0_7, %c0_8] : memref<32x1xf32, #tpu.memory_space<vmem>>, vector<32x1xf32>
    %cst = arith.constant 9.99999971E-10 : f32
    %11 = vector.broadcast %cst : f32 to vector<32x1xf32>
    %12 = arith.addf %10, %11 : vector<32x1xf32>
    %13 = tpu.reciprocal %12 {approx = true} : vector<32x1xf32> -> vector<32x1xf32>
    %cst_9 = arith.constant 5.000000e-01 : f32
    %14 = vector.broadcast %cst_9 : f32 to vector<32x1xf32>
    %15 = arith.mulf %14, %13 : vector<32x1xf32>
    %cst_10 = arith.constant 2.000000e+00 : f32
    %16 = vector.broadcast %cst_10 : f32 to vector<32x1xf32>
    %17 = arith.mulf %16, %10 : vector<32x1xf32>
    %18 = vector.broadcast %17 : vector<32x1xf32> to vector<32x19xf32>
    %19 = arith.mulf %18, %9 : vector<32x19xf32>
    %20 = math.cos %19 : vector<32x19xf32>
    %cst_11 = arith.constant 1.000000e+00 : f32
    %21 = vector.broadcast %cst_11 : f32 to vector<32x19xf32>
    %22 = arith.subf %21, %20 : vector<32x19xf32>
    %23 = vector.broadcast %15 : vector<32x1xf32> to vector<32x19xf32>
    %24 = arith.mulf %23, %22 : vector<32x19xf32>
    %25 = arith.addf %9, %24 : vector<32x19xf32>
    %26 = arith.truncf %25 : vector<32x19xf32> to vector<32x19xbf16>
    %27 = vector.extract_strided_slice %26 {offsets = [0, 0], sizes = [32, 17], strides = [1, 1]} : vector<32x19xbf16> to vector<32x17xbf16>
    %28 = vector.extract_strided_slice %26 {offsets = [0, 1], sizes = [32, 17], strides = [1, 1]} : vector<32x19xbf16> to vector<32x17xbf16>
    %29 = vector.extract_strided_slice %26 {offsets = [0, 2], sizes = [32, 17], strides = [1, 1]} : vector<32x19xbf16> to vector<32x17xbf16>
    %30 = tpu.concatenate %27, %28, %29 in 0 : vector<32x17xbf16>, vector<32x17xbf16>, vector<32x17xbf16> -> vector<96x17xbf16>
    %c0_12 = arith.constant 0 : index
    %c0_13 = arith.constant 0 : index
    %31 = vector.load %arg3[%c0_12, %c0_13] : memref<32x96xbf16, #tpu.memory_space<vmem>>, vector<32x96xbf16>
    %cst_14 = arith.constant dense<0.000000e+00> : vector<32x17xf32>
    %32 = tpu.matmul %31, %30, %cst_14 {dimension_numbers = #tpu.dot_dimension_numbers<[1], [0], [0], [1], [0, 0, 1, 1], [], []>} : vector<32x96xbf16>, vector<96x17xbf16>, vector<32x17xf32> -> vector<32x17xf32>
    %c0_15 = arith.constant 0 : index
    %c0_16 = arith.constant 0 : index
    %33 = vector.load %arg4[%c0_15, %c0_16] : memref<32x1xf32, #tpu.memory_space<vmem>>, vector<32x1xf32>
    %34 = vector.broadcast %33 : vector<32x1xf32> to vector<32x17xf32>
    %35 = arith.addf %32, %34 : vector<32x17xf32>
    %36 = arith.truncf %35 : vector<32x17xf32> to vector<32x17xbf16>
    %c0_17 = arith.constant 0 : index
    %c0_18 = arith.constant 0 : index
    %c0_19 = arith.constant 0 : index
    %37 = vector.load %arg6[%c0_17, %c0_18, %c0_19] : memref<1x32x17xbf16, #tpu.memory_space<vmem>>, vector<1x32x17xbf16>
    %38 = vector.shape_cast %37 : vector<1x32x17xbf16> to vector<32x17xbf16>
    %39 = vector.shape_cast %36 : vector<32x17xbf16> to vector<1x32x17xbf16>
    tpu.vector_store %arg6[%c0_17, %c0_18, %c0_19], %39 {strides = array<i32>} : memref<1x32x17xbf16, #tpu.memory_space<vmem>>, vector<1x32x17xbf16>,
    return
  }
  func.func @transform_0(%arg0: i32, %arg1: i32) -> (i32, i32, i32) {
    %c0_i32 = arith.constant 0 : i32
    %0 = arith.subi %c0_i32, %arg1 : i32
    %c0_i32_0 = arith.constant 0 : i32
    %c0_i32_1 = arith.constant 0 : i32
    return %arg0, %c0_i32_0, %0 : i32, i32, i32
  }
  func.func @transform_1(%arg0: i32, %arg1: i32) -> (i32, i32) {
    %c0_i32 = arith.constant 0 : i32
    %c0_i32_0 = arith.constant 0 : i32
    %c0_i32_1 = arith.constant 0 : i32
    return %c0_i32, %c0_i32_0 : i32, i32
  }
  func.func @transform_2(%arg0: i32, %arg1: i32) -> (i32, i32) {
    %c0_i32 = arith.constant 0 : i32
    %c0_i32_0 = arith.constant 0 : i32
    %c0_i32_1 = arith.constant 0 : i32
    return %c0_i32, %c0_i32_0 : i32, i32
  }
  func.func @transform_3(%arg0: i32, %arg1: i32) -> (i32, i32) {
    %c0_i32 = arith.constant 0 : i32
    %c0_i32_0 = arith.constant 0 : i32
    %c0_i32_1 = arith.constant 0 : i32
    return %c0_i32, %c0_i32_0 : i32, i32
  }
  func.func @transform_4(%arg0: i32, %arg1: i32) -> (i32, i32, i32) {
    %c0_i32 = arith.constant 0 : i32
    %0 = arith.subi %c0_i32, %arg1 : i32
    %c0_i32_0 = arith.constant 0 : i32
    %c0_i32_1 = arith.constant 0 : i32
    return %arg0, %c0_i32_0, %0 : i32, i32, i32
  }
}

module attributes {stable_mosaic.version = 11 : i64} {
  func.func @_fused_conv_kernel(%arg0: i32, %arg1: i32, %arg2: memref<1x16x35xbf16, #tpu.memory_space<vmem>>, %arg3: memref<16x112xbf16, #tpu.memory_space<vmem>>, %arg4: memref<16x1xf32, #tpu.memory_space<vmem>>, %arg5: memref<16x1xf32, #tpu.memory_space<vmem>>, %arg6: memref<16x16xbf16, #tpu.memory_space<vmem>>, %arg7: memref<16x1xf32, #tpu.memory_space<vmem>>, %arg8: memref<16x1xf32, #tpu.memory_space<vmem>>, %arg9: memref<1x16x35xbf16, #tpu.memory_space<vmem>>, %arg10: memref<16x6xbf16, #tpu.memory_space<vmem>>) attributes {dimension_semantics = [#tpu.dimension_semantics<parallel>, #tpu.dimension_semantics<arbitrary>], iteration_bounds = array<i64: 2, 1>, scalar_prefetch = 0 : i64, scratch_operands = 1 : i64, tpu.core_type = #tpu.core_type<tc>, window_params = [{transform_indices = @transform_0, window_bounds = array<i64: 1, 16, 35>}, {pipeline_mode = #tpu.pipeline_mode<synchronous>, transform_indices = @transform_1, window_bounds = array<i64: 16, 112>}, {pipeline_mode = #tpu.pipeline_mode<synchronous>, transform_indices = @transform_2, window_bounds = array<i64: 16, 1>}, {pipeline_mode = #tpu.pipeline_mode<synchronous>, transform_indices = @transform_3, window_bounds = array<i64: 16, 1>}, {pipeline_mode = #tpu.pipeline_mode<synchronous>, transform_indices = @transform_4, window_bounds = array<i64: 16, 16>}, {pipeline_mode = #tpu.pipeline_mode<synchronous>, transform_indices = @transform_5, window_bounds = array<i64: 16, 1>}, {pipeline_mode = #tpu.pipeline_mode<synchronous>, transform_indices = @transform_6, window_bounds = array<i64: 16, 1>}, {transform_indices = @transform_7, window_bounds = array<i64: 1, 16, 35>}]} {
    %c0_i32 = arith.constant 0 : i32
    %0 = arith.cmpi eq, %arg1, %c0_i32 : i32
    %1 = arith.extui %0 : i1 to i32
    %c0_i32_0 = arith.constant 0 : i32
    %2 = arith.cmpi ne, %1, %c0_i32_0 : i32
    scf.if %2 {
      %cst_31 = arith.constant 0.000000e+00 : bf16
      %69 = vector.broadcast %cst_31 : bf16 to vector<16x6xbf16>
      %c0_32 = arith.constant 0 : index
      %c0_33 = arith.constant 0 : index
      %70 = vector.load %arg10[%c0_32, %c0_33] : memref<16x6xbf16, #tpu.memory_space<vmem>>, vector<16x6xbf16>
      tpu.vector_store %arg10[%c0_32, %c0_33], %69 {strides = array<i32>} : memref<16x6xbf16, #tpu.memory_space<vmem>>, vector<16x6xbf16>,
    } else {
    }
    %c0 = arith.constant 0 : index
    %c0_1 = arith.constant 0 : index
    %c0_2 = arith.constant 0 : index
    %3 = vector.load %arg2[%c0, %c0_1, %c0_2] : memref<1x16x35xbf16, #tpu.memory_space<vmem>>, vector<1x16x35xbf16>
    %4 = vector.shape_cast %3 : vector<1x16x35xbf16> to vector<16x35xbf16>
    %c0_3 = arith.constant 0 : index
    %c0_4 = arith.constant 0 : index
    %5 = vector.load %arg10[%c0_3, %c0_4] : memref<16x6xbf16, #tpu.memory_space<vmem>>, vector<16x6xbf16>
    %6 = tpu.concatenate %4, %5 in 1 : vector<16x35xbf16>, vector<16x6xbf16> -> vector<16x41xbf16>
    %7 = vector.extract_strided_slice %4 {offsets = [0, 0], sizes = [16, 6], strides = [1, 1]} : vector<16x35xbf16> to vector<16x6xbf16>
    %c0_5 = arith.constant 0 : index
    %c0_6 = arith.constant 0 : index
    %8 = vector.load %arg10[%c0_5, %c0_6] : memref<16x6xbf16, #tpu.memory_space<vmem>>, vector<16x6xbf16>
    tpu.vector_store %arg10[%c0_5, %c0_6], %7 {strides = array<i32>} : memref<16x6xbf16, #tpu.memory_space<vmem>>, vector<16x6xbf16>,
    %9 = arith.extf %6 : vector<16x41xbf16> to vector<16x41xf32>
    %c0_7 = arith.constant 0 : index
    %c0_8 = arith.constant 0 : index
    %10 = vector.load %arg5[%c0_7, %c0_8] : memref<16x1xf32, #tpu.memory_space<vmem>>, vector<16x1xf32>
    %cst = arith.constant 9.99999971E-10 : f32
    %11 = vector.broadcast %cst : f32 to vector<16x1xf32>
    %12 = arith.addf %10, %11 : vector<16x1xf32>
    %13 = tpu.reciprocal %12 {approx = true} : vector<16x1xf32> -> vector<16x1xf32>
    %cst_9 = arith.constant 5.000000e-01 : f32
    %14 = vector.broadcast %cst_9 : f32 to vector<16x1xf32>
    %15 = arith.mulf %14, %13 : vector<16x1xf32>
    %cst_10 = arith.constant 2.000000e+00 : f32
    %16 = vector.broadcast %cst_10 : f32 to vector<16x1xf32>
    %17 = arith.mulf %16, %10 : vector<16x1xf32>
    %18 = vector.broadcast %17 : vector<16x1xf32> to vector<16x41xf32>
    %19 = arith.mulf %18, %9 : vector<16x41xf32>
    %20 = math.cos %19 : vector<16x41xf32>
    %cst_11 = arith.constant 1.000000e+00 : f32
    %21 = vector.broadcast %cst_11 : f32 to vector<16x41xf32>
    %22 = arith.subf %21, %20 : vector<16x41xf32>
    %23 = vector.broadcast %15 : vector<16x1xf32> to vector<16x41xf32>
    %24 = arith.mulf %23, %22 : vector<16x41xf32>
    %25 = arith.addf %9, %24 : vector<16x41xf32>
    %26 = arith.truncf %25 : vector<16x41xf32> to vector<16x41xbf16>
    %27 = vector.extract_strided_slice %26 {offsets = [0, 0], sizes = [16, 35], strides = [1, 1]} : vector<16x41xbf16> to vector<16x35xbf16>
    %28 = vector.extract_strided_slice %26 {offsets = [0, 1], sizes = [16, 35], strides = [1, 1]} : vector<16x41xbf16> to vector<16x35xbf16>
    %29 = vector.extract_strided_slice %26 {offsets = [0, 2], sizes = [16, 35], strides = [1, 1]} : vector<16x41xbf16> to vector<16x35xbf16>
    %30 = vector.extract_strided_slice %26 {offsets = [0, 3], sizes = [16, 35], strides = [1, 1]} : vector<16x41xbf16> to vector<16x35xbf16>
    %31 = vector.extract_strided_slice %26 {offsets = [0, 4], sizes = [16, 35], strides = [1, 1]} : vector<16x41xbf16> to vector<16x35xbf16>
    %32 = vector.extract_strided_slice %26 {offsets = [0, 5], sizes = [16, 35], strides = [1, 1]} : vector<16x41xbf16> to vector<16x35xbf16>
    %33 = vector.extract_strided_slice %26 {offsets = [0, 6], sizes = [16, 35], strides = [1, 1]} : vector<16x41xbf16> to vector<16x35xbf16>
    %34 = tpu.concatenate %27, %28, %29, %30, %31, %32, %33 in 0 : vector<16x35xbf16>, vector<16x35xbf16>, vector<16x35xbf16>, vector<16x35xbf16>, vector<16x35xbf16>, vector<16x35xbf16>, vector<16x35xbf16> -> vector<112x35xbf16>
    %c0_12 = arith.constant 0 : index
    %c0_13 = arith.constant 0 : index
    %35 = vector.load %arg3[%c0_12, %c0_13] : memref<16x112xbf16, #tpu.memory_space<vmem>>, vector<16x112xbf16>
    %cst_14 = arith.constant dense<0.000000e+00> : vector<16x35xf32>
    %36 = tpu.matmul %35, %34, %cst_14 {dimension_numbers = #tpu.dot_dimension_numbers<[1], [0], [0], [1], [0, 0, 1, 1], [], []>} : vector<16x112xbf16>, vector<112x35xbf16>, vector<16x35xf32> -> vector<16x35xf32>
    %c0_15 = arith.constant 0 : index
    %c0_16 = arith.constant 0 : index
    %37 = vector.load %arg4[%c0_15, %c0_16] : memref<16x1xf32, #tpu.memory_space<vmem>>, vector<16x1xf32>
    %38 = vector.broadcast %37 : vector<16x1xf32> to vector<16x35xf32>
    %39 = arith.addf %36, %38 : vector<16x35xf32>
    %c0_17 = arith.constant 0 : index
    %c0_18 = arith.constant 0 : index
    %40 = vector.load %arg8[%c0_17, %c0_18] : memref<16x1xf32, #tpu.memory_space<vmem>>, vector<16x1xf32>
    %cst_19 = arith.constant 9.99999971E-10 : f32
    %41 = vector.broadcast %cst_19 : f32 to vector<16x1xf32>
    %42 = arith.addf %40, %41 : vector<16x1xf32>
    %43 = tpu.reciprocal %42 {approx = true} : vector<16x1xf32> -> vector<16x1xf32>
    %cst_20 = arith.constant 5.000000e-01 : f32
    %44 = vector.broadcast %cst_20 : f32 to vector<16x1xf32>
    %45 = arith.mulf %44, %43 : vector<16x1xf32>
    %cst_21 = arith.constant 2.000000e+00 : f32
    %46 = vector.broadcast %cst_21 : f32 to vector<16x1xf32>
    %47 = arith.mulf %46, %40 : vector<16x1xf32>
    %48 = vector.broadcast %47 : vector<16x1xf32> to vector<16x35xf32>
    %49 = arith.mulf %48, %39 : vector<16x35xf32>
    %50 = math.cos %49 : vector<16x35xf32>
    %cst_22 = arith.constant 1.000000e+00 : f32
    %51 = vector.broadcast %cst_22 : f32 to vector<16x35xf32>
    %52 = arith.subf %51, %50 : vector<16x35xf32>
    %53 = vector.broadcast %45 : vector<16x1xf32> to vector<16x35xf32>
    %54 = arith.mulf %53, %52 : vector<16x35xf32>
    %55 = arith.addf %39, %54 : vector<16x35xf32>
    %c0_23 = arith.constant 0 : index
    %c0_24 = arith.constant 0 : index
    %56 = vector.load %arg6[%c0_23, %c0_24] : memref<16x16xbf16, #tpu.memory_space<vmem>>, vector<16x16xbf16>
    %57 = arith.truncf %55 : vector<16x35xf32> to vector<16x35xbf16>
    %cst_25 = arith.constant dense<0.000000e+00> : vector<16x35xf32>
    %58 = tpu.matmul %56, %57, %cst_25 {dimension_numbers = #tpu.dot_dimension_numbers<[1], [0], [0], [1], [0, 0, 1, 1], [], []>} : vector<16x16xbf16>, vector<16x35xbf16>, vector<16x35xf32> -> vector<16x35xf32>
    %c0_26 = arith.constant 0 : index
    %c0_27 = arith.constant 0 : index
    %59 = vector.load %arg7[%c0_26, %c0_27] : memref<16x1xf32, #tpu.memory_space<vmem>>, vector<16x1xf32>
    %60 = vector.broadcast %59 : vector<16x1xf32> to vector<16x35xf32>
    %61 = arith.addf %58, %60 : vector<16x35xf32>
    %62 = vector.extract_strided_slice %6 {offsets = [0, 3], sizes = [16, 35], strides = [1, 1]} : vector<16x41xbf16> to vector<16x35xbf16>
    %63 = arith.extf %62 : vector<16x35xbf16> to vector<16x35xf32>
    %64 = arith.addf %61, %63 : vector<16x35xf32>
    %65 = arith.truncf %64 : vector<16x35xf32> to vector<16x35xbf16>
    %c0_28 = arith.constant 0 : index
    %c0_29 = arith.constant 0 : index
    %c0_30 = arith.constant 0 : index
    %66 = vector.load %arg9[%c0_28, %c0_29, %c0_30] : memref<1x16x35xbf16, #tpu.memory_space<vmem>>, vector<1x16x35xbf16>
    %67 = vector.shape_cast %66 : vector<1x16x35xbf16> to vector<16x35xbf16>
    %68 = vector.shape_cast %65 : vector<16x35xbf16> to vector<1x16x35xbf16>
    tpu.vector_store %arg9[%c0_28, %c0_29, %c0_30], %68 {strides = array<i32>} : memref<1x16x35xbf16, #tpu.memory_space<vmem>>, vector<1x16x35xbf16>,
    return
  }
  func.func @transform_0(%arg0: i32, %arg1: i32) -> (i32, i32, i32) {
    %c0_i32 = arith.constant 0 : i32
    %0 = arith.subi %c0_i32, %arg1 : i32
    %c0_i32_0 = arith.constant 0 : i32
    %c0_i32_1 = arith.constant 0 : i32
    return %arg0, %c0_i32_0, %0 : i32, i32, i32
  }
  func.func @transform_1(%arg0: i32, %arg1: i32) -> (i32, i32) {
    %c0_i32 = arith.constant 0 : i32
    %c0_i32_0 = arith.constant 0 : i32
    %c0_i32_1 = arith.constant 0 : i32
    return %c0_i32, %c0_i32_0 : i32, i32
  }
  func.func @transform_2(%arg0: i32, %arg1: i32) -> (i32, i32) {
    %c0_i32 = arith.constant 0 : i32
    %c0_i32_0 = arith.constant 0 : i32
    %c0_i32_1 = arith.constant 0 : i32
    return %c0_i32, %c0_i32_0 : i32, i32
  }
  func.func @transform_3(%arg0: i32, %arg1: i32) -> (i32, i32) {
    %c0_i32 = arith.constant 0 : i32
    %c0_i32_0 = arith.constant 0 : i32
    %c0_i32_1 = arith.constant 0 : i32
    return %c0_i32, %c0_i32_0 : i32, i32
  }
  func.func @transform_4(%arg0: i32, %arg1: i32) -> (i32, i32) {
    %c0_i32 = arith.constant 0 : i32
    %c0_i32_0 = arith.constant 0 : i32
    %c0_i32_1 = arith.constant 0 : i32
    return %c0_i32, %c0_i32_0 : i32, i32
  }
  func.func @transform_5(%arg0: i32, %arg1: i32) -> (i32, i32) {
    %c0_i32 = arith.constant 0 : i32
    %c0_i32_0 = arith.constant 0 : i32
    %c0_i32_1 = arith.constant 0 : i32
    return %c0_i32, %c0_i32_0 : i32, i32
  }
  func.func @transform_6(%arg0: i32, %arg1: i32) -> (i32, i32) {
    %c0_i32 = arith.constant 0 : i32
    %c0_i32_0 = arith.constant 0 : i32
    %c0_i32_1 = arith.constant 0 : i32
    return %c0_i32, %c0_i32_0 : i32, i32
  }
  func.func @transform_7(%arg0: i32, %arg1: i32) -> (i32, i32, i32) {
    %c0_i32 = arith.constant 0 : i32
    %0 = arith.subi %c0_i32, %arg1 : i32
    %c0_i32_0 = arith.constant 0 : i32
    %c0_i32_1 = arith.constant 0 : i32
    return %arg0, %c0_i32_0, %0 : i32, i32, i32
  }
}

module attributes {stable_mosaic.version = 11 : i64} {
  func.func @_fused_conv_kernel(%arg0: i32, %arg1: i32, %arg2: memref<1x16x41xbf16, #tpu.memory_space<vmem>>, %arg3: memref<16x112xbf16, #tpu.memory_space<vmem>>, %arg4: memref<16x1xf32, #tpu.memory_space<vmem>>, %arg5: memref<16x1xf32, #tpu.memory_space<vmem>>, %arg6: memref<16x16xbf16, #tpu.memory_space<vmem>>, %arg7: memref<16x1xf32, #tpu.memory_space<vmem>>, %arg8: memref<16x1xf32, #tpu.memory_space<vmem>>, %arg9: memref<1x16x41xbf16, #tpu.memory_space<vmem>>, %arg10: memref<16x18xbf16, #tpu.memory_space<vmem>>) attributes {dimension_semantics = [#tpu.dimension_semantics<parallel>, #tpu.dimension_semantics<arbitrary>], iteration_bounds = array<i64: 2, 1>, scalar_prefetch = 0 : i64, scratch_operands = 1 : i64, tpu.core_type = #tpu.core_type<tc>, window_params = [{transform_indices = @transform_0, window_bounds = array<i64: 1, 16, 41>}, {pipeline_mode = #tpu.pipeline_mode<synchronous>, transform_indices = @transform_1, window_bounds = array<i64: 16, 112>}, {pipeline_mode = #tpu.pipeline_mode<synchronous>, transform_indices = @transform_2, window_bounds = array<i64: 16, 1>}, {pipeline_mode = #tpu.pipeline_mode<synchronous>, transform_indices = @transform_3, window_bounds = array<i64: 16, 1>}, {pipeline_mode = #tpu.pipeline_mode<synchronous>, transform_indices = @transform_4, window_bounds = array<i64: 16, 16>}, {pipeline_mode = #tpu.pipeline_mode<synchronous>, transform_indices = @transform_5, window_bounds = array<i64: 16, 1>}, {pipeline_mode = #tpu.pipeline_mode<synchronous>, transform_indices = @transform_6, window_bounds = array<i64: 16, 1>}, {transform_indices = @transform_7, window_bounds = array<i64: 1, 16, 41>}]} {
    %c0_i32 = arith.constant 0 : i32
    %0 = arith.cmpi eq, %arg1, %c0_i32 : i32
    %1 = arith.extui %0 : i1 to i32
    %c0_i32_0 = arith.constant 0 : i32
    %2 = arith.cmpi ne, %1, %c0_i32_0 : i32
    scf.if %2 {
      %cst_31 = arith.constant 0.000000e+00 : bf16
      %69 = vector.broadcast %cst_31 : bf16 to vector<16x18xbf16>
      %c0_32 = arith.constant 0 : index
      %c0_33 = arith.constant 0 : index
      %70 = vector.load %arg10[%c0_32, %c0_33] : memref<16x18xbf16, #tpu.memory_space<vmem>>, vector<16x18xbf16>
      tpu.vector_store %arg10[%c0_32, %c0_33], %69 {strides = array<i32>} : memref<16x18xbf16, #tpu.memory_space<vmem>>, vector<16x18xbf16>,
    } else {
    }
    %c0 = arith.constant 0 : index
    %c0_1 = arith.constant 0 : index
    %c0_2 = arith.constant 0 : index
    %3 = vector.load %arg2[%c0, %c0_1, %c0_2] : memref<1x16x41xbf16, #tpu.memory_space<vmem>>, vector<1x16x41xbf16>
    %4 = vector.shape_cast %3 : vector<1x16x41xbf16> to vector<16x41xbf16>
    %c0_3 = arith.constant 0 : index
    %c0_4 = arith.constant 0 : index
    %5 = vector.load %arg10[%c0_3, %c0_4] : memref<16x18xbf16, #tpu.memory_space<vmem>>, vector<16x18xbf16>
    %6 = tpu.concatenate %4, %5 in 1 : vector<16x41xbf16>, vector<16x18xbf16> -> vector<16x59xbf16>
    %7 = vector.extract_strided_slice %4 {offsets = [0, 0], sizes = [16, 18], strides = [1, 1]} : vector<16x41xbf16> to vector<16x18xbf16>
    %c0_5 = arith.constant 0 : index
    %c0_6 = arith.constant 0 : index
    %8 = vector.load %arg10[%c0_5, %c0_6] : memref<16x18xbf16, #tpu.memory_space<vmem>>, vector<16x18xbf16>
    tpu.vector_store %arg10[%c0_5, %c0_6], %7 {strides = array<i32>} : memref<16x18xbf16, #tpu.memory_space<vmem>>, vector<16x18xbf16>,
    %9 = arith.extf %6 : vector<16x59xbf16> to vector<16x59xf32>
    %c0_7 = arith.constant 0 : index
    %c0_8 = arith.constant 0 : index
    %10 = vector.load %arg5[%c0_7, %c0_8] : memref<16x1xf32, #tpu.memory_space<vmem>>, vector<16x1xf32>
    %cst = arith.constant 9.99999971E-10 : f32
    %11 = vector.broadcast %cst : f32 to vector<16x1xf32>
    %12 = arith.addf %10, %11 : vector<16x1xf32>
    %13 = tpu.reciprocal %12 {approx = true} : vector<16x1xf32> -> vector<16x1xf32>
    %cst_9 = arith.constant 5.000000e-01 : f32
    %14 = vector.broadcast %cst_9 : f32 to vector<16x1xf32>
    %15 = arith.mulf %14, %13 : vector<16x1xf32>
    %cst_10 = arith.constant 2.000000e+00 : f32
    %16 = vector.broadcast %cst_10 : f32 to vector<16x1xf32>
    %17 = arith.mulf %16, %10 : vector<16x1xf32>
    %18 = vector.broadcast %17 : vector<16x1xf32> to vector<16x59xf32>
    %19 = arith.mulf %18, %9 : vector<16x59xf32>
    %20 = math.cos %19 : vector<16x59xf32>
    %cst_11 = arith.constant 1.000000e+00 : f32
    %21 = vector.broadcast %cst_11 : f32 to vector<16x59xf32>
    %22 = arith.subf %21, %20 : vector<16x59xf32>
    %23 = vector.broadcast %15 : vector<16x1xf32> to vector<16x59xf32>
    %24 = arith.mulf %23, %22 : vector<16x59xf32>
    %25 = arith.addf %9, %24 : vector<16x59xf32>
    %26 = arith.truncf %25 : vector<16x59xf32> to vector<16x59xbf16>
    %27 = vector.extract_strided_slice %26 {offsets = [0, 0], sizes = [16, 41], strides = [1, 1]} : vector<16x59xbf16> to vector<16x41xbf16>
    %28 = vector.extract_strided_slice %26 {offsets = [0, 3], sizes = [16, 41], strides = [1, 1]} : vector<16x59xbf16> to vector<16x41xbf16>
    %29 = vector.extract_strided_slice %26 {offsets = [0, 6], sizes = [16, 41], strides = [1, 1]} : vector<16x59xbf16> to vector<16x41xbf16>
    %30 = vector.extract_strided_slice %26 {offsets = [0, 9], sizes = [16, 41], strides = [1, 1]} : vector<16x59xbf16> to vector<16x41xbf16>
    %31 = vector.extract_strided_slice %26 {offsets = [0, 12], sizes = [16, 41], strides = [1, 1]} : vector<16x59xbf16> to vector<16x41xbf16>
    %32 = vector.extract_strided_slice %26 {offsets = [0, 15], sizes = [16, 41], strides = [1, 1]} : vector<16x59xbf16> to vector<16x41xbf16>
    %33 = vector.extract_strided_slice %26 {offsets = [0, 18], sizes = [16, 41], strides = [1, 1]} : vector<16x59xbf16> to vector<16x41xbf16>
    %34 = tpu.concatenate %27, %28, %29, %30, %31, %32, %33 in 0 : vector<16x41xbf16>, vector<16x41xbf16>, vector<16x41xbf16>, vector<16x41xbf16>, vector<16x41xbf16>, vector<16x41xbf16>, vector<16x41xbf16> -> vector<112x41xbf16>
    %c0_12 = arith.constant 0 : index
    %c0_13 = arith.constant 0 : index
    %35 = vector.load %arg3[%c0_12, %c0_13] : memref<16x112xbf16, #tpu.memory_space<vmem>>, vector<16x112xbf16>
    %cst_14 = arith.constant dense<0.000000e+00> : vector<16x41xf32>
    %36 = tpu.matmul %35, %34, %cst_14 {dimension_numbers = #tpu.dot_dimension_numbers<[1], [0], [0], [1], [0, 0, 1, 1], [], []>} : vector<16x112xbf16>, vector<112x41xbf16>, vector<16x41xf32> -> vector<16x41xf32>
    %c0_15 = arith.constant 0 : index
    %c0_16 = arith.constant 0 : index
    %37 = vector.load %arg4[%c0_15, %c0_16] : memref<16x1xf32, #tpu.memory_space<vmem>>, vector<16x1xf32>
    %38 = vector.broadcast %37 : vector<16x1xf32> to vector<16x41xf32>
    %39 = arith.addf %36, %38 : vector<16x41xf32>
    %c0_17 = arith.constant 0 : index
    %c0_18 = arith.constant 0 : index
    %40 = vector.load %arg8[%c0_17, %c0_18] : memref<16x1xf32, #tpu.memory_space<vmem>>, vector<16x1xf32>
    %cst_19 = arith.constant 9.99999971E-10 : f32
    %41 = vector.broadcast %cst_19 : f32 to vector<16x1xf32>
    %42 = arith.addf %40, %41 : vector<16x1xf32>
    %43 = tpu.reciprocal %42 {approx = true} : vector<16x1xf32> -> vector<16x1xf32>
    %cst_20 = arith.constant 5.000000e-01 : f32
    %44 = vector.broadcast %cst_20 : f32 to vector<16x1xf32>
    %45 = arith.mulf %44, %43 : vector<16x1xf32>
    %cst_21 = arith.constant 2.000000e+00 : f32
    %46 = vector.broadcast %cst_21 : f32 to vector<16x1xf32>
    %47 = arith.mulf %46, %40 : vector<16x1xf32>
    %48 = vector.broadcast %47 : vector<16x1xf32> to vector<16x41xf32>
    %49 = arith.mulf %48, %39 : vector<16x41xf32>
    %50 = math.cos %49 : vector<16x41xf32>
    %cst_22 = arith.constant 1.000000e+00 : f32
    %51 = vector.broadcast %cst_22 : f32 to vector<16x41xf32>
    %52 = arith.subf %51, %50 : vector<16x41xf32>
    %53 = vector.broadcast %45 : vector<16x1xf32> to vector<16x41xf32>
    %54 = arith.mulf %53, %52 : vector<16x41xf32>
    %55 = arith.addf %39, %54 : vector<16x41xf32>
    %c0_23 = arith.constant 0 : index
    %c0_24 = arith.constant 0 : index
    %56 = vector.load %arg6[%c0_23, %c0_24] : memref<16x16xbf16, #tpu.memory_space<vmem>>, vector<16x16xbf16>
    %57 = arith.truncf %55 : vector<16x41xf32> to vector<16x41xbf16>
    %cst_25 = arith.constant dense<0.000000e+00> : vector<16x41xf32>
    %58 = tpu.matmul %56, %57, %cst_25 {dimension_numbers = #tpu.dot_dimension_numbers<[1], [0], [0], [1], [0, 0, 1, 1], [], []>} : vector<16x16xbf16>, vector<16x41xbf16>, vector<16x41xf32> -> vector<16x41xf32>
    %c0_26 = arith.constant 0 : index
    %c0_27 = arith.constant 0 : index
    %59 = vector.load %arg7[%c0_26, %c0_27] : memref<16x1xf32, #tpu.memory_space<vmem>>, vector<16x1xf32>
    %60 = vector.broadcast %59 : vector<16x1xf32> to vector<16x41xf32>
    %61 = arith.addf %58, %60 : vector<16x41xf32>
    %62 = vector.extract_strided_slice %6 {offsets = [0, 9], sizes = [16, 41], strides = [1, 1]} : vector<16x59xbf16> to vector<16x41xbf16>
    %63 = arith.extf %62 : vector<16x41xbf16> to vector<16x41xf32>
    %64 = arith.addf %61, %63 : vector<16x41xf32>
    %65 = arith.truncf %64 : vector<16x41xf32> to vector<16x41xbf16>
    %c0_28 = arith.constant 0 : index
    %c0_29 = arith.constant 0 : index
    %c0_30 = arith.constant 0 : index
    %66 = vector.load %arg9[%c0_28, %c0_29, %c0_30] : memref<1x16x41xbf16, #tpu.memory_space<vmem>>, vector<1x16x41xbf16>
    %67 = vector.shape_cast %66 : vector<1x16x41xbf16> to vector<16x41xbf16>
    %68 = vector.shape_cast %65 : vector<16x41xbf16> to vector<1x16x41xbf16>
    tpu.vector_store %arg9[%c0_28, %c0_29, %c0_30], %68 {strides = array<i32>} : memref<1x16x41xbf16, #tpu.memory_space<vmem>>, vector<1x16x41xbf16>,
    return
  }
  func.func @transform_0(%arg0: i32, %arg1: i32) -> (i32, i32, i32) {
    %c0_i32 = arith.constant 0 : i32
    %0 = arith.subi %c0_i32, %arg1 : i32
    %c0_i32_0 = arith.constant 0 : i32
    %c0_i32_1 = arith.constant 0 : i32
    return %arg0, %c0_i32_0, %0 : i32, i32, i32
  }
  func.func @transform_1(%arg0: i32, %arg1: i32) -> (i32, i32) {
    %c0_i32 = arith.constant 0 : i32
    %c0_i32_0 = arith.constant 0 : i32
    %c0_i32_1 = arith.constant 0 : i32
    return %c0_i32, %c0_i32_0 : i32, i32
  }
  func.func @transform_2(%arg0: i32, %arg1: i32) -> (i32, i32) {
    %c0_i32 = arith.constant 0 : i32
    %c0_i32_0 = arith.constant 0 : i32
    %c0_i32_1 = arith.constant 0 : i32
    return %c0_i32, %c0_i32_0 : i32, i32
  }
  func.func @transform_3(%arg0: i32, %arg1: i32) -> (i32, i32) {
    %c0_i32 = arith.constant 0 : i32
    %c0_i32_0 = arith.constant 0 : i32
    %c0_i32_1 = arith.constant 0 : i32
    return %c0_i32, %c0_i32_0 : i32, i32
  }
  func.func @transform_4(%arg0: i32, %arg1: i32) -> (i32, i32) {
    %c0_i32 = arith.constant 0 : i32
    %c0_i32_0 = arith.constant 0 : i32
    %c0_i32_1 = arith.constant 0 : i32
    return %c0_i32, %c0_i32_0 : i32, i32
  }
  func.func @transform_5(%arg0: i32, %arg1: i32) -> (i32, i32) {
    %c0_i32 = arith.constant 0 : i32
    %c0_i32_0 = arith.constant 0 : i32
    %c0_i32_1 = arith.constant 0 : i32
    return %c0_i32, %c0_i32_0 : i32, i32
  }
  func.func @transform_6(%arg0: i32, %arg1: i32) -> (i32, i32) {
    %c0_i32 = arith.constant 0 : i32
    %c0_i32_0 = arith.constant 0 : i32
    %c0_i32_1 = arith.constant 0 : i32
    return %c0_i32, %c0_i32_0 : i32, i32
  }
  func.func @transform_7(%arg0: i32, %arg1: i32) -> (i32, i32, i32) {
    %c0_i32 = arith.constant 0 : i32
    %0 = arith.subi %c0_i32, %arg1 : i32
    %c0_i32_0 = arith.constant 0 : i32
    %c0_i32_1 = arith.constant 0 : i32
    return %arg0, %c0_i32_0, %0 : i32, i32, i32
  }
}

module attributes {stable_mosaic.version = 11 : i64} {
  func.func @_fused_conv_kernel(%arg0: i32, %arg1: i32, %arg2: memref<1x16x59xbf16, #tpu.memory_space<vmem>>, %arg3: memref<16x112xbf16, #tpu.memory_space<vmem>>, %arg4: memref<16x1xf32, #tpu.memory_space<vmem>>, %arg5: memref<16x1xf32, #tpu.memory_space<vmem>>, %arg6: memref<16x16xbf16, #tpu.memory_space<vmem>>, %arg7: memref<16x1xf32, #tpu.memory_space<vmem>>, %arg8: memref<16x1xf32, #tpu.memory_space<vmem>>, %arg9: memref<1x16x59xbf16, #tpu.memory_space<vmem>>, %arg10: memref<16x54xbf16, #tpu.memory_space<vmem>>) attributes {dimension_semantics = [#tpu.dimension_semantics<parallel>, #tpu.dimension_semantics<arbitrary>], iteration_bounds = array<i64: 2, 1>, scalar_prefetch = 0 : i64, scratch_operands = 1 : i64, tpu.core_type = #tpu.core_type<tc>, window_params = [{transform_indices = @transform_0, window_bounds = array<i64: 1, 16, 59>}, {pipeline_mode = #tpu.pipeline_mode<synchronous>, transform_indices = @transform_1, window_bounds = array<i64: 16, 112>}, {pipeline_mode = #tpu.pipeline_mode<synchronous>, transform_indices = @transform_2, window_bounds = array<i64: 16, 1>}, {pipeline_mode = #tpu.pipeline_mode<synchronous>, transform_indices = @transform_3, window_bounds = array<i64: 16, 1>}, {pipeline_mode = #tpu.pipeline_mode<synchronous>, transform_indices = @transform_4, window_bounds = array<i64: 16, 16>}, {pipeline_mode = #tpu.pipeline_mode<synchronous>, transform_indices = @transform_5, window_bounds = array<i64: 16, 1>}, {pipeline_mode = #tpu.pipeline_mode<synchronous>, transform_indices = @transform_6, window_bounds = array<i64: 16, 1>}, {transform_indices = @transform_7, window_bounds = array<i64: 1, 16, 59>}]} {
    %c0_i32 = arith.constant 0 : i32
    %0 = arith.cmpi eq, %arg1, %c0_i32 : i32
    %1 = arith.extui %0 : i1 to i32
    %c0_i32_0 = arith.constant 0 : i32
    %2 = arith.cmpi ne, %1, %c0_i32_0 : i32
    scf.if %2 {
      %cst_31 = arith.constant 0.000000e+00 : bf16
      %69 = vector.broadcast %cst_31 : bf16 to vector<16x54xbf16>
      %c0_32 = arith.constant 0 : index
      %c0_33 = arith.constant 0 : index
      %70 = vector.load %arg10[%c0_32, %c0_33] : memref<16x54xbf16, #tpu.memory_space<vmem>>, vector<16x54xbf16>
      tpu.vector_store %arg10[%c0_32, %c0_33], %69 {strides = array<i32>} : memref<16x54xbf16, #tpu.memory_space<vmem>>, vector<16x54xbf16>,
    } else {
    }
    %c0 = arith.constant 0 : index
    %c0_1 = arith.constant 0 : index
    %c0_2 = arith.constant 0 : index
    %3 = vector.load %arg2[%c0, %c0_1, %c0_2] : memref<1x16x59xbf16, #tpu.memory_space<vmem>>, vector<1x16x59xbf16>
    %4 = vector.shape_cast %3 : vector<1x16x59xbf16> to vector<16x59xbf16>
    %c0_3 = arith.constant 0 : index
    %c0_4 = arith.constant 0 : index
    %5 = vector.load %arg10[%c0_3, %c0_4] : memref<16x54xbf16, #tpu.memory_space<vmem>>, vector<16x54xbf16>
    %6 = tpu.concatenate %4, %5 in 1 : vector<16x59xbf16>, vector<16x54xbf16> -> vector<16x113xbf16>
    %7 = vector.extract_strided_slice %4 {offsets = [0, 0], sizes = [16, 54], strides = [1, 1]} : vector<16x59xbf16> to vector<16x54xbf16>
    %c0_5 = arith.constant 0 : index
    %c0_6 = arith.constant 0 : index
    %8 = vector.load %arg10[%c0_5, %c0_6] : memref<16x54xbf16, #tpu.memory_space<vmem>>, vector<16x54xbf16>
    tpu.vector_store %arg10[%c0_5, %c0_6], %7 {strides = array<i32>} : memref<16x54xbf16, #tpu.memory_space<vmem>>, vector<16x54xbf16>,
    %9 = arith.extf %6 : vector<16x113xbf16> to vector<16x113xf32>
    %c0_7 = arith.constant 0 : index
    %c0_8 = arith.constant 0 : index
    %10 = vector.load %arg5[%c0_7, %c0_8] : memref<16x1xf32, #tpu.memory_space<vmem>>, vector<16x1xf32>
    %cst = arith.constant 9.99999971E-10 : f32
    %11 = vector.broadcast %cst : f32 to vector<16x1xf32>
    %12 = arith.addf %10, %11 : vector<16x1xf32>
    %13 = tpu.reciprocal %12 {approx = true} : vector<16x1xf32> -> vector<16x1xf32>
    %cst_9 = arith.constant 5.000000e-01 : f32
    %14 = vector.broadcast %cst_9 : f32 to vector<16x1xf32>
    %15 = arith.mulf %14, %13 : vector<16x1xf32>
    %cst_10 = arith.constant 2.000000e+00 : f32
    %16 = vector.broadcast %cst_10 : f32 to vector<16x1xf32>
    %17 = arith.mulf %16, %10 : vector<16x1xf32>
    %18 = vector.broadcast %17 : vector<16x1xf32> to vector<16x113xf32>
    %19 = arith.mulf %18, %9 : vector<16x113xf32>
    %20 = math.cos %19 : vector<16x113xf32>
    %cst_11 = arith.constant 1.000000e+00 : f32
    %21 = vector.broadcast %cst_11 : f32 to vector<16x113xf32>
    %22 = arith.subf %21, %20 : vector<16x113xf32>
    %23 = vector.broadcast %15 : vector<16x1xf32> to vector<16x113xf32>
    %24 = arith.mulf %23, %22 : vector<16x113xf32>
    %25 = arith.addf %9, %24 : vector<16x113xf32>
    %26 = arith.truncf %25 : vector<16x113xf32> to vector<16x113xbf16>
    %27 = vector.extract_strided_slice %26 {offsets = [0, 0], sizes = [16, 59], strides = [1, 1]} : vector<16x113xbf16> to vector<16x59xbf16>
    %28 = vector.extract_strided_slice %26 {offsets = [0, 9], sizes = [16, 59], strides = [1, 1]} : vector<16x113xbf16> to vector<16x59xbf16>
    %29 = vector.extract_strided_slice %26 {offsets = [0, 18], sizes = [16, 59], strides = [1, 1]} : vector<16x113xbf16> to vector<16x59xbf16>
    %30 = vector.extract_strided_slice %26 {offsets = [0, 27], sizes = [16, 59], strides = [1, 1]} : vector<16x113xbf16> to vector<16x59xbf16>
    %31 = vector.extract_strided_slice %26 {offsets = [0, 36], sizes = [16, 59], strides = [1, 1]} : vector<16x113xbf16> to vector<16x59xbf16>
    %32 = vector.extract_strided_slice %26 {offsets = [0, 45], sizes = [16, 59], strides = [1, 1]} : vector<16x113xbf16> to vector<16x59xbf16>
    %33 = vector.extract_strided_slice %26 {offsets = [0, 54], sizes = [16, 59], strides = [1, 1]} : vector<16x113xbf16> to vector<16x59xbf16>
    %34 = tpu.concatenate %27, %28, %29, %30, %31, %32, %33 in 0 : vector<16x59xbf16>, vector<16x59xbf16>, vector<16x59xbf16>, vector<16x59xbf16>, vector<16x59xbf16>, vector<16x59xbf16>, vector<16x59xbf16> -> vector<112x59xbf16>
    %c0_12 = arith.constant 0 : index
    %c0_13 = arith.constant 0 : index
    %35 = vector.load %arg3[%c0_12, %c0_13] : memref<16x112xbf16, #tpu.memory_space<vmem>>, vector<16x112xbf16>
    %cst_14 = arith.constant dense<0.000000e+00> : vector<16x59xf32>
    %36 = tpu.matmul %35, %34, %cst_14 {dimension_numbers = #tpu.dot_dimension_numbers<[1], [0], [0], [1], [0, 0, 1, 1], [], []>} : vector<16x112xbf16>, vector<112x59xbf16>, vector<16x59xf32> -> vector<16x59xf32>
    %c0_15 = arith.constant 0 : index
    %c0_16 = arith.constant 0 : index
    %37 = vector.load %arg4[%c0_15, %c0_16] : memref<16x1xf32, #tpu.memory_space<vmem>>, vector<16x1xf32>
    %38 = vector.broadcast %37 : vector<16x1xf32> to vector<16x59xf32>
    %39 = arith.addf %36, %38 : vector<16x59xf32>
    %c0_17 = arith.constant 0 : index
    %c0_18 = arith.constant 0 : index
    %40 = vector.load %arg8[%c0_17, %c0_18] : memref<16x1xf32, #tpu.memory_space<vmem>>, vector<16x1xf32>
    %cst_19 = arith.constant 9.99999971E-10 : f32
    %41 = vector.broadcast %cst_19 : f32 to vector<16x1xf32>
    %42 = arith.addf %40, %41 : vector<16x1xf32>
    %43 = tpu.reciprocal %42 {approx = true} : vector<16x1xf32> -> vector<16x1xf32>
    %cst_20 = arith.constant 5.000000e-01 : f32
    %44 = vector.broadcast %cst_20 : f32 to vector<16x1xf32>
    %45 = arith.mulf %44, %43 : vector<16x1xf32>
    %cst_21 = arith.constant 2.000000e+00 : f32
    %46 = vector.broadcast %cst_21 : f32 to vector<16x1xf32>
    %47 = arith.mulf %46, %40 : vector<16x1xf32>
    %48 = vector.broadcast %47 : vector<16x1xf32> to vector<16x59xf32>
    %49 = arith.mulf %48, %39 : vector<16x59xf32>
    %50 = math.cos %49 : vector<16x59xf32>
    %cst_22 = arith.constant 1.000000e+00 : f32
    %51 = vector.broadcast %cst_22 : f32 to vector<16x59xf32>
    %52 = arith.subf %51, %50 : vector<16x59xf32>
    %53 = vector.broadcast %45 : vector<16x1xf32> to vector<16x59xf32>
    %54 = arith.mulf %53, %52 : vector<16x59xf32>
    %55 = arith.addf %39, %54 : vector<16x59xf32>
    %c0_23 = arith.constant 0 : index
    %c0_24 = arith.constant 0 : index
    %56 = vector.load %arg6[%c0_23, %c0_24] : memref<16x16xbf16, #tpu.memory_space<vmem>>, vector<16x16xbf16>
    %57 = arith.truncf %55 : vector<16x59xf32> to vector<16x59xbf16>
    %cst_25 = arith.constant dense<0.000000e+00> : vector<16x59xf32>
    %58 = tpu.matmul %56, %57, %cst_25 {dimension_numbers = #tpu.dot_dimension_numbers<[1], [0], [0], [1], [0, 0, 1, 1], [], []>} : vector<16x16xbf16>, vector<16x59xbf16>, vector<16x59xf32> -> vector<16x59xf32>
    %c0_26 = arith.constant 0 : index
    %c0_27 = arith.constant 0 : index
    %59 = vector.load %arg7[%c0_26, %c0_27] : memref<16x1xf32, #tpu.memory_space<vmem>>, vector<16x1xf32>
    %60 = vector.broadcast %59 : vector<16x1xf32> to vector<16x59xf32>
    %61 = arith.addf %58, %60 : vector<16x59xf32>
    %62 = vector.extract_strided_slice %6 {offsets = [0, 27], sizes = [16, 59], strides = [1, 1]} : vector<16x113xbf16> to vector<16x59xbf16>
    %63 = arith.extf %62 : vector<16x59xbf16> to vector<16x59xf32>
    %64 = arith.addf %61, %63 : vector<16x59xf32>
    %65 = arith.truncf %64 : vector<16x59xf32> to vector<16x59xbf16>
    %c0_28 = arith.constant 0 : index
    %c0_29 = arith.constant 0 : index
    %c0_30 = arith.constant 0 : index
    %66 = vector.load %arg9[%c0_28, %c0_29, %c0_30] : memref<1x16x59xbf16, #tpu.memory_space<vmem>>, vector<1x16x59xbf16>
    %67 = vector.shape_cast %66 : vector<1x16x59xbf16> to vector<16x59xbf16>
    %68 = vector.shape_cast %65 : vector<16x59xbf16> to vector<1x16x59xbf16>
    tpu.vector_store %arg9[%c0_28, %c0_29, %c0_30], %68 {strides = array<i32>} : memref<1x16x59xbf16, #tpu.memory_space<vmem>>, vector<1x16x59xbf16>,
    return
  }
  func.func @transform_0(%arg0: i32, %arg1: i32) -> (i32, i32, i32) {
    %c0_i32 = arith.constant 0 : i32
    %0 = arith.subi %c0_i32, %arg1 : i32
    %c0_i32_0 = arith.constant 0 : i32
    %c0_i32_1 = arith.constant 0 : i32
    return %arg0, %c0_i32_0, %0 : i32, i32, i32
  }
  func.func @transform_1(%arg0: i32, %arg1: i32) -> (i32, i32) {
    %c0_i32 = arith.constant 0 : i32
    %c0_i32_0 = arith.constant 0 : i32
    %c0_i32_1 = arith.constant 0 : i32
    return %c0_i32, %c0_i32_0 : i32, i32
  }
  func.func @transform_2(%arg0: i32, %arg1: i32) -> (i32, i32) {
    %c0_i32 = arith.constant 0 : i32
    %c0_i32_0 = arith.constant 0 : i32
    %c0_i32_1 = arith.constant 0 : i32
    return %c0_i32, %c0_i32_0 : i32, i32
  }
  func.func @transform_3(%arg0: i32, %arg1: i32) -> (i32, i32) {
    %c0_i32 = arith.constant 0 : i32
    %c0_i32_0 = arith.constant 0 : i32
    %c0_i32_1 = arith.constant 0 : i32
    return %c0_i32, %c0_i32_0 : i32, i32
  }
  func.func @transform_4(%arg0: i32, %arg1: i32) -> (i32, i32) {
    %c0_i32 = arith.constant 0 : i32
    %c0_i32_0 = arith.constant 0 : i32
    %c0_i32_1 = arith.constant 0 : i32
    return %c0_i32, %c0_i32_0 : i32, i32
  }
  func.func @transform_5(%arg0: i32, %arg1: i32) -> (i32, i32) {
    %c0_i32 = arith.constant 0 : i32
    %c0_i32_0 = arith.constant 0 : i32
    %c0_i32_1 = arith.constant 0 : i32
    return %c0_i32, %c0_i32_0 : i32, i32
  }
  func.func @transform_6(%arg0: i32, %arg1: i32) -> (i32, i32) {
    %c0_i32 = arith.constant 0 : i32
    %c0_i32_0 = arith.constant 0 : i32
    %c0_i32_1 = arith.constant 0 : i32
    return %c0_i32, %c0_i32_0 : i32, i32
  }
  func.func @transform_7(%arg0: i32, %arg1: i32) -> (i32, i32, i32) {
    %c0_i32 = arith.constant 0 : i32
    %0 = arith.subi %c0_i32, %arg1 : i32
    %c0_i32_0 = arith.constant 0 : i32
    %c0_i32_1 = arith.constant 0 : i32
    return %arg0, %c0_i32_0, %0 : i32, i32, i32
  }
}

module attributes {stable_mosaic.version = 11 : i64} {
  func.func @_fused_conv_kernel(%arg0: i32, %arg1: i32, %arg2: memref<1x16x33xbf16, #tpu.memory_space<vmem>>, %arg3: memref<16x48xbf16, #tpu.memory_space<vmem>>, %arg4: memref<16x1xf32, #tpu.memory_space<vmem>>, %arg5: memref<16x1xf32, #tpu.memory_space<vmem>>, %arg6: memref<1x16x33xbf16, #tpu.memory_space<vmem>>, %arg7: memref<16x2xbf16, #tpu.memory_space<vmem>>) attributes {dimension_semantics = [#tpu.dimension_semantics<parallel>, #tpu.dimension_semantics<arbitrary>], iteration_bounds = array<i64: 2, 1>, scalar_prefetch = 0 : i64, scratch_operands = 1 : i64, tpu.core_type = #tpu.core_type<tc>, window_params = [{transform_indices = @transform_0, window_bounds = array<i64: 1, 16, 33>}, {pipeline_mode = #tpu.pipeline_mode<synchronous>, transform_indices = @transform_1, window_bounds = array<i64: 16, 48>}, {pipeline_mode = #tpu.pipeline_mode<synchronous>, transform_indices = @transform_2, window_bounds = array<i64: 16, 1>}, {pipeline_mode = #tpu.pipeline_mode<synchronous>, transform_indices = @transform_3, window_bounds = array<i64: 16, 1>}, {transform_indices = @transform_4, window_bounds = array<i64: 1, 16, 33>}]} {
    %c0_i32 = arith.constant 0 : i32
    %0 = arith.cmpi eq, %arg1, %c0_i32 : i32
    %1 = arith.extui %0 : i1 to i32
    %c0_i32_0 = arith.constant 0 : i32
    %2 = arith.cmpi ne, %1, %c0_i32_0 : i32
    scf.if %2 {
      %cst_20 = arith.constant 0.000000e+00 : bf16
      %40 = vector.broadcast %cst_20 : bf16 to vector<16x2xbf16>
      %c0_21 = arith.constant 0 : index
      %c0_22 = arith.constant 0 : index
      %41 = vector.load %arg7[%c0_21, %c0_22] : memref<16x2xbf16, #tpu.memory_space<vmem>>, vector<16x2xbf16>
      tpu.vector_store %arg7[%c0_21, %c0_22], %40 {strides = array<i32>} : memref<16x2xbf16, #tpu.memory_space<vmem>>, vector<16x2xbf16>,
    } else {
    }
    %c0 = arith.constant 0 : index
    %c0_1 = arith.constant 0 : index
    %c0_2 = arith.constant 0 : index
    %3 = vector.load %arg2[%c0, %c0_1, %c0_2] : memref<1x16x33xbf16, #tpu.memory_space<vmem>>, vector<1x16x33xbf16>
    %4 = vector.shape_cast %3 : vector<1x16x33xbf16> to vector<16x33xbf16>
    %c0_3 = arith.constant 0 : index
    %c0_4 = arith.constant 0 : index
    %5 = vector.load %arg7[%c0_3, %c0_4] : memref<16x2xbf16, #tpu.memory_space<vmem>>, vector<16x2xbf16>
    %6 = tpu.concatenate %4, %5 in 1 : vector<16x33xbf16>, vector<16x2xbf16> -> vector<16x35xbf16>
    %7 = vector.extract_strided_slice %4 {offsets = [0, 0], sizes = [16, 2], strides = [1, 1]} : vector<16x33xbf16> to vector<16x2xbf16>
    %c0_5 = arith.constant 0 : index
    %c0_6 = arith.constant 0 : index
    %8 = vector.load %arg7[%c0_5, %c0_6] : memref<16x2xbf16, #tpu.memory_space<vmem>>, vector<16x2xbf16>
    tpu.vector_store %arg7[%c0_5, %c0_6], %7 {strides = array<i32>} : memref<16x2xbf16, #tpu.memory_space<vmem>>, vector<16x2xbf16>,
    %9 = arith.extf %6 : vector<16x35xbf16> to vector<16x35xf32>
    %c0_7 = arith.constant 0 : index
    %c0_8 = arith.constant 0 : index
    %10 = vector.load %arg5[%c0_7, %c0_8] : memref<16x1xf32, #tpu.memory_space<vmem>>, vector<16x1xf32>
    %cst = arith.constant 9.99999971E-10 : f32
    %11 = vector.broadcast %cst : f32 to vector<16x1xf32>
    %12 = arith.addf %10, %11 : vector<16x1xf32>
    %13 = tpu.reciprocal %12 {approx = true} : vector<16x1xf32> -> vector<16x1xf32>
    %cst_9 = arith.constant 5.000000e-01 : f32
    %14 = vector.broadcast %cst_9 : f32 to vector<16x1xf32>
    %15 = arith.mulf %14, %13 : vector<16x1xf32>
    %cst_10 = arith.constant 2.000000e+00 : f32
    %16 = vector.broadcast %cst_10 : f32 to vector<16x1xf32>
    %17 = arith.mulf %16, %10 : vector<16x1xf32>
    %18 = vector.broadcast %17 : vector<16x1xf32> to vector<16x35xf32>
    %19 = arith.mulf %18, %9 : vector<16x35xf32>
    %20 = math.cos %19 : vector<16x35xf32>
    %cst_11 = arith.constant 1.000000e+00 : f32
    %21 = vector.broadcast %cst_11 : f32 to vector<16x35xf32>
    %22 = arith.subf %21, %20 : vector<16x35xf32>
    %23 = vector.broadcast %15 : vector<16x1xf32> to vector<16x35xf32>
    %24 = arith.mulf %23, %22 : vector<16x35xf32>
    %25 = arith.addf %9, %24 : vector<16x35xf32>
    %26 = arith.truncf %25 : vector<16x35xf32> to vector<16x35xbf16>
    %27 = vector.extract_strided_slice %26 {offsets = [0, 0], sizes = [16, 33], strides = [1, 1]} : vector<16x35xbf16> to vector<16x33xbf16>
    %28 = vector.extract_strided_slice %26 {offsets = [0, 1], sizes = [16, 33], strides = [1, 1]} : vector<16x35xbf16> to vector<16x33xbf16>
    %29 = vector.extract_strided_slice %26 {offsets = [0, 2], sizes = [16, 33], strides = [1, 1]} : vector<16x35xbf16> to vector<16x33xbf16>
    %30 = tpu.concatenate %27, %28, %29 in 0 : vector<16x33xbf16>, vector<16x33xbf16>, vector<16x33xbf16> -> vector<48x33xbf16>
    %c0_12 = arith.constant 0 : index
    %c0_13 = arith.constant 0 : index
    %31 = vector.load %arg3[%c0_12, %c0_13] : memref<16x48xbf16, #tpu.memory_space<vmem>>, vector<16x48xbf16>
    %cst_14 = arith.constant dense<0.000000e+00> : vector<16x33xf32>
    %32 = tpu.matmul %31, %30, %cst_14 {dimension_numbers = #tpu.dot_dimension_numbers<[1], [0], [0], [1], [0, 0, 1, 1], [], []>} : vector<16x48xbf16>, vector<48x33xbf16>, vector<16x33xf32> -> vector<16x33xf32>
    %c0_15 = arith.constant 0 : index
    %c0_16 = arith.constant 0 : index
    %33 = vector.load %arg4[%c0_15, %c0_16] : memref<16x1xf32, #tpu.memory_space<vmem>>, vector<16x1xf32>
    %34 = vector.broadcast %33 : vector<16x1xf32> to vector<16x33xf32>
    %35 = arith.addf %32, %34 : vector<16x33xf32>
    %36 = arith.truncf %35 : vector<16x33xf32> to vector<16x33xbf16>
    %c0_17 = arith.constant 0 : index
    %c0_18 = arith.constant 0 : index
    %c0_19 = arith.constant 0 : index
    %37 = vector.load %arg6[%c0_17, %c0_18, %c0_19] : memref<1x16x33xbf16, #tpu.memory_space<vmem>>, vector<1x16x33xbf16>
    %38 = vector.shape_cast %37 : vector<1x16x33xbf16> to vector<16x33xbf16>
    %39 = vector.shape_cast %36 : vector<16x33xbf16> to vector<1x16x33xbf16>
    tpu.vector_store %arg6[%c0_17, %c0_18, %c0_19], %39 {strides = array<i32>} : memref<1x16x33xbf16, #tpu.memory_space<vmem>>, vector<1x16x33xbf16>,
    return
  }
  func.func @transform_0(%arg0: i32, %arg1: i32) -> (i32, i32, i32) {
    %c0_i32 = arith.constant 0 : i32
    %0 = arith.subi %c0_i32, %arg1 : i32
    %c0_i32_0 = arith.constant 0 : i32
    %c0_i32_1 = arith.constant 0 : i32
    return %arg0, %c0_i32_0, %0 : i32, i32, i32
  }
  func.func @transform_1(%arg0: i32, %arg1: i32) -> (i32, i32) {
    %c0_i32 = arith.constant 0 : i32
    %c0_i32_0 = arith.constant 0 : i32
    %c0_i32_1 = arith.constant 0 : i32
    return %c0_i32, %c0_i32_0 : i32, i32
  }
  func.func @transform_2(%arg0: i32, %arg1: i32) -> (i32, i32) {
    %c0_i32 = arith.constant 0 : i32
    %c0_i32_0 = arith.constant 0 : i32
    %c0_i32_1 = arith.constant 0 : i32
    return %c0_i32, %c0_i32_0 : i32, i32
  }
  func.func @transform_3(%arg0: i32, %arg1: i32) -> (i32, i32) {
    %c0_i32 = arith.constant 0 : i32
    %c0_i32_0 = arith.constant 0 : i32
    %c0_i32_1 = arith.constant 0 : i32
    return %c0_i32, %c0_i32_0 : i32, i32
  }
  func.func @transform_4(%arg0: i32, %arg1: i32) -> (i32, i32, i32) {
    %c0_i32 = arith.constant 0 : i32
    %0 = arith.subi %c0_i32, %arg1 : i32
    %c0_i32_0 = arith.constant 0 : i32
    %c0_i32_1 = arith.constant 0 : i32
    return %arg0, %c0_i32_0, %0 : i32, i32, i32
  }
}

module attributes {stable_mosaic.version = 11 : i64} {
  func.func @_fused_conv_kernel(%arg0: i32, %arg1: i32, %arg2: memref<1x8x67xbf16, #tpu.memory_space<vmem>>, %arg3: memref<8x56xbf16, #tpu.memory_space<vmem>>, %arg4: memref<8x1xf32, #tpu.memory_space<vmem>>, %arg5: memref<8x1xf32, #tpu.memory_space<vmem>>, %arg6: memref<8x8xbf16, #tpu.memory_space<vmem>>, %arg7: memref<8x1xf32, #tpu.memory_space<vmem>>, %arg8: memref<8x1xf32, #tpu.memory_space<vmem>>, %arg9: memref<1x8x67xbf16, #tpu.memory_space<vmem>>, %arg10: memref<8x6xbf16, #tpu.memory_space<vmem>>) attributes {dimension_semantics = [#tpu.dimension_semantics<parallel>, #tpu.dimension_semantics<arbitrary>], iteration_bounds = array<i64: 2, 1>, scalar_prefetch = 0 : i64, scratch_operands = 1 : i64, tpu.core_type = #tpu.core_type<tc>, window_params = [{transform_indices = @transform_0, window_bounds = array<i64: 1, 8, 67>}, {pipeline_mode = #tpu.pipeline_mode<synchronous>, transform_indices = @transform_1, window_bounds = array<i64: 8, 56>}, {pipeline_mode = #tpu.pipeline_mode<synchronous>, transform_indices = @transform_2, window_bounds = array<i64: 8, 1>}, {pipeline_mode = #tpu.pipeline_mode<synchronous>, transform_indices = @transform_3, window_bounds = array<i64: 8, 1>}, {pipeline_mode = #tpu.pipeline_mode<synchronous>, transform_indices = @transform_4, window_bounds = array<i64: 8, 8>}, {pipeline_mode = #tpu.pipeline_mode<synchronous>, transform_indices = @transform_5, window_bounds = array<i64: 8, 1>}, {pipeline_mode = #tpu.pipeline_mode<synchronous>, transform_indices = @transform_6, window_bounds = array<i64: 8, 1>}, {transform_indices = @transform_7, window_bounds = array<i64: 1, 8, 67>}]} {
    %c0_i32 = arith.constant 0 : i32
    %0 = arith.cmpi eq, %arg1, %c0_i32 : i32
    %1 = arith.extui %0 : i1 to i32
    %c0_i32_0 = arith.constant 0 : i32
    %2 = arith.cmpi ne, %1, %c0_i32_0 : i32
    scf.if %2 {
      %cst_31 = arith.constant 0.000000e+00 : bf16
      %69 = vector.broadcast %cst_31 : bf16 to vector<8x6xbf16>
      %c0_32 = arith.constant 0 : index
      %c0_33 = arith.constant 0 : index
      %70 = vector.load %arg10[%c0_32, %c0_33] : memref<8x6xbf16, #tpu.memory_space<vmem>>, vector<8x6xbf16>
      tpu.vector_store %arg10[%c0_32, %c0_33], %69 {strides = array<i32>} : memref<8x6xbf16, #tpu.memory_space<vmem>>, vector<8x6xbf16>,
    } else {
    }
    %c0 = arith.constant 0 : index
    %c0_1 = arith.constant 0 : index
    %c0_2 = arith.constant 0 : index
    %3 = vector.load %arg2[%c0, %c0_1, %c0_2] : memref<1x8x67xbf16, #tpu.memory_space<vmem>>, vector<1x8x67xbf16>
    %4 = vector.shape_cast %3 : vector<1x8x67xbf16> to vector<8x67xbf16>
    %c0_3 = arith.constant 0 : index
    %c0_4 = arith.constant 0 : index
    %5 = vector.load %arg10[%c0_3, %c0_4] : memref<8x6xbf16, #tpu.memory_space<vmem>>, vector<8x6xbf16>
    %6 = tpu.concatenate %4, %5 in 1 : vector<8x67xbf16>, vector<8x6xbf16> -> vector<8x73xbf16>
    %7 = vector.extract_strided_slice %4 {offsets = [0, 0], sizes = [8, 6], strides = [1, 1]} : vector<8x67xbf16> to vector<8x6xbf16>
    %c0_5 = arith.constant 0 : index
    %c0_6 = arith.constant 0 : index
    %8 = vector.load %arg10[%c0_5, %c0_6] : memref<8x6xbf16, #tpu.memory_space<vmem>>, vector<8x6xbf16>
    tpu.vector_store %arg10[%c0_5, %c0_6], %7 {strides = array<i32>} : memref<8x6xbf16, #tpu.memory_space<vmem>>, vector<8x6xbf16>,
    %9 = arith.extf %6 : vector<8x73xbf16> to vector<8x73xf32>
    %c0_7 = arith.constant 0 : index
    %c0_8 = arith.constant 0 : index
    %10 = vector.load %arg5[%c0_7, %c0_8] : memref<8x1xf32, #tpu.memory_space<vmem>>, vector<8x1xf32>
    %cst = arith.constant 9.99999971E-10 : f32
    %11 = vector.broadcast %cst : f32 to vector<8x1xf32>
    %12 = arith.addf %10, %11 : vector<8x1xf32>
    %13 = tpu.reciprocal %12 {approx = true} : vector<8x1xf32> -> vector<8x1xf32>
    %cst_9 = arith.constant 5.000000e-01 : f32
    %14 = vector.broadcast %cst_9 : f32 to vector<8x1xf32>
    %15 = arith.mulf %14, %13 : vector<8x1xf32>
    %cst_10 = arith.constant 2.000000e+00 : f32
    %16 = vector.broadcast %cst_10 : f32 to vector<8x1xf32>
    %17 = arith.mulf %16, %10 : vector<8x1xf32>
    %18 = vector.broadcast %17 : vector<8x1xf32> to vector<8x73xf32>
    %19 = arith.mulf %18, %9 : vector<8x73xf32>
    %20 = math.cos %19 : vector<8x73xf32>
    %cst_11 = arith.constant 1.000000e+00 : f32
    %21 = vector.broadcast %cst_11 : f32 to vector<8x73xf32>
    %22 = arith.subf %21, %20 : vector<8x73xf32>
    %23 = vector.broadcast %15 : vector<8x1xf32> to vector<8x73xf32>
    %24 = arith.mulf %23, %22 : vector<8x73xf32>
    %25 = arith.addf %9, %24 : vector<8x73xf32>
    %26 = arith.truncf %25 : vector<8x73xf32> to vector<8x73xbf16>
    %27 = vector.extract_strided_slice %26 {offsets = [0, 0], sizes = [8, 67], strides = [1, 1]} : vector<8x73xbf16> to vector<8x67xbf16>
    %28 = vector.extract_strided_slice %26 {offsets = [0, 1], sizes = [8, 67], strides = [1, 1]} : vector<8x73xbf16> to vector<8x67xbf16>
    %29 = vector.extract_strided_slice %26 {offsets = [0, 2], sizes = [8, 67], strides = [1, 1]} : vector<8x73xbf16> to vector<8x67xbf16>
    %30 = vector.extract_strided_slice %26 {offsets = [0, 3], sizes = [8, 67], strides = [1, 1]} : vector<8x73xbf16> to vector<8x67xbf16>
    %31 = vector.extract_strided_slice %26 {offsets = [0, 4], sizes = [8, 67], strides = [1, 1]} : vector<8x73xbf16> to vector<8x67xbf16>
    %32 = vector.extract_strided_slice %26 {offsets = [0, 5], sizes = [8, 67], strides = [1, 1]} : vector<8x73xbf16> to vector<8x67xbf16>
    %33 = vector.extract_strided_slice %26 {offsets = [0, 6], sizes = [8, 67], strides = [1, 1]} : vector<8x73xbf16> to vector<8x67xbf16>
    %34 = tpu.concatenate %27, %28, %29, %30, %31, %32, %33 in 0 : vector<8x67xbf16>, vector<8x67xbf16>, vector<8x67xbf16>, vector<8x67xbf16>, vector<8x67xbf16>, vector<8x67xbf16>, vector<8x67xbf16> -> vector<56x67xbf16>
    %c0_12 = arith.constant 0 : index
    %c0_13 = arith.constant 0 : index
    %35 = vector.load %arg3[%c0_12, %c0_13] : memref<8x56xbf16, #tpu.memory_space<vmem>>, vector<8x56xbf16>
    %cst_14 = arith.constant dense<0.000000e+00> : vector<8x67xf32>
    %36 = tpu.matmul %35, %34, %cst_14 {dimension_numbers = #tpu.dot_dimension_numbers<[1], [0], [0], [1], [0, 0, 1, 1], [], []>} : vector<8x56xbf16>, vector<56x67xbf16>, vector<8x67xf32> -> vector<8x67xf32>
    %c0_15 = arith.constant 0 : index
    %c0_16 = arith.constant 0 : index
    %37 = vector.load %arg4[%c0_15, %c0_16] : memref<8x1xf32, #tpu.memory_space<vmem>>, vector<8x1xf32>
    %38 = vector.broadcast %37 : vector<8x1xf32> to vector<8x67xf32>
    %39 = arith.addf %36, %38 : vector<8x67xf32>
    %c0_17 = arith.constant 0 : index
    %c0_18 = arith.constant 0 : index
    %40 = vector.load %arg8[%c0_17, %c0_18] : memref<8x1xf32, #tpu.memory_space<vmem>>, vector<8x1xf32>
    %cst_19 = arith.constant 9.99999971E-10 : f32
    %41 = vector.broadcast %cst_19 : f32 to vector<8x1xf32>
    %42 = arith.addf %40, %41 : vector<8x1xf32>
    %43 = tpu.reciprocal %42 {approx = true} : vector<8x1xf32> -> vector<8x1xf32>
    %cst_20 = arith.constant 5.000000e-01 : f32
    %44 = vector.broadcast %cst_20 : f32 to vector<8x1xf32>
    %45 = arith.mulf %44, %43 : vector<8x1xf32>
    %cst_21 = arith.constant 2.000000e+00 : f32
    %46 = vector.broadcast %cst_21 : f32 to vector<8x1xf32>
    %47 = arith.mulf %46, %40 : vector<8x1xf32>
    %48 = vector.broadcast %47 : vector<8x1xf32> to vector<8x67xf32>
    %49 = arith.mulf %48, %39 : vector<8x67xf32>
    %50 = math.cos %49 : vector<8x67xf32>
    %cst_22 = arith.constant 1.000000e+00 : f32
    %51 = vector.broadcast %cst_22 : f32 to vector<8x67xf32>
    %52 = arith.subf %51, %50 : vector<8x67xf32>
    %53 = vector.broadcast %45 : vector<8x1xf32> to vector<8x67xf32>
    %54 = arith.mulf %53, %52 : vector<8x67xf32>
    %55 = arith.addf %39, %54 : vector<8x67xf32>
    %c0_23 = arith.constant 0 : index
    %c0_24 = arith.constant 0 : index
    %56 = vector.load %arg6[%c0_23, %c0_24] : memref<8x8xbf16, #tpu.memory_space<vmem>>, vector<8x8xbf16>
    %57 = arith.truncf %55 : vector<8x67xf32> to vector<8x67xbf16>
    %cst_25 = arith.constant dense<0.000000e+00> : vector<8x67xf32>
    %58 = tpu.matmul %56, %57, %cst_25 {dimension_numbers = #tpu.dot_dimension_numbers<[1], [0], [0], [1], [0, 0, 1, 1], [], []>} : vector<8x8xbf16>, vector<8x67xbf16>, vector<8x67xf32> -> vector<8x67xf32>
    %c0_26 = arith.constant 0 : index
    %c0_27 = arith.constant 0 : index
    %59 = vector.load %arg7[%c0_26, %c0_27] : memref<8x1xf32, #tpu.memory_space<vmem>>, vector<8x1xf32>
    %60 = vector.broadcast %59 : vector<8x1xf32> to vector<8x67xf32>
    %61 = arith.addf %58, %60 : vector<8x67xf32>
    %62 = vector.extract_strided_slice %6 {offsets = [0, 3], sizes = [8, 67], strides = [1, 1]} : vector<8x73xbf16> to vector<8x67xbf16>
    %63 = arith.extf %62 : vector<8x67xbf16> to vector<8x67xf32>
    %64 = arith.addf %61, %63 : vector<8x67xf32>
    %65 = arith.truncf %64 : vector<8x67xf32> to vector<8x67xbf16>
    %c0_28 = arith.constant 0 : index
    %c0_29 = arith.constant 0 : index
    %c0_30 = arith.constant 0 : index
    %66 = vector.load %arg9[%c0_28, %c0_29, %c0_30] : memref<1x8x67xbf16, #tpu.memory_space<vmem>>, vector<1x8x67xbf16>
    %67 = vector.shape_cast %66 : vector<1x8x67xbf16> to vector<8x67xbf16>
    %68 = vector.shape_cast %65 : vector<8x67xbf16> to vector<1x8x67xbf16>
    tpu.vector_store %arg9[%c0_28, %c0_29, %c0_30], %68 {strides = array<i32>} : memref<1x8x67xbf16, #tpu.memory_space<vmem>>, vector<1x8x67xbf16>,
    return
  }
  func.func @transform_0(%arg0: i32, %arg1: i32) -> (i32, i32, i32) {
    %c0_i32 = arith.constant 0 : i32
    %0 = arith.subi %c0_i32, %arg1 : i32
    %c0_i32_0 = arith.constant 0 : i32
    %c0_i32_1 = arith.constant 0 : i32
    return %arg0, %c0_i32_0, %0 : i32, i32, i32
  }
  func.func @transform_1(%arg0: i32, %arg1: i32) -> (i32, i32) {
    %c0_i32 = arith.constant 0 : i32
    %c0_i32_0 = arith.constant 0 : i32
    %c0_i32_1 = arith.constant 0 : i32
    return %c0_i32, %c0_i32_0 : i32, i32
  }
  func.func @transform_2(%arg0: i32, %arg1: i32) -> (i32, i32) {
    %c0_i32 = arith.constant 0 : i32
    %c0_i32_0 = arith.constant 0 : i32
    %c0_i32_1 = arith.constant 0 : i32
    return %c0_i32, %c0_i32_0 : i32, i32
  }
  func.func @transform_3(%arg0: i32, %arg1: i32) -> (i32, i32) {
    %c0_i32 = arith.constant 0 : i32
    %c0_i32_0 = arith.constant 0 : i32
    %c0_i32_1 = arith.constant 0 : i32
    return %c0_i32, %c0_i32_0 : i32, i32
  }
  func.func @transform_4(%arg0: i32, %arg1: i32) -> (i32, i32) {
    %c0_i32 = arith.constant 0 : i32
    %c0_i32_0 = arith.constant 0 : i32
    %c0_i32_1 = arith.constant 0 : i32
    return %c0_i32, %c0_i32_0 : i32, i32
  }
  func.func @transform_5(%arg0: i32, %arg1: i32) -> (i32, i32) {
    %c0_i32 = arith.constant 0 : i32
    %c0_i32_0 = arith.constant 0 : i32
    %c0_i32_1 = arith.constant 0 : i32
    return %c0_i32, %c0_i32_0 : i32, i32
  }
  func.func @transform_6(%arg0: i32, %arg1: i32) -> (i32, i32) {
    %c0_i32 = arith.constant 0 : i32
    %c0_i32_0 = arith.constant 0 : i32
    %c0_i32_1 = arith.constant 0 : i32
    return %c0_i32, %c0_i32_0 : i32, i32
  }
  func.func @transform_7(%arg0: i32, %arg1: i32) -> (i32, i32, i32) {
    %c0_i32 = arith.constant 0 : i32
    %0 = arith.subi %c0_i32, %arg1 : i32
    %c0_i32_0 = arith.constant 0 : i32
    %c0_i32_1 = arith.constant 0 : i32
    return %arg0, %c0_i32_0, %0 : i32, i32, i32
  }
}

module attributes {stable_mosaic.version = 11 : i64} {
  func.func @_fused_conv_kernel(%arg0: i32, %arg1: i32, %arg2: memref<1x8x73xbf16, #tpu.memory_space<vmem>>, %arg3: memref<8x56xbf16, #tpu.memory_space<vmem>>, %arg4: memref<8x1xf32, #tpu.memory_space<vmem>>, %arg5: memref<8x1xf32, #tpu.memory_space<vmem>>, %arg6: memref<8x8xbf16, #tpu.memory_space<vmem>>, %arg7: memref<8x1xf32, #tpu.memory_space<vmem>>, %arg8: memref<8x1xf32, #tpu.memory_space<vmem>>, %arg9: memref<1x8x73xbf16, #tpu.memory_space<vmem>>, %arg10: memref<8x18xbf16, #tpu.memory_space<vmem>>) attributes {dimension_semantics = [#tpu.dimension_semantics<parallel>, #tpu.dimension_semantics<arbitrary>], iteration_bounds = array<i64: 2, 1>, scalar_prefetch = 0 : i64, scratch_operands = 1 : i64, tpu.core_type = #tpu.core_type<tc>, window_params = [{transform_indices = @transform_0, window_bounds = array<i64: 1, 8, 73>}, {pipeline_mode = #tpu.pipeline_mode<synchronous>, transform_indices = @transform_1, window_bounds = array<i64: 8, 56>}, {pipeline_mode = #tpu.pipeline_mode<synchronous>, transform_indices = @transform_2, window_bounds = array<i64: 8, 1>}, {pipeline_mode = #tpu.pipeline_mode<synchronous>, transform_indices = @transform_3, window_bounds = array<i64: 8, 1>}, {pipeline_mode = #tpu.pipeline_mode<synchronous>, transform_indices = @transform_4, window_bounds = array<i64: 8, 8>}, {pipeline_mode = #tpu.pipeline_mode<synchronous>, transform_indices = @transform_5, window_bounds = array<i64: 8, 1>}, {pipeline_mode = #tpu.pipeline_mode<synchronous>, transform_indices = @transform_6, window_bounds = array<i64: 8, 1>}, {transform_indices = @transform_7, window_bounds = array<i64: 1, 8, 73>}]} {
    %c0_i32 = arith.constant 0 : i32
    %0 = arith.cmpi eq, %arg1, %c0_i32 : i32
    %1 = arith.extui %0 : i1 to i32
    %c0_i32_0 = arith.constant 0 : i32
    %2 = arith.cmpi ne, %1, %c0_i32_0 : i32
    scf.if %2 {
      %cst_31 = arith.constant 0.000000e+00 : bf16
      %69 = vector.broadcast %cst_31 : bf16 to vector<8x18xbf16>
      %c0_32 = arith.constant 0 : index
      %c0_33 = arith.constant 0 : index
      %70 = vector.load %arg10[%c0_32, %c0_33] : memref<8x18xbf16, #tpu.memory_space<vmem>>, vector<8x18xbf16>
      tpu.vector_store %arg10[%c0_32, %c0_33], %69 {strides = array<i32>} : memref<8x18xbf16, #tpu.memory_space<vmem>>, vector<8x18xbf16>,
    } else {
    }
    %c0 = arith.constant 0 : index
    %c0_1 = arith.constant 0 : index
    %c0_2 = arith.constant 0 : index
    %3 = vector.load %arg2[%c0, %c0_1, %c0_2] : memref<1x8x73xbf16, #tpu.memory_space<vmem>>, vector<1x8x73xbf16>
    %4 = vector.shape_cast %3 : vector<1x8x73xbf16> to vector<8x73xbf16>
    %c0_3 = arith.constant 0 : index
    %c0_4 = arith.constant 0 : index
    %5 = vector.load %arg10[%c0_3, %c0_4] : memref<8x18xbf16, #tpu.memory_space<vmem>>, vector<8x18xbf16>
    %6 = tpu.concatenate %4, %5 in 1 : vector<8x73xbf16>, vector<8x18xbf16> -> vector<8x91xbf16>
    %7 = vector.extract_strided_slice %4 {offsets = [0, 0], sizes = [8, 18], strides = [1, 1]} : vector<8x73xbf16> to vector<8x18xbf16>
    %c0_5 = arith.constant 0 : index
    %c0_6 = arith.constant 0 : index
    %8 = vector.load %arg10[%c0_5, %c0_6] : memref<8x18xbf16, #tpu.memory_space<vmem>>, vector<8x18xbf16>
    tpu.vector_store %arg10[%c0_5, %c0_6], %7 {strides = array<i32>} : memref<8x18xbf16, #tpu.memory_space<vmem>>, vector<8x18xbf16>,
    %9 = arith.extf %6 : vector<8x91xbf16> to vector<8x91xf32>
    %c0_7 = arith.constant 0 : index
    %c0_8 = arith.constant 0 : index
    %10 = vector.load %arg5[%c0_7, %c0_8] : memref<8x1xf32, #tpu.memory_space<vmem>>, vector<8x1xf32>
    %cst = arith.constant 9.99999971E-10 : f32
    %11 = vector.broadcast %cst : f32 to vector<8x1xf32>
    %12 = arith.addf %10, %11 : vector<8x1xf32>
    %13 = tpu.reciprocal %12 {approx = true} : vector<8x1xf32> -> vector<8x1xf32>
    %cst_9 = arith.constant 5.000000e-01 : f32
    %14 = vector.broadcast %cst_9 : f32 to vector<8x1xf32>
    %15 = arith.mulf %14, %13 : vector<8x1xf32>
    %cst_10 = arith.constant 2.000000e+00 : f32
    %16 = vector.broadcast %cst_10 : f32 to vector<8x1xf32>
    %17 = arith.mulf %16, %10 : vector<8x1xf32>
    %18 = vector.broadcast %17 : vector<8x1xf32> to vector<8x91xf32>
    %19 = arith.mulf %18, %9 : vector<8x91xf32>
    %20 = math.cos %19 : vector<8x91xf32>
    %cst_11 = arith.constant 1.000000e+00 : f32
    %21 = vector.broadcast %cst_11 : f32 to vector<8x91xf32>
    %22 = arith.subf %21, %20 : vector<8x91xf32>
    %23 = vector.broadcast %15 : vector<8x1xf32> to vector<8x91xf32>
    %24 = arith.mulf %23, %22 : vector<8x91xf32>
    %25 = arith.addf %9, %24 : vector<8x91xf32>
    %26 = arith.truncf %25 : vector<8x91xf32> to vector<8x91xbf16>
    %27 = vector.extract_strided_slice %26 {offsets = [0, 0], sizes = [8, 73], strides = [1, 1]} : vector<8x91xbf16> to vector<8x73xbf16>
    %28 = vector.extract_strided_slice %26 {offsets = [0, 3], sizes = [8, 73], strides = [1, 1]} : vector<8x91xbf16> to vector<8x73xbf16>
    %29 = vector.extract_strided_slice %26 {offsets = [0, 6], sizes = [8, 73], strides = [1, 1]} : vector<8x91xbf16> to vector<8x73xbf16>
    %30 = vector.extract_strided_slice %26 {offsets = [0, 9], sizes = [8, 73], strides = [1, 1]} : vector<8x91xbf16> to vector<8x73xbf16>
    %31 = vector.extract_strided_slice %26 {offsets = [0, 12], sizes = [8, 73], strides = [1, 1]} : vector<8x91xbf16> to vector<8x73xbf16>
    %32 = vector.extract_strided_slice %26 {offsets = [0, 15], sizes = [8, 73], strides = [1, 1]} : vector<8x91xbf16> to vector<8x73xbf16>
    %33 = vector.extract_strided_slice %26 {offsets = [0, 18], sizes = [8, 73], strides = [1, 1]} : vector<8x91xbf16> to vector<8x73xbf16>
    %34 = tpu.concatenate %27, %28, %29, %30, %31, %32, %33 in 0 : vector<8x73xbf16>, vector<8x73xbf16>, vector<8x73xbf16>, vector<8x73xbf16>, vector<8x73xbf16>, vector<8x73xbf16>, vector<8x73xbf16> -> vector<56x73xbf16>
    %c0_12 = arith.constant 0 : index
    %c0_13 = arith.constant 0 : index
    %35 = vector.load %arg3[%c0_12, %c0_13] : memref<8x56xbf16, #tpu.memory_space<vmem>>, vector<8x56xbf16>
    %cst_14 = arith.constant dense<0.000000e+00> : vector<8x73xf32>
    %36 = tpu.matmul %35, %34, %cst_14 {dimension_numbers = #tpu.dot_dimension_numbers<[1], [0], [0], [1], [0, 0, 1, 1], [], []>} : vector<8x56xbf16>, vector<56x73xbf16>, vector<8x73xf32> -> vector<8x73xf32>
    %c0_15 = arith.constant 0 : index
    %c0_16 = arith.constant 0 : index
    %37 = vector.load %arg4[%c0_15, %c0_16] : memref<8x1xf32, #tpu.memory_space<vmem>>, vector<8x1xf32>
    %38 = vector.broadcast %37 : vector<8x1xf32> to vector<8x73xf32>
    %39 = arith.addf %36, %38 : vector<8x73xf32>
    %c0_17 = arith.constant 0 : index
    %c0_18 = arith.constant 0 : index
    %40 = vector.load %arg8[%c0_17, %c0_18] : memref<8x1xf32, #tpu.memory_space<vmem>>, vector<8x1xf32>
    %cst_19 = arith.constant 9.99999971E-10 : f32
    %41 = vector.broadcast %cst_19 : f32 to vector<8x1xf32>
    %42 = arith.addf %40, %41 : vector<8x1xf32>
    %43 = tpu.reciprocal %42 {approx = true} : vector<8x1xf32> -> vector<8x1xf32>
    %cst_20 = arith.constant 5.000000e-01 : f32
    %44 = vector.broadcast %cst_20 : f32 to vector<8x1xf32>
    %45 = arith.mulf %44, %43 : vector<8x1xf32>
    %cst_21 = arith.constant 2.000000e+00 : f32
    %46 = vector.broadcast %cst_21 : f32 to vector<8x1xf32>
    %47 = arith.mulf %46, %40 : vector<8x1xf32>
    %48 = vector.broadcast %47 : vector<8x1xf32> to vector<8x73xf32>
    %49 = arith.mulf %48, %39 : vector<8x73xf32>
    %50 = math.cos %49 : vector<8x73xf32>
    %cst_22 = arith.constant 1.000000e+00 : f32
    %51 = vector.broadcast %cst_22 : f32 to vector<8x73xf32>
    %52 = arith.subf %51, %50 : vector<8x73xf32>
    %53 = vector.broadcast %45 : vector<8x1xf32> to vector<8x73xf32>
    %54 = arith.mulf %53, %52 : vector<8x73xf32>
    %55 = arith.addf %39, %54 : vector<8x73xf32>
    %c0_23 = arith.constant 0 : index
    %c0_24 = arith.constant 0 : index
    %56 = vector.load %arg6[%c0_23, %c0_24] : memref<8x8xbf16, #tpu.memory_space<vmem>>, vector<8x8xbf16>
    %57 = arith.truncf %55 : vector<8x73xf32> to vector<8x73xbf16>
    %cst_25 = arith.constant dense<0.000000e+00> : vector<8x73xf32>
    %58 = tpu.matmul %56, %57, %cst_25 {dimension_numbers = #tpu.dot_dimension_numbers<[1], [0], [0], [1], [0, 0, 1, 1], [], []>} : vector<8x8xbf16>, vector<8x73xbf16>, vector<8x73xf32> -> vector<8x73xf32>
    %c0_26 = arith.constant 0 : index
    %c0_27 = arith.constant 0 : index
    %59 = vector.load %arg7[%c0_26, %c0_27] : memref<8x1xf32, #tpu.memory_space<vmem>>, vector<8x1xf32>
    %60 = vector.broadcast %59 : vector<8x1xf32> to vector<8x73xf32>
    %61 = arith.addf %58, %60 : vector<8x73xf32>
    %62 = vector.extract_strided_slice %6 {offsets = [0, 9], sizes = [8, 73], strides = [1, 1]} : vector<8x91xbf16> to vector<8x73xbf16>
    %63 = arith.extf %62 : vector<8x73xbf16> to vector<8x73xf32>
    %64 = arith.addf %61, %63 : vector<8x73xf32>
    %65 = arith.truncf %64 : vector<8x73xf32> to vector<8x73xbf16>
    %c0_28 = arith.constant 0 : index
    %c0_29 = arith.constant 0 : index
    %c0_30 = arith.constant 0 : index
    %66 = vector.load %arg9[%c0_28, %c0_29, %c0_30] : memref<1x8x73xbf16, #tpu.memory_space<vmem>>, vector<1x8x73xbf16>
    %67 = vector.shape_cast %66 : vector<1x8x73xbf16> to vector<8x73xbf16>
    %68 = vector.shape_cast %65 : vector<8x73xbf16> to vector<1x8x73xbf16>
    tpu.vector_store %arg9[%c0_28, %c0_29, %c0_30], %68 {strides = array<i32>} : memref<1x8x73xbf16, #tpu.memory_space<vmem>>, vector<1x8x73xbf16>,
    return
  }
  func.func @transform_0(%arg0: i32, %arg1: i32) -> (i32, i32, i32) {
    %c0_i32 = arith.constant 0 : i32
    %0 = arith.subi %c0_i32, %arg1 : i32
    %c0_i32_0 = arith.constant 0 : i32
    %c0_i32_1 = arith.constant 0 : i32
    return %arg0, %c0_i32_0, %0 : i32, i32, i32
  }
  func.func @transform_1(%arg0: i32, %arg1: i32) -> (i32, i32) {
    %c0_i32 = arith.constant 0 : i32
    %c0_i32_0 = arith.constant 0 : i32
    %c0_i32_1 = arith.constant 0 : i32
    return %c0_i32, %c0_i32_0 : i32, i32
  }
  func.func @transform_2(%arg0: i32, %arg1: i32) -> (i32, i32) {
    %c0_i32 = arith.constant 0 : i32
    %c0_i32_0 = arith.constant 0 : i32
    %c0_i32_1 = arith.constant 0 : i32
    return %c0_i32, %c0_i32_0 : i32, i32
  }
  func.func @transform_3(%arg0: i32, %arg1: i32) -> (i32, i32) {
    %c0_i32 = arith.constant 0 : i32
    %c0_i32_0 = arith.constant 0 : i32
    %c0_i32_1 = arith.constant 0 : i32
    return %c0_i32, %c0_i32_0 : i32, i32
  }
  func.func @transform_4(%arg0: i32, %arg1: i32) -> (i32, i32) {
    %c0_i32 = arith.constant 0 : i32
    %c0_i32_0 = arith.constant 0 : i32
    %c0_i32_1 = arith.constant 0 : i32
    return %c0_i32, %c0_i32_0 : i32, i32
  }
  func.func @transform_5(%arg0: i32, %arg1: i32) -> (i32, i32) {
    %c0_i32 = arith.constant 0 : i32
    %c0_i32_0 = arith.constant 0 : i32
    %c0_i32_1 = arith.constant 0 : i32
    return %c0_i32, %c0_i32_0 : i32, i32
  }
  func.func @transform_6(%arg0: i32, %arg1: i32) -> (i32, i32) {
    %c0_i32 = arith.constant 0 : i32
    %c0_i32_0 = arith.constant 0 : i32
    %c0_i32_1 = arith.constant 0 : i32
    return %c0_i32, %c0_i32_0 : i32, i32
  }
  func.func @transform_7(%arg0: i32, %arg1: i32) -> (i32, i32, i32) {
    %c0_i32 = arith.constant 0 : i32
    %0 = arith.subi %c0_i32, %arg1 : i32
    %c0_i32_0 = arith.constant 0 : i32
    %c0_i32_1 = arith.constant 0 : i32
    return %arg0, %c0_i32_0, %0 : i32, i32, i32
  }
}

module attributes {stable_mosaic.version = 11 : i64} {
  func.func @_fused_conv_kernel(%arg0: i32, %arg1: i32, %arg2: memref<1x8x67xbf16, #tpu.memory_space<vmem>>, %arg3: memref<8x56xbf16, #tpu.memory_space<vmem>>, %arg4: memref<8x1xf32, #tpu.memory_space<vmem>>, %arg5: memref<8x1xf32, #tpu.memory_space<vmem>>, %arg6: memref<1x8x67xf32, #tpu.memory_space<vmem>>, %arg7: memref<8x6xbf16, #tpu.memory_space<vmem>>) attributes {dimension_semantics = [#tpu.dimension_semantics<parallel>, #tpu.dimension_semantics<arbitrary>], iteration_bounds = array<i64: 2, 1>, scalar_prefetch = 0 : i64, scratch_operands = 1 : i64, tpu.core_type = #tpu.core_type<tc>, window_params = [{transform_indices = @transform_0, window_bounds = array<i64: 1, 8, 67>}, {pipeline_mode = #tpu.pipeline_mode<synchronous>, transform_indices = @transform_1, window_bounds = array<i64: 8, 56>}, {pipeline_mode = #tpu.pipeline_mode<synchronous>, transform_indices = @transform_2, window_bounds = array<i64: 8, 1>}, {pipeline_mode = #tpu.pipeline_mode<synchronous>, transform_indices = @transform_3, window_bounds = array<i64: 8, 1>}, {transform_indices = @transform_4, window_bounds = array<i64: 1, 8, 67>}]} {
    %c0_i32 = arith.constant 0 : i32
    %0 = arith.cmpi eq, %arg1, %c0_i32 : i32
    %1 = arith.extui %0 : i1 to i32
    %c0_i32_0 = arith.constant 0 : i32
    %2 = arith.cmpi ne, %1, %c0_i32_0 : i32
    scf.if %2 {
      %cst_20 = arith.constant 0.000000e+00 : bf16
      %44 = vector.broadcast %cst_20 : bf16 to vector<8x6xbf16>
      %c0_21 = arith.constant 0 : index
      %c0_22 = arith.constant 0 : index
      %45 = vector.load %arg7[%c0_21, %c0_22] : memref<8x6xbf16, #tpu.memory_space<vmem>>, vector<8x6xbf16>
      tpu.vector_store %arg7[%c0_21, %c0_22], %44 {strides = array<i32>} : memref<8x6xbf16, #tpu.memory_space<vmem>>, vector<8x6xbf16>,
    } else {
    }
    %c0 = arith.constant 0 : index
    %c0_1 = arith.constant 0 : index
    %c0_2 = arith.constant 0 : index
    %3 = vector.load %arg2[%c0, %c0_1, %c0_2] : memref<1x8x67xbf16, #tpu.memory_space<vmem>>, vector<1x8x67xbf16>
    %4 = vector.shape_cast %3 : vector<1x8x67xbf16> to vector<8x67xbf16>
    %c0_3 = arith.constant 0 : index
    %c0_4 = arith.constant 0 : index
    %5 = vector.load %arg7[%c0_3, %c0_4] : memref<8x6xbf16, #tpu.memory_space<vmem>>, vector<8x6xbf16>
    %6 = tpu.concatenate %4, %5 in 1 : vector<8x67xbf16>, vector<8x6xbf16> -> vector<8x73xbf16>
    %7 = vector.extract_strided_slice %4 {offsets = [0, 0], sizes = [8, 6], strides = [1, 1]} : vector<8x67xbf16> to vector<8x6xbf16>
    %c0_5 = arith.constant 0 : index
    %c0_6 = arith.constant 0 : index
    %8 = vector.load %arg7[%c0_5, %c0_6] : memref<8x6xbf16, #tpu.memory_space<vmem>>, vector<8x6xbf16>
    tpu.vector_store %arg7[%c0_5, %c0_6], %7 {strides = array<i32>} : memref<8x6xbf16, #tpu.memory_space<vmem>>, vector<8x6xbf16>,
    %9 = arith.extf %6 : vector<8x73xbf16> to vector<8x73xf32>
    %c0_7 = arith.constant 0 : index
    %c0_8 = arith.constant 0 : index
    %10 = vector.load %arg5[%c0_7, %c0_8] : memref<8x1xf32, #tpu.memory_space<vmem>>, vector<8x1xf32>
    %cst = arith.constant 9.99999971E-10 : f32
    %11 = vector.broadcast %cst : f32 to vector<8x1xf32>
    %12 = arith.addf %10, %11 : vector<8x1xf32>
    %13 = tpu.reciprocal %12 {approx = true} : vector<8x1xf32> -> vector<8x1xf32>
    %cst_9 = arith.constant 5.000000e-01 : f32
    %14 = vector.broadcast %cst_9 : f32 to vector<8x1xf32>
    %15 = arith.mulf %14, %13 : vector<8x1xf32>
    %cst_10 = arith.constant 2.000000e+00 : f32
    %16 = vector.broadcast %cst_10 : f32 to vector<8x1xf32>
    %17 = arith.mulf %16, %10 : vector<8x1xf32>
    %18 = vector.broadcast %17 : vector<8x1xf32> to vector<8x73xf32>
    %19 = arith.mulf %18, %9 : vector<8x73xf32>
    %20 = math.cos %19 : vector<8x73xf32>
    %cst_11 = arith.constant 1.000000e+00 : f32
    %21 = vector.broadcast %cst_11 : f32 to vector<8x73xf32>
    %22 = arith.subf %21, %20 : vector<8x73xf32>
    %23 = vector.broadcast %15 : vector<8x1xf32> to vector<8x73xf32>
    %24 = arith.mulf %23, %22 : vector<8x73xf32>
    %25 = arith.addf %9, %24 : vector<8x73xf32>
    %26 = arith.truncf %25 : vector<8x73xf32> to vector<8x73xbf16>
    %27 = vector.extract_strided_slice %26 {offsets = [0, 0], sizes = [8, 67], strides = [1, 1]} : vector<8x73xbf16> to vector<8x67xbf16>
    %28 = vector.extract_strided_slice %26 {offsets = [0, 1], sizes = [8, 67], strides = [1, 1]} : vector<8x73xbf16> to vector<8x67xbf16>
    %29 = vector.extract_strided_slice %26 {offsets = [0, 2], sizes = [8, 67], strides = [1, 1]} : vector<8x73xbf16> to vector<8x67xbf16>
    %30 = vector.extract_strided_slice %26 {offsets = [0, 3], sizes = [8, 67], strides = [1, 1]} : vector<8x73xbf16> to vector<8x67xbf16>
    %31 = vector.extract_strided_slice %26 {offsets = [0, 4], sizes = [8, 67], strides = [1, 1]} : vector<8x73xbf16> to vector<8x67xbf16>
    %32 = vector.extract_strided_slice %26 {offsets = [0, 5], sizes = [8, 67], strides = [1, 1]} : vector<8x73xbf16> to vector<8x67xbf16>
    %33 = vector.extract_strided_slice %26 {offsets = [0, 6], sizes = [8, 67], strides = [1, 1]} : vector<8x73xbf16> to vector<8x67xbf16>
    %34 = tpu.concatenate %27, %28, %29, %30, %31, %32, %33 in 0 : vector<8x67xbf16>, vector<8x67xbf16>, vector<8x67xbf16>, vector<8x67xbf16>, vector<8x67xbf16>, vector<8x67xbf16>, vector<8x67xbf16> -> vector<56x67xbf16>
    %c0_12 = arith.constant 0 : index
    %c0_13 = arith.constant 0 : index
    %35 = vector.load %arg3[%c0_12, %c0_13] : memref<8x56xbf16, #tpu.memory_space<vmem>>, vector<8x56xbf16>
    %cst_14 = arith.constant dense<0.000000e+00> : vector<8x67xf32>
    %36 = tpu.matmul %35, %34, %cst_14 {dimension_numbers = #tpu.dot_dimension_numbers<[1], [0], [0], [1], [0, 0, 1, 1], [], []>} : vector<8x56xbf16>, vector<56x67xbf16>, vector<8x67xf32> -> vector<8x67xf32>
    %c0_15 = arith.constant 0 : index
    %c0_16 = arith.constant 0 : index
    %37 = vector.load %arg4[%c0_15, %c0_16] : memref<8x1xf32, #tpu.memory_space<vmem>>, vector<8x1xf32>
    %38 = vector.broadcast %37 : vector<8x1xf32> to vector<8x67xf32>
    %39 = arith.addf %36, %38 : vector<8x67xf32>
    %40 = math.tanh %39 : vector<8x67xf32>
    %c0_17 = arith.constant 0 : index
    %c0_18 = arith.constant 0 : index
    %c0_19 = arith.constant 0 : index
    %41 = vector.load %arg6[%c0_17, %c0_18, %c0_19] : memref<1x8x67xf32, #tpu.memory_space<vmem>>, vector<1x8x67xf32>
    %42 = vector.shape_cast %41 : vector<1x8x67xf32> to vector<8x67xf32>
    %43 = vector.shape_cast %40 : vector<8x67xf32> to vector<1x8x67xf32>
    tpu.vector_store %arg6[%c0_17, %c0_18, %c0_19], %43 {strides = array<i32>} : memref<1x8x67xf32, #tpu.memory_space<vmem>>, vector<1x8x67xf32>,
    return
  }
  func.func @transform_0(%arg0: i32, %arg1: i32) -> (i32, i32, i32) {
    %c0_i32 = arith.constant 0 : i32
    %0 = arith.subi %c0_i32, %arg1 : i32
    %c0_i32_0 = arith.constant 0 : i32
    %c0_i32_1 = arith.constant 0 : i32
    return %arg0, %c0_i32_0, %0 : i32, i32, i32
  }
  func.func @transform_1(%arg0: i32, %arg1: i32) -> (i32, i32) {
    %c0_i32 = arith.constant 0 : i32
    %c0_i32_0 = arith.constant 0 : i32
    %c0_i32_1 = arith.constant 0 : i32
    return %c0_i32, %c0_i32_0 : i32, i32
  }
  func.func @transform_2(%arg0: i32, %arg1: i32) -> (i32, i32) {
    %c0_i32 = arith.constant 0 : i32
    %c0_i32_0 = arith.constant 0 : i32
    %c0_i32_1 = arith.constant 0 : i32
    return %c0_i32, %c0_i32_0 : i32, i32
  }
  func.func @transform_3(%arg0: i32, %arg1: i32) -> (i32, i32) {
    %c0_i32 = arith.constant 0 : i32
    %c0_i32_0 = arith.constant 0 : i32
    %c0_i32_1 = arith.constant 0 : i32
    return %c0_i32, %c0_i32_0 : i32, i32
  }
  func.func @transform_4(%arg0: i32, %arg1: i32) -> (i32, i32, i32) {
    %c0_i32 = arith.constant 0 : i32
    %0 = arith.subi %c0_i32, %arg1 : i32
    %c0_i32_0 = arith.constant 0 : i32
    %c0_i32_1 = arith.constant 0 : i32
    return %arg0, %c0_i32_0, %0 : i32, i32, i32
  }
}

module attributes {stable_mosaic.version = 11 : i64} {
  func.func @_fused_conv_kernel(%arg0: i32, %arg1: i32, %arg2: memref<1x8x91xbf16, #tpu.memory_space<vmem>>, %arg3: memref<8x56xbf16, #tpu.memory_space<vmem>>, %arg4: memref<8x1xf32, #tpu.memory_space<vmem>>, %arg5: memref<8x1xf32, #tpu.memory_space<vmem>>, %arg6: memref<8x8xbf16, #tpu.memory_space<vmem>>, %arg7: memref<8x1xf32, #tpu.memory_space<vmem>>, %arg8: memref<8x1xf32, #tpu.memory_space<vmem>>, %arg9: memref<1x8x91xbf16, #tpu.memory_space<vmem>>, %arg10: memref<8x54xbf16, #tpu.memory_space<vmem>>) attributes {dimension_semantics = [#tpu.dimension_semantics<parallel>, #tpu.dimension_semantics<arbitrary>], iteration_bounds = array<i64: 2, 1>, scalar_prefetch = 0 : i64, scratch_operands = 1 : i64, tpu.core_type = #tpu.core_type<tc>, window_params = [{transform_indices = @transform_0, window_bounds = array<i64: 1, 8, 91>}, {pipeline_mode = #tpu.pipeline_mode<synchronous>, transform_indices = @transform_1, window_bounds = array<i64: 8, 56>}, {pipeline_mode = #tpu.pipeline_mode<synchronous>, transform_indices = @transform_2, window_bounds = array<i64: 8, 1>}, {pipeline_mode = #tpu.pipeline_mode<synchronous>, transform_indices = @transform_3, window_bounds = array<i64: 8, 1>}, {pipeline_mode = #tpu.pipeline_mode<synchronous>, transform_indices = @transform_4, window_bounds = array<i64: 8, 8>}, {pipeline_mode = #tpu.pipeline_mode<synchronous>, transform_indices = @transform_5, window_bounds = array<i64: 8, 1>}, {pipeline_mode = #tpu.pipeline_mode<synchronous>, transform_indices = @transform_6, window_bounds = array<i64: 8, 1>}, {transform_indices = @transform_7, window_bounds = array<i64: 1, 8, 91>}]} {
    %c0_i32 = arith.constant 0 : i32
    %0 = arith.cmpi eq, %arg1, %c0_i32 : i32
    %1 = arith.extui %0 : i1 to i32
    %c0_i32_0 = arith.constant 0 : i32
    %2 = arith.cmpi ne, %1, %c0_i32_0 : i32
    scf.if %2 {
      %cst_31 = arith.constant 0.000000e+00 : bf16
      %69 = vector.broadcast %cst_31 : bf16 to vector<8x54xbf16>
      %c0_32 = arith.constant 0 : index
      %c0_33 = arith.constant 0 : index
      %70 = vector.load %arg10[%c0_32, %c0_33] : memref<8x54xbf16, #tpu.memory_space<vmem>>, vector<8x54xbf16>
      tpu.vector_store %arg10[%c0_32, %c0_33], %69 {strides = array<i32>} : memref<8x54xbf16, #tpu.memory_space<vmem>>, vector<8x54xbf16>,
    } else {
    }
    %c0 = arith.constant 0 : index
    %c0_1 = arith.constant 0 : index
    %c0_2 = arith.constant 0 : index
    %3 = vector.load %arg2[%c0, %c0_1, %c0_2] : memref<1x8x91xbf16, #tpu.memory_space<vmem>>, vector<1x8x91xbf16>
    %4 = vector.shape_cast %3 : vector<1x8x91xbf16> to vector<8x91xbf16>
    %c0_3 = arith.constant 0 : index
    %c0_4 = arith.constant 0 : index
    %5 = vector.load %arg10[%c0_3, %c0_4] : memref<8x54xbf16, #tpu.memory_space<vmem>>, vector<8x54xbf16>
    %6 = tpu.concatenate %4, %5 in 1 : vector<8x91xbf16>, vector<8x54xbf16> -> vector<8x145xbf16>
    %7 = vector.extract_strided_slice %4 {offsets = [0, 0], sizes = [8, 54], strides = [1, 1]} : vector<8x91xbf16> to vector<8x54xbf16>
    %c0_5 = arith.constant 0 : index
    %c0_6 = arith.constant 0 : index
    %8 = vector.load %arg10[%c0_5, %c0_6] : memref<8x54xbf16, #tpu.memory_space<vmem>>, vector<8x54xbf16>
    tpu.vector_store %arg10[%c0_5, %c0_6], %7 {strides = array<i32>} : memref<8x54xbf16, #tpu.memory_space<vmem>>, vector<8x54xbf16>,
    %9 = arith.extf %6 : vector<8x145xbf16> to vector<8x145xf32>
    %c0_7 = arith.constant 0 : index
    %c0_8 = arith.constant 0 : index
    %10 = vector.load %arg5[%c0_7, %c0_8] : memref<8x1xf32, #tpu.memory_space<vmem>>, vector<8x1xf32>
    %cst = arith.constant 9.99999971E-10 : f32
    %11 = vector.broadcast %cst : f32 to vector<8x1xf32>
    %12 = arith.addf %10, %11 : vector<8x1xf32>
    %13 = tpu.reciprocal %12 {approx = true} : vector<8x1xf32> -> vector<8x1xf32>
    %cst_9 = arith.constant 5.000000e-01 : f32
    %14 = vector.broadcast %cst_9 : f32 to vector<8x1xf32>
    %15 = arith.mulf %14, %13 : vector<8x1xf32>
    %cst_10 = arith.constant 2.000000e+00 : f32
    %16 = vector.broadcast %cst_10 : f32 to vector<8x1xf32>
    %17 = arith.mulf %16, %10 : vector<8x1xf32>
    %18 = vector.broadcast %17 : vector<8x1xf32> to vector<8x145xf32>
    %19 = arith.mulf %18, %9 : vector<8x145xf32>
    %20 = math.cos %19 : vector<8x145xf32>
    %cst_11 = arith.constant 1.000000e+00 : f32
    %21 = vector.broadcast %cst_11 : f32 to vector<8x145xf32>
    %22 = arith.subf %21, %20 : vector<8x145xf32>
    %23 = vector.broadcast %15 : vector<8x1xf32> to vector<8x145xf32>
    %24 = arith.mulf %23, %22 : vector<8x145xf32>
    %25 = arith.addf %9, %24 : vector<8x145xf32>
    %26 = arith.truncf %25 : vector<8x145xf32> to vector<8x145xbf16>
    %27 = vector.extract_strided_slice %26 {offsets = [0, 0], sizes = [8, 91], strides = [1, 1]} : vector<8x145xbf16> to vector<8x91xbf16>
    %28 = vector.extract_strided_slice %26 {offsets = [0, 9], sizes = [8, 91], strides = [1, 1]} : vector<8x145xbf16> to vector<8x91xbf16>
    %29 = vector.extract_strided_slice %26 {offsets = [0, 18], sizes = [8, 91], strides = [1, 1]} : vector<8x145xbf16> to vector<8x91xbf16>
    %30 = vector.extract_strided_slice %26 {offsets = [0, 27], sizes = [8, 91], strides = [1, 1]} : vector<8x145xbf16> to vector<8x91xbf16>
    %31 = vector.extract_strided_slice %26 {offsets = [0, 36], sizes = [8, 91], strides = [1, 1]} : vector<8x145xbf16> to vector<8x91xbf16>
    %32 = vector.extract_strided_slice %26 {offsets = [0, 45], sizes = [8, 91], strides = [1, 1]} : vector<8x145xbf16> to vector<8x91xbf16>
    %33 = vector.extract_strided_slice %26 {offsets = [0, 54], sizes = [8, 91], strides = [1, 1]} : vector<8x145xbf16> to vector<8x91xbf16>
    %34 = tpu.concatenate %27, %28, %29, %30, %31, %32, %33 in 0 : vector<8x91xbf16>, vector<8x91xbf16>, vector<8x91xbf16>, vector<8x91xbf16>, vector<8x91xbf16>, vector<8x91xbf16>, vector<8x91xbf16> -> vector<56x91xbf16>
    %c0_12 = arith.constant 0 : index
    %c0_13 = arith.constant 0 : index
    %35 = vector.load %arg3[%c0_12, %c0_13] : memref<8x56xbf16, #tpu.memory_space<vmem>>, vector<8x56xbf16>
    %cst_14 = arith.constant dense<0.000000e+00> : vector<8x91xf32>
    %36 = tpu.matmul %35, %34, %cst_14 {dimension_numbers = #tpu.dot_dimension_numbers<[1], [0], [0], [1], [0, 0, 1, 1], [], []>} : vector<8x56xbf16>, vector<56x91xbf16>, vector<8x91xf32> -> vector<8x91xf32>
    %c0_15 = arith.constant 0 : index
    %c0_16 = arith.constant 0 : index
    %37 = vector.load %arg4[%c0_15, %c0_16] : memref<8x1xf32, #tpu.memory_space<vmem>>, vector<8x1xf32>
    %38 = vector.broadcast %37 : vector<8x1xf32> to vector<8x91xf32>
    %39 = arith.addf %36, %38 : vector<8x91xf32>
    %c0_17 = arith.constant 0 : index
    %c0_18 = arith.constant 0 : index
    %40 = vector.load %arg8[%c0_17, %c0_18] : memref<8x1xf32, #tpu.memory_space<vmem>>, vector<8x1xf32>
    %cst_19 = arith.constant 9.99999971E-10 : f32
    %41 = vector.broadcast %cst_19 : f32 to vector<8x1xf32>
    %42 = arith.addf %40, %41 : vector<8x1xf32>
    %43 = tpu.reciprocal %42 {approx = true} : vector<8x1xf32> -> vector<8x1xf32>
    %cst_20 = arith.constant 5.000000e-01 : f32
    %44 = vector.broadcast %cst_20 : f32 to vector<8x1xf32>
    %45 = arith.mulf %44, %43 : vector<8x1xf32>
    %cst_21 = arith.constant 2.000000e+00 : f32
    %46 = vector.broadcast %cst_21 : f32 to vector<8x1xf32>
    %47 = arith.mulf %46, %40 : vector<8x1xf32>
    %48 = vector.broadcast %47 : vector<8x1xf32> to vector<8x91xf32>
    %49 = arith.mulf %48, %39 : vector<8x91xf32>
    %50 = math.cos %49 : vector<8x91xf32>
    %cst_22 = arith.constant 1.000000e+00 : f32
    %51 = vector.broadcast %cst_22 : f32 to vector<8x91xf32>
    %52 = arith.subf %51, %50 : vector<8x91xf32>
    %53 = vector.broadcast %45 : vector<8x1xf32> to vector<8x91xf32>
    %54 = arith.mulf %53, %52 : vector<8x91xf32>
    %55 = arith.addf %39, %54 : vector<8x91xf32>
    %c0_23 = arith.constant 0 : index
    %c0_24 = arith.constant 0 : index
    %56 = vector.load %arg6[%c0_23, %c0_24] : memref<8x8xbf16, #tpu.memory_space<vmem>>, vector<8x8xbf16>
    %57 = arith.truncf %55 : vector<8x91xf32> to vector<8x91xbf16>
    %cst_25 = arith.constant dense<0.000000e+00> : vector<8x91xf32>
    %58 = tpu.matmul %56, %57, %cst_25 {dimension_numbers = #tpu.dot_dimension_numbers<[1], [0], [0], [1], [0, 0, 1, 1], [], []>} : vector<8x8xbf16>, vector<8x91xbf16>, vector<8x91xf32> -> vector<8x91xf32>
    %c0_26 = arith.constant 0 : index
    %c0_27 = arith.constant 0 : index
    %59 = vector.load %arg7[%c0_26, %c0_27] : memref<8x1xf32, #tpu.memory_space<vmem>>, vector<8x1xf32>
    %60 = vector.broadcast %59 : vector<8x1xf32> to vector<8x91xf32>
    %61 = arith.addf %58, %60 : vector<8x91xf32>
    %62 = vector.extract_strided_slice %6 {offsets = [0, 27], sizes = [8, 91], strides = [1, 1]} : vector<8x145xbf16> to vector<8x91xbf16>
    %63 = arith.extf %62 : vector<8x91xbf16> to vector<8x91xf32>
    %64 = arith.addf %61, %63 : vector<8x91xf32>
    %65 = arith.truncf %64 : vector<8x91xf32> to vector<8x91xbf16>
    %c0_28 = arith.constant 0 : index
    %c0_29 = arith.constant 0 : index
    %c0_30 = arith.constant 0 : index
    %66 = vector.load %arg9[%c0_28, %c0_29, %c0_30] : memref<1x8x91xbf16, #tpu.memory_space<vmem>>, vector<1x8x91xbf16>
    %67 = vector.shape_cast %66 : vector<1x8x91xbf16> to vector<8x91xbf16>
    %68 = vector.shape_cast %65 : vector<8x91xbf16> to vector<1x8x91xbf16>
    tpu.vector_store %arg9[%c0_28, %c0_29, %c0_30], %68 {strides = array<i32>} : memref<1x8x91xbf16, #tpu.memory_space<vmem>>, vector<1x8x91xbf16>,
    return
  }
  func.func @transform_0(%arg0: i32, %arg1: i32) -> (i32, i32, i32) {
    %c0_i32 = arith.constant 0 : i32
    %0 = arith.subi %c0_i32, %arg1 : i32
    %c0_i32_0 = arith.constant 0 : i32
    %c0_i32_1 = arith.constant 0 : i32
    return %arg0, %c0_i32_0, %0 : i32, i32, i32
  }
  func.func @transform_1(%arg0: i32, %arg1: i32) -> (i32, i32) {
    %c0_i32 = arith.constant 0 : i32
    %c0_i32_0 = arith.constant 0 : i32
    %c0_i32_1 = arith.constant 0 : i32
    return %c0_i32, %c0_i32_0 : i32, i32
  }
  func.func @transform_2(%arg0: i32, %arg1: i32) -> (i32, i32) {
    %c0_i32 = arith.constant 0 : i32
    %c0_i32_0 = arith.constant 0 : i32
    %c0_i32_1 = arith.constant 0 : i32
    return %c0_i32, %c0_i32_0 : i32, i32
  }
  func.func @transform_3(%arg0: i32, %arg1: i32) -> (i32, i32) {
    %c0_i32 = arith.constant 0 : i32
    %c0_i32_0 = arith.constant 0 : i32
    %c0_i32_1 = arith.constant 0 : i32
    return %c0_i32, %c0_i32_0 : i32, i32
  }
  func.func @transform_4(%arg0: i32, %arg1: i32) -> (i32, i32) {
    %c0_i32 = arith.constant 0 : i32
    %c0_i32_0 = arith.constant 0 : i32
    %c0_i32_1 = arith.constant 0 : i32
    return %c0_i32, %c0_i32_0 : i32, i32
  }
  func.func @transform_5(%arg0: i32, %arg1: i32) -> (i32, i32) {
    %c0_i32 = arith.constant 0 : i32
    %c0_i32_0 = arith.constant 0 : i32
    %c0_i32_1 = arith.constant 0 : i32
    return %c0_i32, %c0_i32_0 : i32, i32
  }
  func.func @transform_6(%arg0: i32, %arg1: i32) -> (i32, i32) {
    %c0_i32 = arith.constant 0 : i32
    %c0_i32_0 = arith.constant 0 : i32
    %c0_i32_1 = arith.constant 0 : i32
    return %c0_i32, %c0_i32_0 : i32, i32
  }
  func.func @transform_7(%arg0: i32, %arg1: i32) -> (i32, i32, i32) {
    %c0_i32 = arith.constant 0 : i32
    %0 = arith.subi %c0_i32, %arg1 : i32
    %c0_i32_0 = arith.constant 0 : i32
    %c0_i32_1 = arith.constant 0 : i32
    return %arg0, %c0_i32_0, %0 : i32, i32, i32
  }
}

</mosaic_0001>

<llo_original>
// kernel: decoder_forward.10
$region0: #{decoder_forward.10}
  #allocation0 [shape = 'u32[]', space=smem, size = 0x4, offset = 0x4, fixed_abs, tag = 'smem constant byte address 0x4 - core index']
  #allocation1 [shape = 'u32[144,128]{1,0:T(1,128)}', space=vmem, size = 0x12000, scoped, tag = 'internal scratch']
  #allocation2 [shape = 'f32[4,6]{1,0:T(4,128)}', space=vmem, size = 0x800, scoped, tag = 'scratch operand']
  %s0 = inlined_call_operand.vmem [shape: f32[2,4,19], index: 0, kind: input, shape index: {}]
  %s1 = inlined_call_operand.vmem [shape: bf16[32,28], index: 1, kind: input, shape index: {}]
  %s2 = inlined_call_operand.vmem [shape: f32[32,1], index: 2, kind: input, shape index: {}]
  %s3 = inlined_call_operand.vmem [shape: bf16[2,32,19], index: 3, kind: output, shape index: {}]
  %s4 = sld [smem:[#allocation0]]
  $region49: #{decoder_forward.10} parent=0
    _
  %s6 = ssub.s32 1, %s4
  %s7 = scalar_select 0, %s6, %s4
  loop: start=0, step=1, limit=4
  $region2: #{decoder_forward.10} parent=0 // loop_pre_header
    _
  $region3: #{decoder_forward.10} parent=0 // loop_header
    %s9 = sphi 0, %s13
    %p10 = scmp.ge.s32.totalorder %s9, 4
    %s16 = sphi 0, %s28
    %s17 = sphi 0, %s24
    %s18 = sphi 0, %s16
    %s19 = sphi 0, %s17
    %s20 = sphi 0, %s18
    %s21 = sphi 0, %s19
    %s35 = sphi 0, %s37
    %s38 = sphi 0, %s35
    %s39 = sphi 0, %s38
    %s55 = sphi 0, %s39
    %s59 = sphi 0, %s59
    %s61 = sphi 0, %s59
    %s62 = sphi 0, %s61
    %s76 = sphi 0, %s62
    %s80 = sphi 0, %s80
    %s82 = sphi 0, %s80
    %s83 = sphi 0, %s82
    %s97 = sphi 0, %s83
    %s107 = sphi 0, %s109
    %s110 = sphi 0, %s107
    %s111 = sphi 0, %s110
    %s127 = sphi 0, %s111
  $region4: #{decoder_forward.10} parent=0 // loop_header_branch
    %12 = sbr.rel (%p10) target = $region8
  $region5: #{decoder_forward.10} parent=0 // loop_body
    %s14 = ssub.s32 %s9, 1
    %s15 = ssub.s32 %s9, 2
    %s22 = sadd.s32 1, %s17
    %p23 = scmp.ge.s32.totalorder %s22, 1
    %s24 = scalar_select %p23, 0, %s22
    %s25 = sadd.s32 1, %s16
    %s26 = scalar_select %p23, %s25, %s16
    %p27 = scmp.ge.s32.totalorder %s26, 2
    %s28 = scalar_select %p27, 0, %s26
    %s29 = ssub.s32 0, %s17
    %s30 = ssub.s32 0, %s24
    %s31 = ssub.s32 %s16, %s28
    %s32 = ssub.s32 %s29, %s30
    %s33 = sor.u32 %s31, %s32
    %p34 = scmp.eq.s32.totalorder %s33, 0
    %s36 = sadd.s32 %s35, 1
    %s37 = scalar_select %p34, %s35, %s36
    %p40 = pneg %p34
    %p41 = scmp.eq.s32.totalorder %s9, 1
    %p42 = por %p40, %p41
    %p43 = scmp.ne.s32.totalorder %s35, %s38
    %p44 = scmp.eq.s32.totalorder %s9, 0
    %p45 = por %p43, %p44
    %p46 = scmp.ne.s32.totalorder %s35, %s38
    %p47 = scmp.eq.s32.totalorder %s14, 1
    %p48 = por %p46, %p47
    %p49 = scmp.ne.s32.totalorder %s38, %s39
    %p50 = scmp.eq.s32.totalorder %s14, 0
    %p51 = por %p49, %p50
    %p52 = scmp.ne.s32.totalorder %s38, %s39
    %p53 = scmp.eq.s32.totalorder %s15, 1
    %p54 = por %p52, %p53
    %p56 = scmp.ne.s32.totalorder %s39, %s55
    %p57 = scmp.eq.s32.totalorder %s15, 0
    %p58 = por %p56, %p57
    %s60 = sadd.s32 %s59, 1
    %p63 = scmp.eq.s32.totalorder %s9, 1
    %p64 = scmp.ne.s32.totalorder %s59, %s61
    %p65 = scmp.eq.s32.totalorder %s9, 0
    %p66 = por %p64, %p65
    %p67 = scmp.ne.s32.totalorder %s59, %s61
    %p68 = scmp.eq.s32.totalorder %s14, 1
    %p69 = por %p67, %p68
    %p70 = scmp.ne.s32.totalorder %s61, %s62
    %p71 = scmp.eq.s32.totalorder %s14, 0
    %p72 = por %p70, %p71
    %p73 = scmp.ne.s32.totalorder %s61, %s62
    %p74 = scmp.eq.s32.totalorder %s15, 1
    %p75 = por %p73, %p74
    %p77 = scmp.ne.s32.totalorder %s62, %s76
    %p78 = scmp.eq.s32.totalorder %s15, 0
    %p79 = por %p77, %p78
    %s81 = sadd.s32 %s80, 1
    %p84 = scmp.eq.s32.totalorder %s9, 1
    %p85 = scmp.ne.s32.totalorder %s80, %s82
    %p86 = scmp.eq.s32.totalorder %s9, 0
    %p87 = por %p85, %p86
    %p88 = scmp.ne.s32.totalorder %s80, %s82
    %p89 = scmp.eq.s32.totalorder %s14, 1
    %p90 = por %p88, %p89
    %p91 = scmp.ne.s32.totalorder %s82, %s83
    %p92 = scmp.eq.s32.totalorder %s14, 0
    %p93 = por %p91, %p92
    %p94 = scmp.ne.s32.totalorder %s82, %s83
    %p95 = scmp.eq.s32.totalorder %s15, 1
    %p96 = por %p94, %p95
    %p98 = scmp.ne.s32.totalorder %s83, %s97
    %p99 = scmp.eq.s32.totalorder %s15, 0
    %p100 = por %p98, %p99
    %s101 = ssub.s32 0, %s17
    %s102 = ssub.s32 0, %s24
    %s103 = ssub.s32 %s16, %s28
    %s104 = ssub.s32 %s101, %s102
    %s105 = sor.u32 %s103, %s104
    %p106 = scmp.eq.s32.totalorder %s105, 0
    %s108 = sadd.s32 %s107, 1
    %s109 = scalar_select %p106, %s107, %s108
    %p112 = pneg %p106
    %p113 = scmp.eq.s32.totalorder %s9, 1
    %p114 = por %p112, %p113
    %p115 = scmp.ne.s32.totalorder %s107, %s110
    %p116 = scmp.eq.s32.totalorder %s9, 0
    %p117 = por %p115, %p116
    %p118 = scmp.ne.s32.totalorder %s107, %s110
    %p119 = scmp.eq.s32.totalorder %s14, 1
    %p120 = por %p118, %p119
    %p121 = scmp.ne.s32.totalorder %s110, %s111
    %p122 = scmp.eq.s32.totalorder %s14, 0
    %p123 = por %p121, %p122
    %p124 = scmp.ne.s32.totalorder %s110, %s111
    %p125 = scmp.eq.s32.totalorder %s15, 1
    %p126 = por %p124, %p125
    %p128 = scmp.ne.s32.totalorder %s111, %s127
    %p129 = scmp.eq.s32.totalorder %s15, 0
    %p130 = por %p128, %p129
    %p131 = scmp.le.s32.totalorder 1, %s9
    %p132 = scmp.lt.s32.totalorder %s9, 3
    %p133 = pnand %p131, %p132
    %p134 = pneg %p133
    // Predicated region
    $region9: #{decoder_forward.10} parent=5 // pred_check
      _
    $region10: #{decoder_forward.10} parent=5 // pred_check_branch
      %136 = sbr.rel (%p133) target = $region12
    $region11: #{decoder_forward.10} parent=5 // pred_region
      %s137 = ssub.s32 %s9, 1
      // Predicated region
      $region13: #{decoder_forward.10} parent=11 // pred_check
        %p138 = pneg %p72
      $region14: #{decoder_forward.10} parent=11 // pred_check_branch
        %140 = sbr.rel (%p138) target = $region16
      $region15: #{decoder_forward.10} parent=11 // pred_region
        _
      $region16: #{decoder_forward.10} parent=11 // pred_fallthru
        _
      // Predicated region
      $region17: #{decoder_forward.10} parent=11 // pred_check
        %p141 = pneg %p93
      $region18: #{decoder_forward.10} parent=11 // pred_check_branch
        %143 = sbr.rel (%p141) target = $region20
      $region19: #{decoder_forward.10} parent=11 // pred_region
        _
      $region20: #{decoder_forward.10} parent=11 // pred_fallthru
        _
    $region12: #{decoder_forward.10} parent=5 // pred_fallthru
      _
    %p144 = scmp.lt.s32.totalorder %s9, 2
    // Predicated region
    $region21: #{decoder_forward.10} parent=5 // pred_check
      %p145 = pneg %p144
    $region22: #{decoder_forward.10} parent=5 // pred_check_branch
      %147 = sbr.rel (%p145) target = $region24
    $region23: #{decoder_forward.10} parent=5 // pred_region
      // Predicated region
      $region25: #{decoder_forward.10} parent=23 // pred_check
        %p148 = pneg %p45
      $region26: #{decoder_forward.10} parent=23 // pred_check_branch
        %150 = sbr.rel (%p148) target = $region28
      $region27: #{decoder_forward.10} parent=23 // pred_region
        %s151 = ssub.s32 0, %s17
        %p152 = scmp.lt.s32.totalorder %s16, 1
        %s153 = scalar_select %p152, %s16, 1
        %p154 = scmp.lt.s32.totalorder %s151, 0
        %s155 = scalar_select %p154, %s151, 0
        %s156 = sadd.s32 %s155, %s153
        %s157 = smul.addr %s156, 4
        %s158 = scalar_lea.vmem %s0, %s157
        %s159 = ssub.s32 0, %s17
      $region28: #{decoder_forward.10} parent=23 // pred_fallthru
        _
    $region24: #{decoder_forward.10} parent=5 // pred_fallthru
      _
    %p160 = scmp.le.s32.totalorder 1, %s9
    %p161 = scmp.lt.s32.totalorder %s9, 3
    %p162 = pnand %p160, %p161
    %p163 = pneg %p162
    // Predicated region
    $region29: #{decoder_forward.10} parent=5 // pred_check
      _
    $region30: #{decoder_forward.10} parent=5 // pred_check_branch
      %165 = sbr.rel (%p162) target = $region32
    $region31: #{decoder_forward.10} parent=5 // pred_region
      %s166 = ssub.s32 %s9, 1
      %s167 = ssub.s32 0, %s19
      %p168 = scmp.lt.s32.totalorder %s18, 1
      %s169 = scalar_select %p168, %s18, 1
      %p170 = scmp.lt.s32.totalorder %s167, 0
      %s171 = scalar_select %p170, %s167, 0
      %s172 = sadd.s32 %s171, %s169
      %s173 = smul.addr %s172, 4
      %s174 = scalar_lea.vmem %s0, %s173
      %p175 = pneg %p51
      %p176 = pneg %p48
      %p177 = pneg %p72
      %p178 = pneg %p69
      %p179 = pneg %p93
      %p180 = pneg %p90
      %p181 = pneg %p123
      %p182 = pneg %p120
      %s183 = ssub.s32 0, %s19
      %p184 = scmp.lt.s32.totalorder %s18, 1
      %s185 = scalar_select %p184, %s18, 1
      %p186 = scmp.lt.s32.totalorder %s183, 0
      %s187 = scalar_select %p186, %s183, 0
      %s188 = smul.addr %s185, 4
      %s189 = sadd.s32 %s187, %s188
      %s190 = smul.addr %s189, 4
      %s191 = scalar_lea.vmem %s3, %s190
      %s192 = ssub.s32 0, %s19
      %p193 = scmp.lt.s32.totalorder %s18, 1
      %s194 = scalar_select %p193, %s18, 1
      %p195 = scmp.lt.s32.totalorder %s192, 0
      %s196 = scalar_select %p195, %s192, 0
      %s197 = sadd.s32 %s196, %s194
      %s198 = smul.addr %s197, 4
      %s199 = scalar_lea.vmem %s0, %s198
      %s200 = ssub.s32 0, %s19
      %s201 = ssub.s32 0, %s19
      %p202 = scmp.lt.s32.totalorder %s18, 1
      %s203 = scalar_select %p202, %s18, 1
      %p204 = scmp.lt.s32.totalorder %s201, 0
      %s205 = scalar_select %p204, %s201, 0
      %s206 = smul.addr %s203, 4
      %s207 = sadd.s32 %s205, %s206
      %s208 = smul.addr %s207, 4
      %s209 = scalar_lea.vmem %s3, %s208
      %s210 = ssub.s32 0, %s19
      %p212 = scmp.eq.s32.totalorder %s19, 0
      // Predicated region
      $region33: #{decoder_forward.10} parent=31 // pred_check
        %p213 = pneg %p212
      $region34: #{decoder_forward.10} parent=31 // pred_check_branch
        %215 = sbr.rel (%p213) target = $region36
      $region35: #{decoder_forward.10} parent=31 // pred_region
        %vm216 = vcmask 44032
        %217 = vst.msk [vmem:[#allocation2] sm:$0xf] %vm216, 0.0
      $region36: #{decoder_forward.10} parent=31 // pred_fallthru
        _
      %v218 = vld [vmem:[%s199] sm:$0xf]
      %v219 = vld [vmem:[#allocation2] sm:$0xf]
      %221 = vrot.lane.b32.xlu0 %v219, 19
      %v222 = vpop.permute.xlu0 %221
      %vm224 = vcmask 154624
      %v225 = vsel %vm224, %v218, %v222
      %vm226 = vcmask 44032
      %227 = vst.msk [vmem:[#allocation2] sm:$0xf] %vm226, %v218
      %v228 = vpack.c.bf16 %v225, %v225
      %v230 = vrot.slane %v228, 6
      %231 = vrot.lane.b32.xlu0 %v230, 127
      %v232 = vpop.permute.xlu0 %231
      %v233 = vrot.slane %v228, 4
      %234 = vrot.lane.b32.xlu0 %v233, 126
      %v235 = vpop.permute.xlu0 %234
      %v236 = vrot.slane %v228, 2
      %237 = vrot.lane.b32.xlu0 %v236, 125
      %v238 = vpop.permute.xlu0 %237
      %239 = vrot.lane.b32.xlu0 %v228, 124
      %v240 = vpop.permute.xlu0 %239
      %241 = vrot.lane.b32.xlu0 %v230, 123
      %v242 = vpop.permute.xlu0 %241
      %243 = vrot.lane.b32.xlu0 %v233, 122
      %v244 = vpop.permute.xlu0 %243
      %vm245 = vcmask 1041408
      %v248 = vsel %vm245, %v228, %v232
      %vm249 = vcmask 1043456
      %v251 = vsel %vm249, %v248, %v235
      %vm252 = vcmask 1045504
      %v254 = vsel %vm252, %v251, %v238
      %v258 = vsel %vm245, %v240, %v242
      %v260 = vsel %vm249, %v258, %v244
      %v261 = vld [vmem:[%s1] sm:$0xf]
      %v262 = vld [vmem:[%s1 + $0x4] sm:$0xf]
      %v263 = vld [vmem:[%s1 + $0x8] sm:$0xf]
      %v264 = vld [vmem:[%s1 + $0xc] sm:$0xf]
      %v265 = vld [vmem:[%s2] sm:$0xff]
      %v266 = vld [vmem:[%s2 + $0x8] sm:$0xff]
      %v267 = vld [vmem:[%s2 + $0x10] sm:$0xff]
      %v268 = vld [vmem:[%s2 + $0x18] sm:$0xff]
      %270 = vset.pattern.permute.xlu0 0
      %271 = vperm.xlu0 %270, %v265
      %v272 = vpop.permute.xlu0 %271
      %275 = vset.pattern.permute.xlu0 0
      %276 = vperm.xlu0 %275, %v266
      %v277 = vpop.permute.xlu0 %276
      %280 = vset.pattern.permute.xlu0 0
      %281 = vperm.xlu0 %280, %v267
      %v282 = vpop.permute.xlu0 %281
      %285 = vset.pattern.permute.xlu0 0
      %286 = vperm.xlu0 %285, %v268
      %v287 = vpop.permute.xlu0 %286
      %v293 = vunpack.c.l.b16 %v261
      %v294 = vunpack.c.l.b16 %v262
      %v295 = vunpack.c.l.b16 %v263
      %v296 = vunpack.c.l.b16 %v264
      %v297 = vpack.c.b16 %v294, %v293
      %v298 = vpack.c.b16 %v296, %v295
      %vm299 = vcmask 228352
      %v301 = vsel %vm299, %v297, 0
      %v304 = vsel %vm299, %v298, 0
      %v306 = vsel %vm252, %v260, 0
      %308 = vmatprep.subr.bf16.mxu0 0
      %309 = vmatpush1.bf16.msra.mxu0 %v254
      %310 = vmatprep.subr.bf16.mxu0 0
      %311 = vmatpush1.bf16.msra.mxu0 %v306
      %312 = vmatprep.subr.bf16.mxu0 0
      %313 = vmatpush1.bf16.msra.mxu0 0
      %314 = vmatprep.subr.bf16.mxu0 0
      %315 = vmatpush1.bf16.msra.mxu0 0
      %316 = vmatprep.subr.bf16.mxu0 0
      %317 = vmatpush1.bf16.msra.mxu0 0
      %318 = vmatprep.subr.bf16.mxu0 0
      %319 = vmatpush1.bf16.msra.mxu0 0
      %320 = vmatprep.subr.bf16.mxu0 0
      %321 = vmatpush1.bf16.msra.mxu0 0
      %322 = vmatprep.subr.bf16.mxu0 0
      %323 = vmatpush1.bf16.msra.mxu0 0
      %324 = vmatprep.subr.bf16.mxu0 0
      %325 = vmatpush1.bf16.msra.mxu0 0
      %326 = vmatprep.subr.bf16.mxu0 0
      %327 = vmatpush1.bf16.msra.mxu0 0
      %328 = vmatprep.subr.bf16.mxu0 0
      %329 = vmatpush1.bf16.msra.mxu0 0
      %330 = vmatprep.subr.bf16.mxu0 0
      %331 = vmatpush1.bf16.msra.mxu0 0
      %332 = vmatprep.subr.bf16.mxu0 0
      %333 = vmatpush1.bf16.msra.mxu0 0
      %334 = vmatprep.subr.bf16.mxu0 0
      %335 = vmatpush1.bf16.msra.mxu0 0
      %336 = vmatprep.subr.bf16.mxu0 0
      %337 = vmatpush1.bf16.msra.mxu0 0
      %338 = vmatprep.subr.bf16.mxu0 0
      %339 = vmatpush1.bf16.msra.mxu0 0
      %340 = vmatprep.mubr.bf16.mxu0 0
      %341 = vmatmul.mubr.bf16.gmra.mrb[0].mxu0 %v301
      %v342 = vpop.f32.mrb[0].mxu0
      %v343 = vadd.f32 %v272, %v342
      %v344 = vpop.f32.mrb[0].mxu0
      %v345 = vpop.f32.mrb[0].mxu0
      %v346 = vadd.f32 %v277, %v345
      %v347 = vpop.f32.mrb[0].mxu0
      %348 = vmatprep.mubr.bf16.mxu0 0
      %349 = vmatmul.mubr.bf16.gmra.mrb[0].mxu0 %v304
      %v350 = vpop.f32.mrb[0].mxu0
      %v351 = vadd.f32 %v282, %v350
      %v352 = vpop.f32.mrb[0].mxu0
      %v353 = vpop.f32.mrb[0].mxu0
      %v354 = vadd.f32 %v287, %v353
      %v355 = vpop.f32.mrb[0].mxu0
      %356 = vdwg.mxu0
      %v357 = vpack.c.bf16 %v346, %v343
      %v358 = vpack.c.bf16 %v354, %v351
      %v361 = vunpack.c.l.b16 %v357
      %v362 = vunpack.c.h.b16 %v357
      %v363 = vunpack.c.l.b16 %v358
      %v364 = vunpack.c.h.b16 %v358
      %v365 = vpack.c.b16 %v361, %v361
      %v366 = vpack.c.b16 %v362, %v362
      %v367 = vpack.c.b16 %v363, %v363
      %v368 = vpack.c.b16 %v364, %v364
      %vm373 = vcmask 150528
      %374 = vst.msk [vmem:[%s209] sm:$0xf] %vm373, %v365
      %375 = vst.msk [vmem:[%s209 + $0x4] sm:$0xf] %vm373, %v366
      %376 = vst.msk [vmem:[%s209 + $0x8] sm:$0xf] %vm373, %v367
      %377 = vst.msk [vmem:[%s209 + $0xc] sm:$0xf] %vm373, %v368
      %s378 = ssub.s32 0, %s19
      %p379 = scmp.lt.s32.totalorder %s18, 1
      %s380 = scalar_select %p379, %s18, 1
      %p381 = scmp.lt.s32.totalorder %s378, 0
      %s382 = scalar_select %p381, %s378, 0
      %s383 = smul.addr %s380, 4
      %s384 = sadd.s32 %s382, %s383
      %s385 = smul.addr %s384, 4
      %s386 = scalar_lea.vmem %s3, %s385
      // Predicated region
      $region37: #{decoder_forward.10} parent=31 // pred_check
        %p387 = pneg %p120
      $region38: #{decoder_forward.10} parent=31 // pred_check_branch
        %389 = sbr.rel (%p387) target = $region40
      $region39: #{decoder_forward.10} parent=31 // pred_region
        %s390 = ssub.s32 0, %s19
      $region40: #{decoder_forward.10} parent=31 // pred_fallthru
        _
    $region32: #{decoder_forward.10} parent=5 // pred_fallthru
      _
    %p391 = scmp.le.s32.totalorder 2, %s9
    // Predicated region
    $region41: #{decoder_forward.10} parent=5 // pred_check
      %p392 = pneg %p391
    $region42: #{decoder_forward.10} parent=5 // pred_check_branch
      %394 = sbr.rel (%p392) target = $region44
    $region43: #{decoder_forward.10} parent=5 // pred_region
      %s395 = ssub.s32 %s9, 2
      // Predicated region
      $region45: #{decoder_forward.10} parent=43 // pred_check
        %p396 = pneg %p126
      $region46: #{decoder_forward.10} parent=43 // pred_check_branch
        %398 = sbr.rel (%p396) target = $region48
      $region47: #{decoder_forward.10} parent=43 // pred_region
        %s399 = ssub.s32 0, %s21
        %p400 = scmp.lt.s32.totalorder %s20, 1
        %s401 = scalar_select %p400, %s20, 1
        %p402 = scmp.lt.s32.totalorder %s399, 0
        %s403 = scalar_select %p402, %s399, 0
        %s404 = smul.addr %s401, 4
        %s405 = sadd.s32 %s403, %s404
        %s406 = smul.addr %s405, 4
        %s407 = scalar_lea.vmem %s3, %s406
      $region48: #{decoder_forward.10} parent=43 // pred_fallthru
        _
    $region44: #{decoder_forward.10} parent=5 // pred_fallthru
      _
  $region6: #{decoder_forward.10} parent=0 // loop_footer
    %s13 = sadd.s32 1, %s9
  $region7: #{decoder_forward.10} parent=0 // loop_footer_branch
    %8 = sbr.rel target = $region3
  $region8: #{decoder_forward.10} parent=0 // loop_exit
    _

// kernel: decoder_forward.11
$region0: #{decoder_forward.11}
  #allocation0 [shape = 'u32[]', space=smem, size = 0x4, offset = 0x4, fixed_abs, tag = 'smem constant byte address 0x4 - core index']
  #allocation1 [shape = 'u32[144,128]{1,0:T(1,128)}', space=vmem, size = 0x12000, scoped, tag = 'internal scratch']
  #allocation2 [shape = 'bf16[32,2]{1,0:T(16,128)(2,1)}', space=vmem, size = 0x2000, scoped, tag = 'scratch operand']
  %s0 = inlined_call_operand.vmem [shape: bf16[2,32,17], index: 0, kind: input, shape index: {}]
  %s1 = inlined_call_operand.vmem [shape: bf16[32,96], index: 1, kind: input, shape index: {}]
  %s2 = inlined_call_operand.vmem [shape: f32[32,1], index: 2, kind: input, shape index: {}]
  %s3 = inlined_call_operand.vmem [shape: f32[32,1], index: 3, kind: input, shape index: {}]
  %s4 = inlined_call_operand.vmem [shape: bf16[2,32,17], index: 4, kind: output, shape index: {}]
  %s5 = sld [smem:[#allocation0]]
  $region53: #{decoder_forward.11} parent=0
    _
  %s7 = ssub.s32 1, %s5
  %s8 = scalar_select 0, %s7, %s5
  loop: start=0, step=1, limit=4
  $region2: #{decoder_forward.11} parent=0 // loop_pre_header
    _
  $region3: #{decoder_forward.11} parent=0 // loop_header
    %s10 = sphi 0, %s14
    %p11 = scmp.ge.s32.totalorder %s10, 4
    %s17 = sphi 0, %s29
    %s18 = sphi 0, %s25
    %s19 = sphi 0, %s17
    %s20 = sphi 0, %s18
    %s21 = sphi 0, %s19
    %s22 = sphi 0, %s20
    %s36 = sphi 0, %s38
    %s39 = sphi 0, %s36
    %s40 = sphi 0, %s39
    %s56 = sphi 0, %s40
    %s60 = sphi 0, %s60
    %s62 = sphi 0, %s60
    %s63 = sphi 0, %s62
    %s77 = sphi 0, %s63
    %s81 = sphi 0, %s81
    %s83 = sphi 0, %s81
    %s84 = sphi 0, %s83
    %s98 = sphi 0, %s84
    %s102 = sphi 0, %s102
    %s104 = sphi 0, %s102
    %s105 = sphi 0, %s104
    %s119 = sphi 0, %s105
    %s129 = sphi 0, %s131
    %s132 = sphi 0, %s129
    %s133 = sphi 0, %s132
    %s149 = sphi 0, %s133
  $region4: #{decoder_forward.11} parent=0 // loop_header_branch
    %13 = sbr.rel (%p11) target = $region8
  $region5: #{decoder_forward.11} parent=0 // loop_body
    %s15 = ssub.s32 %s10, 1
    %s16 = ssub.s32 %s10, 2
    %s23 = sadd.s32 1, %s18
    %p24 = scmp.ge.s32.totalorder %s23, 1
    %s25 = scalar_select %p24, 0, %s23
    %s26 = sadd.s32 1, %s17
    %s27 = scalar_select %p24, %s26, %s17
    %p28 = scmp.ge.s32.totalorder %s27, 2
    %s29 = scalar_select %p28, 0, %s27
    %s30 = ssub.s32 0, %s18
    %s31 = ssub.s32 0, %s25
    %s32 = ssub.s32 %s17, %s29
    %s33 = ssub.s32 %s30, %s31
    %s34 = sor.u32 %s32, %s33
    %p35 = scmp.eq.s32.totalorder %s34, 0
    %s37 = sadd.s32 %s36, 1
    %s38 = scalar_select %p35, %s36, %s37
    %p41 = pneg %p35
    %p42 = scmp.eq.s32.totalorder %s10, 1
    %p43 = por %p41, %p42
    %p44 = scmp.ne.s32.totalorder %s36, %s39
    %p45 = scmp.eq.s32.totalorder %s10, 0
    %p46 = por %p44, %p45
    %p47 = scmp.ne.s32.totalorder %s36, %s39
    %p48 = scmp.eq.s32.totalorder %s15, 1
    %p49 = por %p47, %p48
    %p50 = scmp.ne.s32.totalorder %s39, %s40
    %p51 = scmp.eq.s32.totalorder %s15, 0
    %p52 = por %p50, %p51
    %p53 = scmp.ne.s32.totalorder %s39, %s40
    %p54 = scmp.eq.s32.totalorder %s16, 1
    %p55 = por %p53, %p54
    %p57 = scmp.ne.s32.totalorder %s40, %s56
    %p58 = scmp.eq.s32.totalorder %s16, 0
    %p59 = por %p57, %p58
    %s61 = sadd.s32 %s60, 1
    %p64 = scmp.eq.s32.totalorder %s10, 1
    %p65 = scmp.ne.s32.totalorder %s60, %s62
    %p66 = scmp.eq.s32.totalorder %s10, 0
    %p67 = por %p65, %p66
    %p68 = scmp.ne.s32.totalorder %s60, %s62
    %p69 = scmp.eq.s32.totalorder %s15, 1
    %p70 = por %p68, %p69
    %p71 = scmp.ne.s32.totalorder %s62, %s63
    %p72 = scmp.eq.s32.totalorder %s15, 0
    %p73 = por %p71, %p72
    %p74 = scmp.ne.s32.totalorder %s62, %s63
    %p75 = scmp.eq.s32.totalorder %s16, 1
    %p76 = por %p74, %p75
    %p78 = scmp.ne.s32.totalorder %s63, %s77
    %p79 = scmp.eq.s32.totalorder %s16, 0
    %p80 = por %p78, %p79
    %s82 = sadd.s32 %s81, 1
    %p85 = scmp.eq.s32.totalorder %s10, 1
    %p86 = scmp.ne.s32.totalorder %s81, %s83
    %p87 = scmp.eq.s32.totalorder %s10, 0
    %p88 = por %p86, %p87
    %p89 = scmp.ne.s32.totalorder %s81, %s83
    %p90 = scmp.eq.s32.totalorder %s15, 1
    %p91 = por %p89, %p90
    %p92 = scmp.ne.s32.totalorder %s83, %s84
    %p93 = scmp.eq.s32.totalorder %s15, 0
    %p94 = por %p92, %p93
    %p95 = scmp.ne.s32.totalorder %s83, %s84
    %p96 = scmp.eq.s32.totalorder %s16, 1
    %p97 = por %p95, %p96
    %p99 = scmp.ne.s32.totalorder %s84, %s98
    %p100 = scmp.eq.s32.totalorder %s16, 0
    %p101 = por %p99, %p100
    %s103 = sadd.s32 %s102, 1
    %p106 = scmp.eq.s32.totalorder %s10, 1
    %p107 = scmp.ne.s32.totalorder %s102, %s104
    %p108 = scmp.eq.s32.totalorder %s10, 0
    %p109 = por %p107, %p108
    %p110 = scmp.ne.s32.totalorder %s102, %s104
    %p111 = scmp.eq.s32.totalorder %s15, 1
    %p112 = por %p110, %p111
    %p113 = scmp.ne.s32.totalorder %s104, %s105
    %p114 = scmp.eq.s32.totalorder %s15, 0
    %p115 = por %p113, %p114
    %p116 = scmp.ne.s32.totalorder %s104, %s105
    %p117 = scmp.eq.s32.totalorder %s16, 1
    %p118 = por %p116, %p117
    %p120 = scmp.ne.s32.totalorder %s105, %s119
    %p121 = scmp.eq.s32.totalorder %s16, 0
    %p122 = por %p120, %p121
    %s123 = ssub.s32 0, %s18
    %s124 = ssub.s32 0, %s25
    %s125 = ssub.s32 %s17, %s29
    %s126 = ssub.s32 %s123, %s124
    %s127 = sor.u32 %s125, %s126
    %p128 = scmp.eq.s32.totalorder %s127, 0
    %s130 = sadd.s32 %s129, 1
    %s131 = scalar_select %p128, %s129, %s130
    %p134 = pneg %p128
    %p135 = scmp.eq.s32.totalorder %s10, 1
    %p136 = por %p134, %p135
    %p137 = scmp.ne.s32.totalorder %s129, %s132
    %p138 = scmp.eq.s32.totalorder %s10, 0
    %p139 = por %p137, %p138
    %p140 = scmp.ne.s32.totalorder %s129, %s132
    %p141 = scmp.eq.s32.totalorder %s15, 1
    %p142 = por %p140, %p141
    %p143 = scmp.ne.s32.totalorder %s132, %s133
    %p144 = scmp.eq.s32.totalorder %s15, 0
    %p145 = por %p143, %p144
    %p146 = scmp.ne.s32.totalorder %s132, %s133
    %p147 = scmp.eq.s32.totalorder %s16, 1
    %p148 = por %p146, %p147
    %p150 = scmp.ne.s32.totalorder %s133, %s149
    %p151 = scmp.eq.s32.totalorder %s16, 0
    %p152 = por %p150, %p151
    %p153 = scmp.le.s32.totalorder 1, %s10
    %p154 = scmp.lt.s32.totalorder %s10, 3
    %p155 = pnand %p153, %p154
    %p156 = pneg %p155
    // Predicated region
    $region9: #{decoder_forward.11} parent=5 // pred_check
      _
    $region10: #{decoder_forward.11} parent=5 // pred_check_branch
      %158 = sbr.rel (%p155) target = $region12
    $region11: #{decoder_forward.11} parent=5 // pred_region
      %s159 = ssub.s32 %s10, 1
      // Predicated region
      $region13: #{decoder_forward.11} parent=11 // pred_check
        %p160 = pneg %p73
      $region14: #{decoder_forward.11} parent=11 // pred_check_branch
        %162 = sbr.rel (%p160) target = $region16
      $region15: #{decoder_forward.11} parent=11 // pred_region
        _
      $region16: #{decoder_forward.11} parent=11 // pred_fallthru
        _
      // Predicated region
      $region17: #{decoder_forward.11} parent=11 // pred_check
        %p163 = pneg %p94
      $region18: #{decoder_forward.11} parent=11 // pred_check_branch
        %165 = sbr.rel (%p163) target = $region20
      $region19: #{decoder_forward.11} parent=11 // pred_region
        _
      $region20: #{decoder_forward.11} parent=11 // pred_fallthru
        _
      // Predicated region
      $region21: #{decoder_forward.11} parent=11 // pred_check
        %p166 = pneg %p115
      $region22: #{decoder_forward.11} parent=11 // pred_check_branch
        %168 = sbr.rel (%p166) target = $region24
      $region23: #{decoder_forward.11} parent=11 // pred_region
        _
      $region24: #{decoder_forward.11} parent=11 // pred_fallthru
        _
    $region12: #{decoder_forward.11} parent=5 // pred_fallthru
      _
    %p169 = scmp.lt.s32.totalorder %s10, 2
    // Predicated region
    $region25: #{decoder_forward.11} parent=5 // pred_check
      %p170 = pneg %p169
    $region26: #{decoder_forward.11} parent=5 // pred_check_branch
      %172 = sbr.rel (%p170) target = $region28
    $region27: #{decoder_forward.11} parent=5 // pred_region
      // Predicated region
      $region29: #{decoder_forward.11} parent=27 // pred_check
        %p173 = pneg %p46
      $region30: #{decoder_forward.11} parent=27 // pred_check_branch
        %175 = sbr.rel (%p173) target = $region32
      $region31: #{decoder_forward.11} parent=27 // pred_region
        %s176 = ssub.s32 0, %s18
        %p177 = scmp.lt.s32.totalorder %s17, 1
        %s178 = scalar_select %p177, %s17, 1
        %p179 = scmp.lt.s32.totalorder %s176, 0
        %s180 = scalar_select %p179, %s176, 0
        %s181 = smul.addr %s178, 4
        %s182 = sadd.s32 %s180, %s181
        %s183 = smul.addr %s182, 4
        %s184 = scalar_lea.vmem %s0, %s183
        %s185 = ssub.s32 0, %s18
      $region32: #{decoder_forward.11} parent=27 // pred_fallthru
        _
    $region28: #{decoder_forward.11} parent=5 // pred_fallthru
      _
    %p186 = scmp.le.s32.totalorder 1, %s10
    %p187 = scmp.lt.s32.totalorder %s10, 3
    %p188 = pnand %p186, %p187
    %p189 = pneg %p188
    // Predicated region
    $region33: #{decoder_forward.11} parent=5 // pred_check
      _
    $region34: #{decoder_forward.11} parent=5 // pred_check_branch
      %191 = sbr.rel (%p188) target = $region36
    $region35: #{decoder_forward.11} parent=5 // pred_region
      %s192 = ssub.s32 %s10, 1
      %s193 = ssub.s32 0, %s20
      %p194 = scmp.lt.s32.totalorder %s19, 1
      %s195 = scalar_select %p194, %s19, 1
      %p196 = scmp.lt.s32.totalorder %s193, 0
      %s197 = scalar_select %p196, %s193, 0
      %s198 = smul.addr %s195, 4
      %s199 = sadd.s32 %s197, %s198
      %s200 = smul.addr %s199, 4
      %s201 = scalar_lea.vmem %s0, %s200
      %p202 = pneg %p52
      %p203 = pneg %p49
      %p204 = pneg %p73
      %p205 = pneg %p70
      %p206 = pneg %p94
      %p207 = pneg %p91
      %p208 = pneg %p115
      %p209 = pneg %p112
      %p210 = pneg %p145
      %p211 = pneg %p142
      %s212 = ssub.s32 0, %s20
      %p213 = scmp.lt.s32.totalorder %s19, 1
      %s214 = scalar_select %p213, %s19, 1
      %p215 = scmp.lt.s32.totalorder %s212, 0
      %s216 = scalar_select %p215, %s212, 0
      %s217 = smul.addr %s214, 4
      %s218 = sadd.s32 %s216, %s217
      %s219 = smul.addr %s218, 4
      %s220 = scalar_lea.vmem %s4, %s219
      %s221 = ssub.s32 0, %s20
      %p222 = scmp.lt.s32.totalorder %s19, 1
      %s223 = scalar_select %p222, %s19, 1
      %p224 = scmp.lt.s32.totalorder %s221, 0
      %s225 = scalar_select %p224, %s221, 0
      %s226 = smul.addr %s223, 4
      %s227 = sadd.s32 %s225, %s226
      %s228 = smul.addr %s227, 4
      %s229 = scalar_lea.vmem %s0, %s228
      %s230 = ssub.s32 0, %s20
      %s231 = ssub.s32 0, %s20
      %p232 = scmp.lt.s32.totalorder %s19, 1
      %s233 = scalar_select %p232, %s19, 1
      %p234 = scmp.lt.s32.totalorder %s231, 0
      %s235 = scalar_select %p234, %s231, 0
      %s236 = smul.addr %s233, 4
      %s237 = sadd.s32 %s235, %s236
      %s238 = smul.addr %s237, 4
      %s239 = scalar_lea.vmem %s4, %s238
      %s240 = ssub.s32 0, %s20
      %p242 = scmp.eq.s32.totalorder %s20, 0
      // Predicated region
      $region37: #{decoder_forward.11} parent=35 // pred_check
        %p243 = pneg %p242
      $region38: #{decoder_forward.11} parent=35 // pred_check_branch
        %245 = sbr.rel (%p243) target = $region40
      $region39: #{decoder_forward.11} parent=35 // pred_region
        %vm246 = vcmask 15360
        %247 = vst.msk [vmem:[#allocation2] sm:$0xff] %vm246, 0
        %248 = vst.msk [vmem:[#allocation2 + $0x8] sm:$0xff] %vm246, 0
      $region40: #{decoder_forward.11} parent=35 // pred_fallthru
        _
      %v249 = vld [vmem:[%s229] sm:$0xf]
      %v250 = vld [vmem:[%s229 + $0x4] sm:$0xf]
      %v251 = vld [vmem:[%s229 + $0x8] sm:$0xf]
      %v252 = vld [vmem:[%s229 + $0xc] sm:$0xf]
      %v253 = vld [vmem:[#allocation2] sm:$0xff]
      %v254 = vld [vmem:[#allocation2 + $0x8] sm:$0xff]
      %v259 = vunpack.c.l.b16 %v249
      %v260 = vunpack.c.l.b16 %v250
      %v261 = vunpack.c.l.b16 %v251
      %v262 = vunpack.c.l.b16 %v252
      %v263 = vpack.c.b16 %v260, %v259
      %v264 = vpack.c.b16 %v262, %v261
      %267 = vrot.lane.b32.xlu0 %v253, 17
      %v268 = vpop.permute.xlu0 %267
      %269 = vrot.lane.b32.xlu0 %v254, 17
      %v270 = vpop.permute.xlu0 %269
      %vm271 = vcmask 138240
      %v274 = vsel %vm271, %v263, %v268
      %v278 = vsel %vm271, %v264, %v270
      %vm282 = vcmask 15360
      %283 = vst.msk [vmem:[#allocation2] sm:$0xff] %vm282, %v263
      %284 = vst.msk [vmem:[#allocation2 + $0x8] sm:$0xff] %vm282, %v264
      %v285 = vunpack.c.l.bf16 %v274
      %v286 = vunpack.c.h.bf16 %v274
      %v287 = vunpack.c.l.bf16 %v278
      %v288 = vunpack.c.h.bf16 %v278
      %v289 = vld [vmem:[%s3] sm:$0xff]
      %v290 = vld [vmem:[%s3 + $0x8] sm:$0xff]
      %v291 = vld [vmem:[%s3 + $0x10] sm:$0xff]
      %v292 = vld [vmem:[%s3 + $0x18] sm:$0xff]
      %v293 = vadd.f32 %v289, 1e-09
      %v294 = vadd.f32 %v290, 1e-09
      %v295 = vadd.f32 %v291, 1e-09
      %v296 = vadd.f32 %v292, 1e-09
      %v297 = vrcp.pop %v293
      %v298 = vrcp.pop %v294
      %v299 = vrcp.pop %v295
      %v300 = vrcp.pop %v296
      %v301 = vmul.f32 %v297, 0.5
      %v302 = vmul.f32 %v298, 0.5
      %v303 = vmul.f32 %v299, 0.5
      %v304 = vmul.f32 %v300, 0.5
      %v305 = vmul.f32 %v289, 2.0
      %v306 = vmul.f32 %v290, 2.0
      %v307 = vmul.f32 %v291, 2.0
      %v308 = vmul.f32 %v292, 2.0
      %310 = vset.pattern.permute.xlu0 0
      %311 = vperm.xlu0 %310, %v305
      %v312 = vpop.permute.xlu0 %311
      %315 = vset.pattern.permute.xlu0 0
      %316 = vperm.xlu0 %315, %v306
      %v317 = vpop.permute.xlu0 %316
      %320 = vset.pattern.permute.xlu0 0
      %321 = vperm.xlu0 %320, %v307
      %v322 = vpop.permute.xlu0 %321
      %325 = vset.pattern.permute.xlu0 0
      %326 = vperm.xlu0 %325, %v308
      %v327 = vpop.permute.xlu0 %326
      %v329 = vmul.f32 %v312, %v285
      %v330 = vmul.f32 %v317, %v286
      %v331 = vmul.f32 %v322, %v287
      %v332 = vmul.f32 %v327, %v288
      %v333 = vand.u32 2147483647, %v329
      %vm334 = vcmp.le.f32.partialorder %v333, 0.7853982
      %vm335 = vcmp.lt.s32.totalorder %v329, 0
      %v336 = vand.u32 %v329, 2139095040
      %v337 = vshrl.u32 %v336, 23
      %v338 = vsub.s32 %v337, 127
      %v339 = vand.u32 2147483647, %v329
      %v340 = vand.u32 %v339, 8388607
      %v341 = vor.u32 %v340, 8388608
      %v342 = vsub.s32 0, %v341
      %v343 = vadd.s32 %v338, 1
      %vm344 = vcmp.gt.s32.totalorder %v343, 0
      %v345 = vsel %vm344, %v343, 0
      %v346 = vshrl.u32 %v345, 5
      %v347 = vand.u32 %v345, 31
      %v348 = vsub.s32 32, %v347
      %v349 = vshrl.u32 683565275, %v348
      %v350 = vshll.u32 683565275, %v347
      %v351 = vshrl.u32 2475754826, %v348
      %v352 = vor.u32 %v350, %v351
      %v353 = vshll.u32 2475754826, %v347
      %v354 = vshrl.u32 2131351028, %v348
      %v355 = vor.u32 %v353, %v354
      %v356 = vshll.u32 2131351028, %v347
      %v357 = vshrl.u32 2102212464, %v348
      %v358 = vor.u32 %v356, %v357
      %v359 = vshll.u32 2102212464, %v347
      %v360 = vshrl.u32 920167782, %v348
      %v361 = vor.u32 %v359, %v360
      %v362 = vshll.u32 920167782, %v347
      %v363 = vshrl.u32 1326507024, %v348
      %v364 = vor.u32 %v362, %v363
      %vm365 = vcmp.lt.s32.totalorder %v346, 1
      %vm366 = vcmp.lt.s32.totalorder %v346, 2
      %vm367 = vcmp.lt.s32.totalorder %v346, 3
      %vm368 = vcmp.lt.s32.totalorder %v346, 4
      %v369 = vsel %vm365, %v349, %v352
      %v370 = vsel %vm368, %v358, 2102212464
      %v371 = vsel %vm367, %v355, %v370
      %v372 = vsel %vm366, %v369, %v371
      %v373 = vsel %vm365, %v352, %v355
      %v374 = vsel %vm368, %v361, 920167782
      %v375 = vsel %vm367, %v358, %v374
      %v376 = vsel %vm366, %v373, %v375
      %v377 = vsel %vm365, %v355, %v358
      %v378 = vsel %vm368, %v364, 1326507024
      %v379 = vsel %vm367, %v361, %v378
      %v380 = vsel %vm366, %v377, %v379
      %v381 = vshll.u32 %v341, 8
      %v382 = vmul.u32.u64.compose %v381, %v380
      %v383 = vextract.low.u32 %v382
      %v384 = vextract.high.u32 %v382
      %v385 = vmul.u32.u64.compose %v381, %v376
      %v386 = vextract.low.u32 %v385
      %v387 = vextract.high.u32 %v385
      %v388 = vmul.u32 %v381, %v372
      %v389 = vadd.s32 %v384, %v386
      %vm390 = vc.u32 %v384, %v386
      %v391 = vadd.s32 %v387, 1
      %v392 = vsel %vm390, %v391, %v387
      %v393 = vadd.s32 %v388, %v392
      %v394 = vadd.s32 %v393, 536870912
      %v395 = vshrl.u32 %v394, 30
      %v396 = vshll.u32 %v395, 30
      %v397 = vsub.s32 %v393, %v396
      %vm398 = vcmp.lt.s32.totalorder %v397, 0
      %v399 = vsub.s32 0, %v397
      %v400 = vsel %vm398, %v399, %v397
      %v401 = vclz %v400
      %v402 = vsub.s32 %v401, 2
      %vm403 = vcmp.gt.s32.totalorder 0, %v402
      %v404 = vsel %vm403, 0, %v402
      %v405 = vsub.s32 32, %v404
      %v406 = vshll.u32 %v397, %v404
      %v407 = vshrl.u32 %v389, %v405
      %v408 = vor.u32 %v406, %v407
      %v409 = vsub.s32 4294967266, %v404
      %v410 = vadd.s32 %v409, 127
      %v411 = vshll.u32 %v410, 23
      %v412 = vor.u32 4788187, %v411
      %v413 = vand.u32 2147483647, %v412
      %v415 = vcvt.s32.f32 %v408
      %v416 = vmul.f32 %v415, %v413
      %v417 = vxor.u32 %v416, 2147483648
      %v418 = vsel %vm335, %v417, %v416
      %v419 = vsub.s32 4, %v395
      %v420 = vsel %vm335, %v419, %v395
      %v421 = vsel %vm334, %v329, %v418
      %v422 = vsel %vm334, 0, %v420
      %v423 = vcosq.f32.pop %v421
      %v424 = vsinq.f32.pop %v421
      %vm425 = vweird.f32 %v329
      %v426 = vand.u32 %v422, 3
      %vm427 = vcmp.lt.s32.totalorder %v426, 2
      %vm428 = vcmp.eq.s32.totalorder %v426, 0
      %v429 = vxor.u32 %v424, 2147483648
      %v430 = vsel %vm428, %v423, %v429
      %vm431 = vcmp.eq.s32.totalorder %v426, 2
      %v432 = vxor.u32 %v423, 2147483648
      %v433 = vsel %vm431, %v432, %v424
      %v434 = vsel %vm427, %v430, %v433
      %v435 = vsel %vm425, nan, %v434
      %v436 = vand.u32 2147483647, %v330
      %vm437 = vcmp.le.f32.partialorder %v436, 0.7853982
      %vm438 = vcmp.lt.s32.totalorder %v330, 0
      %v439 = vand.u32 %v330, 2139095040
      %v440 = vshrl.u32 %v439, 23
      %v441 = vsub.s32 %v440, 127
      %v442 = vand.u32 2147483647, %v330
      %v443 = vand.u32 %v442, 8388607
      %v444 = vor.u32 %v443, 8388608
      %v445 = vsub.s32 0, %v444
      %v446 = vadd.s32 %v441, 1
      %vm447 = vcmp.gt.s32.totalorder %v446, 0
      %v448 = vsel %vm447, %v446, 0
      %v449 = vshrl.u32 %v448, 5
      %v450 = vand.u32 %v448, 31
      %v451 = vsub.s32 32, %v450
      %v452 = vshrl.u32 683565275, %v451
      %v453 = vshll.u32 683565275, %v450
      %v454 = vshrl.u32 2475754826, %v451
      %v455 = vor.u32 %v453, %v454
      %v456 = vshll.u32 2475754826, %v450
      %v457 = vshrl.u32 2131351028, %v451
      %v458 = vor.u32 %v456, %v457
      %v459 = vshll.u32 2131351028, %v450
      %v460 = vshrl.u32 2102212464, %v451
      %v461 = vor.u32 %v459, %v460
      %v462 = vshll.u32 2102212464, %v450
      %v463 = vshrl.u32 920167782, %v451
      %v464 = vor.u32 %v462, %v463
      %v465 = vshll.u32 920167782, %v450
      %v466 = vshrl.u32 1326507024, %v451
      %v467 = vor.u32 %v465, %v466
      %vm468 = vcmp.lt.s32.totalorder %v449, 1
      %vm469 = vcmp.lt.s32.totalorder %v449, 2
      %vm470 = vcmp.lt.s32.totalorder %v449, 3
      %vm471 = vcmp.lt.s32.totalorder %v449, 4
      %v472 = vsel %vm468, %v452, %v455
      %v473 = vsel %vm471, %v461, 2102212464
      %v474 = vsel %vm470, %v458, %v473
      %v475 = vsel %vm469, %v472, %v474
      %v476 = vsel %vm468, %v455, %v458
      %v477 = vsel %vm471, %v464, 920167782
      %v478 = vsel %vm470, %v461, %v477
      %v479 = vsel %vm469, %v476, %v478
      %v480 = vsel %vm468, %v458, %v461
      %v481 = vsel %vm471, %v467, 1326507024
      %v482 = vsel %vm470, %v464, %v481
      %v483 = vsel %vm469, %v480, %v482
      %v484 = vshll.u32 %v444, 8
      %v485 = vmul.u32.u64.compose %v484, %v483
      %v486 = vextract.low.u32 %v485
      %v487 = vextract.high.u32 %v485
      %v488 = vmul.u32.u64.compose %v484, %v479
      %v489 = vextract.low.u32 %v488
      %v490 = vextract.high.u32 %v488
      %v491 = vmul.u32 %v484, %v475
      %v492 = vadd.s32 %v487, %v489
      %vm493 = vc.u32 %v487, %v489
      %v494 = vadd.s32 %v490, 1
      %v495 = vsel %vm493, %v494, %v490
      %v496 = vadd.s32 %v491, %v495
      %v497 = vadd.s32 %v496, 536870912
      %v498 = vshrl.u32 %v497, 30
      %v499 = vshll.u32 %v498, 30
      %v500 = vsub.s32 %v496, %v499
      %vm501 = vcmp.lt.s32.totalorder %v500, 0
      %v502 = vsub.s32 0, %v500
      %v503 = vsel %vm501, %v502, %v500
      %v504 = vclz %v503
      %v505 = vsub.s32 %v504, 2
      %vm506 = vcmp.gt.s32.totalorder 0, %v505
      %v507 = vsel %vm506, 0, %v505
      %v508 = vsub.s32 32, %v507
      %v509 = vshll.u32 %v500, %v507
      %v510 = vshrl.u32 %v492, %v508
      %v511 = vor.u32 %v509, %v510
      %v512 = vsub.s32 4294967266, %v507
      %v513 = vadd.s32 %v512, 127
      %v514 = vshll.u32 %v513, 23
      %v515 = vor.u32 4788187, %v514
      %v516 = vand.u32 2147483647, %v515
      %v518 = vcvt.s32.f32 %v511
      %v519 = vmul.f32 %v518, %v516
      %v520 = vxor.u32 %v519, 2147483648
      %v521 = vsel %vm438, %v520, %v519
      %v522 = vsub.s32 4, %v498
      %v523 = vsel %vm438, %v522, %v498
      %v524 = vsel %vm437, %v330, %v521
      %v525 = vsel %vm437, 0, %v523
      %v526 = vcosq.f32.pop %v524
      %v527 = vsinq.f32.pop %v524
      %vm528 = vweird.f32 %v330
      %v529 = vand.u32 %v525, 3
      %vm530 = vcmp.lt.s32.totalorder %v529, 2
      %vm531 = vcmp.eq.s32.totalorder %v529, 0
      %v532 = vxor.u32 %v527, 2147483648
      %v533 = vsel %vm531, %v526, %v532
      %vm534 = vcmp.eq.s32.totalorder %v529, 2
      %v535 = vxor.u32 %v526, 2147483648
      %v536 = vsel %vm534, %v535, %v527
      %v537 = vsel %vm530, %v533, %v536
      %v538 = vsel %vm528, nan, %v537
      %v539 = vand.u32 2147483647, %v331
      %vm540 = vcmp.le.f32.partialorder %v539, 0.7853982
      %vm541 = vcmp.lt.s32.totalorder %v331, 0
      %v542 = vand.u32 %v331, 2139095040
      %v543 = vshrl.u32 %v542, 23
      %v544 = vsub.s32 %v543, 127
      %v545 = vand.u32 2147483647, %v331
      %v546 = vand.u32 %v545, 8388607
      %v547 = vor.u32 %v546, 8388608
      %v548 = vsub.s32 0, %v547
      %v549 = vadd.s32 %v544, 1
      %vm550 = vcmp.gt.s32.totalorder %v549, 0
      %v551 = vsel %vm550, %v549, 0
      %v552 = vshrl.u32 %v551, 5
      %v553 = vand.u32 %v551, 31
      %v554 = vsub.s32 32, %v553
      %v555 = vshrl.u32 683565275, %v554
      %v556 = vshll.u32 683565275, %v553
      %v557 = vshrl.u32 2475754826, %v554
      %v558 = vor.u32 %v556, %v557
      %v559 = vshll.u32 2475754826, %v553
      %v560 = vshrl.u32 2131351028, %v554
      %v561 = vor.u32 %v559, %v560
      %v562 = vshll.u32 2131351028, %v553
      %v563 = vshrl.u32 2102212464, %v554
      %v564 = vor.u32 %v562, %v563
      %v565 = vshll.u32 2102212464, %v553
      %v566 = vshrl.u32 920167782, %v554
      %v567 = vor.u32 %v565, %v566
      %v568 = vshll.u32 920167782, %v553
      %v569 = vshrl.u32 1326507024, %v554
      %v570 = vor.u32 %v568, %v569
      %vm571 = vcmp.lt.s32.totalorder %v552, 1
      %vm572 = vcmp.lt.s32.totalorder %v552, 2
      %vm573 = vcmp.lt.s32.totalorder %v552, 3
      %vm574 = vcmp.lt.s32.totalorder %v552, 4
      %v575 = vsel %vm571, %v555, %v558
      %v576 = vsel %vm574, %v564, 2102212464
      %v577 = vsel %vm573, %v561, %v576
      %v578 = vsel %vm572, %v575, %v577
      %v579 = vsel %vm571, %v558, %v561
      %v580 = vsel %vm574, %v567, 920167782
      %v581 = vsel %vm573, %v564, %v580
      %v582 = vsel %vm572, %v579, %v581
      %v583 = vsel %vm571, %v561, %v564
      %v584 = vsel %vm574, %v570, 1326507024
      %v585 = vsel %vm573, %v567, %v584
      %v586 = vsel %vm572, %v583, %v585
      %v587 = vshll.u32 %v547, 8
      %v588 = vmul.u32.u64.compose %v587, %v586
      %v589 = vextract.low.u32 %v588
      %v590 = vextract.high.u32 %v588
      %v591 = vmul.u32.u64.compose %v587, %v582
      %v592 = vextract.low.u32 %v591
      %v593 = vextract.high.u32 %v591
      %v594 = vmul.u32 %v587, %v578
      %v595 = vadd.s32 %v590, %v592
      %vm596 = vc.u32 %v590, %v592
      %v597 = vadd.s32 %v593, 1
      %v598 = vsel %vm596, %v597, %v593
      %v599 = vadd.s32 %v594, %v598
      %v600 = vadd.s32 %v599, 536870912
      %v601 = vshrl.u32 %v600, 30
      %v602 = vshll.u32 %v601, 30
      %v603 = vsub.s32 %v599, %v602
      %vm604 = vcmp.lt.s32.totalorder %v603, 0
      %v605 = vsub.s32 0, %v603
      %v606 = vsel %vm604, %v605, %v603
      %v607 = vclz %v606
      %v608 = vsub.s32 %v607, 2
      %vm609 = vcmp.gt.s32.totalorder 0, %v608
      %v610 = vsel %vm609, 0, %v608
      %v611 = vsub.s32 32, %v610
      %v612 = vshll.u32 %v603, %v610
      %v613 = vshrl.u32 %v595, %v611
      %v614 = vor.u32 %v612, %v613
      %v615 = vsub.s32 4294967266, %v610
      %v616 = vadd.s32 %v615, 127
      %v617 = vshll.u32 %v616, 23
      %v618 = vor.u32 4788187, %v617
      %v619 = vand.u32 2147483647, %v618
      %v621 = vcvt.s32.f32 %v614
      %v622 = vmul.f32 %v621, %v619
      %v623 = vxor.u32 %v622, 2147483648
      %v624 = vsel %vm541, %v623, %v622
      %v625 = vsub.s32 4, %v601
      %v626 = vsel %vm541, %v625, %v601
      %v627 = vsel %vm540, %v331, %v624
      %v628 = vsel %vm540, 0, %v626
      %v629 = vcosq.f32.pop %v627
      %v630 = vsinq.f32.pop %v627
      %vm631 = vweird.f32 %v331
      %v632 = vand.u32 %v628, 3
      %vm633 = vcmp.lt.s32.totalorder %v632, 2
      %vm634 = vcmp.eq.s32.totalorder %v632, 0
      %v635 = vxor.u32 %v630, 2147483648
      %v636 = vsel %vm634, %v629, %v635
      %vm637 = vcmp.eq.s32.totalorder %v632, 2
      %v638 = vxor.u32 %v629, 2147483648
      %v639 = vsel %vm637, %v638, %v630
      %v640 = vsel %vm633, %v636, %v639
      %v641 = vsel %vm631, nan, %v640
      %v642 = vand.u32 2147483647, %v332
      %vm643 = vcmp.le.f32.partialorder %v642, 0.7853982
      %vm644 = vcmp.lt.s32.totalorder %v332, 0
      %v645 = vand.u32 %v332, 2139095040
      %v646 = vshrl.u32 %v645, 23
      %v647 = vsub.s32 %v646, 127
      %v648 = vand.u32 2147483647, %v332
      %v649 = vand.u32 %v648, 8388607
      %v650 = vor.u32 %v649, 8388608
      %v651 = vsub.s32 0, %v650
      %v652 = vadd.s32 %v647, 1
      %vm653 = vcmp.gt.s32.totalorder %v652, 0
      %v654 = vsel %vm653, %v652, 0
      %v655 = vshrl.u32 %v654, 5
      %v656 = vand.u32 %v654, 31
      %v657 = vsub.s32 32, %v656
      %v658 = vshrl.u32 683565275, %v657
      %v659 = vshll.u32 683565275, %v656
      %v660 = vshrl.u32 2475754826, %v657
      %v661 = vor.u32 %v659, %v660
      %v662 = vshll.u32 2475754826, %v656
      %v663 = vshrl.u32 2131351028, %v657
      %v664 = vor.u32 %v662, %v663
      %v665 = vshll.u32 2131351028, %v656
      %v666 = vshrl.u32 2102212464, %v657
      %v667 = vor.u32 %v665, %v666
      %v668 = vshll.u32 2102212464, %v656
      %v669 = vshrl.u32 920167782, %v657
      %v670 = vor.u32 %v668, %v669
      %v671 = vshll.u32 920167782, %v656
      %v672 = vshrl.u32 1326507024, %v657
      %v673 = vor.u32 %v671, %v672
      %vm674 = vcmp.lt.s32.totalorder %v655, 1
      %vm675 = vcmp.lt.s32.totalorder %v655, 2
      %vm676 = vcmp.lt.s32.totalorder %v655, 3
      %vm677 = vcmp.lt.s32.totalorder %v655, 4
      %v678 = vsel %vm674, %v658, %v661
      %v679 = vsel %vm677, %v667, 2102212464
      %v680 = vsel %vm676, %v664, %v679
      %v681 = vsel %vm675, %v678, %v680
      %v682 = vsel %vm674, %v661, %v664
      %v683 = vsel %vm677, %v670, 920167782
      %v684 = vsel %vm676, %v667, %v683
      %v685 = vsel %vm675, %v682, %v684
      %v686 = vsel %vm674, %v664, %v667
      %v687 = vsel %vm677, %v673, 1326507024
      %v688 = vsel %vm676, %v670, %v687
      %v689 = vsel %vm675, %v686, %v688
      %v690 = vshll.u32 %v650, 8
      %v691 = vmul.u32.u64.compose %v690, %v689
      %v692 = vextract.low.u32 %v691
      %v693 = vextract.high.u32 %v691
      %v694 = vmul.u32.u64.compose %v690, %v685
      %v695 = vextract.low.u32 %v694
      %v696 = vextract.high.u32 %v694
      %v697 = vmul.u32 %v690, %v681
      %v698 = vadd.s32 %v693, %v695
      %vm699 = vc.u32 %v693, %v695
      %v700 = vadd.s32 %v696, 1
      %v701 = vsel %vm699, %v700, %v696
      %v702 = vadd.s32 %v697, %v701
      %v703 = vadd.s32 %v702, 536870912
      %v704 = vshrl.u32 %v703, 30
      %v705 = vshll.u32 %v704, 30
      %v706 = vsub.s32 %v702, %v705
      %vm707 = vcmp.lt.s32.totalorder %v706, 0
      %v708 = vsub.s32 0, %v706
      %v709 = vsel %vm707, %v708, %v706
      %v710 = vclz %v709
      %v711 = vsub.s32 %v710, 2
      %vm712 = vcmp.gt.s32.totalorder 0, %v711
      %v713 = vsel %vm712, 0, %v711
      %v714 = vsub.s32 32, %v713
      %v715 = vshll.u32 %v706, %v713
      %v716 = vshrl.u32 %v698, %v714
      %v717 = vor.u32 %v715, %v716
      %v718 = vsub.s32 4294967266, %v713
      %v719 = vadd.s32 %v718, 127
      %v720 = vshll.u32 %v719, 23
      %v721 = vor.u32 4788187, %v720
      %v722 = vand.u32 2147483647, %v721
      %v724 = vcvt.s32.f32 %v717
      %v725 = vmul.f32 %v724, %v722
      %v726 = vxor.u32 %v725, 2147483648
      %v727 = vsel %vm644, %v726, %v725
      %v728 = vsub.s32 4, %v704
      %v729 = vsel %vm644, %v728, %v704
      %v730 = vsel %vm643, %v332, %v727
      %v731 = vsel %vm643, 0, %v729
      %v732 = vcosq.f32.pop %v730
      %v733 = vsinq.f32.pop %v730
      %vm734 = vweird.f32 %v332
      %v735 = vand.u32 %v731, 3
      %vm736 = vcmp.lt.s32.totalorder %v735, 2
      %vm737 = vcmp.eq.s32.totalorder %v735, 0
      %v738 = vxor.u32 %v733, 2147483648
      %v739 = vsel %vm737, %v732, %v738
      %vm740 = vcmp.eq.s32.totalorder %v735, 2
      %v741 = vxor.u32 %v732, 2147483648
      %v742 = vsel %vm740, %v741, %v733
      %v743 = vsel %vm736, %v739, %v742
      %v744 = vsel %vm734, nan, %v743
      %v745 = vsub.f32 1.0, %v435
      %v746 = vsub.f32 1.0, %v538
      %v747 = vsub.f32 1.0, %v641
      %v748 = vsub.f32 1.0, %v744
      %750 = vset.pattern.permute.xlu0 0
      %751 = vperm.xlu0 %750, %v301
      %v752 = vpop.permute.xlu0 %751
      %755 = vset.pattern.permute.xlu0 0
      %756 = vperm.xlu0 %755, %v302
      %v757 = vpop.permute.xlu0 %756
      %760 = vset.pattern.permute.xlu0 0
      %761 = vperm.xlu0 %760, %v303
      %v762 = vpop.permute.xlu0 %761
      %765 = vset.pattern.permute.xlu0 0
      %766 = vperm.xlu0 %765, %v304
      %v767 = vpop.permute.xlu0 %766
      %v769 = vmul.f32 %v752, %v745
      %v770 = vmul.f32 %v757, %v746
      %v771 = vmul.f32 %v762, %v747
      %v772 = vmul.f32 %v767, %v748
      %v773 = vadd.f32 %v285, %v769
      %v774 = vadd.f32 %v286, %v770
      %v775 = vadd.f32 %v287, %v771
      %v776 = vadd.f32 %v288, %v772
      %v777 = vpack.c.bf16 %v774, %v773
      %v778 = vpack.c.bf16 %v776, %v775
      %781 = vrot.lane.b32.xlu0 %v777, 127
      %v782 = vpop.permute.xlu0 %781
      %783 = vrot.lane.b32.xlu0 %v778, 127
      %v784 = vpop.permute.xlu0 %783
      %787 = vrot.lane.b32.xlu0 %v777, 126
      %v788 = vpop.permute.xlu0 %787
      %789 = vrot.lane.b32.xlu0 %v778, 126
      %v790 = vpop.permute.xlu0 %789
      %v793 = vld [vmem:[%s1] sm:$0xf]
      %v794 = vld [vmem:[%s1 + $0x4] sm:$0xf]
      %v795 = vld [vmem:[%s1 + $0x8] sm:$0xf]
      %v796 = vld [vmem:[%s1 + $0xc] sm:$0xf]
      %v797 = vld [vmem:[%s2] sm:$0xff]
      %v798 = vld [vmem:[%s2 + $0x8] sm:$0xff]
      %v799 = vld [vmem:[%s2 + $0x10] sm:$0xff]
      %v800 = vld [vmem:[%s2 + $0x18] sm:$0xff]
      %802 = vset.pattern.permute.xlu0 0
      %803 = vperm.xlu0 %802, %v797
      %v804 = vpop.permute.xlu0 %803
      %807 = vset.pattern.permute.xlu0 0
      %808 = vperm.xlu0 %807, %v798
      %v809 = vpop.permute.xlu0 %808
      %812 = vset.pattern.permute.xlu0 0
      %813 = vperm.xlu0 %812, %v799
      %v814 = vpop.permute.xlu0 %813
      %817 = vset.pattern.permute.xlu0 0
      %818 = vperm.xlu0 %817, %v800
      %v819 = vpop.permute.xlu0 %818
      %v825 = vunpack.c.l.b16 %v793
      %v826 = vunpack.c.l.b16 %v794
      %v827 = vunpack.c.l.b16 %v795
      %v828 = vunpack.c.l.b16 %v796
      %v829 = vpack.c.b16 %v826, %v825
      %v830 = vpack.c.b16 %v828, %v827
      %vm831 = vcmask 785408
      %v833 = vsel %vm831, %v829, 0
      %v836 = vsel %vm831, %v830, 0
      %838 = vmatprep.subr.bf16.mxu0 0
      %839 = vmatpush1.bf16.msra.mxu0 %v777
      %840 = vmatprep.subr.bf16.mxu0 0
      %841 = vmatpush1.bf16.msra.mxu0 %v778
      %842 = vmatprep.subr.bf16.mxu0 0
      %843 = vmatpush1.bf16.msra.mxu0 %v782
      %844 = vmatprep.subr.bf16.mxu0 0
      %845 = vmatpush1.bf16.msra.mxu0 %v784
      %846 = vmatprep.subr.bf16.mxu0 0
      %847 = vmatpush1.bf16.msra.mxu0 %v788
      %848 = vmatprep.subr.bf16.mxu0 0
      %849 = vmatpush1.bf16.msra.mxu0 %v790
      %850 = vmatprep.subr.bf16.mxu0 0
      %851 = vmatpush1.bf16.msra.mxu0 0
      %852 = vmatprep.subr.bf16.mxu0 0
      %853 = vmatpush1.bf16.msra.mxu0 0
      %854 = vmatprep.subr.bf16.mxu0 0
      %855 = vmatpush1.bf16.msra.mxu0 0
      %856 = vmatprep.subr.bf16.mxu0 0
      %857 = vmatpush1.bf16.msra.mxu0 0
      %858 = vmatprep.subr.bf16.mxu0 0
      %859 = vmatpush1.bf16.msra.mxu0 0
      %860 = vmatprep.subr.bf16.mxu0 0
      %861 = vmatpush1.bf16.msra.mxu0 0
      %862 = vmatprep.subr.bf16.mxu0 0
      %863 = vmatpush1.bf16.msra.mxu0 0
      %864 = vmatprep.subr.bf16.mxu0 0
      %865 = vmatpush1.bf16.msra.mxu0 0
      %866 = vmatprep.subr.bf16.mxu0 0
      %867 = vmatpush1.bf16.msra.mxu0 0
      %868 = vmatprep.subr.bf16.mxu0 0
      %869 = vmatpush1.bf16.msra.mxu0 0
      %870 = vmatprep.mubr.bf16.mxu0 0
      %871 = vmatmul.mubr.bf16.gmra.mrb[0].mxu0 %v833
      %v872 = vpop.f32.mrb[0].mxu0
      %v873 = vadd.f32 %v804, %v872
      %v874 = vpop.f32.mrb[0].mxu0
      %v875 = vpop.f32.mrb[0].mxu0
      %v876 = vadd.f32 %v809, %v875
      %v877 = vpop.f32.mrb[0].mxu0
      %878 = vmatprep.mubr.bf16.mxu0 0
      %879 = vmatmul.mubr.bf16.gmra.mrb[0].mxu0 %v836
      %v880 = vpop.f32.mrb[0].mxu0
      %v881 = vadd.f32 %v814, %v880
      %v882 = vpop.f32.mrb[0].mxu0
      %v883 = vpop.f32.mrb[0].mxu0
      %v884 = vadd.f32 %v819, %v883
      %v885 = vpop.f32.mrb[0].mxu0
      %886 = vdwg.mxu0
      %v887 = vpack.c.bf16 %v876, %v873
      %v888 = vpack.c.bf16 %v884, %v881
      %v891 = vunpack.c.l.b16 %v887
      %v892 = vunpack.c.h.b16 %v887
      %v893 = vunpack.c.l.b16 %v888
      %v894 = vunpack.c.h.b16 %v888
      %v895 = vpack.c.b16 %v891, %v891
      %v896 = vpack.c.b16 %v892, %v892
      %v897 = vpack.c.b16 %v893, %v893
      %v898 = vpack.c.b16 %v894, %v894
      %vm903 = vcmask 134144
      %904 = vst.msk [vmem:[%s239] sm:$0xf] %vm903, %v895
      %905 = vst.msk [vmem:[%s239 + $0x4] sm:$0xf] %vm903, %v896
      %906 = vst.msk [vmem:[%s239 + $0x8] sm:$0xf] %vm903, %v897
      %907 = vst.msk [vmem:[%s239 + $0xc] sm:$0xf] %vm903, %v898
      %s908 = ssub.s32 0, %s20
      %p909 = scmp.lt.s32.totalorder %s19, 1
      %s910 = scalar_select %p909, %s19, 1
      %p911 = scmp.lt.s32.totalorder %s908, 0
      %s912 = scalar_select %p911, %s908, 0
      %s913 = smul.addr %s910, 4
      %s914 = sadd.s32 %s912, %s913
      %s915 = smul.addr %s914, 4
      %s916 = scalar_lea.vmem %s4, %s915
      // Predicated region
      $region41: #{decoder_forward.11} parent=35 // pred_check
        %p917 = pneg %p142
      $region42: #{decoder_forward.11} parent=35 // pred_check_branch
        %919 = sbr.rel (%p917) target = $region44
      $region43: #{decoder_forward.11} parent=35 // pred_region
        %s920 = ssub.s32 0, %s20
      $region44: #{decoder_forward.11} parent=35 // pred_fallthru
        _
    $region36: #{decoder_forward.11} parent=5 // pred_fallthru
      _
    %p921 = scmp.le.s32.totalorder 2, %s10
    // Predicated region
    $region45: #{decoder_forward.11} parent=5 // pred_check
      %p922 = pneg %p921
    $region46: #{decoder_forward.11} parent=5 // pred_check_branch
      %924 = sbr.rel (%p922) target = $region48
    $region47: #{decoder_forward.11} parent=5 // pred_region
      %s925 = ssub.s32 %s10, 2
      // Predicated region
      $region49: #{decoder_forward.11} parent=47 // pred_check
        %p926 = pneg %p148
      $region50: #{decoder_forward.11} parent=47 // pred_check_branch
        %928 = sbr.rel (%p926) target = $region52
      $region51: #{decoder_forward.11} parent=47 // pred_region
        %s929 = ssub.s32 0, %s22
        %p930 = scmp.lt.s32.totalorder %s21, 1
        %s931 = scalar_select %p930, %s21, 1
        %p932 = scmp.lt.s32.totalorder %s929, 0
        %s933 = scalar_select %p932, %s929, 0
        %s934 = smul.addr %s931, 4
        %s935 = sadd.s32 %s933, %s934
        %s936 = smul.addr %s935, 4
        %s937 = scalar_lea.vmem %s4, %s936
      $region52: #{decoder_forward.11} parent=47 // pred_fallthru
        _
    $region48: #{decoder_forward.11} parent=5 // pred_fallthru
      _
  $region6: #{decoder_forward.11} parent=0 // loop_footer
    %s14 = sadd.s32 1, %s10
  $region7: #{decoder_forward.11} parent=0 // loop_footer_branch
    %9 = sbr.rel target = $region3
  $region8: #{decoder_forward.11} parent=0 // loop_exit
    _

// kernel: decoder_forward.12
$region0: #{decoder_forward.12}
  #allocation0 [shape = 'u32[]', space=smem, size = 0x4, offset = 0x4, fixed_abs, tag = 'smem constant byte address 0x4 - core index']
  #allocation1 [shape = 'u32[144,128]{1,0:T(1,128)}', space=vmem, size = 0x12000, scoped, tag = 'internal scratch']
  #allocation2 [shape = 'bf16[16,6]{1,0:T(16,128)(2,1)}', space=vmem, size = 0x1000, scoped, tag = 'scratch operand']
  %s0 = inlined_call_operand.vmem [shape: bf16[2,16,35], index: 0, kind: input, shape index: {}]
  %s1 = inlined_call_operand.vmem [shape: bf16[16,112], index: 1, kind: input, shape index: {}]
  %s2 = inlined_call_operand.vmem [shape: f32[16,1], index: 2, kind: input, shape index: {}]
  %s3 = inlined_call_operand.vmem [shape: f32[16,1], index: 3, kind: input, shape index: {}]
  %s4 = inlined_call_operand.vmem [shape: bf16[16,16], index: 4, kind: input, shape index: {}]
  %s5 = inlined_call_operand.vmem [shape: f32[16,1], index: 5, kind: input, shape index: {}]
  %s6 = inlined_call_operand.vmem [shape: f32[16,1], index: 6, kind: input, shape index: {}]
  %s7 = inlined_call_operand.vmem [shape: bf16[2,16,35], index: 7, kind: output, shape index: {}]
  %s8 = sld [smem:[#allocation0]]
  $region65: #{decoder_forward.12} parent=0
    _
  %s10 = ssub.s32 1, %s8
  %s11 = scalar_select 0, %s10, %s8
  loop: start=0, step=1, limit=4
  $region2: #{decoder_forward.12} parent=0 // loop_pre_header
    _
  $region3: #{decoder_forward.12} parent=0 // loop_header
    %s13 = sphi 0, %s17
    %p14 = scmp.ge.s32.totalorder %s13, 4
    %s20 = sphi 0, %s32
    %s21 = sphi 0, %s28
    %s22 = sphi 0, %s20
    %s23 = sphi 0, %s21
    %s24 = sphi 0, %s22
    %s25 = sphi 0, %s23
    %s39 = sphi 0, %s41
    %s42 = sphi 0, %s39
    %s43 = sphi 0, %s42
    %s59 = sphi 0, %s43
    %s63 = sphi 0, %s63
    %s65 = sphi 0, %s63
    %s66 = sphi 0, %s65
    %s80 = sphi 0, %s66
    %s84 = sphi 0, %s84
    %s86 = sphi 0, %s84
    %s87 = sphi 0, %s86
    %s101 = sphi 0, %s87
    %s105 = sphi 0, %s105
    %s107 = sphi 0, %s105
    %s108 = sphi 0, %s107
    %s122 = sphi 0, %s108
    %s126 = sphi 0, %s126
    %s128 = sphi 0, %s126
    %s129 = sphi 0, %s128
    %s143 = sphi 0, %s129
    %s147 = sphi 0, %s147
    %s149 = sphi 0, %s147
    %s150 = sphi 0, %s149
    %s164 = sphi 0, %s150
    %s168 = sphi 0, %s168
    %s170 = sphi 0, %s168
    %s171 = sphi 0, %s170
    %s185 = sphi 0, %s171
    %s195 = sphi 0, %s197
    %s198 = sphi 0, %s195
    %s199 = sphi 0, %s198
    %s215 = sphi 0, %s199
  $region4: #{decoder_forward.12} parent=0 // loop_header_branch
    %16 = sbr.rel (%p14) target = $region8
  $region5: #{decoder_forward.12} parent=0 // loop_body
    %s18 = ssub.s32 %s13, 1
    %s19 = ssub.s32 %s13, 2
    %s26 = sadd.s32 1, %s21
    %p27 = scmp.ge.s32.totalorder %s26, 1
    %s28 = scalar_select %p27, 0, %s26
    %s29 = sadd.s32 1, %s20
    %s30 = scalar_select %p27, %s29, %s20
    %p31 = scmp.ge.s32.totalorder %s30, 2
    %s32 = scalar_select %p31, 0, %s30
    %s33 = ssub.s32 0, %s21
    %s34 = ssub.s32 0, %s28
    %s35 = ssub.s32 %s20, %s32
    %s36 = ssub.s32 %s33, %s34
    %s37 = sor.u32 %s35, %s36
    %p38 = scmp.eq.s32.totalorder %s37, 0
    %s40 = sadd.s32 %s39, 1
    %s41 = scalar_select %p38, %s39, %s40
    %p44 = pneg %p38
    %p45 = scmp.eq.s32.totalorder %s13, 1
    %p46 = por %p44, %p45
    %p47 = scmp.ne.s32.totalorder %s39, %s42
    %p48 = scmp.eq.s32.totalorder %s13, 0
    %p49 = por %p47, %p48
    %p50 = scmp.ne.s32.totalorder %s39, %s42
    %p51 = scmp.eq.s32.totalorder %s18, 1
    %p52 = por %p50, %p51
    %p53 = scmp.ne.s32.totalorder %s42, %s43
    %p54 = scmp.eq.s32.totalorder %s18, 0
    %p55 = por %p53, %p54
    %p56 = scmp.ne.s32.totalorder %s42, %s43
    %p57 = scmp.eq.s32.totalorder %s19, 1
    %p58 = por %p56, %p57
    %p60 = scmp.ne.s32.totalorder %s43, %s59
    %p61 = scmp.eq.s32.totalorder %s19, 0
    %p62 = por %p60, %p61
    %s64 = sadd.s32 %s63, 1
    %p67 = scmp.eq.s32.totalorder %s13, 1
    %p68 = scmp.ne.s32.totalorder %s63, %s65
    %p69 = scmp.eq.s32.totalorder %s13, 0
    %p70 = por %p68, %p69
    %p71 = scmp.ne.s32.totalorder %s63, %s65
    %p72 = scmp.eq.s32.totalorder %s18, 1
    %p73 = por %p71, %p72
    %p74 = scmp.ne.s32.totalorder %s65, %s66
    %p75 = scmp.eq.s32.totalorder %s18, 0
    %p76 = por %p74, %p75
    %p77 = scmp.ne.s32.totalorder %s65, %s66
    %p78 = scmp.eq.s32.totalorder %s19, 1
    %p79 = por %p77, %p78
    %p81 = scmp.ne.s32.totalorder %s66, %s80
    %p82 = scmp.eq.s32.totalorder %s19, 0
    %p83 = por %p81, %p82
    %s85 = sadd.s32 %s84, 1
    %p88 = scmp.eq.s32.totalorder %s13, 1
    %p89 = scmp.ne.s32.totalorder %s84, %s86
    %p90 = scmp.eq.s32.totalorder %s13, 0
    %p91 = por %p89, %p90
    %p92 = scmp.ne.s32.totalorder %s84, %s86
    %p93 = scmp.eq.s32.totalorder %s18, 1
    %p94 = por %p92, %p93
    %p95 = scmp.ne.s32.totalorder %s86, %s87
    %p96 = scmp.eq.s32.totalorder %s18, 0
    %p97 = por %p95, %p96
    %p98 = scmp.ne.s32.totalorder %s86, %s87
    %p99 = scmp.eq.s32.totalorder %s19, 1
    %p100 = por %p98, %p99
    %p102 = scmp.ne.s32.totalorder %s87, %s101
    %p103 = scmp.eq.s32.totalorder %s19, 0
    %p104 = por %p102, %p103
    %s106 = sadd.s32 %s105, 1
    %p109 = scmp.eq.s32.totalorder %s13, 1
    %p110 = scmp.ne.s32.totalorder %s105, %s107
    %p111 = scmp.eq.s32.totalorder %s13, 0
    %p112 = por %p110, %p111
    %p113 = scmp.ne.s32.totalorder %s105, %s107
    %p114 = scmp.eq.s32.totalorder %s18, 1
    %p115 = por %p113, %p114
    %p116 = scmp.ne.s32.totalorder %s107, %s108
    %p117 = scmp.eq.s32.totalorder %s18, 0
    %p118 = por %p116, %p117
    %p119 = scmp.ne.s32.totalorder %s107, %s108
    %p120 = scmp.eq.s32.totalorder %s19, 1
    %p121 = por %p119, %p120
    %p123 = scmp.ne.s32.totalorder %s108, %s122
    %p124 = scmp.eq.s32.totalorder %s19, 0
    %p125 = por %p123, %p124
    %s127 = sadd.s32 %s126, 1
    %p130 = scmp.eq.s32.totalorder %s13, 1
    %p131 = scmp.ne.s32.totalorder %s126, %s128
    %p132 = scmp.eq.s32.totalorder %s13, 0
    %p133 = por %p131, %p132
    %p134 = scmp.ne.s32.totalorder %s126, %s128
    %p135 = scmp.eq.s32.totalorder %s18, 1
    %p136 = por %p134, %p135
    %p137 = scmp.ne.s32.totalorder %s128, %s129
    %p138 = scmp.eq.s32.totalorder %s18, 0
    %p139 = por %p137, %p138
    %p140 = scmp.ne.s32.totalorder %s128, %s129
    %p141 = scmp.eq.s32.totalorder %s19, 1
    %p142 = por %p140, %p141
    %p144 = scmp.ne.s32.totalorder %s129, %s143
    %p145 = scmp.eq.s32.totalorder %s19, 0
    %p146 = por %p144, %p145
    %s148 = sadd.s32 %s147, 1
    %p151 = scmp.eq.s32.totalorder %s13, 1
    %p152 = scmp.ne.s32.totalorder %s147, %s149
    %p153 = scmp.eq.s32.totalorder %s13, 0
    %p154 = por %p152, %p153
    %p155 = scmp.ne.s32.totalorder %s147, %s149
    %p156 = scmp.eq.s32.totalorder %s18, 1
    %p157 = por %p155, %p156
    %p158 = scmp.ne.s32.totalorder %s149, %s150
    %p159 = scmp.eq.s32.totalorder %s18, 0
    %p160 = por %p158, %p159
    %p161 = scmp.ne.s32.totalorder %s149, %s150
    %p162 = scmp.eq.s32.totalorder %s19, 1
    %p163 = por %p161, %p162
    %p165 = scmp.ne.s32.totalorder %s150, %s164
    %p166 = scmp.eq.s32.totalorder %s19, 0
    %p167 = por %p165, %p166
    %s169 = sadd.s32 %s168, 1
    %p172 = scmp.eq.s32.totalorder %s13, 1
    %p173 = scmp.ne.s32.totalorder %s168, %s170
    %p174 = scmp.eq.s32.totalorder %s13, 0
    %p175 = por %p173, %p174
    %p176 = scmp.ne.s32.totalorder %s168, %s170
    %p177 = scmp.eq.s32.totalorder %s18, 1
    %p178 = por %p176, %p177
    %p179 = scmp.ne.s32.totalorder %s170, %s171
    %p180 = scmp.eq.s32.totalorder %s18, 0
    %p181 = por %p179, %p180
    %p182 = scmp.ne.s32.totalorder %s170, %s171
    %p183 = scmp.eq.s32.totalorder %s19, 1
    %p184 = por %p182, %p183
    %p186 = scmp.ne.s32.totalorder %s171, %s185
    %p187 = scmp.eq.s32.totalorder %s19, 0
    %p188 = por %p186, %p187
    %s189 = ssub.s32 0, %s21
    %s190 = ssub.s32 0, %s28
    %s191 = ssub.s32 %s20, %s32
    %s192 = ssub.s32 %s189, %s190
    %s193 = sor.u32 %s191, %s192
    %p194 = scmp.eq.s32.totalorder %s193, 0
    %s196 = sadd.s32 %s195, 1
    %s197 = scalar_select %p194, %s195, %s196
    %p200 = pneg %p194
    %p201 = scmp.eq.s32.totalorder %s13, 1
    %p202 = por %p200, %p201
    %p203 = scmp.ne.s32.totalorder %s195, %s198
    %p204 = scmp.eq.s32.totalorder %s13, 0
    %p205 = por %p203, %p204
    %p206 = scmp.ne.s32.totalorder %s195, %s198
    %p207 = scmp.eq.s32.totalorder %s18, 1
    %p208 = por %p206, %p207
    %p209 = scmp.ne.s32.totalorder %s198, %s199
    %p210 = scmp.eq.s32.totalorder %s18, 0
    %p211 = por %p209, %p210
    %p212 = scmp.ne.s32.totalorder %s198, %s199
    %p213 = scmp.eq.s32.totalorder %s19, 1
    %p214 = por %p212, %p213
    %p216 = scmp.ne.s32.totalorder %s199, %s215
    %p217 = scmp.eq.s32.totalorder %s19, 0
    %p218 = por %p216, %p217
    %p219 = scmp.le.s32.totalorder 1, %s13
    %p220 = scmp.lt.s32.totalorder %s13, 3
    %p221 = pnand %p219, %p220
    %p222 = pneg %p221
    // Predicated region
    $region9: #{decoder_forward.12} parent=5 // pred_check
      _
    $region10: #{decoder_forward.12} parent=5 // pred_check_branch
      %224 = sbr.rel (%p221) target = $region12
    $region11: #{decoder_forward.12} parent=5 // pred_region
      %s225 = ssub.s32 %s13, 1
      // Predicated region
      $region13: #{decoder_forward.12} parent=11 // pred_check
        %p226 = pneg %p76
      $region14: #{decoder_forward.12} parent=11 // pred_check_branch
        %228 = sbr.rel (%p226) target = $region16
      $region15: #{decoder_forward.12} parent=11 // pred_region
        _
      $region16: #{decoder_forward.12} parent=11 // pred_fallthru
        _
      // Predicated region
      $region17: #{decoder_forward.12} parent=11 // pred_check
        %p229 = pneg %p97
      $region18: #{decoder_forward.12} parent=11 // pred_check_branch
        %231 = sbr.rel (%p229) target = $region20
      $region19: #{decoder_forward.12} parent=11 // pred_region
        _
      $region20: #{decoder_forward.12} parent=11 // pred_fallthru
        _
      // Predicated region
      $region21: #{decoder_forward.12} parent=11 // pred_check
        %p232 = pneg %p118
      $region22: #{decoder_forward.12} parent=11 // pred_check_branch
        %234 = sbr.rel (%p232) target = $region24
      $region23: #{decoder_forward.12} parent=11 // pred_region
        _
      $region24: #{decoder_forward.12} parent=11 // pred_fallthru
        _
      // Predicated region
      $region25: #{decoder_forward.12} parent=11 // pred_check
        %p235 = pneg %p139
      $region26: #{decoder_forward.12} parent=11 // pred_check_branch
        %237 = sbr.rel (%p235) target = $region28
      $region27: #{decoder_forward.12} parent=11 // pred_region
        _
      $region28: #{decoder_forward.12} parent=11 // pred_fallthru
        _
      // Predicated region
      $region29: #{decoder_forward.12} parent=11 // pred_check
        %p238 = pneg %p160
      $region30: #{decoder_forward.12} parent=11 // pred_check_branch
        %240 = sbr.rel (%p238) target = $region32
      $region31: #{decoder_forward.12} parent=11 // pred_region
        _
      $region32: #{decoder_forward.12} parent=11 // pred_fallthru
        _
      // Predicated region
      $region33: #{decoder_forward.12} parent=11 // pred_check
        %p241 = pneg %p181
      $region34: #{decoder_forward.12} parent=11 // pred_check_branch
        %243 = sbr.rel (%p241) target = $region36
      $region35: #{decoder_forward.12} parent=11 // pred_region
        _
      $region36: #{decoder_forward.12} parent=11 // pred_fallthru
        _
    $region12: #{decoder_forward.12} parent=5 // pred_fallthru
      _
    %p244 = scmp.lt.s32.totalorder %s13, 2
    // Predicated region
    $region37: #{decoder_forward.12} parent=5 // pred_check
      %p245 = pneg %p244
    $region38: #{decoder_forward.12} parent=5 // pred_check_branch
      %247 = sbr.rel (%p245) target = $region40
    $region39: #{decoder_forward.12} parent=5 // pred_region
      // Predicated region
      $region41: #{decoder_forward.12} parent=39 // pred_check
        %p248 = pneg %p49
      $region42: #{decoder_forward.12} parent=39 // pred_check_branch
        %250 = sbr.rel (%p248) target = $region44
      $region43: #{decoder_forward.12} parent=39 // pred_region
        %s251 = ssub.s32 0, %s21
        %p252 = scmp.lt.s32.totalorder %s20, 1
        %s253 = scalar_select %p252, %s20, 1
        %p254 = scmp.lt.s32.totalorder %s251, 0
        %s255 = scalar_select %p254, %s251, 0
        %s256 = smul.addr %s253, 2
        %s257 = sadd.s32 %s255, %s256
        %s258 = smul.addr %s257, 4
        %s259 = scalar_lea.vmem %s0, %s258
        %s260 = ssub.s32 0, %s21
      $region44: #{decoder_forward.12} parent=39 // pred_fallthru
        _
    $region40: #{decoder_forward.12} parent=5 // pred_fallthru
      _
    %p261 = scmp.le.s32.totalorder 1, %s13
    %p262 = scmp.lt.s32.totalorder %s13, 3
    %p263 = pnand %p261, %p262
    %p264 = pneg %p263
    // Predicated region
    $region45: #{decoder_forward.12} parent=5 // pred_check
      _
    $region46: #{decoder_forward.12} parent=5 // pred_check_branch
      %266 = sbr.rel (%p263) target = $region48
    $region47: #{decoder_forward.12} parent=5 // pred_region
      %s267 = ssub.s32 %s13, 1
      %s268 = ssub.s32 0, %s23
      %p269 = scmp.lt.s32.totalorder %s22, 1
      %s270 = scalar_select %p269, %s22, 1
      %p271 = scmp.lt.s32.totalorder %s268, 0
      %s272 = scalar_select %p271, %s268, 0
      %s273 = smul.addr %s270, 2
      %s274 = sadd.s32 %s272, %s273
      %s275 = smul.addr %s274, 4
      %s276 = scalar_lea.vmem %s0, %s275
      %p277 = pneg %p55
      %p278 = pneg %p52
      %p279 = pneg %p76
      %p280 = pneg %p73
      %p281 = pneg %p97
      %p282 = pneg %p94
      %p283 = pneg %p118
      %p284 = pneg %p115
      %p285 = pneg %p139
      %p286 = pneg %p136
      %p287 = pneg %p160
      %p288 = pneg %p157
      %p289 = pneg %p181
      %p290 = pneg %p178
      %p291 = pneg %p211
      %p292 = pneg %p208
      %s293 = ssub.s32 0, %s23
      %p294 = scmp.lt.s32.totalorder %s22, 1
      %s295 = scalar_select %p294, %s22, 1
      %p296 = scmp.lt.s32.totalorder %s293, 0
      %s297 = scalar_select %p296, %s293, 0
      %s298 = smul.addr %s295, 2
      %s299 = sadd.s32 %s297, %s298
      %s300 = smul.addr %s299, 4
      %s301 = scalar_lea.vmem %s7, %s300
      %s302 = ssub.s32 0, %s23
      %p303 = scmp.lt.s32.totalorder %s22, 1
      %s304 = scalar_select %p303, %s22, 1
      %p305 = scmp.lt.s32.totalorder %s302, 0
      %s306 = scalar_select %p305, %s302, 0
      %s307 = smul.addr %s304, 2
      %s308 = sadd.s32 %s306, %s307
      %s309 = smul.addr %s308, 4
      %s310 = scalar_lea.vmem %s0, %s309
      %s311 = ssub.s32 0, %s23
      %s312 = ssub.s32 0, %s23
      %p313 = scmp.lt.s32.totalorder %s22, 1
      %s314 = scalar_select %p313, %s22, 1
      %p315 = scmp.lt.s32.totalorder %s312, 0
      %s316 = scalar_select %p315, %s312, 0
      %s317 = smul.addr %s314, 2
      %s318 = sadd.s32 %s316, %s317
      %s319 = smul.addr %s318, 4
      %s320 = scalar_lea.vmem %s7, %s319
      %s321 = ssub.s32 0, %s23
      %p323 = scmp.eq.s32.totalorder %s23, 0
      // Predicated region
      $region49: #{decoder_forward.12} parent=47 // pred_check
        %p324 = pneg %p323
      $region50: #{decoder_forward.12} parent=47 // pred_check_branch
        %326 = sbr.rel (%p324) target = $region52
      $region51: #{decoder_forward.12} parent=47 // pred_region
        %vm327 = vcmask 48128
        %328 = vst.msk [vmem:[#allocation2] sm:$0xff] %vm327, 0
      $region52: #{decoder_forward.12} parent=47 // pred_fallthru
        _
      %v329 = vld [vmem:[%s310] sm:$0xf]
      %v330 = vld [vmem:[%s310 + $0x4] sm:$0xf]
      %v331 = vld [vmem:[#allocation2] sm:$0xff]
      %v334 = vunpack.c.l.b16 %v329
      %v335 = vunpack.c.l.b16 %v330
      %v336 = vpack.c.b16 %v335, %v334
      %338 = vrot.lane.b32.xlu0 %v331, 35
      %v339 = vpop.permute.xlu0 %338
      %vm340 = vcmask 285696
      %v343 = vsel %vm340, %v336, %v339
      %vm346 = vcmask 48128
      %347 = vst.msk [vmem:[#allocation2] sm:$0xff] %vm346, %v336
      %v348 = vunpack.c.l.bf16 %v343
      %v349 = vunpack.c.h.bf16 %v343
      %v350 = vld [vmem:[%s3] sm:$0xff]
      %v351 = vld [vmem:[%s3 + $0x8] sm:$0xff]
      %v352 = vadd.f32 %v350, 1e-09
      %v353 = vadd.f32 %v351, 1e-09
      %v354 = vrcp.pop %v352
      %v355 = vrcp.pop %v353
      %v356 = vmul.f32 %v354, 0.5
      %v357 = vmul.f32 %v355, 0.5
      %v358 = vmul.f32 %v350, 2.0
      %v359 = vmul.f32 %v351, 2.0
      %361 = vset.pattern.permute.xlu0 0
      %362 = vperm.xlu0 %361, %v358
      %v363 = vpop.permute.xlu0 %362
      %366 = vset.pattern.permute.xlu0 0
      %367 = vperm.xlu0 %366, %v359
      %v368 = vpop.permute.xlu0 %367
      %v370 = vmul.f32 %v363, %v348
      %v371 = vmul.f32 %v368, %v349
      %v372 = vand.u32 2147483647, %v370
      %vm373 = vcmp.le.f32.partialorder %v372, 0.7853982
      %vm374 = vcmp.lt.s32.totalorder %v370, 0
      %v375 = vand.u32 %v370, 2139095040
      %v376 = vshrl.u32 %v375, 23
      %v377 = vsub.s32 %v376, 127
      %v378 = vand.u32 2147483647, %v370
      %v379 = vand.u32 %v378, 8388607
      %v380 = vor.u32 %v379, 8388608
      %v381 = vsub.s32 0, %v380
      %v382 = vadd.s32 %v377, 1
      %vm383 = vcmp.gt.s32.totalorder %v382, 0
      %v384 = vsel %vm383, %v382, 0
      %v385 = vshrl.u32 %v384, 5
      %v386 = vand.u32 %v384, 31
      %v387 = vsub.s32 32, %v386
      %v388 = vshrl.u32 683565275, %v387
      %v389 = vshll.u32 683565275, %v386
      %v390 = vshrl.u32 2475754826, %v387
      %v391 = vor.u32 %v389, %v390
      %v392 = vshll.u32 2475754826, %v386
      %v393 = vshrl.u32 2131351028, %v387
      %v394 = vor.u32 %v392, %v393
      %v395 = vshll.u32 2131351028, %v386
      %v396 = vshrl.u32 2102212464, %v387
      %v397 = vor.u32 %v395, %v396
      %v398 = vshll.u32 2102212464, %v386
      %v399 = vshrl.u32 920167782, %v387
      %v400 = vor.u32 %v398, %v399
      %v401 = vshll.u32 920167782, %v386
      %v402 = vshrl.u32 1326507024, %v387
      %v403 = vor.u32 %v401, %v402
      %vm404 = vcmp.lt.s32.totalorder %v385, 1
      %vm405 = vcmp.lt.s32.totalorder %v385, 2
      %vm406 = vcmp.lt.s32.totalorder %v385, 3
      %vm407 = vcmp.lt.s32.totalorder %v385, 4
      %v408 = vsel %vm404, %v388, %v391
      %v409 = vsel %vm407, %v397, 2102212464
      %v410 = vsel %vm406, %v394, %v409
      %v411 = vsel %vm405, %v408, %v410
      %v412 = vsel %vm404, %v391, %v394
      %v413 = vsel %vm407, %v400, 920167782
      %v414 = vsel %vm406, %v397, %v413
      %v415 = vsel %vm405, %v412, %v414
      %v416 = vsel %vm404, %v394, %v397
      %v417 = vsel %vm407, %v403, 1326507024
      %v418 = vsel %vm406, %v400, %v417
      %v419 = vsel %vm405, %v416, %v418
      %v420 = vshll.u32 %v380, 8
      %v421 = vmul.u32.u64.compose %v420, %v419
      %v422 = vextract.low.u32 %v421
      %v423 = vextract.high.u32 %v421
      %v424 = vmul.u32.u64.compose %v420, %v415
      %v425 = vextract.low.u32 %v424
      %v426 = vextract.high.u32 %v424
      %v427 = vmul.u32 %v420, %v411
      %v428 = vadd.s32 %v423, %v425
      %vm429 = vc.u32 %v423, %v425
      %v430 = vadd.s32 %v426, 1
      %v431 = vsel %vm429, %v430, %v426
      %v432 = vadd.s32 %v427, %v431
      %v433 = vadd.s32 %v432, 536870912
      %v434 = vshrl.u32 %v433, 30
      %v435 = vshll.u32 %v434, 30
      %v436 = vsub.s32 %v432, %v435
      %vm437 = vcmp.lt.s32.totalorder %v436, 0
      %v438 = vsub.s32 0, %v436
      %v439 = vsel %vm437, %v438, %v436
      %v440 = vclz %v439
      %v441 = vsub.s32 %v440, 2
      %vm442 = vcmp.gt.s32.totalorder 0, %v441
      %v443 = vsel %vm442, 0, %v441
      %v444 = vsub.s32 32, %v443
      %v445 = vshll.u32 %v436, %v443
      %v446 = vshrl.u32 %v428, %v444
      %v447 = vor.u32 %v445, %v446
      %v448 = vsub.s32 4294967266, %v443
      %v449 = vadd.s32 %v448, 127
      %v450 = vshll.u32 %v449, 23
      %v451 = vor.u32 4788187, %v450
      %v452 = vand.u32 2147483647, %v451
      %v454 = vcvt.s32.f32 %v447
      %v455 = vmul.f32 %v454, %v452
      %v456 = vxor.u32 %v455, 2147483648
      %v457 = vsel %vm374, %v456, %v455
      %v458 = vsub.s32 4, %v434
      %v459 = vsel %vm374, %v458, %v434
      %v460 = vsel %vm373, %v370, %v457
      %v461 = vsel %vm373, 0, %v459
      %v462 = vcosq.f32.pop %v460
      %v463 = vsinq.f32.pop %v460
      %vm464 = vweird.f32 %v370
      %v465 = vand.u32 %v461, 3
      %vm466 = vcmp.lt.s32.totalorder %v465, 2
      %vm467 = vcmp.eq.s32.totalorder %v465, 0
      %v468 = vxor.u32 %v463, 2147483648
      %v469 = vsel %vm467, %v462, %v468
      %vm470 = vcmp.eq.s32.totalorder %v465, 2
      %v471 = vxor.u32 %v462, 2147483648
      %v472 = vsel %vm470, %v471, %v463
      %v473 = vsel %vm466, %v469, %v472
      %v474 = vsel %vm464, nan, %v473
      %v475 = vand.u32 2147483647, %v371
      %vm476 = vcmp.le.f32.partialorder %v475, 0.7853982
      %vm477 = vcmp.lt.s32.totalorder %v371, 0
      %v478 = vand.u32 %v371, 2139095040
      %v479 = vshrl.u32 %v478, 23
      %v480 = vsub.s32 %v479, 127
      %v481 = vand.u32 2147483647, %v371
      %v482 = vand.u32 %v481, 8388607
      %v483 = vor.u32 %v482, 8388608
      %v484 = vsub.s32 0, %v483
      %v485 = vadd.s32 %v480, 1
      %vm486 = vcmp.gt.s32.totalorder %v485, 0
      %v487 = vsel %vm486, %v485, 0
      %v488 = vshrl.u32 %v487, 5
      %v489 = vand.u32 %v487, 31
      %v490 = vsub.s32 32, %v489
      %v491 = vshrl.u32 683565275, %v490
      %v492 = vshll.u32 683565275, %v489
      %v493 = vshrl.u32 2475754826, %v490
      %v494 = vor.u32 %v492, %v493
      %v495 = vshll.u32 2475754826, %v489
      %v496 = vshrl.u32 2131351028, %v490
      %v497 = vor.u32 %v495, %v496
      %v498 = vshll.u32 2131351028, %v489
      %v499 = vshrl.u32 2102212464, %v490
      %v500 = vor.u32 %v498, %v499
      %v501 = vshll.u32 2102212464, %v489
      %v502 = vshrl.u32 920167782, %v490
      %v503 = vor.u32 %v501, %v502
      %v504 = vshll.u32 920167782, %v489
      %v505 = vshrl.u32 1326507024, %v490
      %v506 = vor.u32 %v504, %v505
      %vm507 = vcmp.lt.s32.totalorder %v488, 1
      %vm508 = vcmp.lt.s32.totalorder %v488, 2
      %vm509 = vcmp.lt.s32.totalorder %v488, 3
      %vm510 = vcmp.lt.s32.totalorder %v488, 4
      %v511 = vsel %vm507, %v491, %v494
      %v512 = vsel %vm510, %v500, 2102212464
      %v513 = vsel %vm509, %v497, %v512
      %v514 = vsel %vm508, %v511, %v513
      %v515 = vsel %vm507, %v494, %v497
      %v516 = vsel %vm510, %v503, 920167782
      %v517 = vsel %vm509, %v500, %v516
      %v518 = vsel %vm508, %v515, %v517
      %v519 = vsel %vm507, %v497, %v500
      %v520 = vsel %vm510, %v506, 1326507024
      %v521 = vsel %vm509, %v503, %v520
      %v522 = vsel %vm508, %v519, %v521
      %v523 = vshll.u32 %v483, 8
      %v524 = vmul.u32.u64.compose %v523, %v522
      %v525 = vextract.low.u32 %v524
      %v526 = vextract.high.u32 %v524
      %v527 = vmul.u32.u64.compose %v523, %v518
      %v528 = vextract.low.u32 %v527
      %v529 = vextract.high.u32 %v527
      %v530 = vmul.u32 %v523, %v514
      %v531 = vadd.s32 %v526, %v528
      %vm532 = vc.u32 %v526, %v528
      %v533 = vadd.s32 %v529, 1
      %v534 = vsel %vm532, %v533, %v529
      %v535 = vadd.s32 %v530, %v534
      %v536 = vadd.s32 %v535, 536870912
      %v537 = vshrl.u32 %v536, 30
      %v538 = vshll.u32 %v537, 30
      %v539 = vsub.s32 %v535, %v538
      %vm540 = vcmp.lt.s32.totalorder %v539, 0
      %v541 = vsub.s32 0, %v539
      %v542 = vsel %vm540, %v541, %v539
      %v543 = vclz %v542
      %v544 = vsub.s32 %v543, 2
      %vm545 = vcmp.gt.s32.totalorder 0, %v544
      %v546 = vsel %vm545, 0, %v544
      %v547 = vsub.s32 32, %v546
      %v548 = vshll.u32 %v539, %v546
      %v549 = vshrl.u32 %v531, %v547
      %v550 = vor.u32 %v548, %v549
      %v551 = vsub.s32 4294967266, %v546
      %v552 = vadd.s32 %v551, 127
      %v553 = vshll.u32 %v552, 23
      %v554 = vor.u32 4788187, %v553
      %v555 = vand.u32 2147483647, %v554
      %v557 = vcvt.s32.f32 %v550
      %v558 = vmul.f32 %v557, %v555
      %v559 = vxor.u32 %v558, 2147483648
      %v560 = vsel %vm477, %v559, %v558
      %v561 = vsub.s32 4, %v537
      %v562 = vsel %vm477, %v561, %v537
      %v563 = vsel %vm476, %v371, %v560
      %v564 = vsel %vm476, 0, %v562
      %v565 = vcosq.f32.pop %v563
      %v566 = vsinq.f32.pop %v563
      %vm567 = vweird.f32 %v371
      %v568 = vand.u32 %v564, 3
      %vm569 = vcmp.lt.s32.totalorder %v568, 2
      %vm570 = vcmp.eq.s32.totalorder %v568, 0
      %v571 = vxor.u32 %v566, 2147483648
      %v572 = vsel %vm570, %v565, %v571
      %vm573 = vcmp.eq.s32.totalorder %v568, 2
      %v574 = vxor.u32 %v565, 2147483648
      %v575 = vsel %vm573, %v574, %v566
      %v576 = vsel %vm569, %v572, %v575
      %v577 = vsel %vm567, nan, %v576
      %v578 = vsub.f32 1.0, %v474
      %v579 = vsub.f32 1.0, %v577
      %581 = vset.pattern.permute.xlu0 0
      %582 = vperm.xlu0 %581, %v356
      %v583 = vpop.permute.xlu0 %582
      %586 = vset.pattern.permute.xlu0 0
      %587 = vperm.xlu0 %586, %v357
      %v588 = vpop.permute.xlu0 %587
      %v590 = vmul.f32 %v583, %v578
      %v591 = vmul.f32 %v588, %v579
      %v592 = vadd.f32 %v348, %v590
      %v593 = vadd.f32 %v349, %v591
      %v594 = vpack.c.bf16 %v593, %v592
      %596 = vrot.lane.b32.xlu0 %v594, 127
      %v597 = vpop.permute.xlu0 %596
      %599 = vrot.lane.b32.xlu0 %v594, 126
      %v600 = vpop.permute.xlu0 %599
      %602 = vrot.lane.b32.xlu0 %v594, 125
      %v603 = vpop.permute.xlu0 %602
      %605 = vrot.lane.b32.xlu0 %v594, 124
      %v606 = vpop.permute.xlu0 %605
      %608 = vrot.lane.b32.xlu0 %v594, 123
      %v609 = vpop.permute.xlu0 %608
      %611 = vrot.lane.b32.xlu0 %v594, 122
      %v612 = vpop.permute.xlu0 %611
      %v614 = vld [vmem:[%s1] sm:$0xf]
      %v615 = vld [vmem:[%s1 + $0x4] sm:$0xf]
      %v616 = vld [vmem:[%s2] sm:$0xff]
      %v617 = vld [vmem:[%s2 + $0x8] sm:$0xff]
      %619 = vset.pattern.permute.xlu0 0
      %620 = vperm.xlu0 %619, %v616
      %v621 = vpop.permute.xlu0 %620
      %624 = vset.pattern.permute.xlu0 0
      %625 = vperm.xlu0 %624, %v617
      %v626 = vpop.permute.xlu0 %625
      %v630 = vunpack.c.l.b16 %v614
      %v631 = vunpack.c.l.b16 %v615
      %v632 = vpack.c.b16 %v631, %v630
      %vm633 = vcmask 916480
      %v635 = vsel %vm633, %v632, 0
      %637 = vmatprep.subr.bf16.mxu0 0
      %638 = vmatpush1.bf16.msra.mxu0 %v594
      %639 = vmatprep.subr.bf16.mxu0 0
      %640 = vmatpush1.bf16.msra.mxu0 %v597
      %641 = vmatprep.subr.bf16.mxu0 0
      %642 = vmatpush1.bf16.msra.mxu0 %v600
      %643 = vmatprep.subr.bf16.mxu0 0
      %644 = vmatpush1.bf16.msra.mxu0 %v603
      %645 = vmatprep.subr.bf16.mxu0 0
      %646 = vmatpush1.bf16.msra.mxu0 %v606
      %647 = vmatprep.subr.bf16.mxu0 0
      %648 = vmatpush1.bf16.msra.mxu0 %v609
      %649 = vmatprep.subr.bf16.mxu0 0
      %650 = vmatpush1.bf16.msra.mxu0 %v612
      %651 = vmatprep.subr.bf16.mxu0 0
      %652 = vmatpush1.bf16.msra.mxu0 0
      %653 = vmatprep.subr.bf16.mxu0 0
      %654 = vmatpush1.bf16.msra.mxu0 0
      %655 = vmatprep.subr.bf16.mxu0 0
      %656 = vmatpush1.bf16.msra.mxu0 0
      %657 = vmatprep.subr.bf16.mxu0 0
      %658 = vmatpush1.bf16.msra.mxu0 0
      %659 = vmatprep.subr.bf16.mxu0 0
      %660 = vmatpush1.bf16.msra.mxu0 0
      %661 = vmatprep.subr.bf16.mxu0 0
      %662 = vmatpush1.bf16.msra.mxu0 0
      %663 = vmatprep.subr.bf16.mxu0 0
      %664 = vmatpush1.bf16.msra.mxu0 0
      %665 = vmatprep.subr.bf16.mxu0 0
      %666 = vmatpush1.bf16.msra.mxu0 0
      %667 = vmatprep.subr.bf16.mxu0 0
      %668 = vmatpush1.bf16.msra.mxu0 0
      %669 = vmatprep.mubr.bf16.mxu0 0
      %670 = vmatmul.mubr.bf16.gmra.mrb[0].mxu0 %v635
      %v671 = vpop.f32.mrb[0].mxu0
      %v672 = vadd.f32 %v621, %v671
      %v673 = vpop.f32.mrb[0].mxu0
      %v674 = vpop.f32.mrb[0].mxu0
      %v675 = vadd.f32 %v626, %v674
      %v676 = vpop.f32.mrb[0].mxu0
      %677 = vdwg.mxu0
      %v678 = vld [vmem:[%s6] sm:$0xff]
      %v679 = vld [vmem:[%s6 + $0x8] sm:$0xff]
      %v680 = vadd.f32 %v678, 1e-09
      %v681 = vadd.f32 %v679, 1e-09
      %v682 = vrcp.pop %v680
      %v683 = vrcp.pop %v681
      %v684 = vmul.f32 %v682, 0.5
      %v685 = vmul.f32 %v683, 0.5
      %v686 = vmul.f32 %v678, 2.0
      %v687 = vmul.f32 %v679, 2.0
      %689 = vset.pattern.permute.xlu0 0
      %690 = vperm.xlu0 %689, %v686
      %v691 = vpop.permute.xlu0 %690
      %694 = vset.pattern.permute.xlu0 0
      %695 = vperm.xlu0 %694, %v687
      %v696 = vpop.permute.xlu0 %695
      %v698 = vmul.f32 %v691, %v672
      %v699 = vmul.f32 %v696, %v675
      %v700 = vand.u32 2147483647, %v698
      %vm701 = vcmp.le.f32.partialorder %v700, 0.7853982
      %vm702 = vcmp.lt.s32.totalorder %v698, 0
      %v703 = vand.u32 %v698, 2139095040
      %v704 = vshrl.u32 %v703, 23
      %v705 = vsub.s32 %v704, 127
      %v706 = vand.u32 2147483647, %v698
      %v707 = vand.u32 %v706, 8388607
      %v708 = vor.u32 %v707, 8388608
      %v709 = vsub.s32 0, %v708
      %v710 = vadd.s32 %v705, 1
      %vm711 = vcmp.gt.s32.totalorder %v710, 0
      %v712 = vsel %vm711, %v710, 0
      %v713 = vshrl.u32 %v712, 5
      %v714 = vand.u32 %v712, 31
      %v715 = vsub.s32 32, %v714
      %v716 = vshrl.u32 683565275, %v715
      %v717 = vshll.u32 683565275, %v714
      %v718 = vshrl.u32 2475754826, %v715
      %v719 = vor.u32 %v717, %v718
      %v720 = vshll.u32 2475754826, %v714
      %v721 = vshrl.u32 2131351028, %v715
      %v722 = vor.u32 %v720, %v721
      %v723 = vshll.u32 2131351028, %v714
      %v724 = vshrl.u32 2102212464, %v715
      %v725 = vor.u32 %v723, %v724
      %v726 = vshll.u32 2102212464, %v714
      %v727 = vshrl.u32 920167782, %v715
      %v728 = vor.u32 %v726, %v727
      %v729 = vshll.u32 920167782, %v714
      %v730 = vshrl.u32 1326507024, %v715
      %v731 = vor.u32 %v729, %v730
      %vm732 = vcmp.lt.s32.totalorder %v713, 1
      %vm733 = vcmp.lt.s32.totalorder %v713, 2
      %vm734 = vcmp.lt.s32.totalorder %v713, 3
      %vm735 = vcmp.lt.s32.totalorder %v713, 4
      %v736 = vsel %vm732, %v716, %v719
      %v737 = vsel %vm735, %v725, 2102212464
      %v738 = vsel %vm734, %v722, %v737
      %v739 = vsel %vm733, %v736, %v738
      %v740 = vsel %vm732, %v719, %v722
      %v741 = vsel %vm735, %v728, 920167782
      %v742 = vsel %vm734, %v725, %v741
      %v743 = vsel %vm733, %v740, %v742
      %v744 = vsel %vm732, %v722, %v725
      %v745 = vsel %vm735, %v731, 1326507024
      %v746 = vsel %vm734, %v728, %v745
      %v747 = vsel %vm733, %v744, %v746
      %v748 = vshll.u32 %v708, 8
      %v749 = vmul.u32.u64.compose %v748, %v747
      %v750 = vextract.low.u32 %v749
      %v751 = vextract.high.u32 %v749
      %v752 = vmul.u32.u64.compose %v748, %v743
      %v753 = vextract.low.u32 %v752
      %v754 = vextract.high.u32 %v752
      %v755 = vmul.u32 %v748, %v739
      %v756 = vadd.s32 %v751, %v753
      %vm757 = vc.u32 %v751, %v753
      %v758 = vadd.s32 %v754, 1
      %v759 = vsel %vm757, %v758, %v754
      %v760 = vadd.s32 %v755, %v759
      %v761 = vadd.s32 %v760, 536870912
      %v762 = vshrl.u32 %v761, 30
      %v763 = vshll.u32 %v762, 30
      %v764 = vsub.s32 %v760, %v763
      %vm765 = vcmp.lt.s32.totalorder %v764, 0
      %v766 = vsub.s32 0, %v764
      %v767 = vsel %vm765, %v766, %v764
      %v768 = vclz %v767
      %v769 = vsub.s32 %v768, 2
      %vm770 = vcmp.gt.s32.totalorder 0, %v769
      %v771 = vsel %vm770, 0, %v769
      %v772 = vsub.s32 32, %v771
      %v773 = vshll.u32 %v764, %v771
      %v774 = vshrl.u32 %v756, %v772
      %v775 = vor.u32 %v773, %v774
      %v776 = vsub.s32 4294967266, %v771
      %v777 = vadd.s32 %v776, 127
      %v778 = vshll.u32 %v777, 23
      %v779 = vor.u32 4788187, %v778
      %v780 = vand.u32 2147483647, %v779
      %v782 = vcvt.s32.f32 %v775
      %v783 = vmul.f32 %v782, %v780
      %v784 = vxor.u32 %v783, 2147483648
      %v785 = vsel %vm702, %v784, %v783
      %v786 = vsub.s32 4, %v762
      %v787 = vsel %vm702, %v786, %v762
      %v788 = vsel %vm701, %v698, %v785
      %v789 = vsel %vm701, 0, %v787
      %v790 = vcosq.f32.pop %v788
      %v791 = vsinq.f32.pop %v788
      %vm792 = vweird.f32 %v698
      %v793 = vand.u32 %v789, 3
      %vm794 = vcmp.lt.s32.totalorder %v793, 2
      %vm795 = vcmp.eq.s32.totalorder %v793, 0
      %v796 = vxor.u32 %v791, 2147483648
      %v797 = vsel %vm795, %v790, %v796
      %vm798 = vcmp.eq.s32.totalorder %v793, 2
      %v799 = vxor.u32 %v790, 2147483648
      %v800 = vsel %vm798, %v799, %v791
      %v801 = vsel %vm794, %v797, %v800
      %v802 = vsel %vm792, nan, %v801
      %v803 = vand.u32 2147483647, %v699
      %vm804 = vcmp.le.f32.partialorder %v803, 0.7853982
      %vm805 = vcmp.lt.s32.totalorder %v699, 0
      %v806 = vand.u32 %v699, 2139095040
      %v807 = vshrl.u32 %v806, 23
      %v808 = vsub.s32 %v807, 127
      %v809 = vand.u32 2147483647, %v699
      %v810 = vand.u32 %v809, 8388607
      %v811 = vor.u32 %v810, 8388608
      %v812 = vsub.s32 0, %v811
      %v813 = vadd.s32 %v808, 1
      %vm814 = vcmp.gt.s32.totalorder %v813, 0
      %v815 = vsel %vm814, %v813, 0
      %v816 = vshrl.u32 %v815, 5
      %v817 = vand.u32 %v815, 31
      %v818 = vsub.s32 32, %v817
      %v819 = vshrl.u32 683565275, %v818
      %v820 = vshll.u32 683565275, %v817
      %v821 = vshrl.u32 2475754826, %v818
      %v822 = vor.u32 %v820, %v821
      %v823 = vshll.u32 2475754826, %v817
      %v824 = vshrl.u32 2131351028, %v818
      %v825 = vor.u32 %v823, %v824
      %v826 = vshll.u32 2131351028, %v817
      %v827 = vshrl.u32 2102212464, %v818
      %v828 = vor.u32 %v826, %v827
      %v829 = vshll.u32 2102212464, %v817
      %v830 = vshrl.u32 920167782, %v818
      %v831 = vor.u32 %v829, %v830
      %v832 = vshll.u32 920167782, %v817
      %v833 = vshrl.u32 1326507024, %v818
      %v834 = vor.u32 %v832, %v833
      %vm835 = vcmp.lt.s32.totalorder %v816, 1
      %vm836 = vcmp.lt.s32.totalorder %v816, 2
      %vm837 = vcmp.lt.s32.totalorder %v816, 3
      %vm838 = vcmp.lt.s32.totalorder %v816, 4
      %v839 = vsel %vm835, %v819, %v822
      %v840 = vsel %vm838, %v828, 2102212464
      %v841 = vsel %vm837, %v825, %v840
      %v842 = vsel %vm836, %v839, %v841
      %v843 = vsel %vm835, %v822, %v825
      %v844 = vsel %vm838, %v831, 920167782
      %v845 = vsel %vm837, %v828, %v844
      %v846 = vsel %vm836, %v843, %v845
      %v847 = vsel %vm835, %v825, %v828
      %v848 = vsel %vm838, %v834, 1326507024
      %v849 = vsel %vm837, %v831, %v848
      %v850 = vsel %vm836, %v847, %v849
      %v851 = vshll.u32 %v811, 8
      %v852 = vmul.u32.u64.compose %v851, %v850
      %v853 = vextract.low.u32 %v852
      %v854 = vextract.high.u32 %v852
      %v855 = vmul.u32.u64.compose %v851, %v846
      %v856 = vextract.low.u32 %v855
      %v857 = vextract.high.u32 %v855
      %v858 = vmul.u32 %v851, %v842
      %v859 = vadd.s32 %v854, %v856
      %vm860 = vc.u32 %v854, %v856
      %v861 = vadd.s32 %v857, 1
      %v862 = vsel %vm860, %v861, %v857
      %v863 = vadd.s32 %v858, %v862
      %v864 = vadd.s32 %v863, 536870912
      %v865 = vshrl.u32 %v864, 30
      %v866 = vshll.u32 %v865, 30
      %v867 = vsub.s32 %v863, %v866
      %vm868 = vcmp.lt.s32.totalorder %v867, 0
      %v869 = vsub.s32 0, %v867
      %v870 = vsel %vm868, %v869, %v867
      %v871 = vclz %v870
      %v872 = vsub.s32 %v871, 2
      %vm873 = vcmp.gt.s32.totalorder 0, %v872
      %v874 = vsel %vm873, 0, %v872
      %v875 = vsub.s32 32, %v874
      %v876 = vshll.u32 %v867, %v874
      %v877 = vshrl.u32 %v859, %v875
      %v878 = vor.u32 %v876, %v877
      %v879 = vsub.s32 4294967266, %v874
      %v880 = vadd.s32 %v879, 127
      %v881 = vshll.u32 %v880, 23
      %v882 = vor.u32 4788187, %v881
      %v883 = vand.u32 2147483647, %v882
      %v885 = vcvt.s32.f32 %v878
      %v886 = vmul.f32 %v885, %v883
      %v887 = vxor.u32 %v886, 2147483648
      %v888 = vsel %vm805, %v887, %v886
      %v889 = vsub.s32 4, %v865
      %v890 = vsel %vm805, %v889, %v865
      %v891 = vsel %vm804, %v699, %v888
      %v892 = vsel %vm804, 0, %v890
      %v893 = vcosq.f32.pop %v891
      %v894 = vsinq.f32.pop %v891
      %vm895 = vweird.f32 %v699
      %v896 = vand.u32 %v892, 3
      %vm897 = vcmp.lt.s32.totalorder %v896, 2
      %vm898 = vcmp.eq.s32.totalorder %v896, 0
      %v899 = vxor.u32 %v894, 2147483648
      %v900 = vsel %vm898, %v893, %v899
      %vm901 = vcmp.eq.s32.totalorder %v896, 2
      %v902 = vxor.u32 %v893, 2147483648
      %v903 = vsel %vm901, %v902, %v894
      %v904 = vsel %vm897, %v900, %v903
      %v905 = vsel %vm895, nan, %v904
      %v906 = vsub.f32 1.0, %v802
      %v907 = vsub.f32 1.0, %v905
      %909 = vset.pattern.permute.xlu0 0
      %910 = vperm.xlu0 %909, %v684
      %v911 = vpop.permute.xlu0 %910
      %914 = vset.pattern.permute.xlu0 0
      %915 = vperm.xlu0 %914, %v685
      %v916 = vpop.permute.xlu0 %915
      %v918 = vmul.f32 %v911, %v906
      %v919 = vmul.f32 %v916, %v907
      %v920 = vadd.f32 %v672, %v918
      %v921 = vadd.f32 %v675, %v919
      %v922 = vld [vmem:[%s4] sm:$0xf]
      %v923 = vld [vmem:[%s4 + $0x4] sm:$0xf]
      %v924 = vpack.c.bf16 %v921, %v920
      %v925 = vld [vmem:[%s5] sm:$0xff]
      %v926 = vld [vmem:[%s5 + $0x8] sm:$0xff]
      %928 = vset.pattern.permute.xlu0 0
      %929 = vperm.xlu0 %928, %v925
      %v930 = vpop.permute.xlu0 %929
      %933 = vset.pattern.permute.xlu0 0
      %934 = vperm.xlu0 %933, %v926
      %v935 = vpop.permute.xlu0 %934
      %v939 = vunpack.c.l.b16 %v922
      %v940 = vunpack.c.l.b16 %v923
      %v941 = vpack.c.b16 %v940, %v939
      %vm942 = vcmask 130048
      %v944 = vsel %vm942, %v941, 0
      %946 = vmatprep.subr.bf16.mxu0 0
      %947 = vmatpush1.bf16.msra.mxu0 %v924
      %948 = vmatprep.subr.bf16.mxu0 0
      %949 = vmatpush1.bf16.msra.mxu0 0
      %950 = vmatprep.subr.bf16.mxu0 0
      %951 = vmatpush1.bf16.msra.mxu0 0
      %952 = vmatprep.subr.bf16.mxu0 0
      %953 = vmatpush1.bf16.msra.mxu0 0
      %954 = vmatprep.subr.bf16.mxu0 0
      %955 = vmatpush1.bf16.msra.mxu0 0
      %956 = vmatprep.subr.bf16.mxu0 0
      %957 = vmatpush1.bf16.msra.mxu0 0
      %958 = vmatprep.subr.bf16.mxu0 0
      %959 = vmatpush1.bf16.msra.mxu0 0
      %960 = vmatprep.subr.bf16.mxu0 0
      %961 = vmatpush1.bf16.msra.mxu0 0
      %962 = vmatprep.subr.bf16.mxu0 0
      %963 = vmatpush1.bf16.msra.mxu0 0
      %964 = vmatprep.subr.bf16.mxu0 0
      %965 = vmatpush1.bf16.msra.mxu0 0
      %966 = vmatprep.subr.bf16.mxu0 0
      %967 = vmatpush1.bf16.msra.mxu0 0
      %968 = vmatprep.subr.bf16.mxu0 0
      %969 = vmatpush1.bf16.msra.mxu0 0
      %970 = vmatprep.subr.bf16.mxu0 0
      %971 = vmatpush1.bf16.msra.mxu0 0
      %972 = vmatprep.subr.bf16.mxu0 0
      %973 = vmatpush1.bf16.msra.mxu0 0
      %974 = vmatprep.subr.bf16.mxu0 0
      %975 = vmatpush1.bf16.msra.mxu0 0
      %976 = vmatprep.subr.bf16.mxu0 0
      %977 = vmatpush1.bf16.msra.mxu0 0
      %978 = vmatprep.mubr.bf16.mxu0 0
      %979 = vmatmul.mubr.bf16.gmra.mrb[0].mxu0 %v944
      %v980 = vpop.f32.mrb[0].mxu0
      %v981 = vadd.f32 %v930, %v980
      %v982 = vpop.f32.mrb[0].mxu0
      %v983 = vpop.f32.mrb[0].mxu0
      %v984 = vadd.f32 %v935, %v983
      %v985 = vpop.f32.mrb[0].mxu0
      %986 = vdwg.mxu0
      %989 = vrot.lane.b32.xlu0 %v348, 125
      %v990 = vpop.permute.xlu0 %989
      %991 = vrot.lane.b32.xlu0 %v349, 125
      %v992 = vpop.permute.xlu0 %991
      %v995 = vadd.f32 %v981, %v990
      %v996 = vadd.f32 %v984, %v992
      %v997 = vpack.c.bf16 %v996, %v995
      %v999 = vunpack.c.l.b16 %v997
      %v1000 = vunpack.c.h.b16 %v997
      %v1001 = vpack.c.b16 %v999, %v999
      %v1002 = vpack.c.b16 %v1000, %v1000
      %vm1005 = vcmask 281600
      %1006 = vst.msk [vmem:[%s320] sm:$0xf] %vm1005, %v1001
      %1007 = vst.msk [vmem:[%s320 + $0x4] sm:$0xf] %vm1005, %v1002
      %s1008 = ssub.s32 0, %s23
      %p1009 = scmp.lt.s32.totalorder %s22, 1
      %s1010 = scalar_select %p1009, %s22, 1
      %p1011 = scmp.lt.s32.totalorder %s1008, 0
      %s1012 = scalar_select %p1011, %s1008, 0
      %s1013 = smul.addr %s1010, 2
      %s1014 = sadd.s32 %s1012, %s1013
      %s1015 = smul.addr %s1014, 4
      %s1016 = scalar_lea.vmem %s7, %s1015
      // Predicated region
      $region53: #{decoder_forward.12} parent=47 // pred_check
        %p1017 = pneg %p208
      $region54: #{decoder_forward.12} parent=47 // pred_check_branch
        %1019 = sbr.rel (%p1017) target = $region56
      $region55: #{decoder_forward.12} parent=47 // pred_region
        %s1020 = ssub.s32 0, %s23
      $region56: #{decoder_forward.12} parent=47 // pred_fallthru
        _
    $region48: #{decoder_forward.12} parent=5 // pred_fallthru
      _
    %p1021 = scmp.le.s32.totalorder 2, %s13
    // Predicated region
    $region57: #{decoder_forward.12} parent=5 // pred_check
      %p1022 = pneg %p1021
    $region58: #{decoder_forward.12} parent=5 // pred_check_branch
      %1024 = sbr.rel (%p1022) target = $region60
    $region59: #{decoder_forward.12} parent=5 // pred_region
      %s1025 = ssub.s32 %s13, 2
      // Predicated region
      $region61: #{decoder_forward.12} parent=59 // pred_check
        %p1026 = pneg %p214
      $region62: #{decoder_forward.12} parent=59 // pred_check_branch
        %1028 = sbr.rel (%p1026) target = $region64
      $region63: #{decoder_forward.12} parent=59 // pred_region
        %s1029 = ssub.s32 0, %s25
        %p1030 = scmp.lt.s32.totalorder %s24, 1
        %s1031 = scalar_select %p1030, %s24, 1
        %p1032 = scmp.lt.s32.totalorder %s1029, 0
        %s1033 = scalar_select %p1032, %s1029, 0
        %s1034 = smul.addr %s1031, 2
        %s1035 = sadd.s32 %s1033, %s1034
        %s1036 = smul.addr %s1035, 4
        %s1037 = scalar_lea.vmem %s7, %s1036
      $region64: #{decoder_forward.12} parent=59 // pred_fallthru
        _
    $region60: #{decoder_forward.12} parent=5 // pred_fallthru
      _
  $region6: #{decoder_forward.12} parent=0 // loop_footer
    %s17 = sadd.s32 1, %s13
  $region7: #{decoder_forward.12} parent=0 // loop_footer_branch
    %12 = sbr.rel target = $region3
  $region8: #{decoder_forward.12} parent=0 // loop_exit
    _

// kernel: decoder_forward.13
$region0: #{decoder_forward.13}
  #allocation0 [shape = 'u32[]', space=smem, size = 0x4, offset = 0x4, fixed_abs, tag = 'smem constant byte address 0x4 - core index']
  #allocation1 [shape = 'u32[144,128]{1,0:T(1,128)}', space=vmem, size = 0x12000, scoped, tag = 'internal scratch']
  #allocation2 [shape = 'bf16[16,18]{1,0:T(16,128)(2,1)}', space=vmem, size = 0x1000, scoped, tag = 'scratch operand']
  %s0 = inlined_call_operand.vmem [shape: bf16[2,16,41], index: 0, kind: input, shape index: {}]
  %s1 = inlined_call_operand.vmem [shape: bf16[16,112], index: 1, kind: input, shape index: {}]
  %s2 = inlined_call_operand.vmem [shape: f32[16,1], index: 2, kind: input, shape index: {}]
  %s3 = inlined_call_operand.vmem [shape: f32[16,1], index: 3, kind: input, shape index: {}]
  %s4 = inlined_call_operand.vmem [shape: bf16[16,16], index: 4, kind: input, shape index: {}]
  %s5 = inlined_call_operand.vmem [shape: f32[16,1], index: 5, kind: input, shape index: {}]
  %s6 = inlined_call_operand.vmem [shape: f32[16,1], index: 6, kind: input, shape index: {}]
  %s7 = inlined_call_operand.vmem [shape: bf16[2,16,41], index: 7, kind: output, shape index: {}]
  %s8 = sld [smem:[#allocation0]]
  $region65: #{decoder_forward.13} parent=0
    _
  %s10 = ssub.s32 1, %s8
  %s11 = scalar_select 0, %s10, %s8
  loop: start=0, step=1, limit=4
  $region2: #{decoder_forward.13} parent=0 // loop_pre_header
    _
  $region3: #{decoder_forward.13} parent=0 // loop_header
    %s13 = sphi 0, %s17
    %p14 = scmp.ge.s32.totalorder %s13, 4
    %s20 = sphi 0, %s32
    %s21 = sphi 0, %s28
    %s22 = sphi 0, %s20
    %s23 = sphi 0, %s21
    %s24 = sphi 0, %s22
    %s25 = sphi 0, %s23
    %s39 = sphi 0, %s41
    %s42 = sphi 0, %s39
    %s43 = sphi 0, %s42
    %s59 = sphi 0, %s43
    %s63 = sphi 0, %s63
    %s65 = sphi 0, %s63
    %s66 = sphi 0, %s65
    %s80 = sphi 0, %s66
    %s84 = sphi 0, %s84
    %s86 = sphi 0, %s84
    %s87 = sphi 0, %s86
    %s101 = sphi 0, %s87
    %s105 = sphi 0, %s105
    %s107 = sphi 0, %s105
    %s108 = sphi 0, %s107
    %s122 = sphi 0, %s108
    %s126 = sphi 0, %s126
    %s128 = sphi 0, %s126
    %s129 = sphi 0, %s128
    %s143 = sphi 0, %s129
    %s147 = sphi 0, %s147
    %s149 = sphi 0, %s147
    %s150 = sphi 0, %s149
    %s164 = sphi 0, %s150
    %s168 = sphi 0, %s168
    %s170 = sphi 0, %s168
    %s171 = sphi 0, %s170
    %s185 = sphi 0, %s171
    %s195 = sphi 0, %s197
    %s198 = sphi 0, %s195
    %s199 = sphi 0, %s198
    %s215 = sphi 0, %s199
  $region4: #{decoder_forward.13} parent=0 // loop_header_branch
    %16 = sbr.rel (%p14) target = $region8
  $region5: #{decoder_forward.13} parent=0 // loop_body
    %s18 = ssub.s32 %s13, 1
    %s19 = ssub.s32 %s13, 2
    %s26 = sadd.s32 1, %s21
    %p27 = scmp.ge.s32.totalorder %s26, 1
    %s28 = scalar_select %p27, 0, %s26
    %s29 = sadd.s32 1, %s20
    %s30 = scalar_select %p27, %s29, %s20
    %p31 = scmp.ge.s32.totalorder %s30, 2
    %s32 = scalar_select %p31, 0, %s30
    %s33 = ssub.s32 0, %s21
    %s34 = ssub.s32 0, %s28
    %s35 = ssub.s32 %s20, %s32
    %s36 = ssub.s32 %s33, %s34
    %s37 = sor.u32 %s35, %s36
    %p38 = scmp.eq.s32.totalorder %s37, 0
    %s40 = sadd.s32 %s39, 1
    %s41 = scalar_select %p38, %s39, %s40
    %p44 = pneg %p38
    %p45 = scmp.eq.s32.totalorder %s13, 1
    %p46 = por %p44, %p45
    %p47 = scmp.ne.s32.totalorder %s39, %s42
    %p48 = scmp.eq.s32.totalorder %s13, 0
    %p49 = por %p47, %p48
    %p50 = scmp.ne.s32.totalorder %s39, %s42
    %p51 = scmp.eq.s32.totalorder %s18, 1
    %p52 = por %p50, %p51
    %p53 = scmp.ne.s32.totalorder %s42, %s43
    %p54 = scmp.eq.s32.totalorder %s18, 0
    %p55 = por %p53, %p54
    %p56 = scmp.ne.s32.totalorder %s42, %s43
    %p57 = scmp.eq.s32.totalorder %s19, 1
    %p58 = por %p56, %p57
    %p60 = scmp.ne.s32.totalorder %s43, %s59
    %p61 = scmp.eq.s32.totalorder %s19, 0
    %p62 = por %p60, %p61
    %s64 = sadd.s32 %s63, 1
    %p67 = scmp.eq.s32.totalorder %s13, 1
    %p68 = scmp.ne.s32.totalorder %s63, %s65
    %p69 = scmp.eq.s32.totalorder %s13, 0
    %p70 = por %p68, %p69
    %p71 = scmp.ne.s32.totalorder %s63, %s65
    %p72 = scmp.eq.s32.totalorder %s18, 1
    %p73 = por %p71, %p72
    %p74 = scmp.ne.s32.totalorder %s65, %s66
    %p75 = scmp.eq.s32.totalorder %s18, 0
    %p76 = por %p74, %p75
    %p77 = scmp.ne.s32.totalorder %s65, %s66
    %p78 = scmp.eq.s32.totalorder %s19, 1
    %p79 = por %p77, %p78
    %p81 = scmp.ne.s32.totalorder %s66, %s80
    %p82 = scmp.eq.s32.totalorder %s19, 0
    %p83 = por %p81, %p82
    %s85 = sadd.s32 %s84, 1
    %p88 = scmp.eq.s32.totalorder %s13, 1
    %p89 = scmp.ne.s32.totalorder %s84, %s86
    %p90 = scmp.eq.s32.totalorder %s13, 0
    %p91 = por %p89, %p90
    %p92 = scmp.ne.s32.totalorder %s84, %s86
    %p93 = scmp.eq.s32.totalorder %s18, 1
    %p94 = por %p92, %p93
    %p95 = scmp.ne.s32.totalorder %s86, %s87
    %p96 = scmp.eq.s32.totalorder %s18, 0
    %p97 = por %p95, %p96
    %p98 = scmp.ne.s32.totalorder %s86, %s87
    %p99 = scmp.eq.s32.totalorder %s19, 1
    %p100 = por %p98, %p99
    %p102 = scmp.ne.s32.totalorder %s87, %s101
    %p103 = scmp.eq.s32.totalorder %s19, 0
    %p104 = por %p102, %p103
    %s106 = sadd.s32 %s105, 1
    %p109 = scmp.eq.s32.totalorder %s13, 1
    %p110 = scmp.ne.s32.totalorder %s105, %s107
    %p111 = scmp.eq.s32.totalorder %s13, 0
    %p112 = por %p110, %p111
    %p113 = scmp.ne.s32.totalorder %s105, %s107
    %p114 = scmp.eq.s32.totalorder %s18, 1
    %p115 = por %p113, %p114
    %p116 = scmp.ne.s32.totalorder %s107, %s108
    %p117 = scmp.eq.s32.totalorder %s18, 0
    %p118 = por %p116, %p117
    %p119 = scmp.ne.s32.totalorder %s107, %s108
    %p120 = scmp.eq.s32.totalorder %s19, 1
    %p121 = por %p119, %p120
    %p123 = scmp.ne.s32.totalorder %s108, %s122
    %p124 = scmp.eq.s32.totalorder %s19, 0
    %p125 = por %p123, %p124
    %s127 = sadd.s32 %s126, 1
    %p130 = scmp.eq.s32.totalorder %s13, 1
    %p131 = scmp.ne.s32.totalorder %s126, %s128
    %p132 = scmp.eq.s32.totalorder %s13, 0
    %p133 = por %p131, %p132
    %p134 = scmp.ne.s32.totalorder %s126, %s128
    %p135 = scmp.eq.s32.totalorder %s18, 1
    %p136 = por %p134, %p135
    %p137 = scmp.ne.s32.totalorder %s128, %s129
    %p138 = scmp.eq.s32.totalorder %s18, 0
    %p139 = por %p137, %p138
    %p140 = scmp.ne.s32.totalorder %s128, %s129
    %p141 = scmp.eq.s32.totalorder %s19, 1
    %p142 = por %p140, %p141
    %p144 = scmp.ne.s32.totalorder %s129, %s143
    %p145 = scmp.eq.s32.totalorder %s19, 0
    %p146 = por %p144, %p145
    %s148 = sadd.s32 %s147, 1
    %p151 = scmp.eq.s32.totalorder %s13, 1
    %p152 = scmp.ne.s32.totalorder %s147, %s149
    %p153 = scmp.eq.s32.totalorder %s13, 0
    %p154 = por %p152, %p153
    %p155 = scmp.ne.s32.totalorder %s147, %s149
    %p156 = scmp.eq.s32.totalorder %s18, 1
    %p157 = por %p155, %p156
    %p158 = scmp.ne.s32.totalorder %s149, %s150
    %p159 = scmp.eq.s32.totalorder %s18, 0
    %p160 = por %p158, %p159
    %p161 = scmp.ne.s32.totalorder %s149, %s150
    %p162 = scmp.eq.s32.totalorder %s19, 1
    %p163 = por %p161, %p162
    %p165 = scmp.ne.s32.totalorder %s150, %s164
    %p166 = scmp.eq.s32.totalorder %s19, 0
    %p167 = por %p165, %p166
    %s169 = sadd.s32 %s168, 1
    %p172 = scmp.eq.s32.totalorder %s13, 1
    %p173 = scmp.ne.s32.totalorder %s168, %s170
    %p174 = scmp.eq.s32.totalorder %s13, 0
    %p175 = por %p173, %p174
    %p176 = scmp.ne.s32.totalorder %s168, %s170
    %p177 = scmp.eq.s32.totalorder %s18, 1
    %p178 = por %p176, %p177
    %p179 = scmp.ne.s32.totalorder %s170, %s171
    %p180 = scmp.eq.s32.totalorder %s18, 0
    %p181 = por %p179, %p180
    %p182 = scmp.ne.s32.totalorder %s170, %s171
    %p183 = scmp.eq.s32.totalorder %s19, 1
    %p184 = por %p182, %p183
    %p186 = scmp.ne.s32.totalorder %s171, %s185
    %p187 = scmp.eq.s32.totalorder %s19, 0
    %p188 = por %p186, %p187
    %s189 = ssub.s32 0, %s21
    %s190 = ssub.s32 0, %s28
    %s191 = ssub.s32 %s20, %s32
    %s192 = ssub.s32 %s189, %s190
    %s193 = sor.u32 %s191, %s192
    %p194 = scmp.eq.s32.totalorder %s193, 0
    %s196 = sadd.s32 %s195, 1
    %s197 = scalar_select %p194, %s195, %s196
    %p200 = pneg %p194
    %p201 = scmp.eq.s32.totalorder %s13, 1
    %p202 = por %p200, %p201
    %p203 = scmp.ne.s32.totalorder %s195, %s198
    %p204 = scmp.eq.s32.totalorder %s13, 0
    %p205 = por %p203, %p204
    %p206 = scmp.ne.s32.totalorder %s195, %s198
    %p207 = scmp.eq.s32.totalorder %s18, 1
    %p208 = por %p206, %p207
    %p209 = scmp.ne.s32.totalorder %s198, %s199
    %p210 = scmp.eq.s32.totalorder %s18, 0
    %p211 = por %p209, %p210
    %p212 = scmp.ne.s32.totalorder %s198, %s199
    %p213 = scmp.eq.s32.totalorder %s19, 1
    %p214 = por %p212, %p213
    %p216 = scmp.ne.s32.totalorder %s199, %s215
    %p217 = scmp.eq.s32.totalorder %s19, 0
    %p218 = por %p216, %p217
    %p219 = scmp.le.s32.totalorder 1, %s13
    %p220 = scmp.lt.s32.totalorder %s13, 3
    %p221 = pnand %p219, %p220
    %p222 = pneg %p221
    // Predicated region
    $region9: #{decoder_forward.13} parent=5 // pred_check
      _
    $region10: #{decoder_forward.13} parent=5 // pred_check_branch
      %224 = sbr.rel (%p221) target = $region12
    $region11: #{decoder_forward.13} parent=5 // pred_region
      %s225 = ssub.s32 %s13, 1
      // Predicated region
      $region13: #{decoder_forward.13} parent=11 // pred_check
        %p226 = pneg %p76
      $region14: #{decoder_forward.13} parent=11 // pred_check_branch
        %228 = sbr.rel (%p226) target = $region16
      $region15: #{decoder_forward.13} parent=11 // pred_region
        _
      $region16: #{decoder_forward.13} parent=11 // pred_fallthru
        _
      // Predicated region
      $region17: #{decoder_forward.13} parent=11 // pred_check
        %p229 = pneg %p97
      $region18: #{decoder_forward.13} parent=11 // pred_check_branch
        %231 = sbr.rel (%p229) target = $region20
      $region19: #{decoder_forward.13} parent=11 // pred_region
        _
      $region20: #{decoder_forward.13} parent=11 // pred_fallthru
        _
      // Predicated region
      $region21: #{decoder_forward.13} parent=11 // pred_check
        %p232 = pneg %p118
      $region22: #{decoder_forward.13} parent=11 // pred_check_branch
        %234 = sbr.rel (%p232) target = $region24
      $region23: #{decoder_forward.13} parent=11 // pred_region
        _
      $region24: #{decoder_forward.13} parent=11 // pred_fallthru
        _
      // Predicated region
      $region25: #{decoder_forward.13} parent=11 // pred_check
        %p235 = pneg %p139
      $region26: #{decoder_forward.13} parent=11 // pred_check_branch
        %237 = sbr.rel (%p235) target = $region28
      $region27: #{decoder_forward.13} parent=11 // pred_region
        _
      $region28: #{decoder_forward.13} parent=11 // pred_fallthru
        _
      // Predicated region
      $region29: #{decoder_forward.13} parent=11 // pred_check
        %p238 = pneg %p160
      $region30: #{decoder_forward.13} parent=11 // pred_check_branch
        %240 = sbr.rel (%p238) target = $region32
      $region31: #{decoder_forward.13} parent=11 // pred_region
        _
      $region32: #{decoder_forward.13} parent=11 // pred_fallthru
        _
      // Predicated region
      $region33: #{decoder_forward.13} parent=11 // pred_check
        %p241 = pneg %p181
      $region34: #{decoder_forward.13} parent=11 // pred_check_branch
        %243 = sbr.rel (%p241) target = $region36
      $region35: #{decoder_forward.13} parent=11 // pred_region
        _
      $region36: #{decoder_forward.13} parent=11 // pred_fallthru
        _
    $region12: #{decoder_forward.13} parent=5 // pred_fallthru
      _
    %p244 = scmp.lt.s32.totalorder %s13, 2
    // Predicated region
    $region37: #{decoder_forward.13} parent=5 // pred_check
      %p245 = pneg %p244
    $region38: #{decoder_forward.13} parent=5 // pred_check_branch
      %247 = sbr.rel (%p245) target = $region40
    $region39: #{decoder_forward.13} parent=5 // pred_region
      // Predicated region
      $region41: #{decoder_forward.13} parent=39 // pred_check
        %p248 = pneg %p49
      $region42: #{decoder_forward.13} parent=39 // pred_check_branch
        %250 = sbr.rel (%p248) target = $region44
      $region43: #{decoder_forward.13} parent=39 // pred_region
        %s251 = ssub.s32 0, %s21
        %p252 = scmp.lt.s32.totalorder %s20, 1
        %s253 = scalar_select %p252, %s20, 1
        %p254 = scmp.lt.s32.totalorder %s251, 0
        %s255 = scalar_select %p254, %s251, 0
        %s256 = smul.addr %s253, 2
        %s257 = sadd.s32 %s255, %s256
        %s258 = smul.addr %s257, 4
        %s259 = scalar_lea.vmem %s0, %s258
        %s260 = ssub.s32 0, %s21
      $region44: #{decoder_forward.13} parent=39 // pred_fallthru
        _
    $region40: #{decoder_forward.13} parent=5 // pred_fallthru
      _
    %p261 = scmp.le.s32.totalorder 1, %s13
    %p262 = scmp.lt.s32.totalorder %s13, 3
    %p263 = pnand %p261, %p262
    %p264 = pneg %p263
    // Predicated region
    $region45: #{decoder_forward.13} parent=5 // pred_check
      _
    $region46: #{decoder_forward.13} parent=5 // pred_check_branch
      %266 = sbr.rel (%p263) target = $region48
    $region47: #{decoder_forward.13} parent=5 // pred_region
      %s267 = ssub.s32 %s13, 1
      %s268 = ssub.s32 0, %s23
      %p269 = scmp.lt.s32.totalorder %s22, 1
      %s270 = scalar_select %p269, %s22, 1
      %p271 = scmp.lt.s32.totalorder %s268, 0
      %s272 = scalar_select %p271, %s268, 0
      %s273 = smul.addr %s270, 2
      %s274 = sadd.s32 %s272, %s273
      %s275 = smul.addr %s274, 4
      %s276 = scalar_lea.vmem %s0, %s275
      %p277 = pneg %p55
      %p278 = pneg %p52
      %p279 = pneg %p76
      %p280 = pneg %p73
      %p281 = pneg %p97
      %p282 = pneg %p94
      %p283 = pneg %p118
      %p284 = pneg %p115
      %p285 = pneg %p139
      %p286 = pneg %p136
      %p287 = pneg %p160
      %p288 = pneg %p157
      %p289 = pneg %p181
      %p290 = pneg %p178
      %p291 = pneg %p211
      %p292 = pneg %p208
      %s293 = ssub.s32 0, %s23
      %p294 = scmp.lt.s32.totalorder %s22, 1
      %s295 = scalar_select %p294, %s22, 1
      %p296 = scmp.lt.s32.totalorder %s293, 0
      %s297 = scalar_select %p296, %s293, 0
      %s298 = smul.addr %s295, 2
      %s299 = sadd.s32 %s297, %s298
      %s300 = smul.addr %s299, 4
      %s301 = scalar_lea.vmem %s7, %s300
      %s302 = ssub.s32 0, %s23
      %p303 = scmp.lt.s32.totalorder %s22, 1
      %s304 = scalar_select %p303, %s22, 1
      %p305 = scmp.lt.s32.totalorder %s302, 0
      %s306 = scalar_select %p305, %s302, 0
      %s307 = smul.addr %s304, 2
      %s308 = sadd.s32 %s306, %s307
      %s309 = smul.addr %s308, 4
      %s310 = scalar_lea.vmem %s0, %s309
      %s311 = ssub.s32 0, %s23
      %s312 = ssub.s32 0, %s23
      %p313 = scmp.lt.s32.totalorder %s22, 1
      %s314 = scalar_select %p313, %s22, 1
      %p315 = scmp.lt.s32.totalorder %s312, 0
      %s316 = scalar_select %p315, %s312, 0
      %s317 = smul.addr %s314, 2
      %s318 = sadd.s32 %s316, %s317
      %s319 = smul.addr %s318, 4
      %s320 = scalar_lea.vmem %s7, %s319
      %s321 = ssub.s32 0, %s23
      %p323 = scmp.eq.s32.totalorder %s23, 0
      // Predicated region
      $region49: #{decoder_forward.13} parent=47 // pred_check
        %p324 = pneg %p323
      $region50: #{decoder_forward.13} parent=47 // pred_check_branch
        %326 = sbr.rel (%p324) target = $region52
      $region51: #{decoder_forward.13} parent=47 // pred_region
        %vm327 = vcmask 146432
        %328 = vst.msk [vmem:[#allocation2] sm:$0xff] %vm327, 0
      $region52: #{decoder_forward.13} parent=47 // pred_fallthru
        _
      %v329 = vld [vmem:[%s310] sm:$0xf]
      %v330 = vld [vmem:[%s310 + $0x4] sm:$0xf]
      %v331 = vld [vmem:[#allocation2] sm:$0xff]
      %v334 = vunpack.c.l.b16 %v329
      %v335 = vunpack.c.l.b16 %v330
      %v336 = vpack.c.b16 %v335, %v334
      %338 = vrot.lane.b32.xlu0 %v331, 41
      %v339 = vpop.permute.xlu0 %338
      %vm340 = vcmask 334848
      %v343 = vsel %vm340, %v336, %v339
      %vm346 = vcmask 146432
      %347 = vst.msk [vmem:[#allocation2] sm:$0xff] %vm346, %v336
      %v348 = vunpack.c.l.bf16 %v343
      %v349 = vunpack.c.h.bf16 %v343
      %v350 = vld [vmem:[%s3] sm:$0xff]
      %v351 = vld [vmem:[%s3 + $0x8] sm:$0xff]
      %v352 = vadd.f32 %v350, 1e-09
      %v353 = vadd.f32 %v351, 1e-09
      %v354 = vrcp.pop %v352
      %v355 = vrcp.pop %v353
      %v356 = vmul.f32 %v354, 0.5
      %v357 = vmul.f32 %v355, 0.5
      %v358 = vmul.f32 %v350, 2.0
      %v359 = vmul.f32 %v351, 2.0
      %361 = vset.pattern.permute.xlu0 0
      %362 = vperm.xlu0 %361, %v358
      %v363 = vpop.permute.xlu0 %362
      %366 = vset.pattern.permute.xlu0 0
      %367 = vperm.xlu0 %366, %v359
      %v368 = vpop.permute.xlu0 %367
      %v370 = vmul.f32 %v363, %v348
      %v371 = vmul.f32 %v368, %v349
      %v372 = vand.u32 2147483647, %v370
      %vm373 = vcmp.le.f32.partialorder %v372, 0.7853982
      %vm374 = vcmp.lt.s32.totalorder %v370, 0
      %v375 = vand.u32 %v370, 2139095040
      %v376 = vshrl.u32 %v375, 23
      %v377 = vsub.s32 %v376, 127
      %v378 = vand.u32 2147483647, %v370
      %v379 = vand.u32 %v378, 8388607
      %v380 = vor.u32 %v379, 8388608
      %v381 = vsub.s32 0, %v380
      %v382 = vadd.s32 %v377, 1
      %vm383 = vcmp.gt.s32.totalorder %v382, 0
      %v384 = vsel %vm383, %v382, 0
      %v385 = vshrl.u32 %v384, 5
      %v386 = vand.u32 %v384, 31
      %v387 = vsub.s32 32, %v386
      %v388 = vshrl.u32 683565275, %v387
      %v389 = vshll.u32 683565275, %v386
      %v390 = vshrl.u32 2475754826, %v387
      %v391 = vor.u32 %v389, %v390
      %v392 = vshll.u32 2475754826, %v386
      %v393 = vshrl.u32 2131351028, %v387
      %v394 = vor.u32 %v392, %v393
      %v395 = vshll.u32 2131351028, %v386
      %v396 = vshrl.u32 2102212464, %v387
      %v397 = vor.u32 %v395, %v396
      %v398 = vshll.u32 2102212464, %v386
      %v399 = vshrl.u32 920167782, %v387
      %v400 = vor.u32 %v398, %v399
      %v401 = vshll.u32 920167782, %v386
      %v402 = vshrl.u32 1326507024, %v387
      %v403 = vor.u32 %v401, %v402
      %vm404 = vcmp.lt.s32.totalorder %v385, 1
      %vm405 = vcmp.lt.s32.totalorder %v385, 2
      %vm406 = vcmp.lt.s32.totalorder %v385, 3
      %vm407 = vcmp.lt.s32.totalorder %v385, 4
      %v408 = vsel %vm404, %v388, %v391
      %v409 = vsel %vm407, %v397, 2102212464
      %v410 = vsel %vm406, %v394, %v409
      %v411 = vsel %vm405, %v408, %v410
      %v412 = vsel %vm404, %v391, %v394
      %v413 = vsel %vm407, %v400, 920167782
      %v414 = vsel %vm406, %v397, %v413
      %v415 = vsel %vm405, %v412, %v414
      %v416 = vsel %vm404, %v394, %v397
      %v417 = vsel %vm407, %v403, 1326507024
      %v418 = vsel %vm406, %v400, %v417
      %v419 = vsel %vm405, %v416, %v418
      %v420 = vshll.u32 %v380, 8
      %v421 = vmul.u32.u64.compose %v420, %v419
      %v422 = vextract.low.u32 %v421
      %v423 = vextract.high.u32 %v421
      %v424 = vmul.u32.u64.compose %v420, %v415
      %v425 = vextract.low.u32 %v424
      %v426 = vextract.high.u32 %v424
      %v427 = vmul.u32 %v420, %v411
      %v428 = vadd.s32 %v423, %v425
      %vm429 = vc.u32 %v423, %v425
      %v430 = vadd.s32 %v426, 1
      %v431 = vsel %vm429, %v430, %v426
      %v432 = vadd.s32 %v427, %v431
      %v433 = vadd.s32 %v432, 536870912
      %v434 = vshrl.u32 %v433, 30
      %v435 = vshll.u32 %v434, 30
      %v436 = vsub.s32 %v432, %v435
      %vm437 = vcmp.lt.s32.totalorder %v436, 0
      %v438 = vsub.s32 0, %v436
      %v439 = vsel %vm437, %v438, %v436
      %v440 = vclz %v439
      %v441 = vsub.s32 %v440, 2
      %vm442 = vcmp.gt.s32.totalorder 0, %v441
      %v443 = vsel %vm442, 0, %v441
      %v444 = vsub.s32 32, %v443
      %v445 = vshll.u32 %v436, %v443
      %v446 = vshrl.u32 %v428, %v444
      %v447 = vor.u32 %v445, %v446
      %v448 = vsub.s32 4294967266, %v443
      %v449 = vadd.s32 %v448, 127
      %v450 = vshll.u32 %v449, 23
      %v451 = vor.u32 4788187, %v450
      %v452 = vand.u32 2147483647, %v451
      %v454 = vcvt.s32.f32 %v447
      %v455 = vmul.f32 %v454, %v452
      %v456 = vxor.u32 %v455, 2147483648
      %v457 = vsel %vm374, %v456, %v455
      %v458 = vsub.s32 4, %v434
      %v459 = vsel %vm374, %v458, %v434
      %v460 = vsel %vm373, %v370, %v457
      %v461 = vsel %vm373, 0, %v459
      %v462 = vcosq.f32.pop %v460
      %v463 = vsinq.f32.pop %v460
      %vm464 = vweird.f32 %v370
      %v465 = vand.u32 %v461, 3
      %vm466 = vcmp.lt.s32.totalorder %v465, 2
      %vm467 = vcmp.eq.s32.totalorder %v465, 0
      %v468 = vxor.u32 %v463, 2147483648
      %v469 = vsel %vm467, %v462, %v468
      %vm470 = vcmp.eq.s32.totalorder %v465, 2
      %v471 = vxor.u32 %v462, 2147483648
      %v472 = vsel %vm470, %v471, %v463
      %v473 = vsel %vm466, %v469, %v472
      %v474 = vsel %vm464, nan, %v473
      %v475 = vand.u32 2147483647, %v371
      %vm476 = vcmp.le.f32.partialorder %v475, 0.7853982
      %vm477 = vcmp.lt.s32.totalorder %v371, 0
      %v478 = vand.u32 %v371, 2139095040
      %v479 = vshrl.u32 %v478, 23
      %v480 = vsub.s32 %v479, 127
      %v481 = vand.u32 2147483647, %v371
      %v482 = vand.u32 %v481, 8388607
      %v483 = vor.u32 %v482, 8388608
      %v484 = vsub.s32 0, %v483
      %v485 = vadd.s32 %v480, 1
      %vm486 = vcmp.gt.s32.totalorder %v485, 0
      %v487 = vsel %vm486, %v485, 0
      %v488 = vshrl.u32 %v487, 5
      %v489 = vand.u32 %v487, 31
      %v490 = vsub.s32 32, %v489
      %v491 = vshrl.u32 683565275, %v490
      %v492 = vshll.u32 683565275, %v489
      %v493 = vshrl.u32 2475754826, %v490
      %v494 = vor.u32 %v492, %v493
      %v495 = vshll.u32 2475754826, %v489
      %v496 = vshrl.u32 2131351028, %v490
      %v497 = vor.u32 %v495, %v496
      %v498 = vshll.u32 2131351028, %v489
      %v499 = vshrl.u32 2102212464, %v490
      %v500 = vor.u32 %v498, %v499
      %v501 = vshll.u32 2102212464, %v489
      %v502 = vshrl.u32 920167782, %v490
      %v503 = vor.u32 %v501, %v502
      %v504 = vshll.u32 920167782, %v489
      %v505 = vshrl.u32 1326507024, %v490
      %v506 = vor.u32 %v504, %v505
      %vm507 = vcmp.lt.s32.totalorder %v488, 1
      %vm508 = vcmp.lt.s32.totalorder %v488, 2
      %vm509 = vcmp.lt.s32.totalorder %v488, 3
      %vm510 = vcmp.lt.s32.totalorder %v488, 4
      %v511 = vsel %vm507, %v491, %v494
      %v512 = vsel %vm510, %v500, 2102212464
      %v513 = vsel %vm509, %v497, %v512
      %v514 = vsel %vm508, %v511, %v513
      %v515 = vsel %vm507, %v494, %v497
      %v516 = vsel %vm510, %v503, 920167782
      %v517 = vsel %vm509, %v500, %v516
      %v518 = vsel %vm508, %v515, %v517
      %v519 = vsel %vm507, %v497, %v500
      %v520 = vsel %vm510, %v506, 1326507024
      %v521 = vsel %vm509, %v503, %v520
      %v522 = vsel %vm508, %v519, %v521
      %v523 = vshll.u32 %v483, 8
      %v524 = vmul.u32.u64.compose %v523, %v522
      %v525 = vextract.low.u32 %v524
      %v526 = vextract.high.u32 %v524
      %v527 = vmul.u32.u64.compose %v523, %v518
      %v528 = vextract.low.u32 %v527
      %v529 = vextract.high.u32 %v527
      %v530 = vmul.u32 %v523, %v514
      %v531 = vadd.s32 %v526, %v528
      %vm532 = vc.u32 %v526, %v528
      %v533 = vadd.s32 %v529, 1
      %v534 = vsel %vm532, %v533, %v529
      %v535 = vadd.s32 %v530, %v534
      %v536 = vadd.s32 %v535, 536870912
      %v537 = vshrl.u32 %v536, 30
      %v538 = vshll.u32 %v537, 30
      %v539 = vsub.s32 %v535, %v538
      %vm540 = vcmp.lt.s32.totalorder %v539, 0
      %v541 = vsub.s32 0, %v539
      %v542 = vsel %vm540, %v541, %v539
      %v543 = vclz %v542
      %v544 = vsub.s32 %v543, 2
      %vm545 = vcmp.gt.s32.totalorder 0, %v544
      %v546 = vsel %vm545, 0, %v544
      %v547 = vsub.s32 32, %v546
      %v548 = vshll.u32 %v539, %v546
      %v549 = vshrl.u32 %v531, %v547
      %v550 = vor.u32 %v548, %v549
      %v551 = vsub.s32 4294967266, %v546
      %v552 = vadd.s32 %v551, 127
      %v553 = vshll.u32 %v552, 23
      %v554 = vor.u32 4788187, %v553
      %v555 = vand.u32 2147483647, %v554
      %v557 = vcvt.s32.f32 %v550
      %v558 = vmul.f32 %v557, %v555
      %v559 = vxor.u32 %v558, 2147483648
      %v560 = vsel %vm477, %v559, %v558
      %v561 = vsub.s32 4, %v537
      %v562 = vsel %vm477, %v561, %v537
      %v563 = vsel %vm476, %v371, %v560
      %v564 = vsel %vm476, 0, %v562
      %v565 = vcosq.f32.pop %v563
      %v566 = vsinq.f32.pop %v563
      %vm567 = vweird.f32 %v371
      %v568 = vand.u32 %v564, 3
      %vm569 = vcmp.lt.s32.totalorder %v568, 2
      %vm570 = vcmp.eq.s32.totalorder %v568, 0
      %v571 = vxor.u32 %v566, 2147483648
      %v572 = vsel %vm570, %v565, %v571
      %vm573 = vcmp.eq.s32.totalorder %v568, 2
      %v574 = vxor.u32 %v565, 2147483648
      %v575 = vsel %vm573, %v574, %v566
      %v576 = vsel %vm569, %v572, %v575
      %v577 = vsel %vm567, nan, %v576
      %v578 = vsub.f32 1.0, %v474
      %v579 = vsub.f32 1.0, %v577
      %581 = vset.pattern.permute.xlu0 0
      %582 = vperm.xlu0 %581, %v356
      %v583 = vpop.permute.xlu0 %582
      %586 = vset.pattern.permute.xlu0 0
      %587 = vperm.xlu0 %586, %v357
      %v588 = vpop.permute.xlu0 %587
      %v590 = vmul.f32 %v583, %v578
      %v591 = vmul.f32 %v588, %v579
      %v592 = vadd.f32 %v348, %v590
      %v593 = vadd.f32 %v349, %v591
      %v594 = vpack.c.bf16 %v593, %v592
      %596 = vrot.lane.b32.xlu0 %v594, 125
      %v597 = vpop.permute.xlu0 %596
      %599 = vrot.lane.b32.xlu0 %v594, 122
      %v600 = vpop.permute.xlu0 %599
      %602 = vrot.lane.b32.xlu0 %v594, 119
      %v603 = vpop.permute.xlu0 %602
      %605 = vrot.lane.b32.xlu0 %v594, 116
      %v606 = vpop.permute.xlu0 %605
      %608 = vrot.lane.b32.xlu0 %v594, 113
      %v609 = vpop.permute.xlu0 %608
      %611 = vrot.lane.b32.xlu0 %v594, 110
      %v612 = vpop.permute.xlu0 %611
      %v614 = vld [vmem:[%s1] sm:$0xf]
      %v615 = vld [vmem:[%s1 + $0x4] sm:$0xf]
      %v616 = vld [vmem:[%s2] sm:$0xff]
      %v617 = vld [vmem:[%s2 + $0x8] sm:$0xff]
      %619 = vset.pattern.permute.xlu0 0
      %620 = vperm.xlu0 %619, %v616
      %v621 = vpop.permute.xlu0 %620
      %624 = vset.pattern.permute.xlu0 0
      %625 = vperm.xlu0 %624, %v617
      %v626 = vpop.permute.xlu0 %625
      %v630 = vunpack.c.l.b16 %v614
      %v631 = vunpack.c.l.b16 %v615
      %v632 = vpack.c.b16 %v631, %v630
      %vm633 = vcmask 916480
      %v635 = vsel %vm633, %v632, 0
      %637 = vmatprep.subr.bf16.mxu0 0
      %638 = vmatpush1.bf16.msra.mxu0 %v594
      %639 = vmatprep.subr.bf16.mxu0 0
      %640 = vmatpush1.bf16.msra.mxu0 %v597
      %641 = vmatprep.subr.bf16.mxu0 0
      %642 = vmatpush1.bf16.msra.mxu0 %v600
      %643 = vmatprep.subr.bf16.mxu0 0
      %644 = vmatpush1.bf16.msra.mxu0 %v603
      %645 = vmatprep.subr.bf16.mxu0 0
      %646 = vmatpush1.bf16.msra.mxu0 %v606
      %647 = vmatprep.subr.bf16.mxu0 0
      %648 = vmatpush1.bf16.msra.mxu0 %v609
      %649 = vmatprep.subr.bf16.mxu0 0
      %650 = vmatpush1.bf16.msra.mxu0 %v612
      %651 = vmatprep.subr.bf16.mxu0 0
      %652 = vmatpush1.bf16.msra.mxu0 0
      %653 = vmatprep.subr.bf16.mxu0 0
      %654 = vmatpush1.bf16.msra.mxu0 0
      %655 = vmatprep.subr.bf16.mxu0 0
      %656 = vmatpush1.bf16.msra.mxu0 0
      %657 = vmatprep.subr.bf16.mxu0 0
      %658 = vmatpush1.bf16.msra.mxu0 0
      %659 = vmatprep.subr.bf16.mxu0 0
      %660 = vmatpush1.bf16.msra.mxu0 0
      %661 = vmatprep.subr.bf16.mxu0 0
      %662 = vmatpush1.bf16.msra.mxu0 0
      %663 = vmatprep.subr.bf16.mxu0 0
      %664 = vmatpush1.bf16.msra.mxu0 0
      %665 = vmatprep.subr.bf16.mxu0 0
      %666 = vmatpush1.bf16.msra.mxu0 0
      %667 = vmatprep.subr.bf16.mxu0 0
      %668 = vmatpush1.bf16.msra.mxu0 0
      %669 = vmatprep.mubr.bf16.mxu0 0
      %670 = vmatmul.mubr.bf16.gmra.mrb[0].mxu0 %v635
      %v671 = vpop.f32.mrb[0].mxu0
      %v672 = vadd.f32 %v621, %v671
      %v673 = vpop.f32.mrb[0].mxu0
      %v674 = vpop.f32.mrb[0].mxu0
      %v675 = vadd.f32 %v626, %v674
      %v676 = vpop.f32.mrb[0].mxu0
      %677 = vdwg.mxu0
      %v678 = vld [vmem:[%s6] sm:$0xff]
      %v679 = vld [vmem:[%s6 + $0x8] sm:$0xff]
      %v680 = vadd.f32 %v678, 1e-09
      %v681 = vadd.f32 %v679, 1e-09
      %v682 = vrcp.pop %v680
      %v683 = vrcp.pop %v681
      %v684 = vmul.f32 %v682, 0.5
      %v685 = vmul.f32 %v683, 0.5
      %v686 = vmul.f32 %v678, 2.0
      %v687 = vmul.f32 %v679, 2.0
      %689 = vset.pattern.permute.xlu0 0
      %690 = vperm.xlu0 %689, %v686
      %v691 = vpop.permute.xlu0 %690
      %694 = vset.pattern.permute.xlu0 0
      %695 = vperm.xlu0 %694, %v687
      %v696 = vpop.permute.xlu0 %695
      %v698 = vmul.f32 %v691, %v672
      %v699 = vmul.f32 %v696, %v675
      %v700 = vand.u32 2147483647, %v698
      %vm701 = vcmp.le.f32.partialorder %v700, 0.7853982
      %vm702 = vcmp.lt.s32.totalorder %v698, 0
      %v703 = vand.u32 %v698, 2139095040
      %v704 = vshrl.u32 %v703, 23
      %v705 = vsub.s32 %v704, 127
      %v706 = vand.u32 2147483647, %v698
      %v707 = vand.u32 %v706, 8388607
      %v708 = vor.u32 %v707, 8388608
      %v709 = vsub.s32 0, %v708
      %v710 = vadd.s32 %v705, 1
      %vm711 = vcmp.gt.s32.totalorder %v710, 0
      %v712 = vsel %vm711, %v710, 0
      %v713 = vshrl.u32 %v712, 5
      %v714 = vand.u32 %v712, 31
      %v715 = vsub.s32 32, %v714
      %v716 = vshrl.u32 683565275, %v715
      %v717 = vshll.u32 683565275, %v714
      %v718 = vshrl.u32 2475754826, %v715
      %v719 = vor.u32 %v717, %v718
      %v720 = vshll.u32 2475754826, %v714
      %v721 = vshrl.u32 2131351028, %v715
      %v722 = vor.u32 %v720, %v721
      %v723 = vshll.u32 2131351028, %v714
      %v724 = vshrl.u32 2102212464, %v715
      %v725 = vor.u32 %v723, %v724
      %v726 = vshll.u32 2102212464, %v714
      %v727 = vshrl.u32 920167782, %v715
      %v728 = vor.u32 %v726, %v727
      %v729 = vshll.u32 920167782, %v714
      %v730 = vshrl.u32 1326507024, %v715
      %v731 = vor.u32 %v729, %v730
      %vm732 = vcmp.lt.s32.totalorder %v713, 1
      %vm733 = vcmp.lt.s32.totalorder %v713, 2
      %vm734 = vcmp.lt.s32.totalorder %v713, 3
      %vm735 = vcmp.lt.s32.totalorder %v713, 4
      %v736 = vsel %vm732, %v716, %v719
      %v737 = vsel %vm735, %v725, 2102212464
      %v738 = vsel %vm734, %v722, %v737
      %v739 = vsel %vm733, %v736, %v738
      %v740 = vsel %vm732, %v719, %v722
      %v741 = vsel %vm735, %v728, 920167782
      %v742 = vsel %vm734, %v725, %v741
      %v743 = vsel %vm733, %v740, %v742
      %v744 = vsel %vm732, %v722, %v725
      %v745 = vsel %vm735, %v731, 1326507024
      %v746 = vsel %vm734, %v728, %v745
      %v747 = vsel %vm733, %v744, %v746
      %v748 = vshll.u32 %v708, 8
      %v749 = vmul.u32.u64.compose %v748, %v747
      %v750 = vextract.low.u32 %v749
      %v751 = vextract.high.u32 %v749
      %v752 = vmul.u32.u64.compose %v748, %v743
      %v753 = vextract.low.u32 %v752
      %v754 = vextract.high.u32 %v752
      %v755 = vmul.u32 %v748, %v739
      %v756 = vadd.s32 %v751, %v753
      %vm757 = vc.u32 %v751, %v753
      %v758 = vadd.s32 %v754, 1
      %v759 = vsel %vm757, %v758, %v754
      %v760 = vadd.s32 %v755, %v759
      %v761 = vadd.s32 %v760, 536870912
      %v762 = vshrl.u32 %v761, 30
      %v763 = vshll.u32 %v762, 30
      %v764 = vsub.s32 %v760, %v763
      %vm765 = vcmp.lt.s32.totalorder %v764, 0
      %v766 = vsub.s32 0, %v764
      %v767 = vsel %vm765, %v766, %v764
      %v768 = vclz %v767
      %v769 = vsub.s32 %v768, 2
      %vm770 = vcmp.gt.s32.totalorder 0, %v769
      %v771 = vsel %vm770, 0, %v769
      %v772 = vsub.s32 32, %v771
      %v773 = vshll.u32 %v764, %v771
      %v774 = vshrl.u32 %v756, %v772
      %v775 = vor.u32 %v773, %v774
      %v776 = vsub.s32 4294967266, %v771
      %v777 = vadd.s32 %v776, 127
      %v778 = vshll.u32 %v777, 23
      %v779 = vor.u32 4788187, %v778
      %v780 = vand.u32 2147483647, %v779
      %v782 = vcvt.s32.f32 %v775
      %v783 = vmul.f32 %v782, %v780
      %v784 = vxor.u32 %v783, 2147483648
      %v785 = vsel %vm702, %v784, %v783
      %v786 = vsub.s32 4, %v762
      %v787 = vsel %vm702, %v786, %v762
      %v788 = vsel %vm701, %v698, %v785
      %v789 = vsel %vm701, 0, %v787
      %v790 = vcosq.f32.pop %v788
      %v791 = vsinq.f32.pop %v788
      %vm792 = vweird.f32 %v698
      %v793 = vand.u32 %v789, 3
      %vm794 = vcmp.lt.s32.totalorder %v793, 2
      %vm795 = vcmp.eq.s32.totalorder %v793, 0
      %v796 = vxor.u32 %v791, 2147483648
      %v797 = vsel %vm795, %v790, %v796
      %vm798 = vcmp.eq.s32.totalorder %v793, 2
      %v799 = vxor.u32 %v790, 2147483648
      %v800 = vsel %vm798, %v799, %v791
      %v801 = vsel %vm794, %v797, %v800
      %v802 = vsel %vm792, nan, %v801
      %v803 = vand.u32 2147483647, %v699
      %vm804 = vcmp.le.f32.partialorder %v803, 0.7853982
      %vm805 = vcmp.lt.s32.totalorder %v699, 0
      %v806 = vand.u32 %v699, 2139095040
      %v807 = vshrl.u32 %v806, 23
      %v808 = vsub.s32 %v807, 127
      %v809 = vand.u32 2147483647, %v699
      %v810 = vand.u32 %v809, 8388607
      %v811 = vor.u32 %v810, 8388608
      %v812 = vsub.s32 0, %v811
      %v813 = vadd.s32 %v808, 1
      %vm814 = vcmp.gt.s32.totalorder %v813, 0
      %v815 = vsel %vm814, %v813, 0
      %v816 = vshrl.u32 %v815, 5
      %v817 = vand.u32 %v815, 31
      %v818 = vsub.s32 32, %v817
      %v819 = vshrl.u32 683565275, %v818
      %v820 = vshll.u32 683565275, %v817
      %v821 = vshrl.u32 2475754826, %v818
      %v822 = vor.u32 %v820, %v821
      %v823 = vshll.u32 2475754826, %v817
      %v824 = vshrl.u32 2131351028, %v818
      %v825 = vor.u32 %v823, %v824
      %v826 = vshll.u32 2131351028, %v817
      %v827 = vshrl.u32 2102212464, %v818
      %v828 = vor.u32 %v826, %v827
      %v829 = vshll.u32 2102212464, %v817
      %v830 = vshrl.u32 920167782, %v818
      %v831 = vor.u32 %v829, %v830
      %v832 = vshll.u32 920167782, %v817
      %v833 = vshrl.u32 1326507024, %v818
      %v834 = vor.u32 %v832, %v833
      %vm835 = vcmp.lt.s32.totalorder %v816, 1
      %vm836 = vcmp.lt.s32.totalorder %v816, 2
      %vm837 = vcmp.lt.s32.totalorder %v816, 3
      %vm838 = vcmp.lt.s32.totalorder %v816, 4
      %v839 = vsel %vm835, %v819, %v822
      %v840 = vsel %vm838, %v828, 2102212464
      %v841 = vsel %vm837, %v825, %v840
      %v842 = vsel %vm836, %v839, %v841
      %v843 = vsel %vm835, %v822, %v825
      %v844 = vsel %vm838, %v831, 920167782
      %v845 = vsel %vm837, %v828, %v844
      %v846 = vsel %vm836, %v843, %v845
      %v847 = vsel %vm835, %v825, %v828
      %v848 = vsel %vm838, %v834, 1326507024
      %v849 = vsel %vm837, %v831, %v848
      %v850 = vsel %vm836, %v847, %v849
      %v851 = vshll.u32 %v811, 8
      %v852 = vmul.u32.u64.compose %v851, %v850
      %v853 = vextract.low.u32 %v852
      %v854 = vextract.high.u32 %v852
      %v855 = vmul.u32.u64.compose %v851, %v846
      %v856 = vextract.low.u32 %v855
      %v857 = vextract.high.u32 %v855
      %v858 = vmul.u32 %v851, %v842
      %v859 = vadd.s32 %v854, %v856
      %vm860 = vc.u32 %v854, %v856
      %v861 = vadd.s32 %v857, 1
      %v862 = vsel %vm860, %v861, %v857
      %v863 = vadd.s32 %v858, %v862
      %v864 = vadd.s32 %v863, 536870912
      %v865 = vshrl.u32 %v864, 30
      %v866 = vshll.u32 %v865, 30
      %v867 = vsub.s32 %v863, %v866
      %vm868 = vcmp.lt.s32.totalorder %v867, 0
      %v869 = vsub.s32 0, %v867
      %v870 = vsel %vm868, %v869, %v867
      %v871 = vclz %v870
      %v872 = vsub.s32 %v871, 2
      %vm873 = vcmp.gt.s32.totalorder 0, %v872
      %v874 = vsel %vm873, 0, %v872
      %v875 = vsub.s32 32, %v874
      %v876 = vshll.u32 %v867, %v874
      %v877 = vshrl.u32 %v859, %v875
      %v878 = vor.u32 %v876, %v877
      %v879 = vsub.s32 4294967266, %v874
      %v880 = vadd.s32 %v879, 127
      %v881 = vshll.u32 %v880, 23
      %v882 = vor.u32 4788187, %v881
      %v883 = vand.u32 2147483647, %v882
      %v885 = vcvt.s32.f32 %v878
      %v886 = vmul.f32 %v885, %v883
      %v887 = vxor.u32 %v886, 2147483648
      %v888 = vsel %vm805, %v887, %v886
      %v889 = vsub.s32 4, %v865
      %v890 = vsel %vm805, %v889, %v865
      %v891 = vsel %vm804, %v699, %v888
      %v892 = vsel %vm804, 0, %v890
      %v893 = vcosq.f32.pop %v891
      %v894 = vsinq.f32.pop %v891
      %vm895 = vweird.f32 %v699
      %v896 = vand.u32 %v892, 3
      %vm897 = vcmp.lt.s32.totalorder %v896, 2
      %vm898 = vcmp.eq.s32.totalorder %v896, 0
      %v899 = vxor.u32 %v894, 2147483648
      %v900 = vsel %vm898, %v893, %v899
      %vm901 = vcmp.eq.s32.totalorder %v896, 2
      %v902 = vxor.u32 %v893, 2147483648
      %v903 = vsel %vm901, %v902, %v894
      %v904 = vsel %vm897, %v900, %v903
      %v905 = vsel %vm895, nan, %v904
      %v906 = vsub.f32 1.0, %v802
      %v907 = vsub.f32 1.0, %v905
      %909 = vset.pattern.permute.xlu0 0
      %910 = vperm.xlu0 %909, %v684
      %v911 = vpop.permute.xlu0 %910
      %914 = vset.pattern.permute.xlu0 0
      %915 = vperm.xlu0 %914, %v685
      %v916 = vpop.permute.xlu0 %915
      %v918 = vmul.f32 %v911, %v906
      %v919 = vmul.f32 %v916, %v907
      %v920 = vadd.f32 %v672, %v918
      %v921 = vadd.f32 %v675, %v919
      %v922 = vld [vmem:[%s4] sm:$0xf]
      %v923 = vld [vmem:[%s4 + $0x4] sm:$0xf]
      %v924 = vpack.c.bf16 %v921, %v920
      %v925 = vld [vmem:[%s5] sm:$0xff]
      %v926 = vld [vmem:[%s5 + $0x8] sm:$0xff]
      %928 = vset.pattern.permute.xlu0 0
      %929 = vperm.xlu0 %928, %v925
      %v930 = vpop.permute.xlu0 %929
      %933 = vset.pattern.permute.xlu0 0
      %934 = vperm.xlu0 %933, %v926
      %v935 = vpop.permute.xlu0 %934
      %v939 = vunpack.c.l.b16 %v922
      %v940 = vunpack.c.l.b16 %v923
      %v941 = vpack.c.b16 %v940, %v939
      %vm942 = vcmask 130048
      %v944 = vsel %vm942, %v941, 0
      %946 = vmatprep.subr.bf16.mxu0 0
      %947 = vmatpush1.bf16.msra.mxu0 %v924
      %948 = vmatprep.subr.bf16.mxu0 0
      %949 = vmatpush1.bf16.msra.mxu0 0
      %950 = vmatprep.subr.bf16.mxu0 0
      %951 = vmatpush1.bf16.msra.mxu0 0
      %952 = vmatprep.subr.bf16.mxu0 0
      %953 = vmatpush1.bf16.msra.mxu0 0
      %954 = vmatprep.subr.bf16.mxu0 0
      %955 = vmatpush1.bf16.msra.mxu0 0
      %956 = vmatprep.subr.bf16.mxu0 0
      %957 = vmatpush1.bf16.msra.mxu0 0
      %958 = vmatprep.subr.bf16.mxu0 0
      %959 = vmatpush1.bf16.msra.mxu0 0
      %960 = vmatprep.subr.bf16.mxu0 0
      %961 = vmatpush1.bf16.msra.mxu0 0
      %962 = vmatprep.subr.bf16.mxu0 0
      %963 = vmatpush1.bf16.msra.mxu0 0
      %964 = vmatprep.subr.bf16.mxu0 0
      %965 = vmatpush1.bf16.msra.mxu0 0
      %966 = vmatprep.subr.bf16.mxu0 0
      %967 = vmatpush1.bf16.msra.mxu0 0
      %968 = vmatprep.subr.bf16.mxu0 0
      %969 = vmatpush1.bf16.msra.mxu0 0
      %970 = vmatprep.subr.bf16.mxu0 0
      %971 = vmatpush1.bf16.msra.mxu0 0
      %972 = vmatprep.subr.bf16.mxu0 0
      %973 = vmatpush1.bf16.msra.mxu0 0
      %974 = vmatprep.subr.bf16.mxu0 0
      %975 = vmatpush1.bf16.msra.mxu0 0
      %976 = vmatprep.subr.bf16.mxu0 0
      %977 = vmatpush1.bf16.msra.mxu0 0
      %978 = vmatprep.mubr.bf16.mxu0 0
      %979 = vmatmul.mubr.bf16.gmra.mrb[0].mxu0 %v944
      %v980 = vpop.f32.mrb[0].mxu0
      %v981 = vadd.f32 %v930, %v980
      %v982 = vpop.f32.mrb[0].mxu0
      %v983 = vpop.f32.mrb[0].mxu0
      %v984 = vadd.f32 %v935, %v983
      %v985 = vpop.f32.mrb[0].mxu0
      %986 = vdwg.mxu0
      %989 = vrot.lane.b32.xlu0 %v348, 119
      %v990 = vpop.permute.xlu0 %989
      %991 = vrot.lane.b32.xlu0 %v349, 119
      %v992 = vpop.permute.xlu0 %991
      %v995 = vadd.f32 %v981, %v990
      %v996 = vadd.f32 %v984, %v992
      %v997 = vpack.c.bf16 %v996, %v995
      %v999 = vunpack.c.l.b16 %v997
      %v1000 = vunpack.c.h.b16 %v997
      %v1001 = vpack.c.b16 %v999, %v999
      %v1002 = vpack.c.b16 %v1000, %v1000
      %vm1005 = vcmask 330752
      %1006 = vst.msk [vmem:[%s320] sm:$0xf] %vm1005, %v1001
      %1007 = vst.msk [vmem:[%s320 + $0x4] sm:$0xf] %vm1005, %v1002
      %s1008 = ssub.s32 0, %s23
      %p1009 = scmp.lt.s32.totalorder %s22, 1
      %s1010 = scalar_select %p1009, %s22, 1
      %p1011 = scmp.lt.s32.totalorder %s1008, 0
      %s1012 = scalar_select %p1011, %s1008, 0
      %s1013 = smul.addr %s1010, 2
      %s1014 = sadd.s32 %s1012, %s1013
      %s1015 = smul.addr %s1014, 4
      %s1016 = scalar_lea.vmem %s7, %s1015
      // Predicated region
      $region53: #{decoder_forward.13} parent=47 // pred_check
        %p1017 = pneg %p208
      $region54: #{decoder_forward.13} parent=47 // pred_check_branch
        %1019 = sbr.rel (%p1017) target = $region56
      $region55: #{decoder_forward.13} parent=47 // pred_region
        %s1020 = ssub.s32 0, %s23
      $region56: #{decoder_forward.13} parent=47 // pred_fallthru
        _
    $region48: #{decoder_forward.13} parent=5 // pred_fallthru
      _
    %p1021 = scmp.le.s32.totalorder 2, %s13
    // Predicated region
    $region57: #{decoder_forward.13} parent=5 // pred_check
      %p1022 = pneg %p1021
    $region58: #{decoder_forward.13} parent=5 // pred_check_branch
      %1024 = sbr.rel (%p1022) target = $region60
    $region59: #{decoder_forward.13} parent=5 // pred_region
      %s1025 = ssub.s32 %s13, 2
      // Predicated region
      $region61: #{decoder_forward.13} parent=59 // pred_check
        %p1026 = pneg %p214
      $region62: #{decoder_forward.13} parent=59 // pred_check_branch
        %1028 = sbr.rel (%p1026) target = $region64
      $region63: #{decoder_forward.13} parent=59 // pred_region
        %s1029 = ssub.s32 0, %s25
        %p1030 = scmp.lt.s32.totalorder %s24, 1
        %s1031 = scalar_select %p1030, %s24, 1
        %p1032 = scmp.lt.s32.totalorder %s1029, 0
        %s1033 = scalar_select %p1032, %s1029, 0
        %s1034 = smul.addr %s1031, 2
        %s1035 = sadd.s32 %s1033, %s1034
        %s1036 = smul.addr %s1035, 4
        %s1037 = scalar_lea.vmem %s7, %s1036
      $region64: #{decoder_forward.13} parent=59 // pred_fallthru
        _
    $region60: #{decoder_forward.13} parent=5 // pred_fallthru
      _
  $region6: #{decoder_forward.13} parent=0 // loop_footer
    %s17 = sadd.s32 1, %s13
  $region7: #{decoder_forward.13} parent=0 // loop_footer_branch
    %12 = sbr.rel target = $region3
  $region8: #{decoder_forward.13} parent=0 // loop_exit
    _

// kernel: decoder_forward.14
$region0: #{decoder_forward.14}
  #allocation0 [shape = 'u32[]', space=smem, size = 0x4, offset = 0x4, fixed_abs, tag = 'smem constant byte address 0x4 - core index']
  #allocation1 [shape = 'u32[144,128]{1,0:T(1,128)}', space=vmem, size = 0x12000, scoped, tag = 'internal scratch']
  #allocation2 [shape = 'bf16[16,54]{1,0:T(16,128)(2,1)}', space=vmem, size = 0x1000, scoped, tag = 'scratch operand']
  %s0 = inlined_call_operand.vmem [shape: bf16[2,16,59], index: 0, kind: input, shape index: {}]
  %s1 = inlined_call_operand.vmem [shape: bf16[16,112], index: 1, kind: input, shape index: {}]
  %s2 = inlined_call_operand.vmem [shape: f32[16,1], index: 2, kind: input, shape index: {}]
  %s3 = inlined_call_operand.vmem [shape: f32[16,1], index: 3, kind: input, shape index: {}]
  %s4 = inlined_call_operand.vmem [shape: bf16[16,16], index: 4, kind: input, shape index: {}]
  %s5 = inlined_call_operand.vmem [shape: f32[16,1], index: 5, kind: input, shape index: {}]
  %s6 = inlined_call_operand.vmem [shape: f32[16,1], index: 6, kind: input, shape index: {}]
  %s7 = inlined_call_operand.vmem [shape: bf16[2,16,59], index: 7, kind: output, shape index: {}]
  %s8 = sld [smem:[#allocation0]]
  $region65: #{decoder_forward.14} parent=0
    _
  %s10 = ssub.s32 1, %s8
  %s11 = scalar_select 0, %s10, %s8
  loop: start=0, step=1, limit=4
  $region2: #{decoder_forward.14} parent=0 // loop_pre_header
    _
  $region3: #{decoder_forward.14} parent=0 // loop_header
    %s13 = sphi 0, %s17
    %p14 = scmp.ge.s32.totalorder %s13, 4
    %s20 = sphi 0, %s32
    %s21 = sphi 0, %s28
    %s22 = sphi 0, %s20
    %s23 = sphi 0, %s21
    %s24 = sphi 0, %s22
    %s25 = sphi 0, %s23
    %s39 = sphi 0, %s41
    %s42 = sphi 0, %s39
    %s43 = sphi 0, %s42
    %s59 = sphi 0, %s43
    %s63 = sphi 0, %s63
    %s65 = sphi 0, %s63
    %s66 = sphi 0, %s65
    %s80 = sphi 0, %s66
    %s84 = sphi 0, %s84
    %s86 = sphi 0, %s84
    %s87 = sphi 0, %s86
    %s101 = sphi 0, %s87
    %s105 = sphi 0, %s105
    %s107 = sphi 0, %s105
    %s108 = sphi 0, %s107
    %s122 = sphi 0, %s108
    %s126 = sphi 0, %s126
    %s128 = sphi 0, %s126
    %s129 = sphi 0, %s128
    %s143 = sphi 0, %s129
    %s147 = sphi 0, %s147
    %s149 = sphi 0, %s147
    %s150 = sphi 0, %s149
    %s164 = sphi 0, %s150
    %s168 = sphi 0, %s168
    %s170 = sphi 0, %s168
    %s171 = sphi 0, %s170
    %s185 = sphi 0, %s171
    %s195 = sphi 0, %s197
    %s198 = sphi 0, %s195
    %s199 = sphi 0, %s198
    %s215 = sphi 0, %s199
  $region4: #{decoder_forward.14} parent=0 // loop_header_branch
    %16 = sbr.rel (%p14) target = $region8
  $region5: #{decoder_forward.14} parent=0 // loop_body
    %s18 = ssub.s32 %s13, 1
    %s19 = ssub.s32 %s13, 2
    %s26 = sadd.s32 1, %s21
    %p27 = scmp.ge.s32.totalorder %s26, 1
    %s28 = scalar_select %p27, 0, %s26
    %s29 = sadd.s32 1, %s20
    %s30 = scalar_select %p27, %s29, %s20
    %p31 = scmp.ge.s32.totalorder %s30, 2
    %s32 = scalar_select %p31, 0, %s30
    %s33 = ssub.s32 0, %s21
    %s34 = ssub.s32 0, %s28
    %s35 = ssub.s32 %s20, %s32
    %s36 = ssub.s32 %s33, %s34
    %s37 = sor.u32 %s35, %s36
    %p38 = scmp.eq.s32.totalorder %s37, 0
    %s40 = sadd.s32 %s39, 1
    %s41 = scalar_select %p38, %s39, %s40
    %p44 = pneg %p38
    %p45 = scmp.eq.s32.totalorder %s13, 1
    %p46 = por %p44, %p45
    %p47 = scmp.ne.s32.totalorder %s39, %s42
    %p48 = scmp.eq.s32.totalorder %s13, 0
    %p49 = por %p47, %p48
    %p50 = scmp.ne.s32.totalorder %s39, %s42
    %p51 = scmp.eq.s32.totalorder %s18, 1
    %p52 = por %p50, %p51
    %p53 = scmp.ne.s32.totalorder %s42, %s43
    %p54 = scmp.eq.s32.totalorder %s18, 0
    %p55 = por %p53, %p54
    %p56 = scmp.ne.s32.totalorder %s42, %s43
    %p57 = scmp.eq.s32.totalorder %s19, 1
    %p58 = por %p56, %p57
    %p60 = scmp.ne.s32.totalorder %s43, %s59
    %p61 = scmp.eq.s32.totalorder %s19, 0
    %p62 = por %p60, %p61
    %s64 = sadd.s32 %s63, 1
    %p67 = scmp.eq.s32.totalorder %s13, 1
    %p68 = scmp.ne.s32.totalorder %s63, %s65
    %p69 = scmp.eq.s32.totalorder %s13, 0
    %p70 = por %p68, %p69
    %p71 = scmp.ne.s32.totalorder %s63, %s65
    %p72 = scmp.eq.s32.totalorder %s18, 1
    %p73 = por %p71, %p72
    %p74 = scmp.ne.s32.totalorder %s65, %s66
    %p75 = scmp.eq.s32.totalorder %s18, 0
    %p76 = por %p74, %p75
    %p77 = scmp.ne.s32.totalorder %s65, %s66
    %p78 = scmp.eq.s32.totalorder %s19, 1
    %p79 = por %p77, %p78
    %p81 = scmp.ne.s32.totalorder %s66, %s80
    %p82 = scmp.eq.s32.totalorder %s19, 0
    %p83 = por %p81, %p82
    %s85 = sadd.s32 %s84, 1
    %p88 = scmp.eq.s32.totalorder %s13, 1
    %p89 = scmp.ne.s32.totalorder %s84, %s86
    %p90 = scmp.eq.s32.totalorder %s13, 0
    %p91 = por %p89, %p90
    %p92 = scmp.ne.s32.totalorder %s84, %s86
    %p93 = scmp.eq.s32.totalorder %s18, 1
    %p94 = por %p92, %p93
    %p95 = scmp.ne.s32.totalorder %s86, %s87
    %p96 = scmp.eq.s32.totalorder %s18, 0
    %p97 = por %p95, %p96
    %p98 = scmp.ne.s32.totalorder %s86, %s87
    %p99 = scmp.eq.s32.totalorder %s19, 1
    %p100 = por %p98, %p99
    %p102 = scmp.ne.s32.totalorder %s87, %s101
    %p103 = scmp.eq.s32.totalorder %s19, 0
    %p104 = por %p102, %p103
    %s106 = sadd.s32 %s105, 1
    %p109 = scmp.eq.s32.totalorder %s13, 1
    %p110 = scmp.ne.s32.totalorder %s105, %s107
    %p111 = scmp.eq.s32.totalorder %s13, 0
    %p112 = por %p110, %p111
    %p113 = scmp.ne.s32.totalorder %s105, %s107
    %p114 = scmp.eq.s32.totalorder %s18, 1
    %p115 = por %p113, %p114
    %p116 = scmp.ne.s32.totalorder %s107, %s108
    %p117 = scmp.eq.s32.totalorder %s18, 0
    %p118 = por %p116, %p117
    %p119 = scmp.ne.s32.totalorder %s107, %s108
    %p120 = scmp.eq.s32.totalorder %s19, 1
    %p121 = por %p119, %p120
    %p123 = scmp.ne.s32.totalorder %s108, %s122
    %p124 = scmp.eq.s32.totalorder %s19, 0
    %p125 = por %p123, %p124
    %s127 = sadd.s32 %s126, 1
    %p130 = scmp.eq.s32.totalorder %s13, 1
    %p131 = scmp.ne.s32.totalorder %s126, %s128
    %p132 = scmp.eq.s32.totalorder %s13, 0
    %p133 = por %p131, %p132
    %p134 = scmp.ne.s32.totalorder %s126, %s128
    %p135 = scmp.eq.s32.totalorder %s18, 1
    %p136 = por %p134, %p135
    %p137 = scmp.ne.s32.totalorder %s128, %s129
    %p138 = scmp.eq.s32.totalorder %s18, 0
    %p139 = por %p137, %p138
    %p140 = scmp.ne.s32.totalorder %s128, %s129
    %p141 = scmp.eq.s32.totalorder %s19, 1
    %p142 = por %p140, %p141
    %p144 = scmp.ne.s32.totalorder %s129, %s143
    %p145 = scmp.eq.s32.totalorder %s19, 0
    %p146 = por %p144, %p145
    %s148 = sadd.s32 %s147, 1
    %p151 = scmp.eq.s32.totalorder %s13, 1
    %p152 = scmp.ne.s32.totalorder %s147, %s149
    %p153 = scmp.eq.s32.totalorder %s13, 0
    %p154 = por %p152, %p153
    %p155 = scmp.ne.s32.totalorder %s147, %s149
    %p156 = scmp.eq.s32.totalorder %s18, 1
    %p157 = por %p155, %p156
    %p158 = scmp.ne.s32.totalorder %s149, %s150
    %p159 = scmp.eq.s32.totalorder %s18, 0
    %p160 = por %p158, %p159
    %p161 = scmp.ne.s32.totalorder %s149, %s150
    %p162 = scmp.eq.s32.totalorder %s19, 1
    %p163 = por %p161, %p162
    %p165 = scmp.ne.s32.totalorder %s150, %s164
    %p166 = scmp.eq.s32.totalorder %s19, 0
    %p167 = por %p165, %p166
    %s169 = sadd.s32 %s168, 1
    %p172 = scmp.eq.s32.totalorder %s13, 1
    %p173 = scmp.ne.s32.totalorder %s168, %s170
    %p174 = scmp.eq.s32.totalorder %s13, 0
    %p175 = por %p173, %p174
    %p176 = scmp.ne.s32.totalorder %s168, %s170
    %p177 = scmp.eq.s32.totalorder %s18, 1
    %p178 = por %p176, %p177
    %p179 = scmp.ne.s32.totalorder %s170, %s171
    %p180 = scmp.eq.s32.totalorder %s18, 0
    %p181 = por %p179, %p180
    %p182 = scmp.ne.s32.totalorder %s170, %s171
    %p183 = scmp.eq.s32.totalorder %s19, 1
    %p184 = por %p182, %p183
    %p186 = scmp.ne.s32.totalorder %s171, %s185
    %p187 = scmp.eq.s32.totalorder %s19, 0
    %p188 = por %p186, %p187
    %s189 = ssub.s32 0, %s21
    %s190 = ssub.s32 0, %s28
    %s191 = ssub.s32 %s20, %s32
    %s192 = ssub.s32 %s189, %s190
    %s193 = sor.u32 %s191, %s192
    %p194 = scmp.eq.s32.totalorder %s193, 0
    %s196 = sadd.s32 %s195, 1
    %s197 = scalar_select %p194, %s195, %s196
    %p200 = pneg %p194
    %p201 = scmp.eq.s32.totalorder %s13, 1
    %p202 = por %p200, %p201
    %p203 = scmp.ne.s32.totalorder %s195, %s198
    %p204 = scmp.eq.s32.totalorder %s13, 0
    %p205 = por %p203, %p204
    %p206 = scmp.ne.s32.totalorder %s195, %s198
    %p207 = scmp.eq.s32.totalorder %s18, 1
    %p208 = por %p206, %p207
    %p209 = scmp.ne.s32.totalorder %s198, %s199
    %p210 = scmp.eq.s32.totalorder %s18, 0
    %p211 = por %p209, %p210
    %p212 = scmp.ne.s32.totalorder %s198, %s199
    %p213 = scmp.eq.s32.totalorder %s19, 1
    %p214 = por %p212, %p213
    %p216 = scmp.ne.s32.totalorder %s199, %s215
    %p217 = scmp.eq.s32.totalorder %s19, 0
    %p218 = por %p216, %p217
    %p219 = scmp.le.s32.totalorder 1, %s13
    %p220 = scmp.lt.s32.totalorder %s13, 3
    %p221 = pnand %p219, %p220
    %p222 = pneg %p221
    // Predicated region
    $region9: #{decoder_forward.14} parent=5 // pred_check
      _
    $region10: #{decoder_forward.14} parent=5 // pred_check_branch
      %224 = sbr.rel (%p221) target = $region12
    $region11: #{decoder_forward.14} parent=5 // pred_region
      %s225 = ssub.s32 %s13, 1
      // Predicated region
      $region13: #{decoder_forward.14} parent=11 // pred_check
        %p226 = pneg %p76
      $region14: #{decoder_forward.14} parent=11 // pred_check_branch
        %228 = sbr.rel (%p226) target = $region16
      $region15: #{decoder_forward.14} parent=11 // pred_region
        _
      $region16: #{decoder_forward.14} parent=11 // pred_fallthru
        _
      // Predicated region
      $region17: #{decoder_forward.14} parent=11 // pred_check
        %p229 = pneg %p97
      $region18: #{decoder_forward.14} parent=11 // pred_check_branch
        %231 = sbr.rel (%p229) target = $region20
      $region19: #{decoder_forward.14} parent=11 // pred_region
        _
      $region20: #{decoder_forward.14} parent=11 // pred_fallthru
        _
      // Predicated region
      $region21: #{decoder_forward.14} parent=11 // pred_check
        %p232 = pneg %p118
      $region22: #{decoder_forward.14} parent=11 // pred_check_branch
        %234 = sbr.rel (%p232) target = $region24
      $region23: #{decoder_forward.14} parent=11 // pred_region
        _
      $region24: #{decoder_forward.14} parent=11 // pred_fallthru
        _
      // Predicated region
      $region25: #{decoder_forward.14} parent=11 // pred_check
        %p235 = pneg %p139
      $region26: #{decoder_forward.14} parent=11 // pred_check_branch
        %237 = sbr.rel (%p235) target = $region28
      $region27: #{decoder_forward.14} parent=11 // pred_region
        _
      $region28: #{decoder_forward.14} parent=11 // pred_fallthru
        _
      // Predicated region
      $region29: #{decoder_forward.14} parent=11 // pred_check
        %p238 = pneg %p160
      $region30: #{decoder_forward.14} parent=11 // pred_check_branch
        %240 = sbr.rel (%p238) target = $region32
      $region31: #{decoder_forward.14} parent=11 // pred_region
        _
      $region32: #{decoder_forward.14} parent=11 // pred_fallthru
        _
      // Predicated region
      $region33: #{decoder_forward.14} parent=11 // pred_check
        %p241 = pneg %p181
      $region34: #{decoder_forward.14} parent=11 // pred_check_branch
        %243 = sbr.rel (%p241) target = $region36
      $region35: #{decoder_forward.14} parent=11 // pred_region
        _
      $region36: #{decoder_forward.14} parent=11 // pred_fallthru
        _
    $region12: #{decoder_forward.14} parent=5 // pred_fallthru
      _
    %p244 = scmp.lt.s32.totalorder %s13, 2
    // Predicated region
    $region37: #{decoder_forward.14} parent=5 // pred_check
      %p245 = pneg %p244
    $region38: #{decoder_forward.14} parent=5 // pred_check_branch
      %247 = sbr.rel (%p245) target = $region40
    $region39: #{decoder_forward.14} parent=5 // pred_region
      // Predicated region
      $region41: #{decoder_forward.14} parent=39 // pred_check
        %p248 = pneg %p49
      $region42: #{decoder_forward.14} parent=39 // pred_check_branch
        %250 = sbr.rel (%p248) target = $region44
      $region43: #{decoder_forward.14} parent=39 // pred_region
        %s251 = ssub.s32 0, %s21
        %p252 = scmp.lt.s32.totalorder %s20, 1
        %s253 = scalar_select %p252, %s20, 1
        %p254 = scmp.lt.s32.totalorder %s251, 0
        %s255 = scalar_select %p254, %s251, 0
        %s256 = smul.addr %s253, 2
        %s257 = sadd.s32 %s255, %s256
        %s258 = smul.addr %s257, 4
        %s259 = scalar_lea.vmem %s0, %s258
        %s260 = ssub.s32 0, %s21
      $region44: #{decoder_forward.14} parent=39 // pred_fallthru
        _
    $region40: #{decoder_forward.14} parent=5 // pred_fallthru
      _
    %p261 = scmp.le.s32.totalorder 1, %s13
    %p262 = scmp.lt.s32.totalorder %s13, 3
    %p263 = pnand %p261, %p262
    %p264 = pneg %p263
    // Predicated region
    $region45: #{decoder_forward.14} parent=5 // pred_check
      _
    $region46: #{decoder_forward.14} parent=5 // pred_check_branch
      %266 = sbr.rel (%p263) target = $region48
    $region47: #{decoder_forward.14} parent=5 // pred_region
      %s267 = ssub.s32 %s13, 1
      %s268 = ssub.s32 0, %s23
      %p269 = scmp.lt.s32.totalorder %s22, 1
      %s270 = scalar_select %p269, %s22, 1
      %p271 = scmp.lt.s32.totalorder %s268, 0
      %s272 = scalar_select %p271, %s268, 0
      %s273 = smul.addr %s270, 2
      %s274 = sadd.s32 %s272, %s273
      %s275 = smul.addr %s274, 4
      %s276 = scalar_lea.vmem %s0, %s275
      %p277 = pneg %p55
      %p278 = pneg %p52
      %p279 = pneg %p76
      %p280 = pneg %p73
      %p281 = pneg %p97
      %p282 = pneg %p94
      %p283 = pneg %p118
      %p284 = pneg %p115
      %p285 = pneg %p139
      %p286 = pneg %p136
      %p287 = pneg %p160
      %p288 = pneg %p157
      %p289 = pneg %p181
      %p290 = pneg %p178
      %p291 = pneg %p211
      %p292 = pneg %p208
      %s293 = ssub.s32 0, %s23
      %p294 = scmp.lt.s32.totalorder %s22, 1
      %s295 = scalar_select %p294, %s22, 1
      %p296 = scmp.lt.s32.totalorder %s293, 0
      %s297 = scalar_select %p296, %s293, 0
      %s298 = smul.addr %s295, 2
      %s299 = sadd.s32 %s297, %s298
      %s300 = smul.addr %s299, 4
      %s301 = scalar_lea.vmem %s7, %s300
      %s302 = ssub.s32 0, %s23
      %p303 = scmp.lt.s32.totalorder %s22, 1
      %s304 = scalar_select %p303, %s22, 1
      %p305 = scmp.lt.s32.totalorder %s302, 0
      %s306 = scalar_select %p305, %s302, 0
      %s307 = smul.addr %s304, 2
      %s308 = sadd.s32 %s306, %s307
      %s309 = smul.addr %s308, 4
      %s310 = scalar_lea.vmem %s0, %s309
      %s311 = ssub.s32 0, %s23
      %s312 = ssub.s32 0, %s23
      %p313 = scmp.lt.s32.totalorder %s22, 1
      %s314 = scalar_select %p313, %s22, 1
      %p315 = scmp.lt.s32.totalorder %s312, 0
      %s316 = scalar_select %p315, %s312, 0
      %s317 = smul.addr %s314, 2
      %s318 = sadd.s32 %s316, %s317
      %s319 = smul.addr %s318, 4
      %s320 = scalar_lea.vmem %s7, %s319
      %s321 = ssub.s32 0, %s23
      %p323 = scmp.eq.s32.totalorder %s23, 0
      // Predicated region
      $region49: #{decoder_forward.14} parent=47 // pred_check
        %p324 = pneg %p323
      $region50: #{decoder_forward.14} parent=47 // pred_check_branch
        %326 = sbr.rel (%p324) target = $region52
      $region51: #{decoder_forward.14} parent=47 // pred_region
        %vm327 = vcmask 441344
        %328 = vst.msk [vmem:[#allocation2] sm:$0xff] %vm327, 0
      $region52: #{decoder_forward.14} parent=47 // pred_fallthru
        _
      %v329 = vld [vmem:[%s310] sm:$0xf]
      %v330 = vld [vmem:[%s310 + $0x4] sm:$0xf]
      %v331 = vld [vmem:[#allocation2] sm:$0xff]
      %v334 = vunpack.c.l.b16 %v329
      %v335 = vunpack.c.l.b16 %v330
      %v336 = vpack.c.b16 %v335, %v334
      %338 = vrot.lane.b32.xlu0 %v331, 59
      %v339 = vpop.permute.xlu0 %338
      %vm340 = vcmask 482304
      %v343 = vsel %vm340, %v336, %v339
      %vm346 = vcmask 441344
      %347 = vst.msk [vmem:[#allocation2] sm:$0xff] %vm346, %v336
      %v348 = vunpack.c.l.bf16 %v343
      %v349 = vunpack.c.h.bf16 %v343
      %v350 = vld [vmem:[%s3] sm:$0xff]
      %v351 = vld [vmem:[%s3 + $0x8] sm:$0xff]
      %v352 = vadd.f32 %v350, 1e-09
      %v353 = vadd.f32 %v351, 1e-09
      %v354 = vrcp.pop %v352
      %v355 = vrcp.pop %v353
      %v356 = vmul.f32 %v354, 0.5
      %v357 = vmul.f32 %v355, 0.5
      %v358 = vmul.f32 %v350, 2.0
      %v359 = vmul.f32 %v351, 2.0
      %361 = vset.pattern.permute.xlu0 0
      %362 = vperm.xlu0 %361, %v358
      %v363 = vpop.permute.xlu0 %362
      %366 = vset.pattern.permute.xlu0 0
      %367 = vperm.xlu0 %366, %v359
      %v368 = vpop.permute.xlu0 %367
      %v370 = vmul.f32 %v363, %v348
      %v371 = vmul.f32 %v368, %v349
      %v372 = vand.u32 2147483647, %v370
      %vm373 = vcmp.le.f32.partialorder %v372, 0.7853982
      %vm374 = vcmp.lt.s32.totalorder %v370, 0
      %v375 = vand.u32 %v370, 2139095040
      %v376 = vshrl.u32 %v375, 23
      %v377 = vsub.s32 %v376, 127
      %v378 = vand.u32 2147483647, %v370
      %v379 = vand.u32 %v378, 8388607
      %v380 = vor.u32 %v379, 8388608
      %v381 = vsub.s32 0, %v380
      %v382 = vadd.s32 %v377, 1
      %vm383 = vcmp.gt.s32.totalorder %v382, 0
      %v384 = vsel %vm383, %v382, 0
      %v385 = vshrl.u32 %v384, 5
      %v386 = vand.u32 %v384, 31
      %v387 = vsub.s32 32, %v386
      %v388 = vshrl.u32 683565275, %v387
      %v389 = vshll.u32 683565275, %v386
      %v390 = vshrl.u32 2475754826, %v387
      %v391 = vor.u32 %v389, %v390
      %v392 = vshll.u32 2475754826, %v386
      %v393 = vshrl.u32 2131351028, %v387
      %v394 = vor.u32 %v392, %v393
      %v395 = vshll.u32 2131351028, %v386
      %v396 = vshrl.u32 2102212464, %v387
      %v397 = vor.u32 %v395, %v396
      %v398 = vshll.u32 2102212464, %v386
      %v399 = vshrl.u32 920167782, %v387
      %v400 = vor.u32 %v398, %v399
      %v401 = vshll.u32 920167782, %v386
      %v402 = vshrl.u32 1326507024, %v387
      %v403 = vor.u32 %v401, %v402
      %vm404 = vcmp.lt.s32.totalorder %v385, 1
      %vm405 = vcmp.lt.s32.totalorder %v385, 2
      %vm406 = vcmp.lt.s32.totalorder %v385, 3
      %vm407 = vcmp.lt.s32.totalorder %v385, 4
      %v408 = vsel %vm404, %v388, %v391
      %v409 = vsel %vm407, %v397, 2102212464
      %v410 = vsel %vm406, %v394, %v409
      %v411 = vsel %vm405, %v408, %v410
      %v412 = vsel %vm404, %v391, %v394
      %v413 = vsel %vm407, %v400, 920167782
      %v414 = vsel %vm406, %v397, %v413
      %v415 = vsel %vm405, %v412, %v414
      %v416 = vsel %vm404, %v394, %v397
      %v417 = vsel %vm407, %v403, 1326507024
      %v418 = vsel %vm406, %v400, %v417
      %v419 = vsel %vm405, %v416, %v418
      %v420 = vshll.u32 %v380, 8
      %v421 = vmul.u32.u64.compose %v420, %v419
      %v422 = vextract.low.u32 %v421
      %v423 = vextract.high.u32 %v421
      %v424 = vmul.u32.u64.compose %v420, %v415
      %v425 = vextract.low.u32 %v424
      %v426 = vextract.high.u32 %v424
      %v427 = vmul.u32 %v420, %v411
      %v428 = vadd.s32 %v423, %v425
      %vm429 = vc.u32 %v423, %v425
      %v430 = vadd.s32 %v426, 1
      %v431 = vsel %vm429, %v430, %v426
      %v432 = vadd.s32 %v427, %v431
      %v433 = vadd.s32 %v432, 536870912
      %v434 = vshrl.u32 %v433, 30
      %v435 = vshll.u32 %v434, 30
      %v436 = vsub.s32 %v432, %v435
      %vm437 = vcmp.lt.s32.totalorder %v436, 0
      %v438 = vsub.s32 0, %v436
      %v439 = vsel %vm437, %v438, %v436
      %v440 = vclz %v439
      %v441 = vsub.s32 %v440, 2
      %vm442 = vcmp.gt.s32.totalorder 0, %v441
      %v443 = vsel %vm442, 0, %v441
      %v444 = vsub.s32 32, %v443
      %v445 = vshll.u32 %v436, %v443
      %v446 = vshrl.u32 %v428, %v444
      %v447 = vor.u32 %v445, %v446
      %v448 = vsub.s32 4294967266, %v443
      %v449 = vadd.s32 %v448, 127
      %v450 = vshll.u32 %v449, 23
      %v451 = vor.u32 4788187, %v450
      %v452 = vand.u32 2147483647, %v451
      %v454 = vcvt.s32.f32 %v447
      %v455 = vmul.f32 %v454, %v452
      %v456 = vxor.u32 %v455, 2147483648
      %v457 = vsel %vm374, %v456, %v455
      %v458 = vsub.s32 4, %v434
      %v459 = vsel %vm374, %v458, %v434
      %v460 = vsel %vm373, %v370, %v457
      %v461 = vsel %vm373, 0, %v459
      %v462 = vcosq.f32.pop %v460
      %v463 = vsinq.f32.pop %v460
      %vm464 = vweird.f32 %v370
      %v465 = vand.u32 %v461, 3
      %vm466 = vcmp.lt.s32.totalorder %v465, 2
      %vm467 = vcmp.eq.s32.totalorder %v465, 0
      %v468 = vxor.u32 %v463, 2147483648
      %v469 = vsel %vm467, %v462, %v468
      %vm470 = vcmp.eq.s32.totalorder %v465, 2
      %v471 = vxor.u32 %v462, 2147483648
      %v472 = vsel %vm470, %v471, %v463
      %v473 = vsel %vm466, %v469, %v472
      %v474 = vsel %vm464, nan, %v473
      %v475 = vand.u32 2147483647, %v371
      %vm476 = vcmp.le.f32.partialorder %v475, 0.7853982
      %vm477 = vcmp.lt.s32.totalorder %v371, 0
      %v478 = vand.u32 %v371, 2139095040
      %v479 = vshrl.u32 %v478, 23
      %v480 = vsub.s32 %v479, 127
      %v481 = vand.u32 2147483647, %v371
      %v482 = vand.u32 %v481, 8388607
      %v483 = vor.u32 %v482, 8388608
      %v484 = vsub.s32 0, %v483
      %v485 = vadd.s32 %v480, 1
      %vm486 = vcmp.gt.s32.totalorder %v485, 0
      %v487 = vsel %vm486, %v485, 0
      %v488 = vshrl.u32 %v487, 5
      %v489 = vand.u32 %v487, 31
      %v490 = vsub.s32 32, %v489
      %v491 = vshrl.u32 683565275, %v490
      %v492 = vshll.u32 683565275, %v489
      %v493 = vshrl.u32 2475754826, %v490
      %v494 = vor.u32 %v492, %v493
      %v495 = vshll.u32 2475754826, %v489
      %v496 = vshrl.u32 2131351028, %v490
      %v497 = vor.u32 %v495, %v496
      %v498 = vshll.u32 2131351028, %v489
      %v499 = vshrl.u32 2102212464, %v490
      %v500 = vor.u32 %v498, %v499
      %v501 = vshll.u32 2102212464, %v489
      %v502 = vshrl.u32 920167782, %v490
      %v503 = vor.u32 %v501, %v502
      %v504 = vshll.u32 920167782, %v489
      %v505 = vshrl.u32 1326507024, %v490
      %v506 = vor.u32 %v504, %v505
      %vm507 = vcmp.lt.s32.totalorder %v488, 1
      %vm508 = vcmp.lt.s32.totalorder %v488, 2
      %vm509 = vcmp.lt.s32.totalorder %v488, 3
      %vm510 = vcmp.lt.s32.totalorder %v488, 4
      %v511 = vsel %vm507, %v491, %v494
      %v512 = vsel %vm510, %v500, 2102212464
      %v513 = vsel %vm509, %v497, %v512
      %v514 = vsel %vm508, %v511, %v513
      %v515 = vsel %vm507, %v494, %v497
      %v516 = vsel %vm510, %v503, 920167782
      %v517 = vsel %vm509, %v500, %v516
      %v518 = vsel %vm508, %v515, %v517
      %v519 = vsel %vm507, %v497, %v500
      %v520 = vsel %vm510, %v506, 1326507024
      %v521 = vsel %vm509, %v503, %v520
      %v522 = vsel %vm508, %v519, %v521
      %v523 = vshll.u32 %v483, 8
      %v524 = vmul.u32.u64.compose %v523, %v522
      %v525 = vextract.low.u32 %v524
      %v526 = vextract.high.u32 %v524
      %v527 = vmul.u32.u64.compose %v523, %v518
      %v528 = vextract.low.u32 %v527
      %v529 = vextract.high.u32 %v527
      %v530 = vmul.u32 %v523, %v514
      %v531 = vadd.s32 %v526, %v528
      %vm532 = vc.u32 %v526, %v528
      %v533 = vadd.s32 %v529, 1
      %v534 = vsel %vm532, %v533, %v529
      %v535 = vadd.s32 %v530, %v534
      %v536 = vadd.s32 %v535, 536870912
      %v537 = vshrl.u32 %v536, 30
      %v538 = vshll.u32 %v537, 30
      %v539 = vsub.s32 %v535, %v538
      %vm540 = vcmp.lt.s32.totalorder %v539, 0
      %v541 = vsub.s32 0, %v539
      %v542 = vsel %vm540, %v541, %v539
      %v543 = vclz %v542
      %v544 = vsub.s32 %v543, 2
      %vm545 = vcmp.gt.s32.totalorder 0, %v544
      %v546 = vsel %vm545, 0, %v544
      %v547 = vsub.s32 32, %v546
      %v548 = vshll.u32 %v539, %v546
      %v549 = vshrl.u32 %v531, %v547
      %v550 = vor.u32 %v548, %v549
      %v551 = vsub.s32 4294967266, %v546
      %v552 = vadd.s32 %v551, 127
      %v553 = vshll.u32 %v552, 23
      %v554 = vor.u32 4788187, %v553
      %v555 = vand.u32 2147483647, %v554
      %v557 = vcvt.s32.f32 %v550
      %v558 = vmul.f32 %v557, %v555
      %v559 = vxor.u32 %v558, 2147483648
      %v560 = vsel %vm477, %v559, %v558
      %v561 = vsub.s32 4, %v537
      %v562 = vsel %vm477, %v561, %v537
      %v563 = vsel %vm476, %v371, %v560
      %v564 = vsel %vm476, 0, %v562
      %v565 = vcosq.f32.pop %v563
      %v566 = vsinq.f32.pop %v563
      %vm567 = vweird.f32 %v371
      %v568 = vand.u32 %v564, 3
      %vm569 = vcmp.lt.s32.totalorder %v568, 2
      %vm570 = vcmp.eq.s32.totalorder %v568, 0
      %v571 = vxor.u32 %v566, 2147483648
      %v572 = vsel %vm570, %v565, %v571
      %vm573 = vcmp.eq.s32.totalorder %v568, 2
      %v574 = vxor.u32 %v565, 2147483648
      %v575 = vsel %vm573, %v574, %v566
      %v576 = vsel %vm569, %v572, %v575
      %v577 = vsel %vm567, nan, %v576
      %v578 = vsub.f32 1.0, %v474
      %v579 = vsub.f32 1.0, %v577
      %581 = vset.pattern.permute.xlu0 0
      %582 = vperm.xlu0 %581, %v356
      %v583 = vpop.permute.xlu0 %582
      %586 = vset.pattern.permute.xlu0 0
      %587 = vperm.xlu0 %586, %v357
      %v588 = vpop.permute.xlu0 %587
      %v590 = vmul.f32 %v583, %v578
      %v591 = vmul.f32 %v588, %v579
      %v592 = vadd.f32 %v348, %v590
      %v593 = vadd.f32 %v349, %v591
      %v594 = vpack.c.bf16 %v593, %v592
      %596 = vrot.lane.b32.xlu0 %v594, 119
      %v597 = vpop.permute.xlu0 %596
      %599 = vrot.lane.b32.xlu0 %v594, 110
      %v600 = vpop.permute.xlu0 %599
      %602 = vrot.lane.b32.xlu0 %v594, 101
      %v603 = vpop.permute.xlu0 %602
      %605 = vrot.lane.b32.xlu0 %v594, 92
      %v606 = vpop.permute.xlu0 %605
      %608 = vrot.lane.b32.xlu0 %v594, 83
      %v609 = vpop.permute.xlu0 %608
      %611 = vrot.lane.b32.xlu0 %v594, 74
      %v612 = vpop.permute.xlu0 %611
      %v614 = vld [vmem:[%s1] sm:$0xf]
      %v615 = vld [vmem:[%s1 + $0x4] sm:$0xf]
      %v616 = vld [vmem:[%s2] sm:$0xff]
      %v617 = vld [vmem:[%s2 + $0x8] sm:$0xff]
      %619 = vset.pattern.permute.xlu0 0
      %620 = vperm.xlu0 %619, %v616
      %v621 = vpop.permute.xlu0 %620
      %624 = vset.pattern.permute.xlu0 0
      %625 = vperm.xlu0 %624, %v617
      %v626 = vpop.permute.xlu0 %625
      %v630 = vunpack.c.l.b16 %v614
      %v631 = vunpack.c.l.b16 %v615
      %v632 = vpack.c.b16 %v631, %v630
      %vm633 = vcmask 916480
      %v635 = vsel %vm633, %v632, 0
      %637 = vmatprep.subr.bf16.mxu0 0
      %638 = vmatpush1.bf16.msra.mxu0 %v594
      %639 = vmatprep.subr.bf16.mxu0 0
      %640 = vmatpush1.bf16.msra.mxu0 %v597
      %641 = vmatprep.subr.bf16.mxu0 0
      %642 = vmatpush1.bf16.msra.mxu0 %v600
      %643 = vmatprep.subr.bf16.mxu0 0
      %644 = vmatpush1.bf16.msra.mxu0 %v603
      %645 = vmatprep.subr.bf16.mxu0 0
      %646 = vmatpush1.bf16.msra.mxu0 %v606
      %647 = vmatprep.subr.bf16.mxu0 0
      %648 = vmatpush1.bf16.msra.mxu0 %v609
      %649 = vmatprep.subr.bf16.mxu0 0
      %650 = vmatpush1.bf16.msra.mxu0 %v612
      %651 = vmatprep.subr.bf16.mxu0 0
      %652 = vmatpush1.bf16.msra.mxu0 0
      %653 = vmatprep.subr.bf16.mxu0 0
      %654 = vmatpush1.bf16.msra.mxu0 0
      %655 = vmatprep.subr.bf16.mxu0 0
      %656 = vmatpush1.bf16.msra.mxu0 0
      %657 = vmatprep.subr.bf16.mxu0 0
      %658 = vmatpush1.bf16.msra.mxu0 0
      %659 = vmatprep.subr.bf16.mxu0 0
      %660 = vmatpush1.bf16.msra.mxu0 0
      %661 = vmatprep.subr.bf16.mxu0 0
      %662 = vmatpush1.bf16.msra.mxu0 0
      %663 = vmatprep.subr.bf16.mxu0 0
      %664 = vmatpush1.bf16.msra.mxu0 0
      %665 = vmatprep.subr.bf16.mxu0 0
      %666 = vmatpush1.bf16.msra.mxu0 0
      %667 = vmatprep.subr.bf16.mxu0 0
      %668 = vmatpush1.bf16.msra.mxu0 0
      %669 = vmatprep.mubr.bf16.mxu0 0
      %670 = vmatmul.mubr.bf16.gmra.mrb[0].mxu0 %v635
      %v671 = vpop.f32.mrb[0].mxu0
      %v672 = vadd.f32 %v621, %v671
      %v673 = vpop.f32.mrb[0].mxu0
      %v674 = vpop.f32.mrb[0].mxu0
      %v675 = vadd.f32 %v626, %v674
      %v676 = vpop.f32.mrb[0].mxu0
      %677 = vdwg.mxu0
      %v678 = vld [vmem:[%s6] sm:$0xff]
      %v679 = vld [vmem:[%s6 + $0x8] sm:$0xff]
      %v680 = vadd.f32 %v678, 1e-09
      %v681 = vadd.f32 %v679, 1e-09
      %v682 = vrcp.pop %v680
      %v683 = vrcp.pop %v681
      %v684 = vmul.f32 %v682, 0.5
      %v685 = vmul.f32 %v683, 0.5
      %v686 = vmul.f32 %v678, 2.0
      %v687 = vmul.f32 %v679, 2.0
      %689 = vset.pattern.permute.xlu0 0
      %690 = vperm.xlu0 %689, %v686
      %v691 = vpop.permute.xlu0 %690
      %694 = vset.pattern.permute.xlu0 0
      %695 = vperm.xlu0 %694, %v687
      %v696 = vpop.permute.xlu0 %695
      %v698 = vmul.f32 %v691, %v672
      %v699 = vmul.f32 %v696, %v675
      %v700 = vand.u32 2147483647, %v698
      %vm701 = vcmp.le.f32.partialorder %v700, 0.7853982
      %vm702 = vcmp.lt.s32.totalorder %v698, 0
      %v703 = vand.u32 %v698, 2139095040
      %v704 = vshrl.u32 %v703, 23
      %v705 = vsub.s32 %v704, 127
      %v706 = vand.u32 2147483647, %v698
      %v707 = vand.u32 %v706, 8388607
      %v708 = vor.u32 %v707, 8388608
      %v709 = vsub.s32 0, %v708
      %v710 = vadd.s32 %v705, 1
      %vm711 = vcmp.gt.s32.totalorder %v710, 0
      %v712 = vsel %vm711, %v710, 0
      %v713 = vshrl.u32 %v712, 5
      %v714 = vand.u32 %v712, 31
      %v715 = vsub.s32 32, %v714
      %v716 = vshrl.u32 683565275, %v715
      %v717 = vshll.u32 683565275, %v714
      %v718 = vshrl.u32 2475754826, %v715
      %v719 = vor.u32 %v717, %v718
      %v720 = vshll.u32 2475754826, %v714
      %v721 = vshrl.u32 2131351028, %v715
      %v722 = vor.u32 %v720, %v721
      %v723 = vshll.u32 2131351028, %v714
      %v724 = vshrl.u32 2102212464, %v715
      %v725 = vor.u32 %v723, %v724
      %v726 = vshll.u32 2102212464, %v714
      %v727 = vshrl.u32 920167782, %v715
      %v728 = vor.u32 %v726, %v727
      %v729 = vshll.u32 920167782, %v714
      %v730 = vshrl.u32 1326507024, %v715
      %v731 = vor.u32 %v729, %v730
      %vm732 = vcmp.lt.s32.totalorder %v713, 1
      %vm733 = vcmp.lt.s32.totalorder %v713, 2
      %vm734 = vcmp.lt.s32.totalorder %v713, 3
      %vm735 = vcmp.lt.s32.totalorder %v713, 4
      %v736 = vsel %vm732, %v716, %v719
      %v737 = vsel %vm735, %v725, 2102212464
      %v738 = vsel %vm734, %v722, %v737
      %v739 = vsel %vm733, %v736, %v738
      %v740 = vsel %vm732, %v719, %v722
      %v741 = vsel %vm735, %v728, 920167782
      %v742 = vsel %vm734, %v725, %v741
      %v743 = vsel %vm733, %v740, %v742
      %v744 = vsel %vm732, %v722, %v725
      %v745 = vsel %vm735, %v731, 1326507024
      %v746 = vsel %vm734, %v728, %v745
      %v747 = vsel %vm733, %v744, %v746
      %v748 = vshll.u32 %v708, 8
      %v749 = vmul.u32.u64.compose %v748, %v747
      %v750 = vextract.low.u32 %v749
      %v751 = vextract.high.u32 %v749
      %v752 = vmul.u32.u64.compose %v748, %v743
      %v753 = vextract.low.u32 %v752
      %v754 = vextract.high.u32 %v752
      %v755 = vmul.u32 %v748, %v739
      %v756 = vadd.s32 %v751, %v753
      %vm757 = vc.u32 %v751, %v753
      %v758 = vadd.s32 %v754, 1
      %v759 = vsel %vm757, %v758, %v754
      %v760 = vadd.s32 %v755, %v759
      %v761 = vadd.s32 %v760, 536870912
      %v762 = vshrl.u32 %v761, 30
      %v763 = vshll.u32 %v762, 30
      %v764 = vsub.s32 %v760, %v763
      %vm765 = vcmp.lt.s32.totalorder %v764, 0
      %v766 = vsub.s32 0, %v764
      %v767 = vsel %vm765, %v766, %v764
      %v768 = vclz %v767
      %v769 = vsub.s32 %v768, 2
      %vm770 = vcmp.gt.s32.totalorder 0, %v769
      %v771 = vsel %vm770, 0, %v769
      %v772 = vsub.s32 32, %v771
      %v773 = vshll.u32 %v764, %v771
      %v774 = vshrl.u32 %v756, %v772
      %v775 = vor.u32 %v773, %v774
      %v776 = vsub.s32 4294967266, %v771
      %v777 = vadd.s32 %v776, 127
      %v778 = vshll.u32 %v777, 23
      %v779 = vor.u32 4788187, %v778
      %v780 = vand.u32 2147483647, %v779
      %v782 = vcvt.s32.f32 %v775
      %v783 = vmul.f32 %v782, %v780
      %v784 = vxor.u32 %v783, 2147483648
      %v785 = vsel %vm702, %v784, %v783
      %v786 = vsub.s32 4, %v762
      %v787 = vsel %vm702, %v786, %v762
      %v788 = vsel %vm701, %v698, %v785
      %v789 = vsel %vm701, 0, %v787
      %v790 = vcosq.f32.pop %v788
      %v791 = vsinq.f32.pop %v788
      %vm792 = vweird.f32 %v698
      %v793 = vand.u32 %v789, 3
      %vm794 = vcmp.lt.s32.totalorder %v793, 2
      %vm795 = vcmp.eq.s32.totalorder %v793, 0
      %v796 = vxor.u32 %v791, 2147483648
      %v797 = vsel %vm795, %v790, %v796
      %vm798 = vcmp.eq.s32.totalorder %v793, 2
      %v799 = vxor.u32 %v790, 2147483648
      %v800 = vsel %vm798, %v799, %v791
      %v801 = vsel %vm794, %v797, %v800
      %v802 = vsel %vm792, nan, %v801
      %v803 = vand.u32 2147483647, %v699
      %vm804 = vcmp.le.f32.partialorder %v803, 0.7853982
      %vm805 = vcmp.lt.s32.totalorder %v699, 0
      %v806 = vand.u32 %v699, 2139095040
      %v807 = vshrl.u32 %v806, 23
      %v808 = vsub.s32 %v807, 127
      %v809 = vand.u32 2147483647, %v699
      %v810 = vand.u32 %v809, 8388607
      %v811 = vor.u32 %v810, 8388608
      %v812 = vsub.s32 0, %v811
      %v813 = vadd.s32 %v808, 1
      %vm814 = vcmp.gt.s32.totalorder %v813, 0
      %v815 = vsel %vm814, %v813, 0
      %v816 = vshrl.u32 %v815, 5
      %v817 = vand.u32 %v815, 31
      %v818 = vsub.s32 32, %v817
      %v819 = vshrl.u32 683565275, %v818
      %v820 = vshll.u32 683565275, %v817
      %v821 = vshrl.u32 2475754826, %v818
      %v822 = vor.u32 %v820, %v821
      %v823 = vshll.u32 2475754826, %v817
      %v824 = vshrl.u32 2131351028, %v818
      %v825 = vor.u32 %v823, %v824
      %v826 = vshll.u32 2131351028, %v817
      %v827 = vshrl.u32 2102212464, %v818
      %v828 = vor.u32 %v826, %v827
      %v829 = vshll.u32 2102212464, %v817
      %v830 = vshrl.u32 920167782, %v818
      %v831 = vor.u32 %v829, %v830
      %v832 = vshll.u32 920167782, %v817
      %v833 = vshrl.u32 1326507024, %v818
      %v834 = vor.u32 %v832, %v833
      %vm835 = vcmp.lt.s32.totalorder %v816, 1
      %vm836 = vcmp.lt.s32.totalorder %v816, 2
      %vm837 = vcmp.lt.s32.totalorder %v816, 3
      %vm838 = vcmp.lt.s32.totalorder %v816, 4
      %v839 = vsel %vm835, %v819, %v822
      %v840 = vsel %vm838, %v828, 2102212464
      %v841 = vsel %vm837, %v825, %v840
      %v842 = vsel %vm836, %v839, %v841
      %v843 = vsel %vm835, %v822, %v825
      %v844 = vsel %vm838, %v831, 920167782
      %v845 = vsel %vm837, %v828, %v844
      %v846 = vsel %vm836, %v843, %v845
      %v847 = vsel %vm835, %v825, %v828
      %v848 = vsel %vm838, %v834, 1326507024
      %v849 = vsel %vm837, %v831, %v848
      %v850 = vsel %vm836, %v847, %v849
      %v851 = vshll.u32 %v811, 8
      %v852 = vmul.u32.u64.compose %v851, %v850
      %v853 = vextract.low.u32 %v852
      %v854 = vextract.high.u32 %v852
      %v855 = vmul.u32.u64.compose %v851, %v846
      %v856 = vextract.low.u32 %v855
      %v857 = vextract.high.u32 %v855
      %v858 = vmul.u32 %v851, %v842
      %v859 = vadd.s32 %v854, %v856
      %vm860 = vc.u32 %v854, %v856
      %v861 = vadd.s32 %v857, 1
      %v862 = vsel %vm860, %v861, %v857
      %v863 = vadd.s32 %v858, %v862
      %v864 = vadd.s32 %v863, 536870912
      %v865 = vshrl.u32 %v864, 30
      %v866 = vshll.u32 %v865, 30
      %v867 = vsub.s32 %v863, %v866
      %vm868 = vcmp.lt.s32.totalorder %v867, 0
      %v869 = vsub.s32 0, %v867
      %v870 = vsel %vm868, %v869, %v867
      %v871 = vclz %v870
      %v872 = vsub.s32 %v871, 2
      %vm873 = vcmp.gt.s32.totalorder 0, %v872
      %v874 = vsel %vm873, 0, %v872
      %v875 = vsub.s32 32, %v874
      %v876 = vshll.u32 %v867, %v874
      %v877 = vshrl.u32 %v859, %v875
      %v878 = vor.u32 %v876, %v877
      %v879 = vsub.s32 4294967266, %v874
      %v880 = vadd.s32 %v879, 127
      %v881 = vshll.u32 %v880, 23
      %v882 = vor.u32 4788187, %v881
      %v883 = vand.u32 2147483647, %v882
      %v885 = vcvt.s32.f32 %v878
      %v886 = vmul.f32 %v885, %v883
      %v887 = vxor.u32 %v886, 2147483648
      %v888 = vsel %vm805, %v887, %v886
      %v889 = vsub.s32 4, %v865
      %v890 = vsel %vm805, %v889, %v865
      %v891 = vsel %vm804, %v699, %v888
      %v892 = vsel %vm804, 0, %v890
      %v893 = vcosq.f32.pop %v891
      %v894 = vsinq.f32.pop %v891
      %vm895 = vweird.f32 %v699
      %v896 = vand.u32 %v892, 3
      %vm897 = vcmp.lt.s32.totalorder %v896, 2
      %vm898 = vcmp.eq.s32.totalorder %v896, 0
      %v899 = vxor.u32 %v894, 2147483648
      %v900 = vsel %vm898, %v893, %v899
      %vm901 = vcmp.eq.s32.totalorder %v896, 2
      %v902 = vxor.u32 %v893, 2147483648
      %v903 = vsel %vm901, %v902, %v894
      %v904 = vsel %vm897, %v900, %v903
      %v905 = vsel %vm895, nan, %v904
      %v906 = vsub.f32 1.0, %v802
      %v907 = vsub.f32 1.0, %v905
      %909 = vset.pattern.permute.xlu0 0
      %910 = vperm.xlu0 %909, %v684
      %v911 = vpop.permute.xlu0 %910
      %914 = vset.pattern.permute.xlu0 0
      %915 = vperm.xlu0 %914, %v685
      %v916 = vpop.permute.xlu0 %915
      %v918 = vmul.f32 %v911, %v906
      %v919 = vmul.f32 %v916, %v907
      %v920 = vadd.f32 %v672, %v918
      %v921 = vadd.f32 %v675, %v919
      %v922 = vld [vmem:[%s4] sm:$0xf]
      %v923 = vld [vmem:[%s4 + $0x4] sm:$0xf]
      %v924 = vpack.c.bf16 %v921, %v920
      %v925 = vld [vmem:[%s5] sm:$0xff]
      %v926 = vld [vmem:[%s5 + $0x8] sm:$0xff]
      %928 = vset.pattern.permute.xlu0 0
      %929 = vperm.xlu0 %928, %v925
      %v930 = vpop.permute.xlu0 %929
      %933 = vset.pattern.permute.xlu0 0
      %934 = vperm.xlu0 %933, %v926
      %v935 = vpop.permute.xlu0 %934
      %v939 = vunpack.c.l.b16 %v922
      %v940 = vunpack.c.l.b16 %v923
      %v941 = vpack.c.b16 %v940, %v939
      %vm942 = vcmask 130048
      %v944 = vsel %vm942, %v941, 0
      %946 = vmatprep.subr.bf16.mxu0 0
      %947 = vmatpush1.bf16.msra.mxu0 %v924
      %948 = vmatprep.subr.bf16.mxu0 0
      %949 = vmatpush1.bf16.msra.mxu0 0
      %950 = vmatprep.subr.bf16.mxu0 0
      %951 = vmatpush1.bf16.msra.mxu0 0
      %952 = vmatprep.subr.bf16.mxu0 0
      %953 = vmatpush1.bf16.msra.mxu0 0
      %954 = vmatprep.subr.bf16.mxu0 0
      %955 = vmatpush1.bf16.msra.mxu0 0
      %956 = vmatprep.subr.bf16.mxu0 0
      %957 = vmatpush1.bf16.msra.mxu0 0
      %958 = vmatprep.subr.bf16.mxu0 0
      %959 = vmatpush1.bf16.msra.mxu0 0
      %960 = vmatprep.subr.bf16.mxu0 0
      %961 = vmatpush1.bf16.msra.mxu0 0
      %962 = vmatprep.subr.bf16.mxu0 0
      %963 = vmatpush1.bf16.msra.mxu0 0
      %964 = vmatprep.subr.bf16.mxu0 0
      %965 = vmatpush1.bf16.msra.mxu0 0
      %966 = vmatprep.subr.bf16.mxu0 0
      %967 = vmatpush1.bf16.msra.mxu0 0
      %968 = vmatprep.subr.bf16.mxu0 0
      %969 = vmatpush1.bf16.msra.mxu0 0
      %970 = vmatprep.subr.bf16.mxu0 0
      %971 = vmatpush1.bf16.msra.mxu0 0
      %972 = vmatprep.subr.bf16.mxu0 0
      %973 = vmatpush1.bf16.msra.mxu0 0
      %974 = vmatprep.subr.bf16.mxu0 0
      %975 = vmatpush1.bf16.msra.mxu0 0
      %976 = vmatprep.subr.bf16.mxu0 0
      %977 = vmatpush1.bf16.msra.mxu0 0
      %978 = vmatprep.mubr.bf16.mxu0 0
      %979 = vmatmul.mubr.bf16.gmra.mrb[0].mxu0 %v944
      %v980 = vpop.f32.mrb[0].mxu0
      %v981 = vadd.f32 %v930, %v980
      %v982 = vpop.f32.mrb[0].mxu0
      %v983 = vpop.f32.mrb[0].mxu0
      %v984 = vadd.f32 %v935, %v983
      %v985 = vpop.f32.mrb[0].mxu0
      %986 = vdwg.mxu0
      %989 = vrot.lane.b32.xlu0 %v348, 101
      %v990 = vpop.permute.xlu0 %989
      %991 = vrot.lane.b32.xlu0 %v349, 101
      %v992 = vpop.permute.xlu0 %991
      %v995 = vadd.f32 %v981, %v990
      %v996 = vadd.f32 %v984, %v992
      %v997 = vpack.c.bf16 %v996, %v995
      %v999 = vunpack.c.l.b16 %v997
      %v1000 = vunpack.c.h.b16 %v997
      %v1001 = vpack.c.b16 %v999, %v999
      %v1002 = vpack.c.b16 %v1000, %v1000
      %vm1005 = vcmask 478208
      %1006 = vst.msk [vmem:[%s320] sm:$0xf] %vm1005, %v1001
      %1007 = vst.msk [vmem:[%s320 + $0x4] sm:$0xf] %vm1005, %v1002
      %s1008 = ssub.s32 0, %s23
      %p1009 = scmp.lt.s32.totalorder %s22, 1
      %s1010 = scalar_select %p1009, %s22, 1
      %p1011 = scmp.lt.s32.totalorder %s1008, 0
      %s1012 = scalar_select %p1011, %s1008, 0
      %s1013 = smul.addr %s1010, 2
      %s1014 = sadd.s32 %s1012, %s1013
      %s1015 = smul.addr %s1014, 4
      %s1016 = scalar_lea.vmem %s7, %s1015
      // Predicated region
      $region53: #{decoder_forward.14} parent=47 // pred_check
        %p1017 = pneg %p208
      $region54: #{decoder_forward.14} parent=47 // pred_check_branch
        %1019 = sbr.rel (%p1017) target = $region56
      $region55: #{decoder_forward.14} parent=47 // pred_region
        %s1020 = ssub.s32 0, %s23
      $region56: #{decoder_forward.14} parent=47 // pred_fallthru
        _
    $region48: #{decoder_forward.14} parent=5 // pred_fallthru
      _
    %p1021 = scmp.le.s32.totalorder 2, %s13
    // Predicated region
    $region57: #{decoder_forward.14} parent=5 // pred_check
      %p1022 = pneg %p1021
    $region58: #{decoder_forward.14} parent=5 // pred_check_branch
      %1024 = sbr.rel (%p1022) target = $region60
    $region59: #{decoder_forward.14} parent=5 // pred_region
      %s1025 = ssub.s32 %s13, 2
      // Predicated region
      $region61: #{decoder_forward.14} parent=59 // pred_check
        %p1026 = pneg %p214
      $region62: #{decoder_forward.14} parent=59 // pred_check_branch
        %1028 = sbr.rel (%p1026) target = $region64
      $region63: #{decoder_forward.14} parent=59 // pred_region
        %s1029 = ssub.s32 0, %s25
        %p1030 = scmp.lt.s32.totalorder %s24, 1
        %s1031 = scalar_select %p1030, %s24, 1
        %p1032 = scmp.lt.s32.totalorder %s1029, 0
        %s1033 = scalar_select %p1032, %s1029, 0
        %s1034 = smul.addr %s1031, 2
        %s1035 = sadd.s32 %s1033, %s1034
        %s1036 = smul.addr %s1035, 4
        %s1037 = scalar_lea.vmem %s7, %s1036
      $region64: #{decoder_forward.14} parent=59 // pred_fallthru
        _
    $region60: #{decoder_forward.14} parent=5 // pred_fallthru
      _
  $region6: #{decoder_forward.14} parent=0 // loop_footer
    %s17 = sadd.s32 1, %s13
  $region7: #{decoder_forward.14} parent=0 // loop_footer_branch
    %12 = sbr.rel target = $region3
  $region8: #{decoder_forward.14} parent=0 // loop_exit
    _

// kernel: decoder_forward.15
$region0: #{decoder_forward.15}
  #allocation0 [shape = 'u32[]', space=smem, size = 0x4, offset = 0x4, fixed_abs, tag = 'smem constant byte address 0x4 - core index']
  #allocation1 [shape = 'u32[144,128]{1,0:T(1,128)}', space=vmem, size = 0x12000, scoped, tag = 'internal scratch']
  #allocation2 [shape = 'bf16[16,2]{1,0:T(16,128)(2,1)}', space=vmem, size = 0x1000, scoped, tag = 'scratch operand']
  %s0 = inlined_call_operand.vmem [shape: bf16[2,16,33], index: 0, kind: input, shape index: {}]
  %s1 = inlined_call_operand.vmem [shape: bf16[16,48], index: 1, kind: input, shape index: {}]
  %s2 = inlined_call_operand.vmem [shape: f32[16,1], index: 2, kind: input, shape index: {}]
  %s3 = inlined_call_operand.vmem [shape: f32[16,1], index: 3, kind: input, shape index: {}]
  %s4 = inlined_call_operand.vmem [shape: bf16[2,16,33], index: 4, kind: output, shape index: {}]
  %s5 = sld [smem:[#allocation0]]
  $region53: #{decoder_forward.15} parent=0
    _
  %s7 = ssub.s32 1, %s5
  %s8 = scalar_select 0, %s7, %s5
  loop: start=0, step=1, limit=4
  $region2: #{decoder_forward.15} parent=0 // loop_pre_header
    _
  $region3: #{decoder_forward.15} parent=0 // loop_header
    %s10 = sphi 0, %s14
    %p11 = scmp.ge.s32.totalorder %s10, 4
    %s17 = sphi 0, %s29
    %s18 = sphi 0, %s25
    %s19 = sphi 0, %s17
    %s20 = sphi 0, %s18
    %s21 = sphi 0, %s19
    %s22 = sphi 0, %s20
    %s36 = sphi 0, %s38
    %s39 = sphi 0, %s36
    %s40 = sphi 0, %s39
    %s56 = sphi 0, %s40
    %s60 = sphi 0, %s60
    %s62 = sphi 0, %s60
    %s63 = sphi 0, %s62
    %s77 = sphi 0, %s63
    %s81 = sphi 0, %s81
    %s83 = sphi 0, %s81
    %s84 = sphi 0, %s83
    %s98 = sphi 0, %s84
    %s102 = sphi 0, %s102
    %s104 = sphi 0, %s102
    %s105 = sphi 0, %s104
    %s119 = sphi 0, %s105
    %s129 = sphi 0, %s131
    %s132 = sphi 0, %s129
    %s133 = sphi 0, %s132
    %s149 = sphi 0, %s133
  $region4: #{decoder_forward.15} parent=0 // loop_header_branch
    %13 = sbr.rel (%p11) target = $region8
  $region5: #{decoder_forward.15} parent=0 // loop_body
    %s15 = ssub.s32 %s10, 1
    %s16 = ssub.s32 %s10, 2
    %s23 = sadd.s32 1, %s18
    %p24 = scmp.ge.s32.totalorder %s23, 1
    %s25 = scalar_select %p24, 0, %s23
    %s26 = sadd.s32 1, %s17
    %s27 = scalar_select %p24, %s26, %s17
    %p28 = scmp.ge.s32.totalorder %s27, 2
    %s29 = scalar_select %p28, 0, %s27
    %s30 = ssub.s32 0, %s18
    %s31 = ssub.s32 0, %s25
    %s32 = ssub.s32 %s17, %s29
    %s33 = ssub.s32 %s30, %s31
    %s34 = sor.u32 %s32, %s33
    %p35 = scmp.eq.s32.totalorder %s34, 0
    %s37 = sadd.s32 %s36, 1
    %s38 = scalar_select %p35, %s36, %s37
    %p41 = pneg %p35
    %p42 = scmp.eq.s32.totalorder %s10, 1
    %p43 = por %p41, %p42
    %p44 = scmp.ne.s32.totalorder %s36, %s39
    %p45 = scmp.eq.s32.totalorder %s10, 0
    %p46 = por %p44, %p45
    %p47 = scmp.ne.s32.totalorder %s36, %s39
    %p48 = scmp.eq.s32.totalorder %s15, 1
    %p49 = por %p47, %p48
    %p50 = scmp.ne.s32.totalorder %s39, %s40
    %p51 = scmp.eq.s32.totalorder %s15, 0
    %p52 = por %p50, %p51
    %p53 = scmp.ne.s32.totalorder %s39, %s40
    %p54 = scmp.eq.s32.totalorder %s16, 1
    %p55 = por %p53, %p54
    %p57 = scmp.ne.s32.totalorder %s40, %s56
    %p58 = scmp.eq.s32.totalorder %s16, 0
    %p59 = por %p57, %p58
    %s61 = sadd.s32 %s60, 1
    %p64 = scmp.eq.s32.totalorder %s10, 1
    %p65 = scmp.ne.s32.totalorder %s60, %s62
    %p66 = scmp.eq.s32.totalorder %s10, 0
    %p67 = por %p65, %p66
    %p68 = scmp.ne.s32.totalorder %s60, %s62
    %p69 = scmp.eq.s32.totalorder %s15, 1
    %p70 = por %p68, %p69
    %p71 = scmp.ne.s32.totalorder %s62, %s63
    %p72 = scmp.eq.s32.totalorder %s15, 0
    %p73 = por %p71, %p72
    %p74 = scmp.ne.s32.totalorder %s62, %s63
    %p75 = scmp.eq.s32.totalorder %s16, 1
    %p76 = por %p74, %p75
    %p78 = scmp.ne.s32.totalorder %s63, %s77
    %p79 = scmp.eq.s32.totalorder %s16, 0
    %p80 = por %p78, %p79
    %s82 = sadd.s32 %s81, 1
    %p85 = scmp.eq.s32.totalorder %s10, 1
    %p86 = scmp.ne.s32.totalorder %s81, %s83
    %p87 = scmp.eq.s32.totalorder %s10, 0
    %p88 = por %p86, %p87
    %p89 = scmp.ne.s32.totalorder %s81, %s83
    %p90 = scmp.eq.s32.totalorder %s15, 1
    %p91 = por %p89, %p90
    %p92 = scmp.ne.s32.totalorder %s83, %s84
    %p93 = scmp.eq.s32.totalorder %s15, 0
    %p94 = por %p92, %p93
    %p95 = scmp.ne.s32.totalorder %s83, %s84
    %p96 = scmp.eq.s32.totalorder %s16, 1
    %p97 = por %p95, %p96
    %p99 = scmp.ne.s32.totalorder %s84, %s98
    %p100 = scmp.eq.s32.totalorder %s16, 0
    %p101 = por %p99, %p100
    %s103 = sadd.s32 %s102, 1
    %p106 = scmp.eq.s32.totalorder %s10, 1
    %p107 = scmp.ne.s32.totalorder %s102, %s104
    %p108 = scmp.eq.s32.totalorder %s10, 0
    %p109 = por %p107, %p108
    %p110 = scmp.ne.s32.totalorder %s102, %s104
    %p111 = scmp.eq.s32.totalorder %s15, 1
    %p112 = por %p110, %p111
    %p113 = scmp.ne.s32.totalorder %s104, %s105
    %p114 = scmp.eq.s32.totalorder %s15, 0
    %p115 = por %p113, %p114
    %p116 = scmp.ne.s32.totalorder %s104, %s105
    %p117 = scmp.eq.s32.totalorder %s16, 1
    %p118 = por %p116, %p117
    %p120 = scmp.ne.s32.totalorder %s105, %s119
    %p121 = scmp.eq.s32.totalorder %s16, 0
    %p122 = por %p120, %p121
    %s123 = ssub.s32 0, %s18
    %s124 = ssub.s32 0, %s25
    %s125 = ssub.s32 %s17, %s29
    %s126 = ssub.s32 %s123, %s124
    %s127 = sor.u32 %s125, %s126
    %p128 = scmp.eq.s32.totalorder %s127, 0
    %s130 = sadd.s32 %s129, 1
    %s131 = scalar_select %p128, %s129, %s130
    %p134 = pneg %p128
    %p135 = scmp.eq.s32.totalorder %s10, 1
    %p136 = por %p134, %p135
    %p137 = scmp.ne.s32.totalorder %s129, %s132
    %p138 = scmp.eq.s32.totalorder %s10, 0
    %p139 = por %p137, %p138
    %p140 = scmp.ne.s32.totalorder %s129, %s132
    %p141 = scmp.eq.s32.totalorder %s15, 1
    %p142 = por %p140, %p141
    %p143 = scmp.ne.s32.totalorder %s132, %s133
    %p144 = scmp.eq.s32.totalorder %s15, 0
    %p145 = por %p143, %p144
    %p146 = scmp.ne.s32.totalorder %s132, %s133
    %p147 = scmp.eq.s32.totalorder %s16, 1
    %p148 = por %p146, %p147
    %p150 = scmp.ne.s32.totalorder %s133, %s149
    %p151 = scmp.eq.s32.totalorder %s16, 0
    %p152 = por %p150, %p151
    %p153 = scmp.le.s32.totalorder 1, %s10
    %p154 = scmp.lt.s32.totalorder %s10, 3
    %p155 = pnand %p153, %p154
    %p156 = pneg %p155
    // Predicated region
    $region9: #{decoder_forward.15} parent=5 // pred_check
      _
    $region10: #{decoder_forward.15} parent=5 // pred_check_branch
      %158 = sbr.rel (%p155) target = $region12
    $region11: #{decoder_forward.15} parent=5 // pred_region
      %s159 = ssub.s32 %s10, 1
      // Predicated region
      $region13: #{decoder_forward.15} parent=11 // pred_check
        %p160 = pneg %p73
      $region14: #{decoder_forward.15} parent=11 // pred_check_branch
        %162 = sbr.rel (%p160) target = $region16
      $region15: #{decoder_forward.15} parent=11 // pred_region
        _
      $region16: #{decoder_forward.15} parent=11 // pred_fallthru
        _
      // Predicated region
      $region17: #{decoder_forward.15} parent=11 // pred_check
        %p163 = pneg %p94
      $region18: #{decoder_forward.15} parent=11 // pred_check_branch
        %165 = sbr.rel (%p163) target = $region20
      $region19: #{decoder_forward.15} parent=11 // pred_region
        _
      $region20: #{decoder_forward.15} parent=11 // pred_fallthru
        _
      // Predicated region
      $region21: #{decoder_forward.15} parent=11 // pred_check
        %p166 = pneg %p115
      $region22: #{decoder_forward.15} parent=11 // pred_check_branch
        %168 = sbr.rel (%p166) target = $region24
      $region23: #{decoder_forward.15} parent=11 // pred_region
        _
      $region24: #{decoder_forward.15} parent=11 // pred_fallthru
        _
    $region12: #{decoder_forward.15} parent=5 // pred_fallthru
      _
    %p169 = scmp.lt.s32.totalorder %s10, 2
    // Predicated region
    $region25: #{decoder_forward.15} parent=5 // pred_check
      %p170 = pneg %p169
    $region26: #{decoder_forward.15} parent=5 // pred_check_branch
      %172 = sbr.rel (%p170) target = $region28
    $region27: #{decoder_forward.15} parent=5 // pred_region
      // Predicated region
      $region29: #{decoder_forward.15} parent=27 // pred_check
        %p173 = pneg %p46
      $region30: #{decoder_forward.15} parent=27 // pred_check_branch
        %175 = sbr.rel (%p173) target = $region32
      $region31: #{decoder_forward.15} parent=27 // pred_region
        %s176 = ssub.s32 0, %s18
        %p177 = scmp.lt.s32.totalorder %s17, 1
        %s178 = scalar_select %p177, %s17, 1
        %p179 = scmp.lt.s32.totalorder %s176, 0
        %s180 = scalar_select %p179, %s176, 0
        %s181 = smul.addr %s178, 2
        %s182 = sadd.s32 %s180, %s181
        %s183 = smul.addr %s182, 4
        %s184 = scalar_lea.vmem %s0, %s183
        %s185 = ssub.s32 0, %s18
      $region32: #{decoder_forward.15} parent=27 // pred_fallthru
        _
    $region28: #{decoder_forward.15} parent=5 // pred_fallthru
      _
    %p186 = scmp.le.s32.totalorder 1, %s10
    %p187 = scmp.lt.s32.totalorder %s10, 3
    %p188 = pnand %p186, %p187
    %p189 = pneg %p188
    // Predicated region
    $region33: #{decoder_forward.15} parent=5 // pred_check
      _
    $region34: #{decoder_forward.15} parent=5 // pred_check_branch
      %191 = sbr.rel (%p188) target = $region36
    $region35: #{decoder_forward.15} parent=5 // pred_region
      %s192 = ssub.s32 %s10, 1
      %s193 = ssub.s32 0, %s20
      %p194 = scmp.lt.s32.totalorder %s19, 1
      %s195 = scalar_select %p194, %s19, 1
      %p196 = scmp.lt.s32.totalorder %s193, 0
      %s197 = scalar_select %p196, %s193, 0
      %s198 = smul.addr %s195, 2
      %s199 = sadd.s32 %s197, %s198
      %s200 = smul.addr %s199, 4
      %s201 = scalar_lea.vmem %s0, %s200
      %p202 = pneg %p52
      %p203 = pneg %p49
      %p204 = pneg %p73
      %p205 = pneg %p70
      %p206 = pneg %p94
      %p207 = pneg %p91
      %p208 = pneg %p115
      %p209 = pneg %p112
      %p210 = pneg %p145
      %p211 = pneg %p142
      %s212 = ssub.s32 0, %s20
      %p213 = scmp.lt.s32.totalorder %s19, 1
      %s214 = scalar_select %p213, %s19, 1
      %p215 = scmp.lt.s32.totalorder %s212, 0
      %s216 = scalar_select %p215, %s212, 0
      %s217 = smul.addr %s214, 2
      %s218 = sadd.s32 %s216, %s217
      %s219 = smul.addr %s218, 4
      %s220 = scalar_lea.vmem %s4, %s219
      %s221 = ssub.s32 0, %s20
      %p222 = scmp.lt.s32.totalorder %s19, 1
      %s223 = scalar_select %p222, %s19, 1
      %p224 = scmp.lt.s32.totalorder %s221, 0
      %s225 = scalar_select %p224, %s221, 0
      %s226 = smul.addr %s223, 2
      %s227 = sadd.s32 %s225, %s226
      %s228 = smul.addr %s227, 4
      %s229 = scalar_lea.vmem %s0, %s228
      %s230 = ssub.s32 0, %s20
      %s231 = ssub.s32 0, %s20
      %p232 = scmp.lt.s32.totalorder %s19, 1
      %s233 = scalar_select %p232, %s19, 1
      %p234 = scmp.lt.s32.totalorder %s231, 0
      %s235 = scalar_select %p234, %s231, 0
      %s236 = smul.addr %s233, 2
      %s237 = sadd.s32 %s235, %s236
      %s238 = smul.addr %s237, 4
      %s239 = scalar_lea.vmem %s4, %s238
      %s240 = ssub.s32 0, %s20
      %p242 = scmp.eq.s32.totalorder %s20, 0
      // Predicated region
      $region37: #{decoder_forward.15} parent=35 // pred_check
        %p243 = pneg %p242
      $region38: #{decoder_forward.15} parent=35 // pred_check_branch
        %245 = sbr.rel (%p243) target = $region40
      $region39: #{decoder_forward.15} parent=35 // pred_region
        %vm246 = vcmask 15360
        %247 = vst.msk [vmem:[#allocation2] sm:$0xff] %vm246, 0
      $region40: #{decoder_forward.15} parent=35 // pred_fallthru
        _
      %v248 = vld [vmem:[%s229] sm:$0xf]
      %v249 = vld [vmem:[%s229 + $0x4] sm:$0xf]
      %v250 = vld [vmem:[#allocation2] sm:$0xff]
      %v253 = vunpack.c.l.b16 %v248
      %v254 = vunpack.c.l.b16 %v249
      %v255 = vpack.c.b16 %v254, %v253
      %257 = vrot.lane.b32.xlu0 %v250, 33
      %v258 = vpop.permute.xlu0 %257
      %vm259 = vcmask 269312
      %v262 = vsel %vm259, %v255, %v258
      %vm265 = vcmask 15360
      %266 = vst.msk [vmem:[#allocation2] sm:$0xff] %vm265, %v255
      %v267 = vunpack.c.l.bf16 %v262
      %v268 = vunpack.c.h.bf16 %v262
      %v269 = vld [vmem:[%s3] sm:$0xff]
      %v270 = vld [vmem:[%s3 + $0x8] sm:$0xff]
      %v271 = vadd.f32 %v269, 1e-09
      %v272 = vadd.f32 %v270, 1e-09
      %v273 = vrcp.pop %v271
      %v274 = vrcp.pop %v272
      %v275 = vmul.f32 %v273, 0.5
      %v276 = vmul.f32 %v274, 0.5
      %v277 = vmul.f32 %v269, 2.0
      %v278 = vmul.f32 %v270, 2.0
      %280 = vset.pattern.permute.xlu0 0
      %281 = vperm.xlu0 %280, %v277
      %v282 = vpop.permute.xlu0 %281
      %285 = vset.pattern.permute.xlu0 0
      %286 = vperm.xlu0 %285, %v278
      %v287 = vpop.permute.xlu0 %286
      %v289 = vmul.f32 %v282, %v267
      %v290 = vmul.f32 %v287, %v268
      %v291 = vand.u32 2147483647, %v289
      %vm292 = vcmp.le.f32.partialorder %v291, 0.7853982
      %vm293 = vcmp.lt.s32.totalorder %v289, 0
      %v294 = vand.u32 %v289, 2139095040
      %v295 = vshrl.u32 %v294, 23
      %v296 = vsub.s32 %v295, 127
      %v297 = vand.u32 2147483647, %v289
      %v298 = vand.u32 %v297, 8388607
      %v299 = vor.u32 %v298, 8388608
      %v300 = vsub.s32 0, %v299
      %v301 = vadd.s32 %v296, 1
      %vm302 = vcmp.gt.s32.totalorder %v301, 0
      %v303 = vsel %vm302, %v301, 0
      %v304 = vshrl.u32 %v303, 5
      %v305 = vand.u32 %v303, 31
      %v306 = vsub.s32 32, %v305
      %v307 = vshrl.u32 683565275, %v306
      %v308 = vshll.u32 683565275, %v305
      %v309 = vshrl.u32 2475754826, %v306
      %v310 = vor.u32 %v308, %v309
      %v311 = vshll.u32 2475754826, %v305
      %v312 = vshrl.u32 2131351028, %v306
      %v313 = vor.u32 %v311, %v312
      %v314 = vshll.u32 2131351028, %v305
      %v315 = vshrl.u32 2102212464, %v306
      %v316 = vor.u32 %v314, %v315
      %v317 = vshll.u32 2102212464, %v305
      %v318 = vshrl.u32 920167782, %v306
      %v319 = vor.u32 %v317, %v318
      %v320 = vshll.u32 920167782, %v305
      %v321 = vshrl.u32 1326507024, %v306
      %v322 = vor.u32 %v320, %v321
      %vm323 = vcmp.lt.s32.totalorder %v304, 1
      %vm324 = vcmp.lt.s32.totalorder %v304, 2
      %vm325 = vcmp.lt.s32.totalorder %v304, 3
      %vm326 = vcmp.lt.s32.totalorder %v304, 4
      %v327 = vsel %vm323, %v307, %v310
      %v328 = vsel %vm326, %v316, 2102212464
      %v329 = vsel %vm325, %v313, %v328
      %v330 = vsel %vm324, %v327, %v329
      %v331 = vsel %vm323, %v310, %v313
      %v332 = vsel %vm326, %v319, 920167782
      %v333 = vsel %vm325, %v316, %v332
      %v334 = vsel %vm324, %v331, %v333
      %v335 = vsel %vm323, %v313, %v316
      %v336 = vsel %vm326, %v322, 1326507024
      %v337 = vsel %vm325, %v319, %v336
      %v338 = vsel %vm324, %v335, %v337
      %v339 = vshll.u32 %v299, 8
      %v340 = vmul.u32.u64.compose %v339, %v338
      %v341 = vextract.low.u32 %v340
      %v342 = vextract.high.u32 %v340
      %v343 = vmul.u32.u64.compose %v339, %v334
      %v344 = vextract.low.u32 %v343
      %v345 = vextract.high.u32 %v343
      %v346 = vmul.u32 %v339, %v330
      %v347 = vadd.s32 %v342, %v344
      %vm348 = vc.u32 %v342, %v344
      %v349 = vadd.s32 %v345, 1
      %v350 = vsel %vm348, %v349, %v345
      %v351 = vadd.s32 %v346, %v350
      %v352 = vadd.s32 %v351, 536870912
      %v353 = vshrl.u32 %v352, 30
      %v354 = vshll.u32 %v353, 30
      %v355 = vsub.s32 %v351, %v354
      %vm356 = vcmp.lt.s32.totalorder %v355, 0
      %v357 = vsub.s32 0, %v355
      %v358 = vsel %vm356, %v357, %v355
      %v359 = vclz %v358
      %v360 = vsub.s32 %v359, 2
      %vm361 = vcmp.gt.s32.totalorder 0, %v360
      %v362 = vsel %vm361, 0, %v360
      %v363 = vsub.s32 32, %v362
      %v364 = vshll.u32 %v355, %v362
      %v365 = vshrl.u32 %v347, %v363
      %v366 = vor.u32 %v364, %v365
      %v367 = vsub.s32 4294967266, %v362
      %v368 = vadd.s32 %v367, 127
      %v369 = vshll.u32 %v368, 23
      %v370 = vor.u32 4788187, %v369
      %v371 = vand.u32 2147483647, %v370
      %v373 = vcvt.s32.f32 %v366
      %v374 = vmul.f32 %v373, %v371
      %v375 = vxor.u32 %v374, 2147483648
      %v376 = vsel %vm293, %v375, %v374
      %v377 = vsub.s32 4, %v353
      %v378 = vsel %vm293, %v377, %v353
      %v379 = vsel %vm292, %v289, %v376
      %v380 = vsel %vm292, 0, %v378
      %v381 = vcosq.f32.pop %v379
      %v382 = vsinq.f32.pop %v379
      %vm383 = vweird.f32 %v289
      %v384 = vand.u32 %v380, 3
      %vm385 = vcmp.lt.s32.totalorder %v384, 2
      %vm386 = vcmp.eq.s32.totalorder %v384, 0
      %v387 = vxor.u32 %v382, 2147483648
      %v388 = vsel %vm386, %v381, %v387
      %vm389 = vcmp.eq.s32.totalorder %v384, 2
      %v390 = vxor.u32 %v381, 2147483648
      %v391 = vsel %vm389, %v390, %v382
      %v392 = vsel %vm385, %v388, %v391
      %v393 = vsel %vm383, nan, %v392
      %v394 = vand.u32 2147483647, %v290
      %vm395 = vcmp.le.f32.partialorder %v394, 0.7853982
      %vm396 = vcmp.lt.s32.totalorder %v290, 0
      %v397 = vand.u32 %v290, 2139095040
      %v398 = vshrl.u32 %v397, 23
      %v399 = vsub.s32 %v398, 127
      %v400 = vand.u32 2147483647, %v290
      %v401 = vand.u32 %v400, 8388607
      %v402 = vor.u32 %v401, 8388608
      %v403 = vsub.s32 0, %v402
      %v404 = vadd.s32 %v399, 1
      %vm405 = vcmp.gt.s32.totalorder %v404, 0
      %v406 = vsel %vm405, %v404, 0
      %v407 = vshrl.u32 %v406, 5
      %v408 = vand.u32 %v406, 31
      %v409 = vsub.s32 32, %v408
      %v410 = vshrl.u32 683565275, %v409
      %v411 = vshll.u32 683565275, %v408
      %v412 = vshrl.u32 2475754826, %v409
      %v413 = vor.u32 %v411, %v412
      %v414 = vshll.u32 2475754826, %v408
      %v415 = vshrl.u32 2131351028, %v409
      %v416 = vor.u32 %v414, %v415
      %v417 = vshll.u32 2131351028, %v408
      %v418 = vshrl.u32 2102212464, %v409
      %v419 = vor.u32 %v417, %v418
      %v420 = vshll.u32 2102212464, %v408
      %v421 = vshrl.u32 920167782, %v409
      %v422 = vor.u32 %v420, %v421
      %v423 = vshll.u32 920167782, %v408
      %v424 = vshrl.u32 1326507024, %v409
      %v425 = vor.u32 %v423, %v424
      %vm426 = vcmp.lt.s32.totalorder %v407, 1
      %vm427 = vcmp.lt.s32.totalorder %v407, 2
      %vm428 = vcmp.lt.s32.totalorder %v407, 3
      %vm429 = vcmp.lt.s32.totalorder %v407, 4
      %v430 = vsel %vm426, %v410, %v413
      %v431 = vsel %vm429, %v419, 2102212464
      %v432 = vsel %vm428, %v416, %v431
      %v433 = vsel %vm427, %v430, %v432
      %v434 = vsel %vm426, %v413, %v416
      %v435 = vsel %vm429, %v422, 920167782
      %v436 = vsel %vm428, %v419, %v435
      %v437 = vsel %vm427, %v434, %v436
      %v438 = vsel %vm426, %v416, %v419
      %v439 = vsel %vm429, %v425, 1326507024
      %v440 = vsel %vm428, %v422, %v439
      %v441 = vsel %vm427, %v438, %v440
      %v442 = vshll.u32 %v402, 8
      %v443 = vmul.u32.u64.compose %v442, %v441
      %v444 = vextract.low.u32 %v443
      %v445 = vextract.high.u32 %v443
      %v446 = vmul.u32.u64.compose %v442, %v437
      %v447 = vextract.low.u32 %v446
      %v448 = vextract.high.u32 %v446
      %v449 = vmul.u32 %v442, %v433
      %v450 = vadd.s32 %v445, %v447
      %vm451 = vc.u32 %v445, %v447
      %v452 = vadd.s32 %v448, 1
      %v453 = vsel %vm451, %v452, %v448
      %v454 = vadd.s32 %v449, %v453
      %v455 = vadd.s32 %v454, 536870912
      %v456 = vshrl.u32 %v455, 30
      %v457 = vshll.u32 %v456, 30
      %v458 = vsub.s32 %v454, %v457
      %vm459 = vcmp.lt.s32.totalorder %v458, 0
      %v460 = vsub.s32 0, %v458
      %v461 = vsel %vm459, %v460, %v458
      %v462 = vclz %v461
      %v463 = vsub.s32 %v462, 2
      %vm464 = vcmp.gt.s32.totalorder 0, %v463
      %v465 = vsel %vm464, 0, %v463
      %v466 = vsub.s32 32, %v465
      %v467 = vshll.u32 %v458, %v465
      %v468 = vshrl.u32 %v450, %v466
      %v469 = vor.u32 %v467, %v468
      %v470 = vsub.s32 4294967266, %v465
      %v471 = vadd.s32 %v470, 127
      %v472 = vshll.u32 %v471, 23
      %v473 = vor.u32 4788187, %v472
      %v474 = vand.u32 2147483647, %v473
      %v476 = vcvt.s32.f32 %v469
      %v477 = vmul.f32 %v476, %v474
      %v478 = vxor.u32 %v477, 2147483648
      %v479 = vsel %vm396, %v478, %v477
      %v480 = vsub.s32 4, %v456
      %v481 = vsel %vm396, %v480, %v456
      %v482 = vsel %vm395, %v290, %v479
      %v483 = vsel %vm395, 0, %v481
      %v484 = vcosq.f32.pop %v482
      %v485 = vsinq.f32.pop %v482
      %vm486 = vweird.f32 %v290
      %v487 = vand.u32 %v483, 3
      %vm488 = vcmp.lt.s32.totalorder %v487, 2
      %vm489 = vcmp.eq.s32.totalorder %v487, 0
      %v490 = vxor.u32 %v485, 2147483648
      %v491 = vsel %vm489, %v484, %v490
      %vm492 = vcmp.eq.s32.totalorder %v487, 2
      %v493 = vxor.u32 %v484, 2147483648
      %v494 = vsel %vm492, %v493, %v485
      %v495 = vsel %vm488, %v491, %v494
      %v496 = vsel %vm486, nan, %v495
      %v497 = vsub.f32 1.0, %v393
      %v498 = vsub.f32 1.0, %v496
      %500 = vset.pattern.permute.xlu0 0
      %501 = vperm.xlu0 %500, %v275
      %v502 = vpop.permute.xlu0 %501
      %505 = vset.pattern.permute.xlu0 0
      %506 = vperm.xlu0 %505, %v276
      %v507 = vpop.permute.xlu0 %506
      %v509 = vmul.f32 %v502, %v497
      %v510 = vmul.f32 %v507, %v498
      %v511 = vadd.f32 %v267, %v509
      %v512 = vadd.f32 %v268, %v510
      %v513 = vpack.c.bf16 %v512, %v511
      %515 = vrot.lane.b32.xlu0 %v513, 127
      %v516 = vpop.permute.xlu0 %515
      %518 = vrot.lane.b32.xlu0 %v513, 126
      %v519 = vpop.permute.xlu0 %518
      %v521 = vld [vmem:[%s1] sm:$0xf]
      %v522 = vld [vmem:[%s1 + $0x4] sm:$0xf]
      %v523 = vld [vmem:[%s2] sm:$0xff]
      %v524 = vld [vmem:[%s2 + $0x8] sm:$0xff]
      %526 = vset.pattern.permute.xlu0 0
      %527 = vperm.xlu0 %526, %v523
      %v528 = vpop.permute.xlu0 %527
      %531 = vset.pattern.permute.xlu0 0
      %532 = vperm.xlu0 %531, %v524
      %v533 = vpop.permute.xlu0 %532
      %v537 = vunpack.c.l.b16 %v521
      %v538 = vunpack.c.l.b16 %v522
      %v539 = vpack.c.b16 %v538, %v537
      %vm540 = vcmask 392192
      %v542 = vsel %vm540, %v539, 0
      %544 = vmatprep.subr.bf16.mxu0 0
      %545 = vmatpush1.bf16.msra.mxu0 %v513
      %546 = vmatprep.subr.bf16.mxu0 0
      %547 = vmatpush1.bf16.msra.mxu0 %v516
      %548 = vmatprep.subr.bf16.mxu0 0
      %549 = vmatpush1.bf16.msra.mxu0 %v519
      %550 = vmatprep.subr.bf16.mxu0 0
      %551 = vmatpush1.bf16.msra.mxu0 0
      %552 = vmatprep.subr.bf16.mxu0 0
      %553 = vmatpush1.bf16.msra.mxu0 0
      %554 = vmatprep.subr.bf16.mxu0 0
      %555 = vmatpush1.bf16.msra.mxu0 0
      %556 = vmatprep.subr.bf16.mxu0 0
      %557 = vmatpush1.bf16.msra.mxu0 0
      %558 = vmatprep.subr.bf16.mxu0 0
      %559 = vmatpush1.bf16.msra.mxu0 0
      %560 = vmatprep.subr.bf16.mxu0 0
      %561 = vmatpush1.bf16.msra.mxu0 0
      %562 = vmatprep.subr.bf16.mxu0 0
      %563 = vmatpush1.bf16.msra.mxu0 0
      %564 = vmatprep.subr.bf16.mxu0 0
      %565 = vmatpush1.bf16.msra.mxu0 0
      %566 = vmatprep.subr.bf16.mxu0 0
      %567 = vmatpush1.bf16.msra.mxu0 0
      %568 = vmatprep.subr.bf16.mxu0 0
      %569 = vmatpush1.bf16.msra.mxu0 0
      %570 = vmatprep.subr.bf16.mxu0 0
      %571 = vmatpush1.bf16.msra.mxu0 0
      %572 = vmatprep.subr.bf16.mxu0 0
      %573 = vmatpush1.bf16.msra.mxu0 0
      %574 = vmatprep.subr.bf16.mxu0 0
      %575 = vmatpush1.bf16.msra.mxu0 0
      %576 = vmatprep.mubr.bf16.mxu0 0
      %577 = vmatmul.mubr.bf16.gmra.mrb[0].mxu0 %v542
      %v578 = vpop.f32.mrb[0].mxu0
      %v579 = vadd.f32 %v528, %v578
      %v580 = vpop.f32.mrb[0].mxu0
      %v581 = vpop.f32.mrb[0].mxu0
      %v582 = vadd.f32 %v533, %v581
      %v583 = vpop.f32.mrb[0].mxu0
      %584 = vdwg.mxu0
      %v585 = vpack.c.bf16 %v582, %v579
      %v587 = vunpack.c.l.b16 %v585
      %v588 = vunpack.c.h.b16 %v585
      %v589 = vpack.c.b16 %v587, %v587
      %v590 = vpack.c.b16 %v588, %v588
      %vm593 = vcmask 265216
      %594 = vst.msk [vmem:[%s239] sm:$0xf] %vm593, %v589
      %595 = vst.msk [vmem:[%s239 + $0x4] sm:$0xf] %vm593, %v590
      %s596 = ssub.s32 0, %s20
      %p597 = scmp.lt.s32.totalorder %s19, 1
      %s598 = scalar_select %p597, %s19, 1
      %p599 = scmp.lt.s32.totalorder %s596, 0
      %s600 = scalar_select %p599, %s596, 0
      %s601 = smul.addr %s598, 2
      %s602 = sadd.s32 %s600, %s601
      %s603 = smul.addr %s602, 4
      %s604 = scalar_lea.vmem %s4, %s603
      // Predicated region
      $region41: #{decoder_forward.15} parent=35 // pred_check
        %p605 = pneg %p142
      $region42: #{decoder_forward.15} parent=35 // pred_check_branch
        %607 = sbr.rel (%p605) target = $region44
      $region43: #{decoder_forward.15} parent=35 // pred_region
        %s608 = ssub.s32 0, %s20
      $region44: #{decoder_forward.15} parent=35 // pred_fallthru
        _
    $region36: #{decoder_forward.15} parent=5 // pred_fallthru
      _
    %p609 = scmp.le.s32.totalorder 2, %s10
    // Predicated region
    $region45: #{decoder_forward.15} parent=5 // pred_check
      %p610 = pneg %p609
    $region46: #{decoder_forward.15} parent=5 // pred_check_branch
      %612 = sbr.rel (%p610) target = $region48
    $region47: #{decoder_forward.15} parent=5 // pred_region
      %s613 = ssub.s32 %s10, 2
      // Predicated region
      $region49: #{decoder_forward.15} parent=47 // pred_check
        %p614 = pneg %p148
      $region50: #{decoder_forward.15} parent=47 // pred_check_branch
        %616 = sbr.rel (%p614) target = $region52
      $region51: #{decoder_forward.15} parent=47 // pred_region
        %s617 = ssub.s32 0, %s22
        %p618 = scmp.lt.s32.totalorder %s21, 1
        %s619 = scalar_select %p618, %s21, 1
        %p620 = scmp.lt.s32.totalorder %s617, 0
        %s621 = scalar_select %p620, %s617, 0
        %s622 = smul.addr %s619, 2
        %s623 = sadd.s32 %s621, %s622
        %s624 = smul.addr %s623, 4
        %s625 = scalar_lea.vmem %s4, %s624
      $region52: #{decoder_forward.15} parent=47 // pred_fallthru
        _
    $region48: #{decoder_forward.15} parent=5 // pred_fallthru
      _
  $region6: #{decoder_forward.15} parent=0 // loop_footer
    %s14 = sadd.s32 1, %s10
  $region7: #{decoder_forward.15} parent=0 // loop_footer_branch
    %9 = sbr.rel target = $region3
  $region8: #{decoder_forward.15} parent=0 // loop_exit
    _

// kernel: decoder_forward.17
$region0: #{decoder_forward.17}
  #allocation0 [shape = 'u32[]', space=smem, size = 0x4, offset = 0x4, fixed_abs, tag = 'smem constant byte address 0x4 - core index']
  #allocation1 [shape = 'u32[144,128]{1,0:T(1,128)}', space=vmem, size = 0x12000, scoped, tag = 'internal scratch']
  #allocation2 [shape = 'bf16[8,18]{1,0:T(8,128)(2,1)}', space=vmem, size = 0x800, scoped, tag = 'scratch operand']
  %s0 = inlined_call_operand.vmem [shape: bf16[2,8,73], index: 0, kind: input, shape index: {}]
  %s1 = inlined_call_operand.vmem [shape: bf16[8,56], index: 1, kind: input, shape index: {}]
  %s2 = inlined_call_operand.vmem [shape: f32[8,1], index: 2, kind: input, shape index: {}]
  %s3 = inlined_call_operand.vmem [shape: f32[8,1], index: 3, kind: input, shape index: {}]
  %s4 = inlined_call_operand.vmem [shape: bf16[8,8], index: 4, kind: input, shape index: {}]
  %s5 = inlined_call_operand.vmem [shape: f32[8,1], index: 5, kind: input, shape index: {}]
  %s6 = inlined_call_operand.vmem [shape: f32[8,1], index: 6, kind: input, shape index: {}]
  %s7 = inlined_call_operand.vmem [shape: bf16[2,8,73], index: 7, kind: output, shape index: {}]
  %s8 = sld [smem:[#allocation0]]
  $region65: #{decoder_forward.17} parent=0
    _
  %s10 = ssub.s32 1, %s8
  %s11 = scalar_select 0, %s10, %s8
  loop: start=0, step=1, limit=4
  $region2: #{decoder_forward.17} parent=0 // loop_pre_header
    _
  $region3: #{decoder_forward.17} parent=0 // loop_header
    %s13 = sphi 0, %s17
    %p14 = scmp.ge.s32.totalorder %s13, 4
    %s20 = sphi 0, %s32
    %s21 = sphi 0, %s28
    %s22 = sphi 0, %s20
    %s23 = sphi 0, %s21
    %s24 = sphi 0, %s22
    %s25 = sphi 0, %s23
    %s39 = sphi 0, %s41
    %s42 = sphi 0, %s39
    %s43 = sphi 0, %s42
    %s59 = sphi 0, %s43
    %s63 = sphi 0, %s63
    %s65 = sphi 0, %s63
    %s66 = sphi 0, %s65
    %s80 = sphi 0, %s66
    %s84 = sphi 0, %s84
    %s86 = sphi 0, %s84
    %s87 = sphi 0, %s86
    %s101 = sphi 0, %s87
    %s105 = sphi 0, %s105
    %s107 = sphi 0, %s105
    %s108 = sphi 0, %s107
    %s122 = sphi 0, %s108
    %s126 = sphi 0, %s126
    %s128 = sphi 0, %s126
    %s129 = sphi 0, %s128
    %s143 = sphi 0, %s129
    %s147 = sphi 0, %s147
    %s149 = sphi 0, %s147
    %s150 = sphi 0, %s149
    %s164 = sphi 0, %s150
    %s168 = sphi 0, %s168
    %s170 = sphi 0, %s168
    %s171 = sphi 0, %s170
    %s185 = sphi 0, %s171
    %s195 = sphi 0, %s197
    %s198 = sphi 0, %s195
    %s199 = sphi 0, %s198
    %s215 = sphi 0, %s199
  $region4: #{decoder_forward.17} parent=0 // loop_header_branch
    %16 = sbr.rel (%p14) target = $region8
  $region5: #{decoder_forward.17} parent=0 // loop_body
    %s18 = ssub.s32 %s13, 1
    %s19 = ssub.s32 %s13, 2
    %s26 = sadd.s32 1, %s21
    %p27 = scmp.ge.s32.totalorder %s26, 1
    %s28 = scalar_select %p27, 0, %s26
    %s29 = sadd.s32 1, %s20
    %s30 = scalar_select %p27, %s29, %s20
    %p31 = scmp.ge.s32.totalorder %s30, 2
    %s32 = scalar_select %p31, 0, %s30
    %s33 = ssub.s32 0, %s21
    %s34 = ssub.s32 0, %s28
    %s35 = ssub.s32 %s20, %s32
    %s36 = ssub.s32 %s33, %s34
    %s37 = sor.u32 %s35, %s36
    %p38 = scmp.eq.s32.totalorder %s37, 0
    %s40 = sadd.s32 %s39, 1
    %s41 = scalar_select %p38, %s39, %s40
    %p44 = pneg %p38
    %p45 = scmp.eq.s32.totalorder %s13, 1
    %p46 = por %p44, %p45
    %p47 = scmp.ne.s32.totalorder %s39, %s42
    %p48 = scmp.eq.s32.totalorder %s13, 0
    %p49 = por %p47, %p48
    %p50 = scmp.ne.s32.totalorder %s39, %s42
    %p51 = scmp.eq.s32.totalorder %s18, 1
    %p52 = por %p50, %p51
    %p53 = scmp.ne.s32.totalorder %s42, %s43
    %p54 = scmp.eq.s32.totalorder %s18, 0
    %p55 = por %p53, %p54
    %p56 = scmp.ne.s32.totalorder %s42, %s43
    %p57 = scmp.eq.s32.totalorder %s19, 1
    %p58 = por %p56, %p57
    %p60 = scmp.ne.s32.totalorder %s43, %s59
    %p61 = scmp.eq.s32.totalorder %s19, 0
    %p62 = por %p60, %p61
    %s64 = sadd.s32 %s63, 1
    %p67 = scmp.eq.s32.totalorder %s13, 1
    %p68 = scmp.ne.s32.totalorder %s63, %s65
    %p69 = scmp.eq.s32.totalorder %s13, 0
    %p70 = por %p68, %p69
    %p71 = scmp.ne.s32.totalorder %s63, %s65
    %p72 = scmp.eq.s32.totalorder %s18, 1
    %p73 = por %p71, %p72
    %p74 = scmp.ne.s32.totalorder %s65, %s66
    %p75 = scmp.eq.s32.totalorder %s18, 0
    %p76 = por %p74, %p75
    %p77 = scmp.ne.s32.totalorder %s65, %s66
    %p78 = scmp.eq.s32.totalorder %s19, 1
    %p79 = por %p77, %p78
    %p81 = scmp.ne.s32.totalorder %s66, %s80
    %p82 = scmp.eq.s32.totalorder %s19, 0
    %p83 = por %p81, %p82
    %s85 = sadd.s32 %s84, 1
    %p88 = scmp.eq.s32.totalorder %s13, 1
    %p89 = scmp.ne.s32.totalorder %s84, %s86
    %p90 = scmp.eq.s32.totalorder %s13, 0
    %p91 = por %p89, %p90
    %p92 = scmp.ne.s32.totalorder %s84, %s86
    %p93 = scmp.eq.s32.totalorder %s18, 1
    %p94 = por %p92, %p93
    %p95 = scmp.ne.s32.totalorder %s86, %s87
    %p96 = scmp.eq.s32.totalorder %s18, 0
    %p97 = por %p95, %p96
    %p98 = scmp.ne.s32.totalorder %s86, %s87
    %p99 = scmp.eq.s32.totalorder %s19, 1
    %p100 = por %p98, %p99
    %p102 = scmp.ne.s32.totalorder %s87, %s101
    %p103 = scmp.eq.s32.totalorder %s19, 0
    %p104 = por %p102, %p103
    %s106 = sadd.s32 %s105, 1
    %p109 = scmp.eq.s32.totalorder %s13, 1
    %p110 = scmp.ne.s32.totalorder %s105, %s107
    %p111 = scmp.eq.s32.totalorder %s13, 0
    %p112 = por %p110, %p111
    %p113 = scmp.ne.s32.totalorder %s105, %s107
    %p114 = scmp.eq.s32.totalorder %s18, 1
    %p115 = por %p113, %p114
    %p116 = scmp.ne.s32.totalorder %s107, %s108
    %p117 = scmp.eq.s32.totalorder %s18, 0
    %p118 = por %p116, %p117
    %p119 = scmp.ne.s32.totalorder %s107, %s108
    %p120 = scmp.eq.s32.totalorder %s19, 1
    %p121 = por %p119, %p120
    %p123 = scmp.ne.s32.totalorder %s108, %s122
    %p124 = scmp.eq.s32.totalorder %s19, 0
    %p125 = por %p123, %p124
    %s127 = sadd.s32 %s126, 1
    %p130 = scmp.eq.s32.totalorder %s13, 1
    %p131 = scmp.ne.s32.totalorder %s126, %s128
    %p132 = scmp.eq.s32.totalorder %s13, 0
    %p133 = por %p131, %p132
    %p134 = scmp.ne.s32.totalorder %s126, %s128
    %p135 = scmp.eq.s32.totalorder %s18, 1
    %p136 = por %p134, %p135
    %p137 = scmp.ne.s32.totalorder %s128, %s129
    %p138 = scmp.eq.s32.totalorder %s18, 0
    %p139 = por %p137, %p138
    %p140 = scmp.ne.s32.totalorder %s128, %s129
    %p141 = scmp.eq.s32.totalorder %s19, 1
    %p142 = por %p140, %p141
    %p144 = scmp.ne.s32.totalorder %s129, %s143
    %p145 = scmp.eq.s32.totalorder %s19, 0
    %p146 = por %p144, %p145
    %s148 = sadd.s32 %s147, 1
    %p151 = scmp.eq.s32.totalorder %s13, 1
    %p152 = scmp.ne.s32.totalorder %s147, %s149
    %p153 = scmp.eq.s32.totalorder %s13, 0
    %p154 = por %p152, %p153
    %p155 = scmp.ne.s32.totalorder %s147, %s149
    %p156 = scmp.eq.s32.totalorder %s18, 1
    %p157 = por %p155, %p156
    %p158 = scmp.ne.s32.totalorder %s149, %s150
    %p159 = scmp.eq.s32.totalorder %s18, 0
    %p160 = por %p158, %p159
    %p161 = scmp.ne.s32.totalorder %s149, %s150
    %p162 = scmp.eq.s32.totalorder %s19, 1
    %p163 = por %p161, %p162
    %p165 = scmp.ne.s32.totalorder %s150, %s164
    %p166 = scmp.eq.s32.totalorder %s19, 0
    %p167 = por %p165, %p166
    %s169 = sadd.s32 %s168, 1
    %p172 = scmp.eq.s32.totalorder %s13, 1
    %p173 = scmp.ne.s32.totalorder %s168, %s170
    %p174 = scmp.eq.s32.totalorder %s13, 0
    %p175 = por %p173, %p174
    %p176 = scmp.ne.s32.totalorder %s168, %s170
    %p177 = scmp.eq.s32.totalorder %s18, 1
    %p178 = por %p176, %p177
    %p179 = scmp.ne.s32.totalorder %s170, %s171
    %p180 = scmp.eq.s32.totalorder %s18, 0
    %p181 = por %p179, %p180
    %p182 = scmp.ne.s32.totalorder %s170, %s171
    %p183 = scmp.eq.s32.totalorder %s19, 1
    %p184 = por %p182, %p183
    %p186 = scmp.ne.s32.totalorder %s171, %s185
    %p187 = scmp.eq.s32.totalorder %s19, 0
    %p188 = por %p186, %p187
    %s189 = ssub.s32 0, %s21
    %s190 = ssub.s32 0, %s28
    %s191 = ssub.s32 %s20, %s32
    %s192 = ssub.s32 %s189, %s190
    %s193 = sor.u32 %s191, %s192
    %p194 = scmp.eq.s32.totalorder %s193, 0
    %s196 = sadd.s32 %s195, 1
    %s197 = scalar_select %p194, %s195, %s196
    %p200 = pneg %p194
    %p201 = scmp.eq.s32.totalorder %s13, 1
    %p202 = por %p200, %p201
    %p203 = scmp.ne.s32.totalorder %s195, %s198
    %p204 = scmp.eq.s32.totalorder %s13, 0
    %p205 = por %p203, %p204
    %p206 = scmp.ne.s32.totalorder %s195, %s198
    %p207 = scmp.eq.s32.totalorder %s18, 1
    %p208 = por %p206, %p207
    %p209 = scmp.ne.s32.totalorder %s198, %s199
    %p210 = scmp.eq.s32.totalorder %s18, 0
    %p211 = por %p209, %p210
    %p212 = scmp.ne.s32.totalorder %s198, %s199
    %p213 = scmp.eq.s32.totalorder %s19, 1
    %p214 = por %p212, %p213
    %p216 = scmp.ne.s32.totalorder %s199, %s215
    %p217 = scmp.eq.s32.totalorder %s19, 0
    %p218 = por %p216, %p217
    %p219 = scmp.le.s32.totalorder 1, %s13
    %p220 = scmp.lt.s32.totalorder %s13, 3
    %p221 = pnand %p219, %p220
    %p222 = pneg %p221
    // Predicated region
    $region9: #{decoder_forward.17} parent=5 // pred_check
      _
    $region10: #{decoder_forward.17} parent=5 // pred_check_branch
      %224 = sbr.rel (%p221) target = $region12
    $region11: #{decoder_forward.17} parent=5 // pred_region
      %s225 = ssub.s32 %s13, 1
      // Predicated region
      $region13: #{decoder_forward.17} parent=11 // pred_check
        %p226 = pneg %p76
      $region14: #{decoder_forward.17} parent=11 // pred_check_branch
        %228 = sbr.rel (%p226) target = $region16
      $region15: #{decoder_forward.17} parent=11 // pred_region
        _
      $region16: #{decoder_forward.17} parent=11 // pred_fallthru
        _
      // Predicated region
      $region17: #{decoder_forward.17} parent=11 // pred_check
        %p229 = pneg %p97
      $region18: #{decoder_forward.17} parent=11 // pred_check_branch
        %231 = sbr.rel (%p229) target = $region20
      $region19: #{decoder_forward.17} parent=11 // pred_region
        _
      $region20: #{decoder_forward.17} parent=11 // pred_fallthru
        _
      // Predicated region
      $region21: #{decoder_forward.17} parent=11 // pred_check
        %p232 = pneg %p118
      $region22: #{decoder_forward.17} parent=11 // pred_check_branch
        %234 = sbr.rel (%p232) target = $region24
      $region23: #{decoder_forward.17} parent=11 // pred_region
        _
      $region24: #{decoder_forward.17} parent=11 // pred_fallthru
        _
      // Predicated region
      $region25: #{decoder_forward.17} parent=11 // pred_check
        %p235 = pneg %p139
      $region26: #{decoder_forward.17} parent=11 // pred_check_branch
        %237 = sbr.rel (%p235) target = $region28
      $region27: #{decoder_forward.17} parent=11 // pred_region
        _
      $region28: #{decoder_forward.17} parent=11 // pred_fallthru
        _
      // Predicated region
      $region29: #{decoder_forward.17} parent=11 // pred_check
        %p238 = pneg %p160
      $region30: #{decoder_forward.17} parent=11 // pred_check_branch
        %240 = sbr.rel (%p238) target = $region32
      $region31: #{decoder_forward.17} parent=11 // pred_region
        _
      $region32: #{decoder_forward.17} parent=11 // pred_fallthru
        _
      // Predicated region
      $region33: #{decoder_forward.17} parent=11 // pred_check
        %p241 = pneg %p181
      $region34: #{decoder_forward.17} parent=11 // pred_check_branch
        %243 = sbr.rel (%p241) target = $region36
      $region35: #{decoder_forward.17} parent=11 // pred_region
        _
      $region36: #{decoder_forward.17} parent=11 // pred_fallthru
        _
    $region12: #{decoder_forward.17} parent=5 // pred_fallthru
      _
    %p244 = scmp.lt.s32.totalorder %s13, 2
    // Predicated region
    $region37: #{decoder_forward.17} parent=5 // pred_check
      %p245 = pneg %p244
    $region38: #{decoder_forward.17} parent=5 // pred_check_branch
      %247 = sbr.rel (%p245) target = $region40
    $region39: #{decoder_forward.17} parent=5 // pred_region
      // Predicated region
      $region41: #{decoder_forward.17} parent=39 // pred_check
        %p248 = pneg %p49
      $region42: #{decoder_forward.17} parent=39 // pred_check_branch
        %250 = sbr.rel (%p248) target = $region44
      $region43: #{decoder_forward.17} parent=39 // pred_region
        %s251 = ssub.s32 0, %s21
        %p252 = scmp.lt.s32.totalorder %s20, 1
        %s253 = scalar_select %p252, %s20, 1
        %p254 = scmp.lt.s32.totalorder %s251, 0
        %s255 = scalar_select %p254, %s251, 0
        %s256 = sadd.s32 %s255, %s253
        %s257 = smul.addr %s256, 4
        %s258 = scalar_lea.vmem %s0, %s257
        %s259 = ssub.s32 0, %s21
      $region44: #{decoder_forward.17} parent=39 // pred_fallthru
        _
    $region40: #{decoder_forward.17} parent=5 // pred_fallthru
      _
    %p260 = scmp.le.s32.totalorder 1, %s13
    %p261 = scmp.lt.s32.totalorder %s13, 3
    %p262 = pnand %p260, %p261
    %p263 = pneg %p262
    // Predicated region
    $region45: #{decoder_forward.17} parent=5 // pred_check
      _
    $region46: #{decoder_forward.17} parent=5 // pred_check_branch
      %265 = sbr.rel (%p262) target = $region48
    $region47: #{decoder_forward.17} parent=5 // pred_region
      %s266 = ssub.s32 %s13, 1
      %s267 = ssub.s32 0, %s23
      %p268 = scmp.lt.s32.totalorder %s22, 1
      %s269 = scalar_select %p268, %s22, 1
      %p270 = scmp.lt.s32.totalorder %s267, 0
      %s271 = scalar_select %p270, %s267, 0
      %s272 = sadd.s32 %s271, %s269
      %s273 = smul.addr %s272, 4
      %s274 = scalar_lea.vmem %s0, %s273
      %p275 = pneg %p55
      %p276 = pneg %p52
      %p277 = pneg %p76
      %p278 = pneg %p73
      %p279 = pneg %p97
      %p280 = pneg %p94
      %p281 = pneg %p118
      %p282 = pneg %p115
      %p283 = pneg %p139
      %p284 = pneg %p136
      %p285 = pneg %p160
      %p286 = pneg %p157
      %p287 = pneg %p181
      %p288 = pneg %p178
      %p289 = pneg %p211
      %p290 = pneg %p208
      %s291 = ssub.s32 0, %s23
      %p292 = scmp.lt.s32.totalorder %s22, 1
      %s293 = scalar_select %p292, %s22, 1
      %p294 = scmp.lt.s32.totalorder %s291, 0
      %s295 = scalar_select %p294, %s291, 0
      %s296 = sadd.s32 %s295, %s293
      %s297 = smul.addr %s296, 4
      %s298 = scalar_lea.vmem %s7, %s297
      %s299 = ssub.s32 0, %s23
      %p300 = scmp.lt.s32.totalorder %s22, 1
      %s301 = scalar_select %p300, %s22, 1
      %p302 = scmp.lt.s32.totalorder %s299, 0
      %s303 = scalar_select %p302, %s299, 0
      %s304 = sadd.s32 %s303, %s301
      %s305 = smul.addr %s304, 4
      %s306 = scalar_lea.vmem %s0, %s305
      %s307 = ssub.s32 0, %s23
      %s308 = ssub.s32 0, %s23
      %p309 = scmp.lt.s32.totalorder %s22, 1
      %s310 = scalar_select %p309, %s22, 1
      %p311 = scmp.lt.s32.totalorder %s308, 0
      %s312 = scalar_select %p311, %s308, 0
      %s313 = sadd.s32 %s312, %s310
      %s314 = smul.addr %s313, 4
      %s315 = scalar_lea.vmem %s7, %s314
      %s316 = ssub.s32 0, %s23
      %p318 = scmp.eq.s32.totalorder %s23, 0
      // Predicated region
      $region49: #{decoder_forward.17} parent=47 // pred_check
        %p319 = pneg %p318
      $region50: #{decoder_forward.17} parent=47 // pred_check_branch
        %321 = sbr.rel (%p319) target = $region52
      $region51: #{decoder_forward.17} parent=47 // pred_region
        %vm322 = vcmask 142336
        %323 = vst.msk [vmem:[#allocation2] sm:$0xf] %vm322, 0
      $region52: #{decoder_forward.17} parent=47 // pred_fallthru
        _
      %v324 = vld [vmem:[%s306] sm:$0xf]
      %v325 = vld [vmem:[#allocation2] sm:$0xf]
      %v327 = vunpack.c.l.b16 %v325
      %v328 = vpack.c.b16 %v327, %v327
      %329 = vrot.lane.b32.xlu0 %v328, 73
      %v330 = vpop.permute.xlu0 %329
      %vm331 = vcmask 596992
      %v334 = vsel %vm331, %v324, %v330
      %vm336 = vcmask 142336
      %337 = vst.msk [vmem:[#allocation2] sm:$0xf] %vm336, %v324
      %v338 = vunpack.c.l.bf16 %v334
      %v339 = vld [vmem:[%s3] sm:$0xff]
      %v340 = vadd.f32 %v339, 1e-09
      %v341 = vrcp.pop %v340
      %v342 = vmul.f32 %v341, 0.5
      %v343 = vmul.f32 %v339, 2.0
      %345 = vset.pattern.permute.xlu0 0
      %346 = vperm.xlu0 %345, %v343
      %v347 = vpop.permute.xlu0 %346
      %v349 = vmul.f32 %v347, %v338
      %v350 = vand.u32 2147483647, %v349
      %vm351 = vcmp.le.f32.partialorder %v350, 0.7853982
      %vm352 = vcmp.lt.s32.totalorder %v349, 0
      %v353 = vand.u32 %v349, 2139095040
      %v354 = vshrl.u32 %v353, 23
      %v355 = vsub.s32 %v354, 127
      %v356 = vand.u32 2147483647, %v349
      %v357 = vand.u32 %v356, 8388607
      %v358 = vor.u32 %v357, 8388608
      %v359 = vsub.s32 0, %v358
      %v360 = vadd.s32 %v355, 1
      %vm361 = vcmp.gt.s32.totalorder %v360, 0
      %v362 = vsel %vm361, %v360, 0
      %v363 = vshrl.u32 %v362, 5
      %v364 = vand.u32 %v362, 31
      %v365 = vsub.s32 32, %v364
      %v366 = vshrl.u32 683565275, %v365
      %v367 = vshll.u32 683565275, %v364
      %v368 = vshrl.u32 2475754826, %v365
      %v369 = vor.u32 %v367, %v368
      %v370 = vshll.u32 2475754826, %v364
      %v371 = vshrl.u32 2131351028, %v365
      %v372 = vor.u32 %v370, %v371
      %v373 = vshll.u32 2131351028, %v364
      %v374 = vshrl.u32 2102212464, %v365
      %v375 = vor.u32 %v373, %v374
      %v376 = vshll.u32 2102212464, %v364
      %v377 = vshrl.u32 920167782, %v365
      %v378 = vor.u32 %v376, %v377
      %v379 = vshll.u32 920167782, %v364
      %v380 = vshrl.u32 1326507024, %v365
      %v381 = vor.u32 %v379, %v380
      %vm382 = vcmp.lt.s32.totalorder %v363, 1
      %vm383 = vcmp.lt.s32.totalorder %v363, 2
      %vm384 = vcmp.lt.s32.totalorder %v363, 3
      %vm385 = vcmp.lt.s32.totalorder %v363, 4
      %v386 = vsel %vm382, %v366, %v369
      %v387 = vsel %vm385, %v375, 2102212464
      %v388 = vsel %vm384, %v372, %v387
      %v389 = vsel %vm383, %v386, %v388
      %v390 = vsel %vm382, %v369, %v372
      %v391 = vsel %vm385, %v378, 920167782
      %v392 = vsel %vm384, %v375, %v391
      %v393 = vsel %vm383, %v390, %v392
      %v394 = vsel %vm382, %v372, %v375
      %v395 = vsel %vm385, %v381, 1326507024
      %v396 = vsel %vm384, %v378, %v395
      %v397 = vsel %vm383, %v394, %v396
      %v398 = vshll.u32 %v358, 8
      %v399 = vmul.u32.u64.compose %v398, %v397
      %v400 = vextract.low.u32 %v399
      %v401 = vextract.high.u32 %v399
      %v402 = vmul.u32.u64.compose %v398, %v393
      %v403 = vextract.low.u32 %v402
      %v404 = vextract.high.u32 %v402
      %v405 = vmul.u32 %v398, %v389
      %v406 = vadd.s32 %v401, %v403
      %vm407 = vc.u32 %v401, %v403
      %v408 = vadd.s32 %v404, 1
      %v409 = vsel %vm407, %v408, %v404
      %v410 = vadd.s32 %v405, %v409
      %v411 = vadd.s32 %v410, 536870912
      %v412 = vshrl.u32 %v411, 30
      %v413 = vshll.u32 %v412, 30
      %v414 = vsub.s32 %v410, %v413
      %vm415 = vcmp.lt.s32.totalorder %v414, 0
      %v416 = vsub.s32 0, %v414
      %v417 = vsel %vm415, %v416, %v414
      %v418 = vclz %v417
      %v419 = vsub.s32 %v418, 2
      %vm420 = vcmp.gt.s32.totalorder 0, %v419
      %v421 = vsel %vm420, 0, %v419
      %v422 = vsub.s32 32, %v421
      %v423 = vshll.u32 %v414, %v421
      %v424 = vshrl.u32 %v406, %v422
      %v425 = vor.u32 %v423, %v424
      %v426 = vsub.s32 4294967266, %v421
      %v427 = vadd.s32 %v426, 127
      %v428 = vshll.u32 %v427, 23
      %v429 = vor.u32 4788187, %v428
      %v430 = vand.u32 2147483647, %v429
      %v432 = vcvt.s32.f32 %v425
      %v433 = vmul.f32 %v432, %v430
      %v434 = vxor.u32 %v433, 2147483648
      %v435 = vsel %vm352, %v434, %v433
      %v436 = vsub.s32 4, %v412
      %v437 = vsel %vm352, %v436, %v412
      %v438 = vsel %vm351, %v349, %v435
      %v439 = vsel %vm351, 0, %v437
      %v440 = vcosq.f32.pop %v438
      %v441 = vsinq.f32.pop %v438
      %vm442 = vweird.f32 %v349
      %v443 = vand.u32 %v439, 3
      %vm444 = vcmp.lt.s32.totalorder %v443, 2
      %vm445 = vcmp.eq.s32.totalorder %v443, 0
      %v446 = vxor.u32 %v441, 2147483648
      %v447 = vsel %vm445, %v440, %v446
      %vm448 = vcmp.eq.s32.totalorder %v443, 2
      %v449 = vxor.u32 %v440, 2147483648
      %v450 = vsel %vm448, %v449, %v441
      %v451 = vsel %vm444, %v447, %v450
      %v452 = vsel %vm442, nan, %v451
      %v453 = vsub.f32 1.0, %v452
      %455 = vset.pattern.permute.xlu0 0
      %456 = vperm.xlu0 %455, %v342
      %v457 = vpop.permute.xlu0 %456
      %v459 = vmul.f32 %v457, %v453
      %v460 = vadd.f32 %v338, %v459
      %v461 = vpack.c.bf16 %v460, %v460
      %v463 = vrot.slane %v461, 4
      %464 = vrot.lane.b32.xlu0 %v463, 125
      %v465 = vpop.permute.xlu0 %464
      %466 = vrot.lane.b32.xlu0 %v461, 122
      %v467 = vpop.permute.xlu0 %466
      %468 = vrot.lane.b32.xlu0 %v463, 119
      %v469 = vpop.permute.xlu0 %468
      %470 = vrot.lane.b32.xlu0 %v461, 116
      %v471 = vpop.permute.xlu0 %470
      %472 = vrot.lane.b32.xlu0 %v463, 113
      %v473 = vpop.permute.xlu0 %472
      %474 = vrot.lane.b32.xlu0 %v461, 110
      %v475 = vpop.permute.xlu0 %474
      %vm476 = vcmask 1043456
      %v479 = vsel %vm476, %v461, %v465
      %v483 = vsel %vm476, %v467, %v469
      %v487 = vsel %vm476, %v471, %v473
      %v489 = vld [vmem:[%s1] sm:$0xf]
      %v490 = vld [vmem:[%s2] sm:$0xff]
      %492 = vset.pattern.permute.xlu0 0
      %493 = vperm.xlu0 %492, %v490
      %v494 = vpop.permute.xlu0 %493
      %vm496 = vcmask 457728
      %v498 = vsel %vm496, %v489, 0
      %v501 = vsel %vm476, %v475, 0
      %503 = vmatprep.subr.bf16.mxu0 0
      %504 = vmatpush1.bf16.msra.mxu0 %v479
      %505 = vmatprep.subr.bf16.mxu0 0
      %506 = vmatpush1.bf16.msra.mxu0 %v483
      %507 = vmatprep.subr.bf16.mxu0 0
      %508 = vmatpush1.bf16.msra.mxu0 %v487
      %509 = vmatprep.subr.bf16.mxu0 0
      %510 = vmatpush1.bf16.msra.mxu0 %v501
      %511 = vmatprep.subr.bf16.mxu0 0
      %512 = vmatpush1.bf16.msra.mxu0 0
      %513 = vmatprep.subr.bf16.mxu0 0
      %514 = vmatpush1.bf16.msra.mxu0 0
      %515 = vmatprep.subr.bf16.mxu0 0
      %516 = vmatpush1.bf16.msra.mxu0 0
      %517 = vmatprep.subr.bf16.mxu0 0
      %518 = vmatpush1.bf16.msra.mxu0 0
      %519 = vmatprep.subr.bf16.mxu0 0
      %520 = vmatpush1.bf16.msra.mxu0 0
      %521 = vmatprep.subr.bf16.mxu0 0
      %522 = vmatpush1.bf16.msra.mxu0 0
      %523 = vmatprep.subr.bf16.mxu0 0
      %524 = vmatpush1.bf16.msra.mxu0 0
      %525 = vmatprep.subr.bf16.mxu0 0
      %526 = vmatpush1.bf16.msra.mxu0 0
      %527 = vmatprep.subr.bf16.mxu0 0
      %528 = vmatpush1.bf16.msra.mxu0 0
      %529 = vmatprep.subr.bf16.mxu0 0
      %530 = vmatpush1.bf16.msra.mxu0 0
      %531 = vmatprep.subr.bf16.mxu0 0
      %532 = vmatpush1.bf16.msra.mxu0 0
      %533 = vmatprep.subr.bf16.mxu0 0
      %534 = vmatpush1.bf16.msra.mxu0 0
      %535 = vmatprep.mubr.bf16.mxu0 0
      %536 = vmatmul.mubr.bf16.gmra.mrb[0].mxu0 %v498
      %v537 = vpop.f32.mrb[0].mxu0
      %v538 = vadd.f32 %v494, %v537
      %v539 = vpop.f32.mrb[0].mxu0
      %v540 = vpop.f32.mrb[0].mxu0
      %v541 = vpop.f32.mrb[0].mxu0
      %542 = vdwg.mxu0
      %v543 = vld [vmem:[%s6] sm:$0xff]
      %v544 = vadd.f32 %v543, 1e-09
      %v545 = vrcp.pop %v544
      %v546 = vmul.f32 %v545, 0.5
      %v547 = vmul.f32 %v543, 2.0
      %549 = vset.pattern.permute.xlu0 0
      %550 = vperm.xlu0 %549, %v547
      %v551 = vpop.permute.xlu0 %550
      %v553 = vmul.f32 %v551, %v538
      %v554 = vand.u32 2147483647, %v553
      %vm555 = vcmp.le.f32.partialorder %v554, 0.7853982
      %vm556 = vcmp.lt.s32.totalorder %v553, 0
      %v557 = vand.u32 %v553, 2139095040
      %v558 = vshrl.u32 %v557, 23
      %v559 = vsub.s32 %v558, 127
      %v560 = vand.u32 2147483647, %v553
      %v561 = vand.u32 %v560, 8388607
      %v562 = vor.u32 %v561, 8388608
      %v563 = vsub.s32 0, %v562
      %v564 = vadd.s32 %v559, 1
      %vm565 = vcmp.gt.s32.totalorder %v564, 0
      %v566 = vsel %vm565, %v564, 0
      %v567 = vshrl.u32 %v566, 5
      %v568 = vand.u32 %v566, 31
      %v569 = vsub.s32 32, %v568
      %v570 = vshrl.u32 683565275, %v569
      %v571 = vshll.u32 683565275, %v568
      %v572 = vshrl.u32 2475754826, %v569
      %v573 = vor.u32 %v571, %v572
      %v574 = vshll.u32 2475754826, %v568
      %v575 = vshrl.u32 2131351028, %v569
      %v576 = vor.u32 %v574, %v575
      %v577 = vshll.u32 2131351028, %v568
      %v578 = vshrl.u32 2102212464, %v569
      %v579 = vor.u32 %v577, %v578
      %v580 = vshll.u32 2102212464, %v568
      %v581 = vshrl.u32 920167782, %v569
      %v582 = vor.u32 %v580, %v581
      %v583 = vshll.u32 920167782, %v568
      %v584 = vshrl.u32 1326507024, %v569
      %v585 = vor.u32 %v583, %v584
      %vm586 = vcmp.lt.s32.totalorder %v567, 1
      %vm587 = vcmp.lt.s32.totalorder %v567, 2
      %vm588 = vcmp.lt.s32.totalorder %v567, 3
      %vm589 = vcmp.lt.s32.totalorder %v567, 4
      %v590 = vsel %vm586, %v570, %v573
      %v591 = vsel %vm589, %v579, 2102212464
      %v592 = vsel %vm588, %v576, %v591
      %v593 = vsel %vm587, %v590, %v592
      %v594 = vsel %vm586, %v573, %v576
      %v595 = vsel %vm589, %v582, 920167782
      %v596 = vsel %vm588, %v579, %v595
      %v597 = vsel %vm587, %v594, %v596
      %v598 = vsel %vm586, %v576, %v579
      %v599 = vsel %vm589, %v585, 1326507024
      %v600 = vsel %vm588, %v582, %v599
      %v601 = vsel %vm587, %v598, %v600
      %v602 = vshll.u32 %v562, 8
      %v603 = vmul.u32.u64.compose %v602, %v601
      %v604 = vextract.low.u32 %v603
      %v605 = vextract.high.u32 %v603
      %v606 = vmul.u32.u64.compose %v602, %v597
      %v607 = vextract.low.u32 %v606
      %v608 = vextract.high.u32 %v606
      %v609 = vmul.u32 %v602, %v593
      %v610 = vadd.s32 %v605, %v607
      %vm611 = vc.u32 %v605, %v607
      %v612 = vadd.s32 %v608, 1
      %v613 = vsel %vm611, %v612, %v608
      %v614 = vadd.s32 %v609, %v613
      %v615 = vadd.s32 %v614, 536870912
      %v616 = vshrl.u32 %v615, 30
      %v617 = vshll.u32 %v616, 30
      %v618 = vsub.s32 %v614, %v617
      %vm619 = vcmp.lt.s32.totalorder %v618, 0
      %v620 = vsub.s32 0, %v618
      %v621 = vsel %vm619, %v620, %v618
      %v622 = vclz %v621
      %v623 = vsub.s32 %v622, 2
      %vm624 = vcmp.gt.s32.totalorder 0, %v623
      %v625 = vsel %vm624, 0, %v623
      %v626 = vsub.s32 32, %v625
      %v627 = vshll.u32 %v618, %v625
      %v628 = vshrl.u32 %v610, %v626
      %v629 = vor.u32 %v627, %v628
      %v630 = vsub.s32 4294967266, %v625
      %v631 = vadd.s32 %v630, 127
      %v632 = vshll.u32 %v631, 23
      %v633 = vor.u32 4788187, %v632
      %v634 = vand.u32 2147483647, %v633
      %v636 = vcvt.s32.f32 %v629
      %v637 = vmul.f32 %v636, %v634
      %v638 = vxor.u32 %v637, 2147483648
      %v639 = vsel %vm556, %v638, %v637
      %v640 = vsub.s32 4, %v616
      %v641 = vsel %vm556, %v640, %v616
      %v642 = vsel %vm555, %v553, %v639
      %v643 = vsel %vm555, 0, %v641
      %v644 = vcosq.f32.pop %v642
      %v645 = vsinq.f32.pop %v642
      %vm646 = vweird.f32 %v553
      %v647 = vand.u32 %v643, 3
      %vm648 = vcmp.lt.s32.totalorder %v647, 2
      %vm649 = vcmp.eq.s32.totalorder %v647, 0
      %v650 = vxor.u32 %v645, 2147483648
      %v651 = vsel %vm649, %v644, %v650
      %vm652 = vcmp.eq.s32.totalorder %v647, 2
      %v653 = vxor.u32 %v644, 2147483648
      %v654 = vsel %vm652, %v653, %v645
      %v655 = vsel %vm648, %v651, %v654
      %v656 = vsel %vm646, nan, %v655
      %v657 = vsub.f32 1.0, %v656
      %659 = vset.pattern.permute.xlu0 0
      %660 = vperm.xlu0 %659, %v546
      %v661 = vpop.permute.xlu0 %660
      %v663 = vmul.f32 %v661, %v657
      %v664 = vadd.f32 %v538, %v663
      %v665 = vld [vmem:[%s4] sm:$0xf]
      %v666 = vpack.c.bf16 %v664, %v664
      %v667 = vld [vmem:[%s5] sm:$0xff]
      %669 = vset.pattern.permute.xlu0 0
      %670 = vperm.xlu0 %669, %v667
      %v671 = vpop.permute.xlu0 %670
      %vm673 = vcmask 64512
      %v675 = vsel %vm673, %v665, 0
      %v678 = vsel %vm476, %v666, 0
      %680 = vmatprep.subr.bf16.mxu0 0
      %681 = vmatpush1.bf16.msra.mxu0 %v678
      %682 = vmatprep.subr.bf16.mxu0 0
      %683 = vmatpush1.bf16.msra.mxu0 0
      %684 = vmatprep.subr.bf16.mxu0 0
      %685 = vmatpush1.bf16.msra.mxu0 0
      %686 = vmatprep.subr.bf16.mxu0 0
      %687 = vmatpush1.bf16.msra.mxu0 0
      %688 = vmatprep.subr.bf16.mxu0 0
      %689 = vmatpush1.bf16.msra.mxu0 0
      %690 = vmatprep.subr.bf16.mxu0 0
      %691 = vmatpush1.bf16.msra.mxu0 0
      %692 = vmatprep.subr.bf16.mxu0 0
      %693 = vmatpush1.bf16.msra.mxu0 0
      %694 = vmatprep.subr.bf16.mxu0 0
      %695 = vmatpush1.bf16.msra.mxu0 0
      %696 = vmatprep.subr.bf16.mxu0 0
      %697 = vmatpush1.bf16.msra.mxu0 0
      %698 = vmatprep.subr.bf16.mxu0 0
      %699 = vmatpush1.bf16.msra.mxu0 0
      %700 = vmatprep.subr.bf16.mxu0 0
      %701 = vmatpush1.bf16.msra.mxu0 0
      %702 = vmatprep.subr.bf16.mxu0 0
      %703 = vmatpush1.bf16.msra.mxu0 0
      %704 = vmatprep.subr.bf16.mxu0 0
      %705 = vmatpush1.bf16.msra.mxu0 0
      %706 = vmatprep.subr.bf16.mxu0 0
      %707 = vmatpush1.bf16.msra.mxu0 0
      %708 = vmatprep.subr.bf16.mxu0 0
      %709 = vmatpush1.bf16.msra.mxu0 0
      %710 = vmatprep.subr.bf16.mxu0 0
      %711 = vmatpush1.bf16.msra.mxu0 0
      %712 = vmatprep.mubr.bf16.mxu0 0
      %713 = vmatmul.mubr.bf16.gmra.mrb[0].mxu0 %v675
      %v714 = vpop.f32.mrb[0].mxu0
      %v715 = vadd.f32 %v671, %v714
      %v716 = vpop.f32.mrb[0].mxu0
      %v717 = vpop.f32.mrb[0].mxu0
      %v718 = vpop.f32.mrb[0].mxu0
      %719 = vdwg.mxu0
      %721 = vrot.lane.b32.xlu0 %v338, 119
      %v722 = vpop.permute.xlu0 %721
      %v724 = vadd.f32 %v715, %v722
      %v725 = vpack.c.bf16 %v724, %v724
      %vm726 = vcmask 592896
      %727 = vst.msk [vmem:[%s315] sm:$0xf] %vm726, %v725
      %s728 = ssub.s32 0, %s23
      %p729 = scmp.lt.s32.totalorder %s22, 1
      %s730 = scalar_select %p729, %s22, 1
      %p731 = scmp.lt.s32.totalorder %s728, 0
      %s732 = scalar_select %p731, %s728, 0
      %s733 = sadd.s32 %s732, %s730
      %s734 = smul.addr %s733, 4
      %s735 = scalar_lea.vmem %s7, %s734
      // Predicated region
      $region53: #{decoder_forward.17} parent=47 // pred_check
        %p736 = pneg %p208
      $region54: #{decoder_forward.17} parent=47 // pred_check_branch
        %738 = sbr.rel (%p736) target = $region56
      $region55: #{decoder_forward.17} parent=47 // pred_region
        %s739 = ssub.s32 0, %s23
      $region56: #{decoder_forward.17} parent=47 // pred_fallthru
        _
    $region48: #{decoder_forward.17} parent=5 // pred_fallthru
      _
    %p740 = scmp.le.s32.totalorder 2, %s13
    // Predicated region
    $region57: #{decoder_forward.17} parent=5 // pred_check
      %p741 = pneg %p740
    $region58: #{decoder_forward.17} parent=5 // pred_check_branch
      %743 = sbr.rel (%p741) target = $region60
    $region59: #{decoder_forward.17} parent=5 // pred_region
      %s744 = ssub.s32 %s13, 2
      // Predicated region
      $region61: #{decoder_forward.17} parent=59 // pred_check
        %p745 = pneg %p214
      $region62: #{decoder_forward.17} parent=59 // pred_check_branch
        %747 = sbr.rel (%p745) target = $region64
      $region63: #{decoder_forward.17} parent=59 // pred_region
        %s748 = ssub.s32 0, %s25
        %p749 = scmp.lt.s32.totalorder %s24, 1
        %s750 = scalar_select %p749, %s24, 1
        %p751 = scmp.lt.s32.totalorder %s748, 0
        %s752 = scalar_select %p751, %s748, 0
        %s753 = sadd.s32 %s752, %s750
        %s754 = smul.addr %s753, 4
        %s755 = scalar_lea.vmem %s7, %s754
      $region64: #{decoder_forward.17} parent=59 // pred_fallthru
        _
    $region60: #{decoder_forward.17} parent=5 // pred_fallthru
      _
  $region6: #{decoder_forward.17} parent=0 // loop_footer
    %s17 = sadd.s32 1, %s13
  $region7: #{decoder_forward.17} parent=0 // loop_footer_branch
    %12 = sbr.rel target = $region3
  $region8: #{decoder_forward.17} parent=0 // loop_exit
    _

// kernel: decoder_forward.16
$region0: #{decoder_forward.16}
  #allocation0 [shape = 'u32[]', space=smem, size = 0x4, offset = 0x4, fixed_abs, tag = 'smem constant byte address 0x4 - core index']
  #allocation1 [shape = 'u32[144,128]{1,0:T(1,128)}', space=vmem, size = 0x12000, scoped, tag = 'internal scratch']
  #allocation2 [shape = 'bf16[8,6]{1,0:T(8,128)(2,1)}', space=vmem, size = 0x800, scoped, tag = 'scratch operand']
  %s0 = inlined_call_operand.vmem [shape: bf16[2,8,67], index: 0, kind: input, shape index: {}]
  %s1 = inlined_call_operand.vmem [shape: bf16[8,56], index: 1, kind: input, shape index: {}]
  %s2 = inlined_call_operand.vmem [shape: f32[8,1], index: 2, kind: input, shape index: {}]
  %s3 = inlined_call_operand.vmem [shape: f32[8,1], index: 3, kind: input, shape index: {}]
  %s4 = inlined_call_operand.vmem [shape: bf16[8,8], index: 4, kind: input, shape index: {}]
  %s5 = inlined_call_operand.vmem [shape: f32[8,1], index: 5, kind: input, shape index: {}]
  %s6 = inlined_call_operand.vmem [shape: f32[8,1], index: 6, kind: input, shape index: {}]
  %s7 = inlined_call_operand.vmem [shape: bf16[2,8,67], index: 7, kind: output, shape index: {}]
  %s8 = sld [smem:[#allocation0]]
  $region65: #{decoder_forward.16} parent=0
    _
  %s10 = ssub.s32 1, %s8
  %s11 = scalar_select 0, %s10, %s8
  loop: start=0, step=1, limit=4
  $region2: #{decoder_forward.16} parent=0 // loop_pre_header
    _
  $region3: #{decoder_forward.16} parent=0 // loop_header
    %s13 = sphi 0, %s17
    %p14 = scmp.ge.s32.totalorder %s13, 4
    %s20 = sphi 0, %s32
    %s21 = sphi 0, %s28
    %s22 = sphi 0, %s20
    %s23 = sphi 0, %s21
    %s24 = sphi 0, %s22
    %s25 = sphi 0, %s23
    %s39 = sphi 0, %s41
    %s42 = sphi 0, %s39
    %s43 = sphi 0, %s42
    %s59 = sphi 0, %s43
    %s63 = sphi 0, %s63
    %s65 = sphi 0, %s63
    %s66 = sphi 0, %s65
    %s80 = sphi 0, %s66
    %s84 = sphi 0, %s84
    %s86 = sphi 0, %s84
    %s87 = sphi 0, %s86
    %s101 = sphi 0, %s87
    %s105 = sphi 0, %s105
    %s107 = sphi 0, %s105
    %s108 = sphi 0, %s107
    %s122 = sphi 0, %s108
    %s126 = sphi 0, %s126
    %s128 = sphi 0, %s126
    %s129 = sphi 0, %s128
    %s143 = sphi 0, %s129
    %s147 = sphi 0, %s147
    %s149 = sphi 0, %s147
    %s150 = sphi 0, %s149
    %s164 = sphi 0, %s150
    %s168 = sphi 0, %s168
    %s170 = sphi 0, %s168
    %s171 = sphi 0, %s170
    %s185 = sphi 0, %s171
    %s195 = sphi 0, %s197
    %s198 = sphi 0, %s195
    %s199 = sphi 0, %s198
    %s215 = sphi 0, %s199
  $region4: #{decoder_forward.16} parent=0 // loop_header_branch
    %16 = sbr.rel (%p14) target = $region8
  $region5: #{decoder_forward.16} parent=0 // loop_body
    %s18 = ssub.s32 %s13, 1
    %s19 = ssub.s32 %s13, 2
    %s26 = sadd.s32 1, %s21
    %p27 = scmp.ge.s32.totalorder %s26, 1
    %s28 = scalar_select %p27, 0, %s26
    %s29 = sadd.s32 1, %s20
    %s30 = scalar_select %p27, %s29, %s20
    %p31 = scmp.ge.s32.totalorder %s30, 2
    %s32 = scalar_select %p31, 0, %s30
    %s33 = ssub.s32 0, %s21
    %s34 = ssub.s32 0, %s28
    %s35 = ssub.s32 %s20, %s32
    %s36 = ssub.s32 %s33, %s34
    %s37 = sor.u32 %s35, %s36
    %p38 = scmp.eq.s32.totalorder %s37, 0
    %s40 = sadd.s32 %s39, 1
    %s41 = scalar_select %p38, %s39, %s40
    %p44 = pneg %p38
    %p45 = scmp.eq.s32.totalorder %s13, 1
    %p46 = por %p44, %p45
    %p47 = scmp.ne.s32.totalorder %s39, %s42
    %p48 = scmp.eq.s32.totalorder %s13, 0
    %p49 = por %p47, %p48
    %p50 = scmp.ne.s32.totalorder %s39, %s42
    %p51 = scmp.eq.s32.totalorder %s18, 1
    %p52 = por %p50, %p51
    %p53 = scmp.ne.s32.totalorder %s42, %s43
    %p54 = scmp.eq.s32.totalorder %s18, 0
    %p55 = por %p53, %p54
    %p56 = scmp.ne.s32.totalorder %s42, %s43
    %p57 = scmp.eq.s32.totalorder %s19, 1
    %p58 = por %p56, %p57
    %p60 = scmp.ne.s32.totalorder %s43, %s59
    %p61 = scmp.eq.s32.totalorder %s19, 0
    %p62 = por %p60, %p61
    %s64 = sadd.s32 %s63, 1
    %p67 = scmp.eq.s32.totalorder %s13, 1
    %p68 = scmp.ne.s32.totalorder %s63, %s65
    %p69 = scmp.eq.s32.totalorder %s13, 0
    %p70 = por %p68, %p69
    %p71 = scmp.ne.s32.totalorder %s63, %s65
    %p72 = scmp.eq.s32.totalorder %s18, 1
    %p73 = por %p71, %p72
    %p74 = scmp.ne.s32.totalorder %s65, %s66
    %p75 = scmp.eq.s32.totalorder %s18, 0
    %p76 = por %p74, %p75
    %p77 = scmp.ne.s32.totalorder %s65, %s66
    %p78 = scmp.eq.s32.totalorder %s19, 1
    %p79 = por %p77, %p78
    %p81 = scmp.ne.s32.totalorder %s66, %s80
    %p82 = scmp.eq.s32.totalorder %s19, 0
    %p83 = por %p81, %p82
    %s85 = sadd.s32 %s84, 1
    %p88 = scmp.eq.s32.totalorder %s13, 1
    %p89 = scmp.ne.s32.totalorder %s84, %s86
    %p90 = scmp.eq.s32.totalorder %s13, 0
    %p91 = por %p89, %p90
    %p92 = scmp.ne.s32.totalorder %s84, %s86
    %p93 = scmp.eq.s32.totalorder %s18, 1
    %p94 = por %p92, %p93
    %p95 = scmp.ne.s32.totalorder %s86, %s87
    %p96 = scmp.eq.s32.totalorder %s18, 0
    %p97 = por %p95, %p96
    %p98 = scmp.ne.s32.totalorder %s86, %s87
    %p99 = scmp.eq.s32.totalorder %s19, 1
    %p100 = por %p98, %p99
    %p102 = scmp.ne.s32.totalorder %s87, %s101
    %p103 = scmp.eq.s32.totalorder %s19, 0
    %p104 = por %p102, %p103
    %s106 = sadd.s32 %s105, 1
    %p109 = scmp.eq.s32.totalorder %s13, 1
    %p110 = scmp.ne.s32.totalorder %s105, %s107
    %p111 = scmp.eq.s32.totalorder %s13, 0
    %p112 = por %p110, %p111
    %p113 = scmp.ne.s32.totalorder %s105, %s107
    %p114 = scmp.eq.s32.totalorder %s18, 1
    %p115 = por %p113, %p114
    %p116 = scmp.ne.s32.totalorder %s107, %s108
    %p117 = scmp.eq.s32.totalorder %s18, 0
    %p118 = por %p116, %p117
    %p119 = scmp.ne.s32.totalorder %s107, %s108
    %p120 = scmp.eq.s32.totalorder %s19, 1
    %p121 = por %p119, %p120
    %p123 = scmp.ne.s32.totalorder %s108, %s122
    %p124 = scmp.eq.s32.totalorder %s19, 0
    %p125 = por %p123, %p124
    %s127 = sadd.s32 %s126, 1
    %p130 = scmp.eq.s32.totalorder %s13, 1
    %p131 = scmp.ne.s32.totalorder %s126, %s128
    %p132 = scmp.eq.s32.totalorder %s13, 0
    %p133 = por %p131, %p132
    %p134 = scmp.ne.s32.totalorder %s126, %s128
    %p135 = scmp.eq.s32.totalorder %s18, 1
    %p136 = por %p134, %p135
    %p137 = scmp.ne.s32.totalorder %s128, %s129
    %p138 = scmp.eq.s32.totalorder %s18, 0
    %p139 = por %p137, %p138
    %p140 = scmp.ne.s32.totalorder %s128, %s129
    %p141 = scmp.eq.s32.totalorder %s19, 1
    %p142 = por %p140, %p141
    %p144 = scmp.ne.s32.totalorder %s129, %s143
    %p145 = scmp.eq.s32.totalorder %s19, 0
    %p146 = por %p144, %p145
    %s148 = sadd.s32 %s147, 1
    %p151 = scmp.eq.s32.totalorder %s13, 1
    %p152 = scmp.ne.s32.totalorder %s147, %s149
    %p153 = scmp.eq.s32.totalorder %s13, 0
    %p154 = por %p152, %p153
    %p155 = scmp.ne.s32.totalorder %s147, %s149
    %p156 = scmp.eq.s32.totalorder %s18, 1
    %p157 = por %p155, %p156
    %p158 = scmp.ne.s32.totalorder %s149, %s150
    %p159 = scmp.eq.s32.totalorder %s18, 0
    %p160 = por %p158, %p159
    %p161 = scmp.ne.s32.totalorder %s149, %s150
    %p162 = scmp.eq.s32.totalorder %s19, 1
    %p163 = por %p161, %p162
    %p165 = scmp.ne.s32.totalorder %s150, %s164
    %p166 = scmp.eq.s32.totalorder %s19, 0
    %p167 = por %p165, %p166
    %s169 = sadd.s32 %s168, 1
    %p172 = scmp.eq.s32.totalorder %s13, 1
    %p173 = scmp.ne.s32.totalorder %s168, %s170
    %p174 = scmp.eq.s32.totalorder %s13, 0
    %p175 = por %p173, %p174
    %p176 = scmp.ne.s32.totalorder %s168, %s170
    %p177 = scmp.eq.s32.totalorder %s18, 1
    %p178 = por %p176, %p177
    %p179 = scmp.ne.s32.totalorder %s170, %s171
    %p180 = scmp.eq.s32.totalorder %s18, 0
    %p181 = por %p179, %p180
    %p182 = scmp.ne.s32.totalorder %s170, %s171
    %p183 = scmp.eq.s32.totalorder %s19, 1
    %p184 = por %p182, %p183
    %p186 = scmp.ne.s32.totalorder %s171, %s185
    %p187 = scmp.eq.s32.totalorder %s19, 0
    %p188 = por %p186, %p187
    %s189 = ssub.s32 0, %s21
    %s190 = ssub.s32 0, %s28
    %s191 = ssub.s32 %s20, %s32
    %s192 = ssub.s32 %s189, %s190
    %s193 = sor.u32 %s191, %s192
    %p194 = scmp.eq.s32.totalorder %s193, 0
    %s196 = sadd.s32 %s195, 1
    %s197 = scalar_select %p194, %s195, %s196
    %p200 = pneg %p194
    %p201 = scmp.eq.s32.totalorder %s13, 1
    %p202 = por %p200, %p201
    %p203 = scmp.ne.s32.totalorder %s195, %s198
    %p204 = scmp.eq.s32.totalorder %s13, 0
    %p205 = por %p203, %p204
    %p206 = scmp.ne.s32.totalorder %s195, %s198
    %p207 = scmp.eq.s32.totalorder %s18, 1
    %p208 = por %p206, %p207
    %p209 = scmp.ne.s32.totalorder %s198, %s199
    %p210 = scmp.eq.s32.totalorder %s18, 0
    %p211 = por %p209, %p210
    %p212 = scmp.ne.s32.totalorder %s198, %s199
    %p213 = scmp.eq.s32.totalorder %s19, 1
    %p214 = por %p212, %p213
    %p216 = scmp.ne.s32.totalorder %s199, %s215
    %p217 = scmp.eq.s32.totalorder %s19, 0
    %p218 = por %p216, %p217
    %p219 = scmp.le.s32.totalorder 1, %s13
    %p220 = scmp.lt.s32.totalorder %s13, 3
    %p221 = pnand %p219, %p220
    %p222 = pneg %p221
    // Predicated region
    $region9: #{decoder_forward.16} parent=5 // pred_check
      _
    $region10: #{decoder_forward.16} parent=5 // pred_check_branch
      %224 = sbr.rel (%p221) target = $region12
    $region11: #{decoder_forward.16} parent=5 // pred_region
      %s225 = ssub.s32 %s13, 1
      // Predicated region
      $region13: #{decoder_forward.16} parent=11 // pred_check
        %p226 = pneg %p76
      $region14: #{decoder_forward.16} parent=11 // pred_check_branch
        %228 = sbr.rel (%p226) target = $region16
      $region15: #{decoder_forward.16} parent=11 // pred_region
        _
      $region16: #{decoder_forward.16} parent=11 // pred_fallthru
        _
      // Predicated region
      $region17: #{decoder_forward.16} parent=11 // pred_check
        %p229 = pneg %p97
      $region18: #{decoder_forward.16} parent=11 // pred_check_branch
        %231 = sbr.rel (%p229) target = $region20
      $region19: #{decoder_forward.16} parent=11 // pred_region
        _
      $region20: #{decoder_forward.16} parent=11 // pred_fallthru
        _
      // Predicated region
      $region21: #{decoder_forward.16} parent=11 // pred_check
        %p232 = pneg %p118
      $region22: #{decoder_forward.16} parent=11 // pred_check_branch
        %234 = sbr.rel (%p232) target = $region24
      $region23: #{decoder_forward.16} parent=11 // pred_region
        _
      $region24: #{decoder_forward.16} parent=11 // pred_fallthru
        _
      // Predicated region
      $region25: #{decoder_forward.16} parent=11 // pred_check
        %p235 = pneg %p139
      $region26: #{decoder_forward.16} parent=11 // pred_check_branch
        %237 = sbr.rel (%p235) target = $region28
      $region27: #{decoder_forward.16} parent=11 // pred_region
        _
      $region28: #{decoder_forward.16} parent=11 // pred_fallthru
        _
      // Predicated region
      $region29: #{decoder_forward.16} parent=11 // pred_check
        %p238 = pneg %p160
      $region30: #{decoder_forward.16} parent=11 // pred_check_branch
        %240 = sbr.rel (%p238) target = $region32
      $region31: #{decoder_forward.16} parent=11 // pred_region
        _
      $region32: #{decoder_forward.16} parent=11 // pred_fallthru
        _
      // Predicated region
      $region33: #{decoder_forward.16} parent=11 // pred_check
        %p241 = pneg %p181
      $region34: #{decoder_forward.16} parent=11 // pred_check_branch
        %243 = sbr.rel (%p241) target = $region36
      $region35: #{decoder_forward.16} parent=11 // pred_region
        _
      $region36: #{decoder_forward.16} parent=11 // pred_fallthru
        _
    $region12: #{decoder_forward.16} parent=5 // pred_fallthru
      _
    %p244 = scmp.lt.s32.totalorder %s13, 2
    // Predicated region
    $region37: #{decoder_forward.16} parent=5 // pred_check
      %p245 = pneg %p244
    $region38: #{decoder_forward.16} parent=5 // pred_check_branch
      %247 = sbr.rel (%p245) target = $region40
    $region39: #{decoder_forward.16} parent=5 // pred_region
      // Predicated region
      $region41: #{decoder_forward.16} parent=39 // pred_check
        %p248 = pneg %p49
      $region42: #{decoder_forward.16} parent=39 // pred_check_branch
        %250 = sbr.rel (%p248) target = $region44
      $region43: #{decoder_forward.16} parent=39 // pred_region
        %s251 = ssub.s32 0, %s21
        %p252 = scmp.lt.s32.totalorder %s20, 1
        %s253 = scalar_select %p252, %s20, 1
        %p254 = scmp.lt.s32.totalorder %s251, 0
        %s255 = scalar_select %p254, %s251, 0
        %s256 = sadd.s32 %s255, %s253
        %s257 = smul.addr %s256, 4
        %s258 = scalar_lea.vmem %s0, %s257
        %s259 = ssub.s32 0, %s21
      $region44: #{decoder_forward.16} parent=39 // pred_fallthru
        _
    $region40: #{decoder_forward.16} parent=5 // pred_fallthru
      _
    %p260 = scmp.le.s32.totalorder 1, %s13
    %p261 = scmp.lt.s32.totalorder %s13, 3
    %p262 = pnand %p260, %p261
    %p263 = pneg %p262
    // Predicated region
    $region45: #{decoder_forward.16} parent=5 // pred_check
      _
    $region46: #{decoder_forward.16} parent=5 // pred_check_branch
      %265 = sbr.rel (%p262) target = $region48
    $region47: #{decoder_forward.16} parent=5 // pred_region
      %s266 = ssub.s32 %s13, 1
      %s267 = ssub.s32 0, %s23
      %p268 = scmp.lt.s32.totalorder %s22, 1
      %s269 = scalar_select %p268, %s22, 1
      %p270 = scmp.lt.s32.totalorder %s267, 0
      %s271 = scalar_select %p270, %s267, 0
      %s272 = sadd.s32 %s271, %s269
      %s273 = smul.addr %s272, 4
      %s274 = scalar_lea.vmem %s0, %s273
      %p275 = pneg %p55
      %p276 = pneg %p52
      %p277 = pneg %p76
      %p278 = pneg %p73
      %p279 = pneg %p97
      %p280 = pneg %p94
      %p281 = pneg %p118
      %p282 = pneg %p115
      %p283 = pneg %p139
      %p284 = pneg %p136
      %p285 = pneg %p160
      %p286 = pneg %p157
      %p287 = pneg %p181
      %p288 = pneg %p178
      %p289 = pneg %p211
      %p290 = pneg %p208
      %s291 = ssub.s32 0, %s23
      %p292 = scmp.lt.s32.totalorder %s22, 1
      %s293 = scalar_select %p292, %s22, 1
      %p294 = scmp.lt.s32.totalorder %s291, 0
      %s295 = scalar_select %p294, %s291, 0
      %s296 = sadd.s32 %s295, %s293
      %s297 = smul.addr %s296, 4
      %s298 = scalar_lea.vmem %s7, %s297
      %s299 = ssub.s32 0, %s23
      %p300 = scmp.lt.s32.totalorder %s22, 1
      %s301 = scalar_select %p300, %s22, 1
      %p302 = scmp.lt.s32.totalorder %s299, 0
      %s303 = scalar_select %p302, %s299, 0
      %s304 = sadd.s32 %s303, %s301
      %s305 = smul.addr %s304, 4
      %s306 = scalar_lea.vmem %s0, %s305
      %s307 = ssub.s32 0, %s23
      %s308 = ssub.s32 0, %s23
      %p309 = scmp.lt.s32.totalorder %s22, 1
      %s310 = scalar_select %p309, %s22, 1
      %p311 = scmp.lt.s32.totalorder %s308, 0
      %s312 = scalar_select %p311, %s308, 0
      %s313 = sadd.s32 %s312, %s310
      %s314 = smul.addr %s313, 4
      %s315 = scalar_lea.vmem %s7, %s314
      %s316 = ssub.s32 0, %s23
      %p318 = scmp.eq.s32.totalorder %s23, 0
      // Predicated region
      $region49: #{decoder_forward.16} parent=47 // pred_check
        %p319 = pneg %p318
      $region50: #{decoder_forward.16} parent=47 // pred_check_branch
        %321 = sbr.rel (%p319) target = $region52
      $region51: #{decoder_forward.16} parent=47 // pred_region
        %vm322 = vcmask 44032
        %323 = vst.msk [vmem:[#allocation2] sm:$0xf] %vm322, 0
      $region52: #{decoder_forward.16} parent=47 // pred_fallthru
        _
      %v324 = vld [vmem:[%s306] sm:$0xf]
      %v325 = vld [vmem:[#allocation2] sm:$0xf]
      %v327 = vunpack.c.l.b16 %v325
      %v328 = vpack.c.b16 %v327, %v327
      %329 = vrot.lane.b32.xlu0 %v328, 67
      %v330 = vpop.permute.xlu0 %329
      %vm331 = vcmask 547840
      %v334 = vsel %vm331, %v324, %v330
      %vm336 = vcmask 44032
      %337 = vst.msk [vmem:[#allocation2] sm:$0xf] %vm336, %v324
      %v338 = vunpack.c.l.bf16 %v334
      %v339 = vld [vmem:[%s3] sm:$0xff]
      %v340 = vadd.f32 %v339, 1e-09
      %v341 = vrcp.pop %v340
      %v342 = vmul.f32 %v341, 0.5
      %v343 = vmul.f32 %v339, 2.0
      %345 = vset.pattern.permute.xlu0 0
      %346 = vperm.xlu0 %345, %v343
      %v347 = vpop.permute.xlu0 %346
      %v349 = vmul.f32 %v347, %v338
      %v350 = vand.u32 2147483647, %v349
      %vm351 = vcmp.le.f32.partialorder %v350, 0.7853982
      %vm352 = vcmp.lt.s32.totalorder %v349, 0
      %v353 = vand.u32 %v349, 2139095040
      %v354 = vshrl.u32 %v353, 23
      %v355 = vsub.s32 %v354, 127
      %v356 = vand.u32 2147483647, %v349
      %v357 = vand.u32 %v356, 8388607
      %v358 = vor.u32 %v357, 8388608
      %v359 = vsub.s32 0, %v358
      %v360 = vadd.s32 %v355, 1
      %vm361 = vcmp.gt.s32.totalorder %v360, 0
      %v362 = vsel %vm361, %v360, 0
      %v363 = vshrl.u32 %v362, 5
      %v364 = vand.u32 %v362, 31
      %v365 = vsub.s32 32, %v364
      %v366 = vshrl.u32 683565275, %v365
      %v367 = vshll.u32 683565275, %v364
      %v368 = vshrl.u32 2475754826, %v365
      %v369 = vor.u32 %v367, %v368
      %v370 = vshll.u32 2475754826, %v364
      %v371 = vshrl.u32 2131351028, %v365
      %v372 = vor.u32 %v370, %v371
      %v373 = vshll.u32 2131351028, %v364
      %v374 = vshrl.u32 2102212464, %v365
      %v375 = vor.u32 %v373, %v374
      %v376 = vshll.u32 2102212464, %v364
      %v377 = vshrl.u32 920167782, %v365
      %v378 = vor.u32 %v376, %v377
      %v379 = vshll.u32 920167782, %v364
      %v380 = vshrl.u32 1326507024, %v365
      %v381 = vor.u32 %v379, %v380
      %vm382 = vcmp.lt.s32.totalorder %v363, 1
      %vm383 = vcmp.lt.s32.totalorder %v363, 2
      %vm384 = vcmp.lt.s32.totalorder %v363, 3
      %vm385 = vcmp.lt.s32.totalorder %v363, 4
      %v386 = vsel %vm382, %v366, %v369
      %v387 = vsel %vm385, %v375, 2102212464
      %v388 = vsel %vm384, %v372, %v387
      %v389 = vsel %vm383, %v386, %v388
      %v390 = vsel %vm382, %v369, %v372
      %v391 = vsel %vm385, %v378, 920167782
      %v392 = vsel %vm384, %v375, %v391
      %v393 = vsel %vm383, %v390, %v392
      %v394 = vsel %vm382, %v372, %v375
      %v395 = vsel %vm385, %v381, 1326507024
      %v396 = vsel %vm384, %v378, %v395
      %v397 = vsel %vm383, %v394, %v396
      %v398 = vshll.u32 %v358, 8
      %v399 = vmul.u32.u64.compose %v398, %v397
      %v400 = vextract.low.u32 %v399
      %v401 = vextract.high.u32 %v399
      %v402 = vmul.u32.u64.compose %v398, %v393
      %v403 = vextract.low.u32 %v402
      %v404 = vextract.high.u32 %v402
      %v405 = vmul.u32 %v398, %v389
      %v406 = vadd.s32 %v401, %v403
      %vm407 = vc.u32 %v401, %v403
      %v408 = vadd.s32 %v404, 1
      %v409 = vsel %vm407, %v408, %v404
      %v410 = vadd.s32 %v405, %v409
      %v411 = vadd.s32 %v410, 536870912
      %v412 = vshrl.u32 %v411, 30
      %v413 = vshll.u32 %v412, 30
      %v414 = vsub.s32 %v410, %v413
      %vm415 = vcmp.lt.s32.totalorder %v414, 0
      %v416 = vsub.s32 0, %v414
      %v417 = vsel %vm415, %v416, %v414
      %v418 = vclz %v417
      %v419 = vsub.s32 %v418, 2
      %vm420 = vcmp.gt.s32.totalorder 0, %v419
      %v421 = vsel %vm420, 0, %v419
      %v422 = vsub.s32 32, %v421
      %v423 = vshll.u32 %v414, %v421
      %v424 = vshrl.u32 %v406, %v422
      %v425 = vor.u32 %v423, %v424
      %v426 = vsub.s32 4294967266, %v421
      %v427 = vadd.s32 %v426, 127
      %v428 = vshll.u32 %v427, 23
      %v429 = vor.u32 4788187, %v428
      %v430 = vand.u32 2147483647, %v429
      %v432 = vcvt.s32.f32 %v425
      %v433 = vmul.f32 %v432, %v430
      %v434 = vxor.u32 %v433, 2147483648
      %v435 = vsel %vm352, %v434, %v433
      %v436 = vsub.s32 4, %v412
      %v437 = vsel %vm352, %v436, %v412
      %v438 = vsel %vm351, %v349, %v435
      %v439 = vsel %vm351, 0, %v437
      %v440 = vcosq.f32.pop %v438
      %v441 = vsinq.f32.pop %v438
      %vm442 = vweird.f32 %v349
      %v443 = vand.u32 %v439, 3
      %vm444 = vcmp.lt.s32.totalorder %v443, 2
      %vm445 = vcmp.eq.s32.totalorder %v443, 0
      %v446 = vxor.u32 %v441, 2147483648
      %v447 = vsel %vm445, %v440, %v446
      %vm448 = vcmp.eq.s32.totalorder %v443, 2
      %v449 = vxor.u32 %v440, 2147483648
      %v450 = vsel %vm448, %v449, %v441
      %v451 = vsel %vm444, %v447, %v450
      %v452 = vsel %vm442, nan, %v451
      %v453 = vsub.f32 1.0, %v452
      %455 = vset.pattern.permute.xlu0 0
      %456 = vperm.xlu0 %455, %v342
      %v457 = vpop.permute.xlu0 %456
      %v459 = vmul.f32 %v457, %v453
      %v460 = vadd.f32 %v338, %v459
      %v461 = vpack.c.bf16 %v460, %v460
      %v463 = vrot.slane %v461, 4
      %464 = vrot.lane.b32.xlu0 %v463, 127
      %v465 = vpop.permute.xlu0 %464
      %466 = vrot.lane.b32.xlu0 %v461, 126
      %v467 = vpop.permute.xlu0 %466
      %468 = vrot.lane.b32.xlu0 %v463, 125
      %v469 = vpop.permute.xlu0 %468
      %470 = vrot.lane.b32.xlu0 %v461, 124
      %v471 = vpop.permute.xlu0 %470
      %472 = vrot.lane.b32.xlu0 %v463, 123
      %v473 = vpop.permute.xlu0 %472
      %474 = vrot.lane.b32.xlu0 %v461, 122
      %v475 = vpop.permute.xlu0 %474
      %vm476 = vcmask 1043456
      %v479 = vsel %vm476, %v461, %v465
      %v483 = vsel %vm476, %v467, %v469
      %v487 = vsel %vm476, %v471, %v473
      %v489 = vld [vmem:[%s1] sm:$0xf]
      %v490 = vld [vmem:[%s2] sm:$0xff]
      %492 = vset.pattern.permute.xlu0 0
      %493 = vperm.xlu0 %492, %v490
      %v494 = vpop.permute.xlu0 %493
      %vm496 = vcmask 457728
      %v498 = vsel %vm496, %v489, 0
      %v501 = vsel %vm476, %v475, 0
      %503 = vmatprep.subr.bf16.mxu0 0
      %504 = vmatpush1.bf16.msra.mxu0 %v479
      %505 = vmatprep.subr.bf16.mxu0 0
      %506 = vmatpush1.bf16.msra.mxu0 %v483
      %507 = vmatprep.subr.bf16.mxu0 0
      %508 = vmatpush1.bf16.msra.mxu0 %v487
      %509 = vmatprep.subr.bf16.mxu0 0
      %510 = vmatpush1.bf16.msra.mxu0 %v501
      %511 = vmatprep.subr.bf16.mxu0 0
      %512 = vmatpush1.bf16.msra.mxu0 0
      %513 = vmatprep.subr.bf16.mxu0 0
      %514 = vmatpush1.bf16.msra.mxu0 0
      %515 = vmatprep.subr.bf16.mxu0 0
      %516 = vmatpush1.bf16.msra.mxu0 0
      %517 = vmatprep.subr.bf16.mxu0 0
      %518 = vmatpush1.bf16.msra.mxu0 0
      %519 = vmatprep.subr.bf16.mxu0 0
      %520 = vmatpush1.bf16.msra.mxu0 0
      %521 = vmatprep.subr.bf16.mxu0 0
      %522 = vmatpush1.bf16.msra.mxu0 0
      %523 = vmatprep.subr.bf16.mxu0 0
      %524 = vmatpush1.bf16.msra.mxu0 0
      %525 = vmatprep.subr.bf16.mxu0 0
      %526 = vmatpush1.bf16.msra.mxu0 0
      %527 = vmatprep.subr.bf16.mxu0 0
      %528 = vmatpush1.bf16.msra.mxu0 0
      %529 = vmatprep.subr.bf16.mxu0 0
      %530 = vmatpush1.bf16.msra.mxu0 0
      %531 = vmatprep.subr.bf16.mxu0 0
      %532 = vmatpush1.bf16.msra.mxu0 0
      %533 = vmatprep.subr.bf16.mxu0 0
      %534 = vmatpush1.bf16.msra.mxu0 0
      %535 = vmatprep.mubr.bf16.mxu0 0
      %536 = vmatmul.mubr.bf16.gmra.mrb[0].mxu0 %v498
      %v537 = vpop.f32.mrb[0].mxu0
      %v538 = vadd.f32 %v494, %v537
      %v539 = vpop.f32.mrb[0].mxu0
      %v540 = vpop.f32.mrb[0].mxu0
      %v541 = vpop.f32.mrb[0].mxu0
      %542 = vdwg.mxu0
      %v543 = vld [vmem:[%s6] sm:$0xff]
      %v544 = vadd.f32 %v543, 1e-09
      %v545 = vrcp.pop %v544
      %v546 = vmul.f32 %v545, 0.5
      %v547 = vmul.f32 %v543, 2.0
      %549 = vset.pattern.permute.xlu0 0
      %550 = vperm.xlu0 %549, %v547
      %v551 = vpop.permute.xlu0 %550
      %v553 = vmul.f32 %v551, %v538
      %v554 = vand.u32 2147483647, %v553
      %vm555 = vcmp.le.f32.partialorder %v554, 0.7853982
      %vm556 = vcmp.lt.s32.totalorder %v553, 0
      %v557 = vand.u32 %v553, 2139095040
      %v558 = vshrl.u32 %v557, 23
      %v559 = vsub.s32 %v558, 127
      %v560 = vand.u32 2147483647, %v553
      %v561 = vand.u32 %v560, 8388607
      %v562 = vor.u32 %v561, 8388608
      %v563 = vsub.s32 0, %v562
      %v564 = vadd.s32 %v559, 1
      %vm565 = vcmp.gt.s32.totalorder %v564, 0
      %v566 = vsel %vm565, %v564, 0
      %v567 = vshrl.u32 %v566, 5
      %v568 = vand.u32 %v566, 31
      %v569 = vsub.s32 32, %v568
      %v570 = vshrl.u32 683565275, %v569
      %v571 = vshll.u32 683565275, %v568
      %v572 = vshrl.u32 2475754826, %v569
      %v573 = vor.u32 %v571, %v572
      %v574 = vshll.u32 2475754826, %v568
      %v575 = vshrl.u32 2131351028, %v569
      %v576 = vor.u32 %v574, %v575
      %v577 = vshll.u32 2131351028, %v568
      %v578 = vshrl.u32 2102212464, %v569
      %v579 = vor.u32 %v577, %v578
      %v580 = vshll.u32 2102212464, %v568
      %v581 = vshrl.u32 920167782, %v569
      %v582 = vor.u32 %v580, %v581
      %v583 = vshll.u32 920167782, %v568
      %v584 = vshrl.u32 1326507024, %v569
      %v585 = vor.u32 %v583, %v584
      %vm586 = vcmp.lt.s32.totalorder %v567, 1
      %vm587 = vcmp.lt.s32.totalorder %v567, 2
      %vm588 = vcmp.lt.s32.totalorder %v567, 3
      %vm589 = vcmp.lt.s32.totalorder %v567, 4
      %v590 = vsel %vm586, %v570, %v573
      %v591 = vsel %vm589, %v579, 2102212464
      %v592 = vsel %vm588, %v576, %v591
      %v593 = vsel %vm587, %v590, %v592
      %v594 = vsel %vm586, %v573, %v576
      %v595 = vsel %vm589, %v582, 920167782
      %v596 = vsel %vm588, %v579, %v595
      %v597 = vsel %vm587, %v594, %v596
      %v598 = vsel %vm586, %v576, %v579
      %v599 = vsel %vm589, %v585, 1326507024
      %v600 = vsel %vm588, %v582, %v599
      %v601 = vsel %vm587, %v598, %v600
      %v602 = vshll.u32 %v562, 8
      %v603 = vmul.u32.u64.compose %v602, %v601
      %v604 = vextract.low.u32 %v603
      %v605 = vextract.high.u32 %v603
      %v606 = vmul.u32.u64.compose %v602, %v597
      %v607 = vextract.low.u32 %v606
      %v608 = vextract.high.u32 %v606
      %v609 = vmul.u32 %v602, %v593
      %v610 = vadd.s32 %v605, %v607
      %vm611 = vc.u32 %v605, %v607
      %v612 = vadd.s32 %v608, 1
      %v613 = vsel %vm611, %v612, %v608
      %v614 = vadd.s32 %v609, %v613
      %v615 = vadd.s32 %v614, 536870912
      %v616 = vshrl.u32 %v615, 30
      %v617 = vshll.u32 %v616, 30
      %v618 = vsub.s32 %v614, %v617
      %vm619 = vcmp.lt.s32.totalorder %v618, 0
      %v620 = vsub.s32 0, %v618
      %v621 = vsel %vm619, %v620, %v618
      %v622 = vclz %v621
      %v623 = vsub.s32 %v622, 2
      %vm624 = vcmp.gt.s32.totalorder 0, %v623
      %v625 = vsel %vm624, 0, %v623
      %v626 = vsub.s32 32, %v625
      %v627 = vshll.u32 %v618, %v625
      %v628 = vshrl.u32 %v610, %v626
      %v629 = vor.u32 %v627, %v628
      %v630 = vsub.s32 4294967266, %v625
      %v631 = vadd.s32 %v630, 127
      %v632 = vshll.u32 %v631, 23
      %v633 = vor.u32 4788187, %v632
      %v634 = vand.u32 2147483647, %v633
      %v636 = vcvt.s32.f32 %v629
      %v637 = vmul.f32 %v636, %v634
      %v638 = vxor.u32 %v637, 2147483648
      %v639 = vsel %vm556, %v638, %v637
      %v640 = vsub.s32 4, %v616
      %v641 = vsel %vm556, %v640, %v616
      %v642 = vsel %vm555, %v553, %v639
      %v643 = vsel %vm555, 0, %v641
      %v644 = vcosq.f32.pop %v642
      %v645 = vsinq.f32.pop %v642
      %vm646 = vweird.f32 %v553
      %v647 = vand.u32 %v643, 3
      %vm648 = vcmp.lt.s32.totalorder %v647, 2
      %vm649 = vcmp.eq.s32.totalorder %v647, 0
      %v650 = vxor.u32 %v645, 2147483648
      %v651 = vsel %vm649, %v644, %v650
      %vm652 = vcmp.eq.s32.totalorder %v647, 2
      %v653 = vxor.u32 %v644, 2147483648
      %v654 = vsel %vm652, %v653, %v645
      %v655 = vsel %vm648, %v651, %v654
      %v656 = vsel %vm646, nan, %v655
      %v657 = vsub.f32 1.0, %v656
      %659 = vset.pattern.permute.xlu0 0
      %660 = vperm.xlu0 %659, %v546
      %v661 = vpop.permute.xlu0 %660
      %v663 = vmul.f32 %v661, %v657
      %v664 = vadd.f32 %v538, %v663
      %v665 = vld [vmem:[%s4] sm:$0xf]
      %v666 = vpack.c.bf16 %v664, %v664
      %v667 = vld [vmem:[%s5] sm:$0xff]
      %669 = vset.pattern.permute.xlu0 0
      %670 = vperm.xlu0 %669, %v667
      %v671 = vpop.permute.xlu0 %670
      %vm673 = vcmask 64512
      %v675 = vsel %vm673, %v665, 0
      %v678 = vsel %vm476, %v666, 0
      %680 = vmatprep.subr.bf16.mxu0 0
      %681 = vmatpush1.bf16.msra.mxu0 %v678
      %682 = vmatprep.subr.bf16.mxu0 0
      %683 = vmatpush1.bf16.msra.mxu0 0
      %684 = vmatprep.subr.bf16.mxu0 0
      %685 = vmatpush1.bf16.msra.mxu0 0
      %686 = vmatprep.subr.bf16.mxu0 0
      %687 = vmatpush1.bf16.msra.mxu0 0
      %688 = vmatprep.subr.bf16.mxu0 0
      %689 = vmatpush1.bf16.msra.mxu0 0
      %690 = vmatprep.subr.bf16.mxu0 0
      %691 = vmatpush1.bf16.msra.mxu0 0
      %692 = vmatprep.subr.bf16.mxu0 0
      %693 = vmatpush1.bf16.msra.mxu0 0
      %694 = vmatprep.subr.bf16.mxu0 0
      %695 = vmatpush1.bf16.msra.mxu0 0
      %696 = vmatprep.subr.bf16.mxu0 0
      %697 = vmatpush1.bf16.msra.mxu0 0
      %698 = vmatprep.subr.bf16.mxu0 0
      %699 = vmatpush1.bf16.msra.mxu0 0
      %700 = vmatprep.subr.bf16.mxu0 0
      %701 = vmatpush1.bf16.msra.mxu0 0
      %702 = vmatprep.subr.bf16.mxu0 0
      %703 = vmatpush1.bf16.msra.mxu0 0
      %704 = vmatprep.subr.bf16.mxu0 0
      %705 = vmatpush1.bf16.msra.mxu0 0
      %706 = vmatprep.subr.bf16.mxu0 0
      %707 = vmatpush1.bf16.msra.mxu0 0
      %708 = vmatprep.subr.bf16.mxu0 0
      %709 = vmatpush1.bf16.msra.mxu0 0
      %710 = vmatprep.subr.bf16.mxu0 0
      %711 = vmatpush1.bf16.msra.mxu0 0
      %712 = vmatprep.mubr.bf16.mxu0 0
      %713 = vmatmul.mubr.bf16.gmra.mrb[0].mxu0 %v675
      %v714 = vpop.f32.mrb[0].mxu0
      %v715 = vadd.f32 %v671, %v714
      %v716 = vpop.f32.mrb[0].mxu0
      %v717 = vpop.f32.mrb[0].mxu0
      %v718 = vpop.f32.mrb[0].mxu0
      %719 = vdwg.mxu0
      %721 = vrot.lane.b32.xlu0 %v338, 125
      %v722 = vpop.permute.xlu0 %721
      %v724 = vadd.f32 %v715, %v722
      %v725 = vpack.c.bf16 %v724, %v724
      %vm726 = vcmask 543744
      %727 = vst.msk [vmem:[%s315] sm:$0xf] %vm726, %v725
      %s728 = ssub.s32 0, %s23
      %p729 = scmp.lt.s32.totalorder %s22, 1
      %s730 = scalar_select %p729, %s22, 1
      %p731 = scmp.lt.s32.totalorder %s728, 0
      %s732 = scalar_select %p731, %s728, 0
      %s733 = sadd.s32 %s732, %s730
      %s734 = smul.addr %s733, 4
      %s735 = scalar_lea.vmem %s7, %s734
      // Predicated region
      $region53: #{decoder_forward.16} parent=47 // pred_check
        %p736 = pneg %p208
      $region54: #{decoder_forward.16} parent=47 // pred_check_branch
        %738 = sbr.rel (%p736) target = $region56
      $region55: #{decoder_forward.16} parent=47 // pred_region
        %s739 = ssub.s32 0, %s23
      $region56: #{decoder_forward.16} parent=47 // pred_fallthru
        _
    $region48: #{decoder_forward.16} parent=5 // pred_fallthru
      _
    %p740 = scmp.le.s32.totalorder 2, %s13
    // Predicated region
    $region57: #{decoder_forward.16} parent=5 // pred_check
      %p741 = pneg %p740
    $region58: #{decoder_forward.16} parent=5 // pred_check_branch
      %743 = sbr.rel (%p741) target = $region60
    $region59: #{decoder_forward.16} parent=5 // pred_region
      %s744 = ssub.s32 %s13, 2
      // Predicated region
      $region61: #{decoder_forward.16} parent=59 // pred_check
        %p745 = pneg %p214
      $region62: #{decoder_forward.16} parent=59 // pred_check_branch
        %747 = sbr.rel (%p745) target = $region64
      $region63: #{decoder_forward.16} parent=59 // pred_region
        %s748 = ssub.s32 0, %s25
        %p749 = scmp.lt.s32.totalorder %s24, 1
        %s750 = scalar_select %p749, %s24, 1
        %p751 = scmp.lt.s32.totalorder %s748, 0
        %s752 = scalar_select %p751, %s748, 0
        %s753 = sadd.s32 %s752, %s750
        %s754 = smul.addr %s753, 4
        %s755 = scalar_lea.vmem %s7, %s754
      $region64: #{decoder_forward.16} parent=59 // pred_fallthru
        _
    $region60: #{decoder_forward.16} parent=5 // pred_fallthru
      _
  $region6: #{decoder_forward.16} parent=0 // loop_footer
    %s17 = sadd.s32 1, %s13
  $region7: #{decoder_forward.16} parent=0 // loop_footer_branch
    %12 = sbr.rel target = $region3
  $region8: #{decoder_forward.16} parent=0 // loop_exit
    _

// kernel: decoder_forward.19
$region0: #{decoder_forward.19}
  #allocation0 [shape = 'u32[]', space=smem, size = 0x4, offset = 0x4, fixed_abs, tag = 'smem constant byte address 0x4 - core index']
  #allocation1 [shape = 'u32[144,128]{1,0:T(1,128)}', space=vmem, size = 0x12000, scoped, tag = 'internal scratch']
  #allocation2 [shape = 'bf16[8,6]{1,0:T(8,128)(2,1)}', space=vmem, size = 0x800, scoped, tag = 'scratch operand']
  %s0 = inlined_call_operand.vmem [shape: bf16[2,8,67], index: 0, kind: input, shape index: {}]
  %s1 = inlined_call_operand.vmem [shape: bf16[8,56], index: 1, kind: input, shape index: {}]
  %s2 = inlined_call_operand.vmem [shape: f32[8,1], index: 2, kind: input, shape index: {}]
  %s3 = inlined_call_operand.vmem [shape: f32[8,1], index: 3, kind: input, shape index: {}]
  %s4 = inlined_call_operand.vmem [shape: f32[2,8,67], index: 4, kind: output, shape index: {}]
  %s5 = sld [smem:[#allocation0]]
  $region53: #{decoder_forward.19} parent=0
    _
  %s7 = ssub.s32 1, %s5
  %s8 = scalar_select 0, %s7, %s5
  loop: start=0, step=1, limit=4
  $region2: #{decoder_forward.19} parent=0 // loop_pre_header
    _
  $region3: #{decoder_forward.19} parent=0 // loop_header
    %s10 = sphi 0, %s14
    %p11 = scmp.ge.s32.totalorder %s10, 4
    %s17 = sphi 0, %s29
    %s18 = sphi 0, %s25
    %s19 = sphi 0, %s17
    %s20 = sphi 0, %s18
    %s21 = sphi 0, %s19
    %s22 = sphi 0, %s20
    %s36 = sphi 0, %s38
    %s39 = sphi 0, %s36
    %s40 = sphi 0, %s39
    %s56 = sphi 0, %s40
    %s60 = sphi 0, %s60
    %s62 = sphi 0, %s60
    %s63 = sphi 0, %s62
    %s77 = sphi 0, %s63
    %s81 = sphi 0, %s81
    %s83 = sphi 0, %s81
    %s84 = sphi 0, %s83
    %s98 = sphi 0, %s84
    %s102 = sphi 0, %s102
    %s104 = sphi 0, %s102
    %s105 = sphi 0, %s104
    %s119 = sphi 0, %s105
    %s129 = sphi 0, %s131
    %s132 = sphi 0, %s129
    %s133 = sphi 0, %s132
    %s149 = sphi 0, %s133
  $region4: #{decoder_forward.19} parent=0 // loop_header_branch
    %13 = sbr.rel (%p11) target = $region8
  $region5: #{decoder_forward.19} parent=0 // loop_body
    %s15 = ssub.s32 %s10, 1
    %s16 = ssub.s32 %s10, 2
    %s23 = sadd.s32 1, %s18
    %p24 = scmp.ge.s32.totalorder %s23, 1
    %s25 = scalar_select %p24, 0, %s23
    %s26 = sadd.s32 1, %s17
    %s27 = scalar_select %p24, %s26, %s17
    %p28 = scmp.ge.s32.totalorder %s27, 2
    %s29 = scalar_select %p28, 0, %s27
    %s30 = ssub.s32 0, %s18
    %s31 = ssub.s32 0, %s25
    %s32 = ssub.s32 %s17, %s29
    %s33 = ssub.s32 %s30, %s31
    %s34 = sor.u32 %s32, %s33
    %p35 = scmp.eq.s32.totalorder %s34, 0
    %s37 = sadd.s32 %s36, 1
    %s38 = scalar_select %p35, %s36, %s37
    %p41 = pneg %p35
    %p42 = scmp.eq.s32.totalorder %s10, 1
    %p43 = por %p41, %p42
    %p44 = scmp.ne.s32.totalorder %s36, %s39
    %p45 = scmp.eq.s32.totalorder %s10, 0
    %p46 = por %p44, %p45
    %p47 = scmp.ne.s32.totalorder %s36, %s39
    %p48 = scmp.eq.s32.totalorder %s15, 1
    %p49 = por %p47, %p48
    %p50 = scmp.ne.s32.totalorder %s39, %s40
    %p51 = scmp.eq.s32.totalorder %s15, 0
    %p52 = por %p50, %p51
    %p53 = scmp.ne.s32.totalorder %s39, %s40
    %p54 = scmp.eq.s32.totalorder %s16, 1
    %p55 = por %p53, %p54
    %p57 = scmp.ne.s32.totalorder %s40, %s56
    %p58 = scmp.eq.s32.totalorder %s16, 0
    %p59 = por %p57, %p58
    %s61 = sadd.s32 %s60, 1
    %p64 = scmp.eq.s32.totalorder %s10, 1
    %p65 = scmp.ne.s32.totalorder %s60, %s62
    %p66 = scmp.eq.s32.totalorder %s10, 0
    %p67 = por %p65, %p66
    %p68 = scmp.ne.s32.totalorder %s60, %s62
    %p69 = scmp.eq.s32.totalorder %s15, 1
    %p70 = por %p68, %p69
    %p71 = scmp.ne.s32.totalorder %s62, %s63
    %p72 = scmp.eq.s32.totalorder %s15, 0
    %p73 = por %p71, %p72
    %p74 = scmp.ne.s32.totalorder %s62, %s63
    %p75 = scmp.eq.s32.totalorder %s16, 1
    %p76 = por %p74, %p75
    %p78 = scmp.ne.s32.totalorder %s63, %s77
    %p79 = scmp.eq.s32.totalorder %s16, 0
    %p80 = por %p78, %p79
    %s82 = sadd.s32 %s81, 1
    %p85 = scmp.eq.s32.totalorder %s10, 1
    %p86 = scmp.ne.s32.totalorder %s81, %s83
    %p87 = scmp.eq.s32.totalorder %s10, 0
    %p88 = por %p86, %p87
    %p89 = scmp.ne.s32.totalorder %s81, %s83
    %p90 = scmp.eq.s32.totalorder %s15, 1
    %p91 = por %p89, %p90
    %p92 = scmp.ne.s32.totalorder %s83, %s84
    %p93 = scmp.eq.s32.totalorder %s15, 0
    %p94 = por %p92, %p93
    %p95 = scmp.ne.s32.totalorder %s83, %s84
    %p96 = scmp.eq.s32.totalorder %s16, 1
    %p97 = por %p95, %p96
    %p99 = scmp.ne.s32.totalorder %s84, %s98
    %p100 = scmp.eq.s32.totalorder %s16, 0
    %p101 = por %p99, %p100
    %s103 = sadd.s32 %s102, 1
    %p106 = scmp.eq.s32.totalorder %s10, 1
    %p107 = scmp.ne.s32.totalorder %s102, %s104
    %p108 = scmp.eq.s32.totalorder %s10, 0
    %p109 = por %p107, %p108
    %p110 = scmp.ne.s32.totalorder %s102, %s104
    %p111 = scmp.eq.s32.totalorder %s15, 1
    %p112 = por %p110, %p111
    %p113 = scmp.ne.s32.totalorder %s104, %s105
    %p114 = scmp.eq.s32.totalorder %s15, 0
    %p115 = por %p113, %p114
    %p116 = scmp.ne.s32.totalorder %s104, %s105
    %p117 = scmp.eq.s32.totalorder %s16, 1
    %p118 = por %p116, %p117
    %p120 = scmp.ne.s32.totalorder %s105, %s119
    %p121 = scmp.eq.s32.totalorder %s16, 0
    %p122 = por %p120, %p121
    %s123 = ssub.s32 0, %s18
    %s124 = ssub.s32 0, %s25
    %s125 = ssub.s32 %s17, %s29
    %s126 = ssub.s32 %s123, %s124
    %s127 = sor.u32 %s125, %s126
    %p128 = scmp.eq.s32.totalorder %s127, 0
    %s130 = sadd.s32 %s129, 1
    %s131 = scalar_select %p128, %s129, %s130
    %p134 = pneg %p128
    %p135 = scmp.eq.s32.totalorder %s10, 1
    %p136 = por %p134, %p135
    %p137 = scmp.ne.s32.totalorder %s129, %s132
    %p138 = scmp.eq.s32.totalorder %s10, 0
    %p139 = por %p137, %p138
    %p140 = scmp.ne.s32.totalorder %s129, %s132
    %p141 = scmp.eq.s32.totalorder %s15, 1
    %p142 = por %p140, %p141
    %p143 = scmp.ne.s32.totalorder %s132, %s133
    %p144 = scmp.eq.s32.totalorder %s15, 0
    %p145 = por %p143, %p144
    %p146 = scmp.ne.s32.totalorder %s132, %s133
    %p147 = scmp.eq.s32.totalorder %s16, 1
    %p148 = por %p146, %p147
    %p150 = scmp.ne.s32.totalorder %s133, %s149
    %p151 = scmp.eq.s32.totalorder %s16, 0
    %p152 = por %p150, %p151
    %p153 = scmp.le.s32.totalorder 1, %s10
    %p154 = scmp.lt.s32.totalorder %s10, 3
    %p155 = pnand %p153, %p154
    %p156 = pneg %p155
    // Predicated region
    $region9: #{decoder_forward.19} parent=5 // pred_check
      _
    $region10: #{decoder_forward.19} parent=5 // pred_check_branch
      %158 = sbr.rel (%p155) target = $region12
    $region11: #{decoder_forward.19} parent=5 // pred_region
      %s159 = ssub.s32 %s10, 1
      // Predicated region
      $region13: #{decoder_forward.19} parent=11 // pred_check
        %p160 = pneg %p73
      $region14: #{decoder_forward.19} parent=11 // pred_check_branch
        %162 = sbr.rel (%p160) target = $region16
      $region15: #{decoder_forward.19} parent=11 // pred_region
        _
      $region16: #{decoder_forward.19} parent=11 // pred_fallthru
        _
      // Predicated region
      $region17: #{decoder_forward.19} parent=11 // pred_check
        %p163 = pneg %p94
      $region18: #{decoder_forward.19} parent=11 // pred_check_branch
        %165 = sbr.rel (%p163) target = $region20
      $region19: #{decoder_forward.19} parent=11 // pred_region
        _
      $region20: #{decoder_forward.19} parent=11 // pred_fallthru
        _
      // Predicated region
      $region21: #{decoder_forward.19} parent=11 // pred_check
        %p166 = pneg %p115
      $region22: #{decoder_forward.19} parent=11 // pred_check_branch
        %168 = sbr.rel (%p166) target = $region24
      $region23: #{decoder_forward.19} parent=11 // pred_region
        _
      $region24: #{decoder_forward.19} parent=11 // pred_fallthru
        _
    $region12: #{decoder_forward.19} parent=5 // pred_fallthru
      _
    %p169 = scmp.lt.s32.totalorder %s10, 2
    // Predicated region
    $region25: #{decoder_forward.19} parent=5 // pred_check
      %p170 = pneg %p169
    $region26: #{decoder_forward.19} parent=5 // pred_check_branch
      %172 = sbr.rel (%p170) target = $region28
    $region27: #{decoder_forward.19} parent=5 // pred_region
      // Predicated region
      $region29: #{decoder_forward.19} parent=27 // pred_check
        %p173 = pneg %p46
      $region30: #{decoder_forward.19} parent=27 // pred_check_branch
        %175 = sbr.rel (%p173) target = $region32
      $region31: #{decoder_forward.19} parent=27 // pred_region
        %s176 = ssub.s32 0, %s18
        %p177 = scmp.lt.s32.totalorder %s17, 1
        %s178 = scalar_select %p177, %s17, 1
        %p179 = scmp.lt.s32.totalorder %s176, 0
        %s180 = scalar_select %p179, %s176, 0
        %s181 = sadd.s32 %s180, %s178
        %s182 = smul.addr %s181, 4
        %s183 = scalar_lea.vmem %s0, %s182
        %s184 = ssub.s32 0, %s18
      $region32: #{decoder_forward.19} parent=27 // pred_fallthru
        _
    $region28: #{decoder_forward.19} parent=5 // pred_fallthru
      _
    %p185 = scmp.le.s32.totalorder 1, %s10
    %p186 = scmp.lt.s32.totalorder %s10, 3
    %p187 = pnand %p185, %p186
    %p188 = pneg %p187
    // Predicated region
    $region33: #{decoder_forward.19} parent=5 // pred_check
      _
    $region34: #{decoder_forward.19} parent=5 // pred_check_branch
      %190 = sbr.rel (%p187) target = $region36
    $region35: #{decoder_forward.19} parent=5 // pred_region
      %s191 = ssub.s32 %s10, 1
      %s192 = ssub.s32 0, %s20
      %p193 = scmp.lt.s32.totalorder %s19, 1
      %s194 = scalar_select %p193, %s19, 1
      %p195 = scmp.lt.s32.totalorder %s192, 0
      %s196 = scalar_select %p195, %s192, 0
      %s197 = sadd.s32 %s196, %s194
      %s198 = smul.addr %s197, 4
      %s199 = scalar_lea.vmem %s0, %s198
      %p200 = pneg %p52
      %p201 = pneg %p49
      %p202 = pneg %p73
      %p203 = pneg %p70
      %p204 = pneg %p94
      %p205 = pneg %p91
      %p206 = pneg %p115
      %p207 = pneg %p112
      %p208 = pneg %p145
      %p209 = pneg %p142
      %s210 = ssub.s32 0, %s20
      %p211 = scmp.lt.s32.totalorder %s19, 1
      %s212 = scalar_select %p211, %s19, 1
      %p213 = scmp.lt.s32.totalorder %s210, 0
      %s214 = scalar_select %p213, %s210, 0
      %s215 = sadd.s32 %s214, %s212
      %s216 = smul.addr %s215, 8
      %s217 = scalar_lea.vmem %s4, %s216
      %s218 = ssub.s32 0, %s20
      %p219 = scmp.lt.s32.totalorder %s19, 1
      %s220 = scalar_select %p219, %s19, 1
      %p221 = scmp.lt.s32.totalorder %s218, 0
      %s222 = scalar_select %p221, %s218, 0
      %s223 = sadd.s32 %s222, %s220
      %s224 = smul.addr %s223, 4
      %s225 = scalar_lea.vmem %s0, %s224
      %s226 = ssub.s32 0, %s20
      %s227 = ssub.s32 0, %s20
      %p228 = scmp.lt.s32.totalorder %s19, 1
      %s229 = scalar_select %p228, %s19, 1
      %p230 = scmp.lt.s32.totalorder %s227, 0
      %s231 = scalar_select %p230, %s227, 0
      %s232 = sadd.s32 %s231, %s229
      %s233 = smul.addr %s232, 8
      %s234 = scalar_lea.vmem %s4, %s233
      %s235 = ssub.s32 0, %s20
      %p237 = scmp.eq.s32.totalorder %s20, 0
      // Predicated region
      $region37: #{decoder_forward.19} parent=35 // pred_check
        %p238 = pneg %p237
      $region38: #{decoder_forward.19} parent=35 // pred_check_branch
        %240 = sbr.rel (%p238) target = $region40
      $region39: #{decoder_forward.19} parent=35 // pred_region
        %vm241 = vcmask 44032
        %242 = vst.msk [vmem:[#allocation2] sm:$0xf] %vm241, 0
      $region40: #{decoder_forward.19} parent=35 // pred_fallthru
        _
      %v243 = vld [vmem:[%s225] sm:$0xf]
      %v244 = vld [vmem:[#allocation2] sm:$0xf]
      %v246 = vunpack.c.l.b16 %v244
      %v247 = vpack.c.b16 %v246, %v246
      %248 = vrot.lane.b32.xlu0 %v247, 67
      %v249 = vpop.permute.xlu0 %248
      %vm250 = vcmask 547840
      %v253 = vsel %vm250, %v243, %v249
      %vm255 = vcmask 44032
      %256 = vst.msk [vmem:[#allocation2] sm:$0xf] %vm255, %v243
      %v257 = vunpack.c.l.bf16 %v253
      %v258 = vld [vmem:[%s3] sm:$0xff]
      %v259 = vadd.f32 %v258, 1e-09
      %v260 = vrcp.pop %v259
      %v261 = vmul.f32 %v260, 0.5
      %v262 = vmul.f32 %v258, 2.0
      %264 = vset.pattern.permute.xlu0 0
      %265 = vperm.xlu0 %264, %v262
      %v266 = vpop.permute.xlu0 %265
      %v268 = vmul.f32 %v266, %v257
      %v269 = vand.u32 2147483647, %v268
      %vm270 = vcmp.le.f32.partialorder %v269, 0.7853982
      %vm271 = vcmp.lt.s32.totalorder %v268, 0
      %v272 = vand.u32 %v268, 2139095040
      %v273 = vshrl.u32 %v272, 23
      %v274 = vsub.s32 %v273, 127
      %v275 = vand.u32 2147483647, %v268
      %v276 = vand.u32 %v275, 8388607
      %v277 = vor.u32 %v276, 8388608
      %v278 = vsub.s32 0, %v277
      %v279 = vadd.s32 %v274, 1
      %vm280 = vcmp.gt.s32.totalorder %v279, 0
      %v281 = vsel %vm280, %v279, 0
      %v282 = vshrl.u32 %v281, 5
      %v283 = vand.u32 %v281, 31
      %v284 = vsub.s32 32, %v283
      %v285 = vshrl.u32 683565275, %v284
      %v286 = vshll.u32 683565275, %v283
      %v287 = vshrl.u32 2475754826, %v284
      %v288 = vor.u32 %v286, %v287
      %v289 = vshll.u32 2475754826, %v283
      %v290 = vshrl.u32 2131351028, %v284
      %v291 = vor.u32 %v289, %v290
      %v292 = vshll.u32 2131351028, %v283
      %v293 = vshrl.u32 2102212464, %v284
      %v294 = vor.u32 %v292, %v293
      %v295 = vshll.u32 2102212464, %v283
      %v296 = vshrl.u32 920167782, %v284
      %v297 = vor.u32 %v295, %v296
      %v298 = vshll.u32 920167782, %v283
      %v299 = vshrl.u32 1326507024, %v284
      %v300 = vor.u32 %v298, %v299
      %vm301 = vcmp.lt.s32.totalorder %v282, 1
      %vm302 = vcmp.lt.s32.totalorder %v282, 2
      %vm303 = vcmp.lt.s32.totalorder %v282, 3
      %vm304 = vcmp.lt.s32.totalorder %v282, 4
      %v305 = vsel %vm301, %v285, %v288
      %v306 = vsel %vm304, %v294, 2102212464
      %v307 = vsel %vm303, %v291, %v306
      %v308 = vsel %vm302, %v305, %v307
      %v309 = vsel %vm301, %v288, %v291
      %v310 = vsel %vm304, %v297, 920167782
      %v311 = vsel %vm303, %v294, %v310
      %v312 = vsel %vm302, %v309, %v311
      %v313 = vsel %vm301, %v291, %v294
      %v314 = vsel %vm304, %v300, 1326507024
      %v315 = vsel %vm303, %v297, %v314
      %v316 = vsel %vm302, %v313, %v315
      %v317 = vshll.u32 %v277, 8
      %v318 = vmul.u32.u64.compose %v317, %v316
      %v319 = vextract.low.u32 %v318
      %v320 = vextract.high.u32 %v318
      %v321 = vmul.u32.u64.compose %v317, %v312
      %v322 = vextract.low.u32 %v321
      %v323 = vextract.high.u32 %v321
      %v324 = vmul.u32 %v317, %v308
      %v325 = vadd.s32 %v320, %v322
      %vm326 = vc.u32 %v320, %v322
      %v327 = vadd.s32 %v323, 1
      %v328 = vsel %vm326, %v327, %v323
      %v329 = vadd.s32 %v324, %v328
      %v330 = vadd.s32 %v329, 536870912
      %v331 = vshrl.u32 %v330, 30
      %v332 = vshll.u32 %v331, 30
      %v333 = vsub.s32 %v329, %v332
      %vm334 = vcmp.lt.s32.totalorder %v333, 0
      %v335 = vsub.s32 0, %v333
      %v336 = vsel %vm334, %v335, %v333
      %v337 = vclz %v336
      %v338 = vsub.s32 %v337, 2
      %vm339 = vcmp.gt.s32.totalorder 0, %v338
      %v340 = vsel %vm339, 0, %v338
      %v341 = vsub.s32 32, %v340
      %v342 = vshll.u32 %v333, %v340
      %v343 = vshrl.u32 %v325, %v341
      %v344 = vor.u32 %v342, %v343
      %v345 = vsub.s32 4294967266, %v340
      %v346 = vadd.s32 %v345, 127
      %v347 = vshll.u32 %v346, 23
      %v348 = vor.u32 4788187, %v347
      %v349 = vand.u32 2147483647, %v348
      %v351 = vcvt.s32.f32 %v344
      %v352 = vmul.f32 %v351, %v349
      %v353 = vxor.u32 %v352, 2147483648
      %v354 = vsel %vm271, %v353, %v352
      %v355 = vsub.s32 4, %v331
      %v356 = vsel %vm271, %v355, %v331
      %v357 = vsel %vm270, %v268, %v354
      %v358 = vsel %vm270, 0, %v356
      %v359 = vcosq.f32.pop %v357
      %v360 = vsinq.f32.pop %v357
      %vm361 = vweird.f32 %v268
      %v362 = vand.u32 %v358, 3
      %vm363 = vcmp.lt.s32.totalorder %v362, 2
      %vm364 = vcmp.eq.s32.totalorder %v362, 0
      %v365 = vxor.u32 %v360, 2147483648
      %v366 = vsel %vm364, %v359, %v365
      %vm367 = vcmp.eq.s32.totalorder %v362, 2
      %v368 = vxor.u32 %v359, 2147483648
      %v369 = vsel %vm367, %v368, %v360
      %v370 = vsel %vm363, %v366, %v369
      %v371 = vsel %vm361, nan, %v370
      %v372 = vsub.f32 1.0, %v371
      %374 = vset.pattern.permute.xlu0 0
      %375 = vperm.xlu0 %374, %v261
      %v376 = vpop.permute.xlu0 %375
      %v378 = vmul.f32 %v376, %v372
      %v379 = vadd.f32 %v257, %v378
      %v380 = vpack.c.bf16 %v379, %v379
      %v382 = vrot.slane %v380, 4
      %383 = vrot.lane.b32.xlu0 %v382, 127
      %v384 = vpop.permute.xlu0 %383
      %385 = vrot.lane.b32.xlu0 %v380, 126
      %v386 = vpop.permute.xlu0 %385
      %387 = vrot.lane.b32.xlu0 %v382, 125
      %v388 = vpop.permute.xlu0 %387
      %389 = vrot.lane.b32.xlu0 %v380, 124
      %v390 = vpop.permute.xlu0 %389
      %391 = vrot.lane.b32.xlu0 %v382, 123
      %v392 = vpop.permute.xlu0 %391
      %393 = vrot.lane.b32.xlu0 %v380, 122
      %v394 = vpop.permute.xlu0 %393
      %vm395 = vcmask 1043456
      %v398 = vsel %vm395, %v380, %v384
      %v402 = vsel %vm395, %v386, %v388
      %v406 = vsel %vm395, %v390, %v392
      %v408 = vld [vmem:[%s1] sm:$0xf]
      %v409 = vld [vmem:[%s2] sm:$0xff]
      %411 = vset.pattern.permute.xlu0 0
      %412 = vperm.xlu0 %411, %v409
      %v413 = vpop.permute.xlu0 %412
      %vm415 = vcmask 457728
      %v417 = vsel %vm415, %v408, 0
      %v420 = vsel %vm395, %v394, 0
      %422 = vmatprep.subr.bf16.mxu0 0
      %423 = vmatpush1.bf16.msra.mxu0 %v398
      %424 = vmatprep.subr.bf16.mxu0 0
      %425 = vmatpush1.bf16.msra.mxu0 %v402
      %426 = vmatprep.subr.bf16.mxu0 0
      %427 = vmatpush1.bf16.msra.mxu0 %v406
      %428 = vmatprep.subr.bf16.mxu0 0
      %429 = vmatpush1.bf16.msra.mxu0 %v420
      %430 = vmatprep.subr.bf16.mxu0 0
      %431 = vmatpush1.bf16.msra.mxu0 0
      %432 = vmatprep.subr.bf16.mxu0 0
      %433 = vmatpush1.bf16.msra.mxu0 0
      %434 = vmatprep.subr.bf16.mxu0 0
      %435 = vmatpush1.bf16.msra.mxu0 0
      %436 = vmatprep.subr.bf16.mxu0 0
      %437 = vmatpush1.bf16.msra.mxu0 0
      %438 = vmatprep.subr.bf16.mxu0 0
      %439 = vmatpush1.bf16.msra.mxu0 0
      %440 = vmatprep.subr.bf16.mxu0 0
      %441 = vmatpush1.bf16.msra.mxu0 0
      %442 = vmatprep.subr.bf16.mxu0 0
      %443 = vmatpush1.bf16.msra.mxu0 0
      %444 = vmatprep.subr.bf16.mxu0 0
      %445 = vmatpush1.bf16.msra.mxu0 0
      %446 = vmatprep.subr.bf16.mxu0 0
      %447 = vmatpush1.bf16.msra.mxu0 0
      %448 = vmatprep.subr.bf16.mxu0 0
      %449 = vmatpush1.bf16.msra.mxu0 0
      %450 = vmatprep.subr.bf16.mxu0 0
      %451 = vmatpush1.bf16.msra.mxu0 0
      %452 = vmatprep.subr.bf16.mxu0 0
      %453 = vmatpush1.bf16.msra.mxu0 0
      %454 = vmatprep.mubr.bf16.mxu0 0
      %455 = vmatmul.mubr.bf16.gmra.mrb[0].mxu0 %v417
      %v456 = vpop.f32.mrb[0].mxu0
      %v457 = vadd.f32 %v413, %v456
      %v458 = vpop.f32.mrb[0].mxu0
      %v459 = vpop.f32.mrb[0].mxu0
      %v460 = vpop.f32.mrb[0].mxu0
      %461 = vdwg.mxu0
      %v462 = vtanh.pop %v457
      %463 = vst.msk [vmem:[%s234] sm:$0xff] %vm250, %v462
      %s464 = ssub.s32 0, %s20
      %p465 = scmp.lt.s32.totalorder %s19, 1
      %s466 = scalar_select %p465, %s19, 1
      %p467 = scmp.lt.s32.totalorder %s464, 0
      %s468 = scalar_select %p467, %s464, 0
      %s469 = sadd.s32 %s468, %s466
      %s470 = smul.addr %s469, 8
      %s471 = scalar_lea.vmem %s4, %s470
      // Predicated region
      $region41: #{decoder_forward.19} parent=35 // pred_check
        %p472 = pneg %p142
      $region42: #{decoder_forward.19} parent=35 // pred_check_branch
        %474 = sbr.rel (%p472) target = $region44
      $region43: #{decoder_forward.19} parent=35 // pred_region
        %s475 = ssub.s32 0, %s20
      $region44: #{decoder_forward.19} parent=35 // pred_fallthru
        _
    $region36: #{decoder_forward.19} parent=5 // pred_fallthru
      _
    %p476 = scmp.le.s32.totalorder 2, %s10
    // Predicated region
    $region45: #{decoder_forward.19} parent=5 // pred_check
      %p477 = pneg %p476
    $region46: #{decoder_forward.19} parent=5 // pred_check_branch
      %479 = sbr.rel (%p477) target = $region48
    $region47: #{decoder_forward.19} parent=5 // pred_region
      %s480 = ssub.s32 %s10, 2
      // Predicated region
      $region49: #{decoder_forward.19} parent=47 // pred_check
        %p481 = pneg %p148
      $region50: #{decoder_forward.19} parent=47 // pred_check_branch
        %483 = sbr.rel (%p481) target = $region52
      $region51: #{decoder_forward.19} parent=47 // pred_region
        %s484 = ssub.s32 0, %s22
        %p485 = scmp.lt.s32.totalorder %s21, 1
        %s486 = scalar_select %p485, %s21, 1
        %p487 = scmp.lt.s32.totalorder %s484, 0
        %s488 = scalar_select %p487, %s484, 0
        %s489 = sadd.s32 %s488, %s486
        %s490 = smul.addr %s489, 8
        %s491 = scalar_lea.vmem %s4, %s490
      $region52: #{decoder_forward.19} parent=47 // pred_fallthru
        _
    $region48: #{decoder_forward.19} parent=5 // pred_fallthru
      _
  $region6: #{decoder_forward.19} parent=0 // loop_footer
    %s14 = sadd.s32 1, %s10
  $region7: #{decoder_forward.19} parent=0 // loop_footer_branch
    %9 = sbr.rel target = $region3
  $region8: #{decoder_forward.19} parent=0 // loop_exit
    _

// kernel: decoder_forward.18
$region0: #{decoder_forward.18}
  #allocation0 [shape = 'u32[]', space=smem, size = 0x4, offset = 0x4, fixed_abs, tag = 'smem constant byte address 0x4 - core index']
  #allocation1 [shape = 'u32[144,128]{1,0:T(1,128)}', space=vmem, size = 0x12000, scoped, tag = 'internal scratch']
  #allocation2 [shape = 'bf16[8,54]{1,0:T(8,128)(2,1)}', space=vmem, size = 0x800, scoped, tag = 'scratch operand']
  %s0 = inlined_call_operand.vmem [shape: bf16[2,8,91], index: 0, kind: input, shape index: {}]
  %s1 = inlined_call_operand.vmem [shape: bf16[8,56], index: 1, kind: input, shape index: {}]
  %s2 = inlined_call_operand.vmem [shape: f32[8,1], index: 2, kind: input, shape index: {}]
  %s3 = inlined_call_operand.vmem [shape: f32[8,1], index: 3, kind: input, shape index: {}]
  %s4 = inlined_call_operand.vmem [shape: bf16[8,8], index: 4, kind: input, shape index: {}]
  %s5 = inlined_call_operand.vmem [shape: f32[8,1], index: 5, kind: input, shape index: {}]
  %s6 = inlined_call_operand.vmem [shape: f32[8,1], index: 6, kind: input, shape index: {}]
  %s7 = inlined_call_operand.vmem [shape: bf16[2,8,91], index: 7, kind: output, shape index: {}]
  %s8 = sld [smem:[#allocation0]]
  $region65: #{decoder_forward.18} parent=0
    _
  %s10 = ssub.s32 1, %s8
  %s11 = scalar_select 0, %s10, %s8
  loop: start=0, step=1, limit=4
  $region2: #{decoder_forward.18} parent=0 // loop_pre_header
    _
  $region3: #{decoder_forward.18} parent=0 // loop_header
    %s13 = sphi 0, %s17
    %p14 = scmp.ge.s32.totalorder %s13, 4
    %s20 = sphi 0, %s32
    %s21 = sphi 0, %s28
    %s22 = sphi 0, %s20
    %s23 = sphi 0, %s21
    %s24 = sphi 0, %s22
    %s25 = sphi 0, %s23
    %s39 = sphi 0, %s41
    %s42 = sphi 0, %s39
    %s43 = sphi 0, %s42
    %s59 = sphi 0, %s43
    %s63 = sphi 0, %s63
    %s65 = sphi 0, %s63
    %s66 = sphi 0, %s65
    %s80 = sphi 0, %s66
    %s84 = sphi 0, %s84
    %s86 = sphi 0, %s84
    %s87 = sphi 0, %s86
    %s101 = sphi 0, %s87
    %s105 = sphi 0, %s105
    %s107 = sphi 0, %s105
    %s108 = sphi 0, %s107
    %s122 = sphi 0, %s108
    %s126 = sphi 0, %s126
    %s128 = sphi 0, %s126
    %s129 = sphi 0, %s128
    %s143 = sphi 0, %s129
    %s147 = sphi 0, %s147
    %s149 = sphi 0, %s147
    %s150 = sphi 0, %s149
    %s164 = sphi 0, %s150
    %s168 = sphi 0, %s168
    %s170 = sphi 0, %s168
    %s171 = sphi 0, %s170
    %s185 = sphi 0, %s171
    %s195 = sphi 0, %s197
    %s198 = sphi 0, %s195
    %s199 = sphi 0, %s198
    %s215 = sphi 0, %s199
  $region4: #{decoder_forward.18} parent=0 // loop_header_branch
    %16 = sbr.rel (%p14) target = $region8
  $region5: #{decoder_forward.18} parent=0 // loop_body
    %s18 = ssub.s32 %s13, 1
    %s19 = ssub.s32 %s13, 2
    %s26 = sadd.s32 1, %s21
    %p27 = scmp.ge.s32.totalorder %s26, 1
    %s28 = scalar_select %p27, 0, %s26
    %s29 = sadd.s32 1, %s20
    %s30 = scalar_select %p27, %s29, %s20
    %p31 = scmp.ge.s32.totalorder %s30, 2
    %s32 = scalar_select %p31, 0, %s30
    %s33 = ssub.s32 0, %s21
    %s34 = ssub.s32 0, %s28
    %s35 = ssub.s32 %s20, %s32
    %s36 = ssub.s32 %s33, %s34
    %s37 = sor.u32 %s35, %s36
    %p38 = scmp.eq.s32.totalorder %s37, 0
    %s40 = sadd.s32 %s39, 1
    %s41 = scalar_select %p38, %s39, %s40
    %p44 = pneg %p38
    %p45 = scmp.eq.s32.totalorder %s13, 1
    %p46 = por %p44, %p45
    %p47 = scmp.ne.s32.totalorder %s39, %s42
    %p48 = scmp.eq.s32.totalorder %s13, 0
    %p49 = por %p47, %p48
    %p50 = scmp.ne.s32.totalorder %s39, %s42
    %p51 = scmp.eq.s32.totalorder %s18, 1
    %p52 = por %p50, %p51
    %p53 = scmp.ne.s32.totalorder %s42, %s43
    %p54 = scmp.eq.s32.totalorder %s18, 0
    %p55 = por %p53, %p54
    %p56 = scmp.ne.s32.totalorder %s42, %s43
    %p57 = scmp.eq.s32.totalorder %s19, 1
    %p58 = por %p56, %p57
    %p60 = scmp.ne.s32.totalorder %s43, %s59
    %p61 = scmp.eq.s32.totalorder %s19, 0
    %p62 = por %p60, %p61
    %s64 = sadd.s32 %s63, 1
    %p67 = scmp.eq.s32.totalorder %s13, 1
    %p68 = scmp.ne.s32.totalorder %s63, %s65
    %p69 = scmp.eq.s32.totalorder %s13, 0
    %p70 = por %p68, %p69
    %p71 = scmp.ne.s32.totalorder %s63, %s65
    %p72 = scmp.eq.s32.totalorder %s18, 1
    %p73 = por %p71, %p72
    %p74 = scmp.ne.s32.totalorder %s65, %s66
    %p75 = scmp.eq.s32.totalorder %s18, 0
    %p76 = por %p74, %p75
    %p77 = scmp.ne.s32.totalorder %s65, %s66
    %p78 = scmp.eq.s32.totalorder %s19, 1
    %p79 = por %p77, %p78
    %p81 = scmp.ne.s32.totalorder %s66, %s80
    %p82 = scmp.eq.s32.totalorder %s19, 0
    %p83 = por %p81, %p82
    %s85 = sadd.s32 %s84, 1
    %p88 = scmp.eq.s32.totalorder %s13, 1
    %p89 = scmp.ne.s32.totalorder %s84, %s86
    %p90 = scmp.eq.s32.totalorder %s13, 0
    %p91 = por %p89, %p90
    %p92 = scmp.ne.s32.totalorder %s84, %s86
    %p93 = scmp.eq.s32.totalorder %s18, 1
    %p94 = por %p92, %p93
    %p95 = scmp.ne.s32.totalorder %s86, %s87
    %p96 = scmp.eq.s32.totalorder %s18, 0
    %p97 = por %p95, %p96
    %p98 = scmp.ne.s32.totalorder %s86, %s87
    %p99 = scmp.eq.s32.totalorder %s19, 1
    %p100 = por %p98, %p99
    %p102 = scmp.ne.s32.totalorder %s87, %s101
    %p103 = scmp.eq.s32.totalorder %s19, 0
    %p104 = por %p102, %p103
    %s106 = sadd.s32 %s105, 1
    %p109 = scmp.eq.s32.totalorder %s13, 1
    %p110 = scmp.ne.s32.totalorder %s105, %s107
    %p111 = scmp.eq.s32.totalorder %s13, 0
    %p112 = por %p110, %p111
    %p113 = scmp.ne.s32.totalorder %s105, %s107
    %p114 = scmp.eq.s32.totalorder %s18, 1
    %p115 = por %p113, %p114
    %p116 = scmp.ne.s32.totalorder %s107, %s108
    %p117 = scmp.eq.s32.totalorder %s18, 0
    %p118 = por %p116, %p117
    %p119 = scmp.ne.s32.totalorder %s107, %s108
    %p120 = scmp.eq.s32.totalorder %s19, 1
    %p121 = por %p119, %p120
    %p123 = scmp.ne.s32.totalorder %s108, %s122
    %p124 = scmp.eq.s32.totalorder %s19, 0
    %p125 = por %p123, %p124
    %s127 = sadd.s32 %s126, 1
    %p130 = scmp.eq.s32.totalorder %s13, 1
    %p131 = scmp.ne.s32.totalorder %s126, %s128
    %p132 = scmp.eq.s32.totalorder %s13, 0
    %p133 = por %p131, %p132
    %p134 = scmp.ne.s32.totalorder %s126, %s128
    %p135 = scmp.eq.s32.totalorder %s18, 1
    %p136 = por %p134, %p135
    %p137 = scmp.ne.s32.totalorder %s128, %s129
    %p138 = scmp.eq.s32.totalorder %s18, 0
    %p139 = por %p137, %p138
    %p140 = scmp.ne.s32.totalorder %s128, %s129
    %p141 = scmp.eq.s32.totalorder %s19, 1
    %p142 = por %p140, %p141
    %p144 = scmp.ne.s32.totalorder %s129, %s143
    %p145 = scmp.eq.s32.totalorder %s19, 0
    %p146 = por %p144, %p145
    %s148 = sadd.s32 %s147, 1
    %p151 = scmp.eq.s32.totalorder %s13, 1
    %p152 = scmp.ne.s32.totalorder %s147, %s149
    %p153 = scmp.eq.s32.totalorder %s13, 0
    %p154 = por %p152, %p153
    %p155 = scmp.ne.s32.totalorder %s147, %s149
    %p156 = scmp.eq.s32.totalorder %s18, 1
    %p157 = por %p155, %p156
    %p158 = scmp.ne.s32.totalorder %s149, %s150
    %p159 = scmp.eq.s32.totalorder %s18, 0
    %p160 = por %p158, %p159
    %p161 = scmp.ne.s32.totalorder %s149, %s150
    %p162 = scmp.eq.s32.totalorder %s19, 1
    %p163 = por %p161, %p162
    %p165 = scmp.ne.s32.totalorder %s150, %s164
    %p166 = scmp.eq.s32.totalorder %s19, 0
    %p167 = por %p165, %p166
    %s169 = sadd.s32 %s168, 1
    %p172 = scmp.eq.s32.totalorder %s13, 1
    %p173 = scmp.ne.s32.totalorder %s168, %s170
    %p174 = scmp.eq.s32.totalorder %s13, 0
    %p175 = por %p173, %p174
    %p176 = scmp.ne.s32.totalorder %s168, %s170
    %p177 = scmp.eq.s32.totalorder %s18, 1
    %p178 = por %p176, %p177
    %p179 = scmp.ne.s32.totalorder %s170, %s171
    %p180 = scmp.eq.s32.totalorder %s18, 0
    %p181 = por %p179, %p180
    %p182 = scmp.ne.s32.totalorder %s170, %s171
    %p183 = scmp.eq.s32.totalorder %s19, 1
    %p184 = por %p182, %p183
    %p186 = scmp.ne.s32.totalorder %s171, %s185
    %p187 = scmp.eq.s32.totalorder %s19, 0
    %p188 = por %p186, %p187
    %s189 = ssub.s32 0, %s21
    %s190 = ssub.s32 0, %s28
    %s191 = ssub.s32 %s20, %s32
    %s192 = ssub.s32 %s189, %s190
    %s193 = sor.u32 %s191, %s192
    %p194 = scmp.eq.s32.totalorder %s193, 0
    %s196 = sadd.s32 %s195, 1
    %s197 = scalar_select %p194, %s195, %s196
    %p200 = pneg %p194
    %p201 = scmp.eq.s32.totalorder %s13, 1
    %p202 = por %p200, %p201
    %p203 = scmp.ne.s32.totalorder %s195, %s198
    %p204 = scmp.eq.s32.totalorder %s13, 0
    %p205 = por %p203, %p204
    %p206 = scmp.ne.s32.totalorder %s195, %s198
    %p207 = scmp.eq.s32.totalorder %s18, 1
    %p208 = por %p206, %p207
    %p209 = scmp.ne.s32.totalorder %s198, %s199
    %p210 = scmp.eq.s32.totalorder %s18, 0
    %p211 = por %p209, %p210
    %p212 = scmp.ne.s32.totalorder %s198, %s199
    %p213 = scmp.eq.s32.totalorder %s19, 1
    %p214 = por %p212, %p213
    %p216 = scmp.ne.s32.totalorder %s199, %s215
    %p217 = scmp.eq.s32.totalorder %s19, 0
    %p218 = por %p216, %p217
    %p219 = scmp.le.s32.totalorder 1, %s13
    %p220 = scmp.lt.s32.totalorder %s13, 3
    %p221 = pnand %p219, %p220
    %p222 = pneg %p221
    // Predicated region
    $region9: #{decoder_forward.18} parent=5 // pred_check
      _
    $region10: #{decoder_forward.18} parent=5 // pred_check_branch
      %224 = sbr.rel (%p221) target = $region12
    $region11: #{decoder_forward.18} parent=5 // pred_region
      %s225 = ssub.s32 %s13, 1
      // Predicated region
      $region13: #{decoder_forward.18} parent=11 // pred_check
        %p226 = pneg %p76
      $region14: #{decoder_forward.18} parent=11 // pred_check_branch
        %228 = sbr.rel (%p226) target = $region16
      $region15: #{decoder_forward.18} parent=11 // pred_region
        _
      $region16: #{decoder_forward.18} parent=11 // pred_fallthru
        _
      // Predicated region
      $region17: #{decoder_forward.18} parent=11 // pred_check
        %p229 = pneg %p97
      $region18: #{decoder_forward.18} parent=11 // pred_check_branch
        %231 = sbr.rel (%p229) target = $region20
      $region19: #{decoder_forward.18} parent=11 // pred_region
        _
      $region20: #{decoder_forward.18} parent=11 // pred_fallthru
        _
      // Predicated region
      $region21: #{decoder_forward.18} parent=11 // pred_check
        %p232 = pneg %p118
      $region22: #{decoder_forward.18} parent=11 // pred_check_branch
        %234 = sbr.rel (%p232) target = $region24
      $region23: #{decoder_forward.18} parent=11 // pred_region
        _
      $region24: #{decoder_forward.18} parent=11 // pred_fallthru
        _
      // Predicated region
      $region25: #{decoder_forward.18} parent=11 // pred_check
        %p235 = pneg %p139
      $region26: #{decoder_forward.18} parent=11 // pred_check_branch
        %237 = sbr.rel (%p235) target = $region28
      $region27: #{decoder_forward.18} parent=11 // pred_region
        _
      $region28: #{decoder_forward.18} parent=11 // pred_fallthru
        _
      // Predicated region
      $region29: #{decoder_forward.18} parent=11 // pred_check
        %p238 = pneg %p160
      $region30: #{decoder_forward.18} parent=11 // pred_check_branch
        %240 = sbr.rel (%p238) target = $region32
      $region31: #{decoder_forward.18} parent=11 // pred_region
        _
      $region32: #{decoder_forward.18} parent=11 // pred_fallthru
        _
      // Predicated region
      $region33: #{decoder_forward.18} parent=11 // pred_check
        %p241 = pneg %p181
      $region34: #{decoder_forward.18} parent=11 // pred_check_branch
        %243 = sbr.rel (%p241) target = $region36
      $region35: #{decoder_forward.18} parent=11 // pred_region
        _
      $region36: #{decoder_forward.18} parent=11 // pred_fallthru
        _
    $region12: #{decoder_forward.18} parent=5 // pred_fallthru
      _
    %p244 = scmp.lt.s32.totalorder %s13, 2
    // Predicated region
    $region37: #{decoder_forward.18} parent=5 // pred_check
      %p245 = pneg %p244
    $region38: #{decoder_forward.18} parent=5 // pred_check_branch
      %247 = sbr.rel (%p245) target = $region40
    $region39: #{decoder_forward.18} parent=5 // pred_region
      // Predicated region
      $region41: #{decoder_forward.18} parent=39 // pred_check
        %p248 = pneg %p49
      $region42: #{decoder_forward.18} parent=39 // pred_check_branch
        %250 = sbr.rel (%p248) target = $region44
      $region43: #{decoder_forward.18} parent=39 // pred_region
        %s251 = ssub.s32 0, %s21
        %p252 = scmp.lt.s32.totalorder %s20, 1
        %s253 = scalar_select %p252, %s20, 1
        %p254 = scmp.lt.s32.totalorder %s251, 0
        %s255 = scalar_select %p254, %s251, 0
        %s256 = sadd.s32 %s255, %s253
        %s257 = smul.addr %s256, 4
        %s258 = scalar_lea.vmem %s0, %s257
        %s259 = ssub.s32 0, %s21
      $region44: #{decoder_forward.18} parent=39 // pred_fallthru
        _
    $region40: #{decoder_forward.18} parent=5 // pred_fallthru
      _
    %p260 = scmp.le.s32.totalorder 1, %s13
    %p261 = scmp.lt.s32.totalorder %s13, 3
    %p262 = pnand %p260, %p261
    %p263 = pneg %p262
    // Predicated region
    $region45: #{decoder_forward.18} parent=5 // pred_check
      _
    $region46: #{decoder_forward.18} parent=5 // pred_check_branch
      %265 = sbr.rel (%p262) target = $region48
    $region47: #{decoder_forward.18} parent=5 // pred_region
      %s266 = ssub.s32 %s13, 1
      %s267 = ssub.s32 0, %s23
      %p268 = scmp.lt.s32.totalorder %s22, 1
      %s269 = scalar_select %p268, %s22, 1
      %p270 = scmp.lt.s32.totalorder %s267, 0
      %s271 = scalar_select %p270, %s267, 0
      %s272 = sadd.s32 %s271, %s269
      %s273 = smul.addr %s272, 4
      %s274 = scalar_lea.vmem %s0, %s273
      %p275 = pneg %p55
      %p276 = pneg %p52
      %p277 = pneg %p76
      %p278 = pneg %p73
      %p279 = pneg %p97
      %p280 = pneg %p94
      %p281 = pneg %p118
      %p282 = pneg %p115
      %p283 = pneg %p139
      %p284 = pneg %p136
      %p285 = pneg %p160
      %p286 = pneg %p157
      %p287 = pneg %p181
      %p288 = pneg %p178
      %p289 = pneg %p211
      %p290 = pneg %p208
      %s291 = ssub.s32 0, %s23
      %p292 = scmp.lt.s32.totalorder %s22, 1
      %s293 = scalar_select %p292, %s22, 1
      %p294 = scmp.lt.s32.totalorder %s291, 0
      %s295 = scalar_select %p294, %s291, 0
      %s296 = sadd.s32 %s295, %s293
      %s297 = smul.addr %s296, 4
      %s298 = scalar_lea.vmem %s7, %s297
      %s299 = ssub.s32 0, %s23
      %p300 = scmp.lt.s32.totalorder %s22, 1
      %s301 = scalar_select %p300, %s22, 1
      %p302 = scmp.lt.s32.totalorder %s299, 0
      %s303 = scalar_select %p302, %s299, 0
      %s304 = sadd.s32 %s303, %s301
      %s305 = smul.addr %s304, 4
      %s306 = scalar_lea.vmem %s0, %s305
      %s307 = ssub.s32 0, %s23
      %s308 = ssub.s32 0, %s23
      %p309 = scmp.lt.s32.totalorder %s22, 1
      %s310 = scalar_select %p309, %s22, 1
      %p311 = scmp.lt.s32.totalorder %s308, 0
      %s312 = scalar_select %p311, %s308, 0
      %s313 = sadd.s32 %s312, %s310
      %s314 = smul.addr %s313, 4
      %s315 = scalar_lea.vmem %s7, %s314
      %s316 = ssub.s32 0, %s23
      %p318 = scmp.eq.s32.totalorder %s23, 0
      // Predicated region
      $region49: #{decoder_forward.18} parent=47 // pred_check
        %p319 = pneg %p318
      $region50: #{decoder_forward.18} parent=47 // pred_check_branch
        %321 = sbr.rel (%p319) target = $region52
      $region51: #{decoder_forward.18} parent=47 // pred_region
        %vm322 = vcmask 437248
        %323 = vst.msk [vmem:[#allocation2] sm:$0xf] %vm322, 0
      $region52: #{decoder_forward.18} parent=47 // pred_fallthru
        _
      %v324 = vld [vmem:[%s306] sm:$0xf]
      %v325 = vld [vmem:[#allocation2] sm:$0xf]
      %v327 = vunpack.c.l.b16 %v325
      %v328 = vpack.c.b16 %v327, %v327
      %329 = vrot.lane.b32.xlu0 %v328, 91
      %v330 = vpop.permute.xlu0 %329
      %vm332 = vcmask 744448
      %v335 = vsel %vm332, %v324, %v330
      %vm337 = vcmask 437248
      %338 = vst.msk [vmem:[#allocation2] sm:$0xf] %vm337, %v324
      %v339 = vunpack.c.l.bf16 %v335
      %v340 = vunpack.c.l.bf16 %v330
      %v341 = vld [vmem:[%s3] sm:$0xff]
      %v342 = vadd.f32 %v341, 1e-09
      %v343 = vrcp.pop %v342
      %v344 = vmul.f32 %v343, 0.5
      %v345 = vmul.f32 %v341, 2.0
      %347 = vset.pattern.permute.xlu0 0
      %348 = vperm.xlu0 %347, %v345
      %v349 = vpop.permute.xlu0 %348
      %v351 = vmul.f32 %v349, %v339
      %v352 = vmul.f32 %v349, %v340
      %v353 = vand.u32 2147483647, %v351
      %vm354 = vcmp.le.f32.partialorder %v353, 0.7853982
      %vm355 = vcmp.lt.s32.totalorder %v351, 0
      %v356 = vand.u32 %v351, 2139095040
      %v357 = vshrl.u32 %v356, 23
      %v358 = vsub.s32 %v357, 127
      %v359 = vand.u32 2147483647, %v351
      %v360 = vand.u32 %v359, 8388607
      %v361 = vor.u32 %v360, 8388608
      %v362 = vsub.s32 0, %v361
      %v363 = vadd.s32 %v358, 1
      %vm364 = vcmp.gt.s32.totalorder %v363, 0
      %v365 = vsel %vm364, %v363, 0
      %v366 = vshrl.u32 %v365, 5
      %v367 = vand.u32 %v365, 31
      %v368 = vsub.s32 32, %v367
      %v369 = vshrl.u32 683565275, %v368
      %v370 = vshll.u32 683565275, %v367
      %v371 = vshrl.u32 2475754826, %v368
      %v372 = vor.u32 %v370, %v371
      %v373 = vshll.u32 2475754826, %v367
      %v374 = vshrl.u32 2131351028, %v368
      %v375 = vor.u32 %v373, %v374
      %v376 = vshll.u32 2131351028, %v367
      %v377 = vshrl.u32 2102212464, %v368
      %v378 = vor.u32 %v376, %v377
      %v379 = vshll.u32 2102212464, %v367
      %v380 = vshrl.u32 920167782, %v368
      %v381 = vor.u32 %v379, %v380
      %v382 = vshll.u32 920167782, %v367
      %v383 = vshrl.u32 1326507024, %v368
      %v384 = vor.u32 %v382, %v383
      %vm385 = vcmp.lt.s32.totalorder %v366, 1
      %vm386 = vcmp.lt.s32.totalorder %v366, 2
      %vm387 = vcmp.lt.s32.totalorder %v366, 3
      %vm388 = vcmp.lt.s32.totalorder %v366, 4
      %v389 = vsel %vm385, %v369, %v372
      %v390 = vsel %vm388, %v378, 2102212464
      %v391 = vsel %vm387, %v375, %v390
      %v392 = vsel %vm386, %v389, %v391
      %v393 = vsel %vm385, %v372, %v375
      %v394 = vsel %vm388, %v381, 920167782
      %v395 = vsel %vm387, %v378, %v394
      %v396 = vsel %vm386, %v393, %v395
      %v397 = vsel %vm385, %v375, %v378
      %v398 = vsel %vm388, %v384, 1326507024
      %v399 = vsel %vm387, %v381, %v398
      %v400 = vsel %vm386, %v397, %v399
      %v401 = vshll.u32 %v361, 8
      %v402 = vmul.u32.u64.compose %v401, %v400
      %v403 = vextract.low.u32 %v402
      %v404 = vextract.high.u32 %v402
      %v405 = vmul.u32.u64.compose %v401, %v396
      %v406 = vextract.low.u32 %v405
      %v407 = vextract.high.u32 %v405
      %v408 = vmul.u32 %v401, %v392
      %v409 = vadd.s32 %v404, %v406
      %vm410 = vc.u32 %v404, %v406
      %v411 = vadd.s32 %v407, 1
      %v412 = vsel %vm410, %v411, %v407
      %v413 = vadd.s32 %v408, %v412
      %v414 = vadd.s32 %v413, 536870912
      %v415 = vshrl.u32 %v414, 30
      %v416 = vshll.u32 %v415, 30
      %v417 = vsub.s32 %v413, %v416
      %vm418 = vcmp.lt.s32.totalorder %v417, 0
      %v419 = vsub.s32 0, %v417
      %v420 = vsel %vm418, %v419, %v417
      %v421 = vclz %v420
      %v422 = vsub.s32 %v421, 2
      %vm423 = vcmp.gt.s32.totalorder 0, %v422
      %v424 = vsel %vm423, 0, %v422
      %v425 = vsub.s32 32, %v424
      %v426 = vshll.u32 %v417, %v424
      %v427 = vshrl.u32 %v409, %v425
      %v428 = vor.u32 %v426, %v427
      %v429 = vsub.s32 4294967266, %v424
      %v430 = vadd.s32 %v429, 127
      %v431 = vshll.u32 %v430, 23
      %v432 = vor.u32 4788187, %v431
      %v433 = vand.u32 2147483647, %v432
      %v435 = vcvt.s32.f32 %v428
      %v436 = vmul.f32 %v435, %v433
      %v437 = vxor.u32 %v436, 2147483648
      %v438 = vsel %vm355, %v437, %v436
      %v439 = vsub.s32 4, %v415
      %v440 = vsel %vm355, %v439, %v415
      %v441 = vsel %vm354, %v351, %v438
      %v442 = vsel %vm354, 0, %v440
      %v443 = vcosq.f32.pop %v441
      %v444 = vsinq.f32.pop %v441
      %vm445 = vweird.f32 %v351
      %v446 = vand.u32 %v442, 3
      %vm447 = vcmp.lt.s32.totalorder %v446, 2
      %vm448 = vcmp.eq.s32.totalorder %v446, 0
      %v449 = vxor.u32 %v444, 2147483648
      %v450 = vsel %vm448, %v443, %v449
      %vm451 = vcmp.eq.s32.totalorder %v446, 2
      %v452 = vxor.u32 %v443, 2147483648
      %v453 = vsel %vm451, %v452, %v444
      %v454 = vsel %vm447, %v450, %v453
      %v455 = vsel %vm445, nan, %v454
      %v456 = vand.u32 2147483647, %v352
      %vm457 = vcmp.le.f32.partialorder %v456, 0.7853982
      %vm458 = vcmp.lt.s32.totalorder %v352, 0
      %v459 = vand.u32 %v352, 2139095040
      %v460 = vshrl.u32 %v459, 23
      %v461 = vsub.s32 %v460, 127
      %v462 = vand.u32 2147483647, %v352
      %v463 = vand.u32 %v462, 8388607
      %v464 = vor.u32 %v463, 8388608
      %v465 = vsub.s32 0, %v464
      %v466 = vadd.s32 %v461, 1
      %vm467 = vcmp.gt.s32.totalorder %v466, 0
      %v468 = vsel %vm467, %v466, 0
      %v469 = vshrl.u32 %v468, 5
      %v470 = vand.u32 %v468, 31
      %v471 = vsub.s32 32, %v470
      %v472 = vshrl.u32 683565275, %v471
      %v473 = vshll.u32 683565275, %v470
      %v474 = vshrl.u32 2475754826, %v471
      %v475 = vor.u32 %v473, %v474
      %v476 = vshll.u32 2475754826, %v470
      %v477 = vshrl.u32 2131351028, %v471
      %v478 = vor.u32 %v476, %v477
      %v479 = vshll.u32 2131351028, %v470
      %v480 = vshrl.u32 2102212464, %v471
      %v481 = vor.u32 %v479, %v480
      %v482 = vshll.u32 2102212464, %v470
      %v483 = vshrl.u32 920167782, %v471
      %v484 = vor.u32 %v482, %v483
      %v485 = vshll.u32 920167782, %v470
      %v486 = vshrl.u32 1326507024, %v471
      %v487 = vor.u32 %v485, %v486
      %vm488 = vcmp.lt.s32.totalorder %v469, 1
      %vm489 = vcmp.lt.s32.totalorder %v469, 2
      %vm490 = vcmp.lt.s32.totalorder %v469, 3
      %vm491 = vcmp.lt.s32.totalorder %v469, 4
      %v492 = vsel %vm488, %v472, %v475
      %v493 = vsel %vm491, %v481, 2102212464
      %v494 = vsel %vm490, %v478, %v493
      %v495 = vsel %vm489, %v492, %v494
      %v496 = vsel %vm488, %v475, %v478
      %v497 = vsel %vm491, %v484, 920167782
      %v498 = vsel %vm490, %v481, %v497
      %v499 = vsel %vm489, %v496, %v498
      %v500 = vsel %vm488, %v478, %v481
      %v501 = vsel %vm491, %v487, 1326507024
      %v502 = vsel %vm490, %v484, %v501
      %v503 = vsel %vm489, %v500, %v502
      %v504 = vshll.u32 %v464, 8
      %v505 = vmul.u32.u64.compose %v504, %v503
      %v506 = vextract.low.u32 %v505
      %v507 = vextract.high.u32 %v505
      %v508 = vmul.u32.u64.compose %v504, %v499
      %v509 = vextract.low.u32 %v508
      %v510 = vextract.high.u32 %v508
      %v511 = vmul.u32 %v504, %v495
      %v512 = vadd.s32 %v507, %v509
      %vm513 = vc.u32 %v507, %v509
      %v514 = vadd.s32 %v510, 1
      %v515 = vsel %vm513, %v514, %v510
      %v516 = vadd.s32 %v511, %v515
      %v517 = vadd.s32 %v516, 536870912
      %v518 = vshrl.u32 %v517, 30
      %v519 = vshll.u32 %v518, 30
      %v520 = vsub.s32 %v516, %v519
      %vm521 = vcmp.lt.s32.totalorder %v520, 0
      %v522 = vsub.s32 0, %v520
      %v523 = vsel %vm521, %v522, %v520
      %v524 = vclz %v523
      %v525 = vsub.s32 %v524, 2
      %vm526 = vcmp.gt.s32.totalorder 0, %v525
      %v527 = vsel %vm526, 0, %v525
      %v528 = vsub.s32 32, %v527
      %v529 = vshll.u32 %v520, %v527
      %v530 = vshrl.u32 %v512, %v528
      %v531 = vor.u32 %v529, %v530
      %v532 = vsub.s32 4294967266, %v527
      %v533 = vadd.s32 %v532, 127
      %v534 = vshll.u32 %v533, 23
      %v535 = vor.u32 4788187, %v534
      %v536 = vand.u32 2147483647, %v535
      %v538 = vcvt.s32.f32 %v531
      %v539 = vmul.f32 %v538, %v536
      %v540 = vxor.u32 %v539, 2147483648
      %v541 = vsel %vm458, %v540, %v539
      %v542 = vsub.s32 4, %v518
      %v543 = vsel %vm458, %v542, %v518
      %v544 = vsel %vm457, %v352, %v541
      %v545 = vsel %vm457, 0, %v543
      %v546 = vcosq.f32.pop %v544
      %v547 = vsinq.f32.pop %v544
      %vm548 = vweird.f32 %v352
      %v549 = vand.u32 %v545, 3
      %vm550 = vcmp.lt.s32.totalorder %v549, 2
      %vm551 = vcmp.eq.s32.totalorder %v549, 0
      %v552 = vxor.u32 %v547, 2147483648
      %v553 = vsel %vm551, %v546, %v552
      %vm554 = vcmp.eq.s32.totalorder %v549, 2
      %v555 = vxor.u32 %v546, 2147483648
      %v556 = vsel %vm554, %v555, %v547
      %v557 = vsel %vm550, %v553, %v556
      %v558 = vsel %vm548, nan, %v557
      %v559 = vsub.f32 1.0, %v455
      %v560 = vsub.f32 1.0, %v558
      %562 = vset.pattern.permute.xlu0 0
      %563 = vperm.xlu0 %562, %v344
      %v564 = vpop.permute.xlu0 %563
      %v566 = vmul.f32 %v564, %v559
      %v567 = vmul.f32 %v564, %v560
      %v568 = vadd.f32 %v339, %v566
      %v569 = vadd.f32 %v340, %v567
      %v570 = vpack.c.bf16 %v568, %v568
      %v571 = vpack.c.bf16 %v569, %v569
      %v573 = vrot.slane %v570, 4
      %574 = vrot.lane.b32.xlu0 %v573, 119
      %v575 = vpop.permute.xlu0 %574
      %576 = vrot.lane.b32.xlu0 %v570, 110
      %v577 = vpop.permute.xlu0 %576
      %578 = vrot.lane.b32.xlu0 %v573, 101
      %v579 = vpop.permute.xlu0 %578
      %580 = vrot.lane.b32.xlu0 %v570, 92
      %v581 = vpop.permute.xlu0 %580
      %v583 = vrot.slane %v571, 4
      %584 = vrot.lane.b32.xlu0 %v573, 83
      %v585 = vpop.permute.xlu0 %584
      %586 = vrot.lane.b32.xlu0 %v583, 83
      %v587 = vpop.permute.xlu0 %586
      %vm588 = vcmask 678912
      %v589 = vsel %vm588, %v585, %v587
      %590 = vrot.lane.b32.xlu0 %v570, 74
      %v591 = vpop.permute.xlu0 %590
      %592 = vrot.lane.b32.xlu0 %v571, 74
      %v593 = vpop.permute.xlu0 %592
      %vm594 = vcmask 605184
      %v595 = vsel %vm594, %v591, %v593
      %vm596 = vcmask 1043456
      %v599 = vsel %vm596, %v570, %v575
      %v603 = vsel %vm596, %v577, %v579
      %v607 = vsel %vm596, %v581, %v589
      %v609 = vld [vmem:[%s1] sm:$0xf]
      %v610 = vld [vmem:[%s2] sm:$0xff]
      %612 = vset.pattern.permute.xlu0 0
      %613 = vperm.xlu0 %612, %v610
      %v614 = vpop.permute.xlu0 %613
      %vm616 = vcmask 457728
      %v618 = vsel %vm616, %v609, 0
      %v621 = vsel %vm596, %v595, 0
      %623 = vmatprep.subr.bf16.mxu0 0
      %624 = vmatpush1.bf16.msra.mxu0 %v599
      %625 = vmatprep.subr.bf16.mxu0 0
      %626 = vmatpush1.bf16.msra.mxu0 %v603
      %627 = vmatprep.subr.bf16.mxu0 0
      %628 = vmatpush1.bf16.msra.mxu0 %v607
      %629 = vmatprep.subr.bf16.mxu0 0
      %630 = vmatpush1.bf16.msra.mxu0 %v621
      %631 = vmatprep.subr.bf16.mxu0 0
      %632 = vmatpush1.bf16.msra.mxu0 0
      %633 = vmatprep.subr.bf16.mxu0 0
      %634 = vmatpush1.bf16.msra.mxu0 0
      %635 = vmatprep.subr.bf16.mxu0 0
      %636 = vmatpush1.bf16.msra.mxu0 0
      %637 = vmatprep.subr.bf16.mxu0 0
      %638 = vmatpush1.bf16.msra.mxu0 0
      %639 = vmatprep.subr.bf16.mxu0 0
      %640 = vmatpush1.bf16.msra.mxu0 0
      %641 = vmatprep.subr.bf16.mxu0 0
      %642 = vmatpush1.bf16.msra.mxu0 0
      %643 = vmatprep.subr.bf16.mxu0 0
      %644 = vmatpush1.bf16.msra.mxu0 0
      %645 = vmatprep.subr.bf16.mxu0 0
      %646 = vmatpush1.bf16.msra.mxu0 0
      %647 = vmatprep.subr.bf16.mxu0 0
      %648 = vmatpush1.bf16.msra.mxu0 0
      %649 = vmatprep.subr.bf16.mxu0 0
      %650 = vmatpush1.bf16.msra.mxu0 0
      %651 = vmatprep.subr.bf16.mxu0 0
      %652 = vmatpush1.bf16.msra.mxu0 0
      %653 = vmatprep.subr.bf16.mxu0 0
      %654 = vmatpush1.bf16.msra.mxu0 0
      %655 = vmatprep.mubr.bf16.mxu0 0
      %656 = vmatmul.mubr.bf16.gmra.mrb[0].mxu0 %v618
      %v657 = vpop.f32.mrb[0].mxu0
      %v658 = vadd.f32 %v614, %v657
      %v659 = vpop.f32.mrb[0].mxu0
      %v660 = vpop.f32.mrb[0].mxu0
      %v661 = vpop.f32.mrb[0].mxu0
      %662 = vdwg.mxu0
      %v663 = vld [vmem:[%s6] sm:$0xff]
      %v664 = vadd.f32 %v663, 1e-09
      %v665 = vrcp.pop %v664
      %v666 = vmul.f32 %v665, 0.5
      %v667 = vmul.f32 %v663, 2.0
      %669 = vset.pattern.permute.xlu0 0
      %670 = vperm.xlu0 %669, %v667
      %v671 = vpop.permute.xlu0 %670
      %v673 = vmul.f32 %v671, %v658
      %v674 = vand.u32 2147483647, %v673
      %vm675 = vcmp.le.f32.partialorder %v674, 0.7853982
      %vm676 = vcmp.lt.s32.totalorder %v673, 0
      %v677 = vand.u32 %v673, 2139095040
      %v678 = vshrl.u32 %v677, 23
      %v679 = vsub.s32 %v678, 127
      %v680 = vand.u32 2147483647, %v673
      %v681 = vand.u32 %v680, 8388607
      %v682 = vor.u32 %v681, 8388608
      %v683 = vsub.s32 0, %v682
      %v684 = vadd.s32 %v679, 1
      %vm685 = vcmp.gt.s32.totalorder %v684, 0
      %v686 = vsel %vm685, %v684, 0
      %v687 = vshrl.u32 %v686, 5
      %v688 = vand.u32 %v686, 31
      %v689 = vsub.s32 32, %v688
      %v690 = vshrl.u32 683565275, %v689
      %v691 = vshll.u32 683565275, %v688
      %v692 = vshrl.u32 2475754826, %v689
      %v693 = vor.u32 %v691, %v692
      %v694 = vshll.u32 2475754826, %v688
      %v695 = vshrl.u32 2131351028, %v689
      %v696 = vor.u32 %v694, %v695
      %v697 = vshll.u32 2131351028, %v688
      %v698 = vshrl.u32 2102212464, %v689
      %v699 = vor.u32 %v697, %v698
      %v700 = vshll.u32 2102212464, %v688
      %v701 = vshrl.u32 920167782, %v689
      %v702 = vor.u32 %v700, %v701
      %v703 = vshll.u32 920167782, %v688
      %v704 = vshrl.u32 1326507024, %v689
      %v705 = vor.u32 %v703, %v704
      %vm706 = vcmp.lt.s32.totalorder %v687, 1
      %vm707 = vcmp.lt.s32.totalorder %v687, 2
      %vm708 = vcmp.lt.s32.totalorder %v687, 3
      %vm709 = vcmp.lt.s32.totalorder %v687, 4
      %v710 = vsel %vm706, %v690, %v693
      %v711 = vsel %vm709, %v699, 2102212464
      %v712 = vsel %vm708, %v696, %v711
      %v713 = vsel %vm707, %v710, %v712
      %v714 = vsel %vm706, %v693, %v696
      %v715 = vsel %vm709, %v702, 920167782
      %v716 = vsel %vm708, %v699, %v715
      %v717 = vsel %vm707, %v714, %v716
      %v718 = vsel %vm706, %v696, %v699
      %v719 = vsel %vm709, %v705, 1326507024
      %v720 = vsel %vm708, %v702, %v719
      %v721 = vsel %vm707, %v718, %v720
      %v722 = vshll.u32 %v682, 8
      %v723 = vmul.u32.u64.compose %v722, %v721
      %v724 = vextract.low.u32 %v723
      %v725 = vextract.high.u32 %v723
      %v726 = vmul.u32.u64.compose %v722, %v717
      %v727 = vextract.low.u32 %v726
      %v728 = vextract.high.u32 %v726
      %v729 = vmul.u32 %v722, %v713
      %v730 = vadd.s32 %v725, %v727
      %vm731 = vc.u32 %v725, %v727
      %v732 = vadd.s32 %v728, 1
      %v733 = vsel %vm731, %v732, %v728
      %v734 = vadd.s32 %v729, %v733
      %v735 = vadd.s32 %v734, 536870912
      %v736 = vshrl.u32 %v735, 30
      %v737 = vshll.u32 %v736, 30
      %v738 = vsub.s32 %v734, %v737
      %vm739 = vcmp.lt.s32.totalorder %v738, 0
      %v740 = vsub.s32 0, %v738
      %v741 = vsel %vm739, %v740, %v738
      %v742 = vclz %v741
      %v743 = vsub.s32 %v742, 2
      %vm744 = vcmp.gt.s32.totalorder 0, %v743
      %v745 = vsel %vm744, 0, %v743
      %v746 = vsub.s32 32, %v745
      %v747 = vshll.u32 %v738, %v745
      %v748 = vshrl.u32 %v730, %v746
      %v749 = vor.u32 %v747, %v748
      %v750 = vsub.s32 4294967266, %v745
      %v751 = vadd.s32 %v750, 127
      %v752 = vshll.u32 %v751, 23
      %v753 = vor.u32 4788187, %v752
      %v754 = vand.u32 2147483647, %v753
      %v756 = vcvt.s32.f32 %v749
      %v757 = vmul.f32 %v756, %v754
      %v758 = vxor.u32 %v757, 2147483648
      %v759 = vsel %vm676, %v758, %v757
      %v760 = vsub.s32 4, %v736
      %v761 = vsel %vm676, %v760, %v736
      %v762 = vsel %vm675, %v673, %v759
      %v763 = vsel %vm675, 0, %v761
      %v764 = vcosq.f32.pop %v762
      %v765 = vsinq.f32.pop %v762
      %vm766 = vweird.f32 %v673
      %v767 = vand.u32 %v763, 3
      %vm768 = vcmp.lt.s32.totalorder %v767, 2
      %vm769 = vcmp.eq.s32.totalorder %v767, 0
      %v770 = vxor.u32 %v765, 2147483648
      %v771 = vsel %vm769, %v764, %v770
      %vm772 = vcmp.eq.s32.totalorder %v767, 2
      %v773 = vxor.u32 %v764, 2147483648
      %v774 = vsel %vm772, %v773, %v765
      %v775 = vsel %vm768, %v771, %v774
      %v776 = vsel %vm766, nan, %v775
      %v777 = vsub.f32 1.0, %v776
      %779 = vset.pattern.permute.xlu0 0
      %780 = vperm.xlu0 %779, %v666
      %v781 = vpop.permute.xlu0 %780
      %v783 = vmul.f32 %v781, %v777
      %v784 = vadd.f32 %v658, %v783
      %v785 = vld [vmem:[%s4] sm:$0xf]
      %v786 = vpack.c.bf16 %v784, %v784
      %v787 = vld [vmem:[%s5] sm:$0xff]
      %789 = vset.pattern.permute.xlu0 0
      %790 = vperm.xlu0 %789, %v787
      %v791 = vpop.permute.xlu0 %790
      %vm793 = vcmask 64512
      %v795 = vsel %vm793, %v785, 0
      %v798 = vsel %vm596, %v786, 0
      %800 = vmatprep.subr.bf16.mxu0 0
      %801 = vmatpush1.bf16.msra.mxu0 %v798
      %802 = vmatprep.subr.bf16.mxu0 0
      %803 = vmatpush1.bf16.msra.mxu0 0
      %804 = vmatprep.subr.bf16.mxu0 0
      %805 = vmatpush1.bf16.msra.mxu0 0
      %806 = vmatprep.subr.bf16.mxu0 0
      %807 = vmatpush1.bf16.msra.mxu0 0
      %808 = vmatprep.subr.bf16.mxu0 0
      %809 = vmatpush1.bf16.msra.mxu0 0
      %810 = vmatprep.subr.bf16.mxu0 0
      %811 = vmatpush1.bf16.msra.mxu0 0
      %812 = vmatprep.subr.bf16.mxu0 0
      %813 = vmatpush1.bf16.msra.mxu0 0
      %814 = vmatprep.subr.bf16.mxu0 0
      %815 = vmatpush1.bf16.msra.mxu0 0
      %816 = vmatprep.subr.bf16.mxu0 0
      %817 = vmatpush1.bf16.msra.mxu0 0
      %818 = vmatprep.subr.bf16.mxu0 0
      %819 = vmatpush1.bf16.msra.mxu0 0
      %820 = vmatprep.subr.bf16.mxu0 0
      %821 = vmatpush1.bf16.msra.mxu0 0
      %822 = vmatprep.subr.bf16.mxu0 0
      %823 = vmatpush1.bf16.msra.mxu0 0
      %824 = vmatprep.subr.bf16.mxu0 0
      %825 = vmatpush1.bf16.msra.mxu0 0
      %826 = vmatprep.subr.bf16.mxu0 0
      %827 = vmatpush1.bf16.msra.mxu0 0
      %828 = vmatprep.subr.bf16.mxu0 0
      %829 = vmatpush1.bf16.msra.mxu0 0
      %830 = vmatprep.subr.bf16.mxu0 0
      %831 = vmatpush1.bf16.msra.mxu0 0
      %832 = vmatprep.mubr.bf16.mxu0 0
      %833 = vmatmul.mubr.bf16.gmra.mrb[0].mxu0 %v795
      %v834 = vpop.f32.mrb[0].mxu0
      %v835 = vadd.f32 %v791, %v834
      %v836 = vpop.f32.mrb[0].mxu0
      %v837 = vpop.f32.mrb[0].mxu0
      %v838 = vpop.f32.mrb[0].mxu0
      %839 = vdwg.mxu0
      %841 = vrot.lane.b32.xlu0 %v339, 101
      %v842 = vpop.permute.xlu0 %841
      %v844 = vadd.f32 %v835, %v842
      %v845 = vpack.c.bf16 %v844, %v844
      %vm846 = vcmask 740352
      %847 = vst.msk [vmem:[%s315] sm:$0xf] %vm846, %v845
      %s848 = ssub.s32 0, %s23
      %p849 = scmp.lt.s32.totalorder %s22, 1
      %s850 = scalar_select %p849, %s22, 1
      %p851 = scmp.lt.s32.totalorder %s848, 0
      %s852 = scalar_select %p851, %s848, 0
      %s853 = sadd.s32 %s852, %s850
      %s854 = smul.addr %s853, 4
      %s855 = scalar_lea.vmem %s7, %s854
      // Predicated region
      $region53: #{decoder_forward.18} parent=47 // pred_check
        %p856 = pneg %p208
      $region54: #{decoder_forward.18} parent=47 // pred_check_branch
        %858 = sbr.rel (%p856) target = $region56
      $region55: #{decoder_forward.18} parent=47 // pred_region
        %s859 = ssub.s32 0, %s23
      $region56: #{decoder_forward.18} parent=47 // pred_fallthru
        _
    $region48: #{decoder_forward.18} parent=5 // pred_fallthru
      _
    %p860 = scmp.le.s32.totalorder 2, %s13
    // Predicated region
    $region57: #{decoder_forward.18} parent=5 // pred_check
      %p861 = pneg %p860
    $region58: #{decoder_forward.18} parent=5 // pred_check_branch
      %863 = sbr.rel (%p861) target = $region60
    $region59: #{decoder_forward.18} parent=5 // pred_region
      %s864 = ssub.s32 %s13, 2
      // Predicated region
      $region61: #{decoder_forward.18} parent=59 // pred_check
        %p865 = pneg %p214
      $region62: #{decoder_forward.18} parent=59 // pred_check_branch
        %867 = sbr.rel (%p865) target = $region64
      $region63: #{decoder_forward.18} parent=59 // pred_region
        %s868 = ssub.s32 0, %s25
        %p869 = scmp.lt.s32.totalorder %s24, 1
        %s870 = scalar_select %p869, %s24, 1
        %p871 = scmp.lt.s32.totalorder %s868, 0
        %s872 = scalar_select %p871, %s868, 0
        %s873 = sadd.s32 %s872, %s870
        %s874 = smul.addr %s873, 4
        %s875 = scalar_lea.vmem %s7, %s874
      $region64: #{decoder_forward.18} parent=59 // pred_fallthru
        _
    $region60: #{decoder_forward.18} parent=5 // pred_fallthru
      _
  $region6: #{decoder_forward.18} parent=0 // loop_footer
    %s17 = sadd.s32 1, %s13
  $region7: #{decoder_forward.18} parent=0 // loop_footer_branch
    %12 = sbr.rel target = $region3
  $region8: #{decoder_forward.18} parent=0 // loop_exit
    _

</llo_original>
